<compile_context>
chip_gen: v6e
topology: v6e:2x2x1
jax: 0.10.0
libtpu: 0.0.40
codegen_flags: <defaults>
</compile_context>

<pallas_src>
import jax
import jax.numpy as jnp
from jax.experimental import pallas as pl
from jax.experimental.pallas import tpu as pltpu

CIN_PAD = 8           # layer-1 input channels padded 3 -> 8 (f32 sublane)
SLOT = 32             # per-branch channel slot in the inter-block feature map
FEAT_C = 4 * SLOT     # 128: [br1 | br3 | br5 | br_pool], real 16/24/24/24


# ---------------------------------------------------------------------------
# in-kernel helpers (traced inside the kernel body; values stay in VMEM)
# ---------------------------------------------------------------------------

def _shift_rows(t, dh):
    """t[i + dh, j, c] with zero fill out of range (static dh)."""
    if dh == 0:
        return t
    z = jnp.zeros((abs(dh),) + t.shape[1:], t.dtype)
    if dh > 0:
        return jnp.concatenate([t[dh:], z], axis=0)
    return jnp.concatenate([z, t[:t.shape[0] + dh]], axis=0)


def _shift_cols(t, dw):
    """t[i, j + dw, c] with zero fill out of range (static dw)."""
    if dw == 0:
        return t
    z = jnp.zeros((t.shape[0], abs(dw)) + t.shape[2:], t.dtype)
    if dw > 0:
        return jnp.concatenate([t[:, dw:], z], axis=1)
    return jnp.concatenate([z, t[:, :t.shape[1] + dw]], axis=1)


def _maxpool3_same(t):
    """3x3 stride-1 'same' max pool: separable + edge-clamped.

    Clamping at the border is exactly equivalent to PyTorch's -inf padding
    for max, so no -inf padded scratch buffer is needed.
    """
    up = jnp.concatenate([t[1:], t[-1:]], axis=0)
    dn = jnp.concatenate([t[:1], t[:-1]], axis=0)
    t = jnp.maximum(jnp.maximum(up, t), dn)
    lf = jnp.concatenate([t[:, 1:], t[:, -1:]], axis=1)
    rt = jnp.concatenate([t[:, :1], t[:, :-1]], axis=1)
    return jnp.maximum(jnp.maximum(lf, t), rt)


def _conv_same_spatial(t, wmat, bias, ksize):
    """'same' KxK conv of a (H, W, 16) map as accumulating MXU matmuls over
    128-lane tap groups (8 taps x 16 ch) of an in-register im2col."""
    H, W, C = t.shape
    HW = H * W
    pad = ksize // 2
    # column (sublane) shifts are shared across kh; row shifts are cheap.
    colsh = [_shift_cols(t, kw - pad) for kw in range(ksize)]
    pieces = []
    for kh in range(ksize):
        for kw in range(ksize):
            pieces.append(_shift_rows(colsh[kw], kh - pad).reshape(HW, C))
    ntap = ksize * ksize
    acc = None
    for g0 in range(0, ntap, 8):
        g1 = min(g0 + 8, ntap)
        lhs = pieces[g0] if g1 - g0 == 1 else jnp.concatenate(pieces[g0:g1], axis=-1)
        d = jnp.dot(lhs.astype(jnp.bfloat16), wmat[g0 * C:g1 * C, :],
                    preferred_element_type=jnp.float32)
        acc = d if acc is None else acc + d
    return acc + bias                                        # (HW, Cout)


def _conv_same_gap(t, wmat, bias, ksize, inv_hw):
    """GAP(conv_same(t)) computed exactly via per-tap window sums.

    Valid because there is no nonlinearity between the conv and the GAP:
    mean over space commutes with the (linear) conv, so only K*K window sums
    of the 16-channel map plus one (1, K*K*16) dot are needed.
    """
    H, W, C = t.shape
    pad = ksize // 2
    cols = []
    for kh in range(ksize):
        dh = kh - pad
        r0, r1 = max(0, dh), H + min(0, dh)
        for kw in range(ksize):
            dw = kw - pad
            c0, c1 = max(0, dw), W + min(0, dw)
            s = t[r0:r1, c0:c1, :].sum(axis=0).sum(axis=0)   # (C,)
            cols.append(s.reshape(1, C))
    row = jnp.concatenate(cols, axis=-1)                     # (1, K*K*C)
    return jnp.dot(row, wmat, preferred_element_type=jnp.float32) * inv_hw + bias


# ---------------------------------------------------------------------------
# fused kernel: block1 -> block2 -> GAP -> fc, one grid step per image
# ---------------------------------------------------------------------------

def _inception_cnn_kernel(x_ref,
                          w1a, b1a, w3a, b3a, w5a, b5a, wpa, bpa,
                          w1b, b1b, wt35, bt35, w3b, b3b, w5b, b5b, wpb, bpb,
                          fcw, fcb,
                          out_ref):
    _, H, W, CIN = x_ref.shape
    HW = H * W
    inv_hw = 1.0 / HW
    x = x_ref[0]                                             # (H, W, 8), ch >= 3 zero
    x2d = x.reshape(HW, CIN)

    # ---------------- inception block 1 ----------------
    # fused branch-entry 1x1 convs: [br1(32) | t3(16) | t5(16)] in one matmul.
    t = jnp.dot(x2d.astype(jnp.bfloat16), w1a[...],
                preferred_element_type=jnp.float32) + b1a[...]          # (HW, 64)
    br1 = t[:, 0:32]                                         # cols 16:32 exact zeros
    t3 = t[:, 32:48].reshape(H, W, 16)
    t5 = t[:, 48:64].reshape(H, W, 16)

    br3 = _conv_same_spatial(t3, w3a[...], b3a[...], 3)      # (HW, 32), cols 24:32 zero
    br5 = _conv_same_spatial(t5, w5a[...], b5a[...], 5)      # (HW, 32)

    pooled1 = _maxpool3_same(x).reshape(HW, CIN)
    brp = jnp.dot(pooled1.astype(jnp.bfloat16), wpa[...],
                  preferred_element_type=jnp.float32) + bpa[...]        # (HW, 32)

    # lane-aligned inter-block feature map: four aligned 32-wide branch slots.
    feat = jnp.concatenate([br1, br3, br5, brp], axis=-1)               # (HW, 128)

    # --------- inception block 2 + GAP + fc (all linear except the pool) ---------
    # branch1 (1x1): GAP first, then the 1x1 conv (exact rewrite).
    mean1 = jnp.sum(feat, axis=0, keepdims=True) * inv_hw               # (1, 128)
    gap1 = jnp.dot(mean1, w1b[...], preferred_element_type=jnp.float32) + b1b[...]

    # branch_pool: max pool is nonlinear -> spatial pool, then GAP, then 1x1.
    pooled2 = _maxpool3_same(feat.reshape(H, W, FEAT_C)).reshape(HW, FEAT_C)
    meanp = jnp.sum(pooled2, axis=0, keepdims=True) * inv_hw
    gapp = jnp.dot(meanp, wpb[...], preferred_element_type=jnp.float32) + bpb[...]

    # branch3 / branch5: fused spatial entry 1x1, then GAP commutes with the
    # KxK conv -> per-tap window sums; block-2's (HW,88) map is never built.
    t35 = jnp.dot(feat.astype(jnp.bfloat16), wt35[...],
                  preferred_element_type=jnp.float32) + bt35[...]       # (HW, 32)
    t3b = t35[:, 0:16].reshape(H, W, 16)
    t5b = t35[:, 16:32].reshape(H, W, 16)
    gap3 = _conv_same_gap(t3b, w3b[...], b3b[...], 3, inv_hw)           # (1, 24)
    gap5 = _conv_same_gap(t5b, w5b[...], b5b[...], 5, inv_hw)           # (1, 24)

    gap_cat = jnp.concatenate([gap1, gap3, gap5, gapp], axis=-1)        # (1, 88)
    out_ref[0] = (jnp.dot(gap_cat, fcw[...], preferred_element_type=jnp.float32)
                  + fcb[...])                                           # (1, 8)


# ---------------------------------------------------------------------------
# pallas_call plumbing
# ---------------------------------------------------------------------------

def _fixed_spec(a):
    zero = (0,) * a.ndim
    return pl.BlockSpec(a.shape, lambda n, _z=zero: _z)


def run_inception_cnn(x, weights):
    """x: (N, H, W, 8) f32 -> (N, 1, 8) f32 channel-padded logits."""
    N, H, W, C = x.shape
    # NOTE(v7x): for N == 1, a second parallel axis (e.g. row strips with a
    # halo) would be needed to occupy both TensorCores; at N >= 2 the batch
    # axis already megacore-shards.
    return pl.pallas_call(
        _inception_cnn_kernel,
        out_shape=jax.ShapeDtypeStruct((N, 1, 8), jnp.float32),
        grid=(N,),
        in_specs=[pl.BlockSpec((1, H, W, C), lambda n: (n, 0, 0, 0))]
                 + [_fixed_spec(a) for a in weights],
        out_specs=pl.BlockSpec((1, 1, 8), lambda n: (n, 0, 0)),
        compiler_params=pltpu.CompilerParams(
            dimension_semantics=("parallel",)),
    )(x, *weights)


# ---------------------------------------------------------------------------
# parameters (deterministic init, PyTorch-default-style bounds)
# ---------------------------------------------------------------------------

def _conv_params(key, cin, cout, k):
    kw_key, kb_key = jax.random.split(key)
    bound = 1.0 / (cin * k * k) ** 0.5
    w = jax.random.uniform(kw_key, (cout, cin, k, k), jnp.float32, -bound, bound)
    b = jax.random.uniform(kb_key, (cout,), jnp.float32, -bound, bound)
    return w, b


def init_inception_block(key, cin):
    ks = jax.random.split(key, 6)
    return {
        "b1":   _conv_params(ks[0], cin, 16, 1),
        "b3_1": _conv_params(ks[1], cin, 16, 1),
        "b3_2": _conv_params(ks[2], 16, 24, 3),
        "b5_1": _conv_params(ks[3], cin, 16, 1),
        "b5_2": _conv_params(ks[4], 16, 24, 5),
        "bp":   _conv_params(ks[5], cin, 24, 1),
    }


def init_model(key):
    k1, k2, k3 = jax.random.split(key, 3)
    kw, kb = jax.random.split(k3)
    bound = 1.0 / 88.0 ** 0.5
    return {
        "layer1": init_inception_block(k1, 3),
        "layer2": init_inception_block(k2, 88),
        "fc_w": jax.random.uniform(kw, (5, 88), jnp.float32, -bound, bound),
        "fc_b": jax.random.uniform(kb, (5,), jnp.float32, -bound, bound),
    }


# ---------------------------------------------------------------------------
# weight packing (layout glue only; runs as tiny XLA ops outside the kernel)
# ---------------------------------------------------------------------------

def _w1x1(w):                      # (Cout, Cin, 1, 1) -> (Cin, Cout)
    return w[:, :, 0, 0].T


def _wkxk(w):                      # (Cout, Cmid, K, K) -> (K*K*Cmid, Cout), (kh,kw,ci)-major
    k = w.shape[-1]
    return jnp.transpose(w, (2, 3, 1, 0)).reshape(k * k * w.shape[1], w.shape[0])


def _padcols(m, n):
    return jnp.pad(m, ((0, 0), (0, n - m.shape[1])))


def _bias_row(b, n):
    return jnp.pad(b, (0, n - b.shape[0])).reshape(1, n)


def _slot_expand(m):
    """(88, Cout) -> (128, Cout): scatter real input rows into the four
    32-wide branch slots of the inter-block feature map."""
    z8 = jnp.zeros((8, m.shape[1]), m.dtype)
    z16 = jnp.zeros((16, m.shape[1]), m.dtype)
    return jnp.concatenate([m[0:16], z16, m[16:40], z8,
                            m[40:64], z8, m[64:88], z8], axis=0)


def pack_params(params):
    p1, p2 = params["layer1"], params["layer2"]
    bf = jnp.bfloat16

    def in8(m):                    # (3, Cout) -> (8, Cout)
        return jnp.pad(m, ((0, CIN_PAD - m.shape[0]), (0, 0)))

    # block 1: fused entry 1x1s as [br1(32) | t3(16) | t5(16)]
    w1a = jnp.concatenate([_padcols(in8(_w1x1(p1["b1"][0])), SLOT),
                           in8(_w1x1(p1["b3_1"][0])),
                           in8(_w1x1(p1["b5_1"][0]))], axis=1).astype(bf)   # (8, 64)
    b1a = jnp.concatenate([_bias_row(p1["b1"][1], SLOT),
                           p1["b3_1"][1].reshape(1, 16),
                           p1["b5_1"][1].reshape(1, 16)], axis=1)           # (1, 64)
    w3a = _padcols(_wkxk(p1["b3_2"][0]), SLOT).astype(bf)                   # (144, 32)
    b3a = _bias_row(p1["b3_2"][1], SLOT)
    w5a = _padcols(_wkxk(p1["b5_2"][0]), SLOT).astype(bf)                   # (400, 32)
    b5a = _bias_row(p1["b5_2"][1], SLOT)
    wpa = _padcols(in8(_w1x1(p1["bp"][0])), SLOT).astype(bf)                # (8, 32)
    bpa = _bias_row(p1["bp"][1], SLOT)

    # block 2: input rows expanded to the 128-wide slot layout
    w1b = _slot_expand(_w1x1(p2["b1"][0]))                                  # (128, 16)
    b1b = p2["b1"][1].reshape(1, 16)
    wt35 = jnp.concatenate([_slot_expand(_w1x1(p2["b3_1"][0])),
                            _slot_expand(_w1x1(p2["b5_1"][0]))],
                           axis=1).astype(bf)                               # (128, 32)
    bt35 = jnp.concatenate([p2["b3_1"][1], p2["b5_1"][1]]).reshape(1, 32)
    w3b = _wkxk(p2["b3_2"][0])                                              # (144, 24)
    b3b = p2["b3_2"][1].reshape(1, 24)
    w5b = _wkxk(p2["b5_2"][0])                                              # (400, 24)
    b5b = p2["b5_2"][1].reshape(1, 24)
    wpb = _slot_expand(_w1x1(p2["bp"][0]))                                  # (128, 24)
    bpb = p2["bp"][1].reshape(1, 24)

    # head
    fcw = _padcols(params["fc_w"].T, 8)                                     # (88, 8)
    fcb = _bias_row(params["fc_b"], 8)                                      # (1, 8)

    return (w1a, b1a, w3a, b3a, w5a, b5a, wpa, bpa,
            w1b, b1b, wt35, bt35, w3b, b3b, w5b, b5b, wpb, bpb, fcw, fcb)


# ---------------------------------------------------------------------------
# model forward
# ---------------------------------------------------------------------------

@jax.jit
def forward(params, x_nchw):
    x = jnp.transpose(x_nchw, (0, 2, 3, 1))                      # NCHW -> NHWC
    n, h, w, cin = x.shape
    x = jnp.pad(x, ((0, 0), (0, 0), (0, 0), (0, CIN_PAD - cin)))  # 3 -> 8 channels
    weights = pack_params(params)
    logits = run_inception_cnn(x, weights)                        # (N, 1, 8)
    return logits[:, 0, :5]                                       # (N, 5)


# ---------------------------------------------------------------------------
# pure-JAX reference (correctness check)
# ---------------------------------------------------------------------------

def _ref_conv(x, wb, pad):
    w, b = wb
    out = jax.lax.conv_general_dilated(
        x, w, window_strides=(1, 1), padding=[(pad, pad), (pad, pad)],
        dimension_numbers=("NCHW", "OIHW", "NCHW"),
        precision=jax.lax.Precision.HIGHEST)
    return out + b.reshape(1, -1, 1, 1)


def _ref_maxpool(x):
    return jax.lax.reduce_window(
        x, jnp.array(-jnp.inf, x.dtype), jax.lax.max,
        (1, 1, 3, 3), (1, 1, 1, 1), [(0, 0), (0, 0), (1, 1), (1, 1)])


def _ref_block(x, p):
    b1 = _ref_conv(x, p["b1"], 0)
    b3 = _ref_conv(_ref_conv(x, p["b3_1"], 0), p["b3_2"], 1)
    b5 = _ref_conv(_ref_conv(x, p["b5_1"], 0), p["b5_2"], 2)
    bp = _ref_conv(_ref_maxpool(x), p["bp"], 0)
    return jnp.concatenate([b1, b3, b5, bp], axis=1)


def _ref_forward(params, x):
    out = _ref_block(x, params["layer1"])
    out = _ref_block(out, params["layer2"])
    mean = out.mean(axis=(2, 3))
    return mean @ params["fc_w"].T + params["fc_b"]


if __name__ == "__main__":
    key = jax.random.PRNGKey(0)
    pkey, xkey = jax.random.split(key)
    params = init_model(pkey)
    x = jax.random.normal(xkey, (2, 3, 16, 16), jnp.float32)   # NCHW, like PyTorch

    out = jax.block_until_ready(forward(params, x))
    assert out.shape == (2, 5)
    assert bool(jnp.all(jnp.isfinite(out)))

    ref = _ref_forward(params, x)
    assert bool(jnp.allclose(out, ref, rtol=2e-2, atol=2e-2)), (out, ref)
    print("KERNEL_OK")
</pallas_src>

<mosaic_0001>
module attributes {stable_mosaic.version = 11 : i64} {
  func.func @_inception_cnn_kernel(%arg0: i32, %arg1: memref<1x16x16x8xf32, #tpu.memory_space<vmem>>, %arg2: memref<8x64xbf16, #tpu.memory_space<vmem>>, %arg3: memref<1x64xf32, #tpu.memory_space<vmem>>, %arg4: memref<144x32xbf16, #tpu.memory_space<vmem>>, %arg5: memref<1x32xf32, #tpu.memory_space<vmem>>, %arg6: memref<400x32xbf16, #tpu.memory_space<vmem>>, %arg7: memref<1x32xf32, #tpu.memory_space<vmem>>, %arg8: memref<8x32xbf16, #tpu.memory_space<vmem>>, %arg9: memref<1x32xf32, #tpu.memory_space<vmem>>, %arg10: memref<128x16xf32, #tpu.memory_space<vmem>>, %arg11: memref<1x16xf32, #tpu.memory_space<vmem>>, %arg12: memref<128x32xbf16, #tpu.memory_space<vmem>>, %arg13: memref<1x32xf32, #tpu.memory_space<vmem>>, %arg14: memref<144x24xf32, #tpu.memory_space<vmem>>, %arg15: memref<1x24xf32, #tpu.memory_space<vmem>>, %arg16: memref<400x24xf32, #tpu.memory_space<vmem>>, %arg17: memref<1x24xf32, #tpu.memory_space<vmem>>, %arg18: memref<128x24xf32, #tpu.memory_space<vmem>>, %arg19: memref<1x24xf32, #tpu.memory_space<vmem>>, %arg20: memref<88x8xf32, #tpu.memory_space<vmem>>, %arg21: memref<1x8xf32, #tpu.memory_space<vmem>>, %arg22: memref<1x1x8xf32, #tpu.memory_space<vmem>>) attributes {dimension_semantics = [#tpu.dimension_semantics<parallel>], iteration_bounds = array<i64: 2>, scalar_prefetch = 0 : i64, scratch_operands = 0 : i64, tpu.core_type = #tpu.core_type<tc>, window_params = [{transform_indices = @transform_0, window_bounds = array<i64: 1, 16, 16, 8>}, {pipeline_mode = #tpu.pipeline_mode<synchronous>, transform_indices = @transform_1, window_bounds = array<i64: 8, 64>}, {pipeline_mode = #tpu.pipeline_mode<synchronous>, transform_indices = @transform_2, window_bounds = array<i64: 1, 64>}, {pipeline_mode = #tpu.pipeline_mode<synchronous>, transform_indices = @transform_3, window_bounds = array<i64: 144, 32>}, {pipeline_mode = #tpu.pipeline_mode<synchronous>, transform_indices = @transform_4, window_bounds = array<i64: 1, 32>}, {pipeline_mode = #tpu.pipeline_mode<synchronous>, transform_indices = @transform_5, window_bounds = array<i64: 400, 32>}, {pipeline_mode = #tpu.pipeline_mode<synchronous>, transform_indices = @transform_6, window_bounds = array<i64: 1, 32>}, {pipeline_mode = #tpu.pipeline_mode<synchronous>, transform_indices = @transform_7, window_bounds = array<i64: 8, 32>}, {pipeline_mode = #tpu.pipeline_mode<synchronous>, transform_indices = @transform_8, window_bounds = array<i64: 1, 32>}, {pipeline_mode = #tpu.pipeline_mode<synchronous>, transform_indices = @transform_9, window_bounds = array<i64: 128, 16>}, {pipeline_mode = #tpu.pipeline_mode<synchronous>, transform_indices = @transform_10, window_bounds = array<i64: 1, 16>}, {pipeline_mode = #tpu.pipeline_mode<synchronous>, transform_indices = @transform_11, window_bounds = array<i64: 128, 32>}, {pipeline_mode = #tpu.pipeline_mode<synchronous>, transform_indices = @transform_12, window_bounds = array<i64: 1, 32>}, {pipeline_mode = #tpu.pipeline_mode<synchronous>, transform_indices = @transform_13, window_bounds = array<i64: 144, 24>}, {pipeline_mode = #tpu.pipeline_mode<synchronous>, transform_indices = @transform_14, window_bounds = array<i64: 1, 24>}, {pipeline_mode = #tpu.pipeline_mode<synchronous>, transform_indices = @transform_15, window_bounds = array<i64: 400, 24>}, {pipeline_mode = #tpu.pipeline_mode<synchronous>, transform_indices = @transform_16, window_bounds = array<i64: 1, 24>}, {pipeline_mode = #tpu.pipeline_mode<synchronous>, transform_indices = @transform_17, window_bounds = array<i64: 128, 24>}, {pipeline_mode = #tpu.pipeline_mode<synchronous>, transform_indices = @transform_18, window_bounds = array<i64: 1, 24>}, {pipeline_mode = #tpu.pipeline_mode<synchronous>, transform_indices = @transform_19, window_bounds = array<i64: 88, 8>}, {pipeline_mode = #tpu.pipeline_mode<synchronous>, transform_indices = @transform_20, window_bounds = array<i64: 1, 8>}, {transform_indices = @transform_21, window_bounds = array<i64: 1, 1, 8>}]} {
    %c0 = arith.constant 0 : index
    %c0_0 = arith.constant 0 : index
    %c0_1 = arith.constant 0 : index
    %c0_2 = arith.constant 0 : index
    %0 = vector.load %arg1[%c0, %c0_0, %c0_1, %c0_2] : memref<1x16x16x8xf32, #tpu.memory_space<vmem>>, vector<1x16x16x8xf32>
    %1 = vector.shape_cast %0 : vector<1x16x16x8xf32> to vector<16x16x8xf32>
    %2 = vector.shape_cast %1 : vector<16x16x8xf32> to vector<256x8xf32>
    %3 = arith.truncf %2 : vector<256x8xf32> to vector<256x8xbf16>
    %c0_3 = arith.constant 0 : index
    %c0_4 = arith.constant 0 : index
    %4 = vector.load %arg2[%c0_3, %c0_4] : memref<8x64xbf16, #tpu.memory_space<vmem>>, vector<8x64xbf16>
    %cst = arith.constant dense<0.000000e+00> : vector<256x64xf32>
    %5 = tpu.matmul %3, %4, %cst {dimension_numbers = #tpu.dot_dimension_numbers<[1], [0], [0], [1], [0, 0, 1, 1], [], []>} : vector<256x8xbf16>, vector<8x64xbf16>, vector<256x64xf32> -> vector<256x64xf32>
    %c0_5 = arith.constant 0 : index
    %c0_6 = arith.constant 0 : index
    %6 = vector.load %arg3[%c0_5, %c0_6] : memref<1x64xf32, #tpu.memory_space<vmem>>, vector<1x64xf32>
    %7 = vector.broadcast %6 : vector<1x64xf32> to vector<256x64xf32>
    %8 = arith.addf %5, %7 : vector<256x64xf32>
    %9 = vector.extract_strided_slice %8 {offsets = [0, 0], sizes = [256, 32], strides = [1, 1]} : vector<256x64xf32> to vector<256x32xf32>
    %10 = vector.extract_strided_slice %8 {offsets = [0, 32], sizes = [256, 16], strides = [1, 1]} : vector<256x64xf32> to vector<256x16xf32>
    %11 = vector.shape_cast %10 : vector<256x16xf32> to vector<16x16x16xf32>
    %12 = vector.extract_strided_slice %8 {offsets = [0, 48], sizes = [256, 16], strides = [1, 1]} : vector<256x64xf32> to vector<256x16xf32>
    %13 = vector.shape_cast %12 : vector<256x16xf32> to vector<16x16x16xf32>
    %c0_7 = arith.constant 0 : index
    %c0_8 = arith.constant 0 : index
    %14 = vector.load %arg4[%c0_7, %c0_8] : memref<144x32xbf16, #tpu.memory_space<vmem>>, vector<144x32xbf16>
    %c0_9 = arith.constant 0 : index
    %c0_10 = arith.constant 0 : index
    %15 = vector.load %arg5[%c0_9, %c0_10] : memref<1x32xf32, #tpu.memory_space<vmem>>, vector<1x32xf32>
    %cst_11 = arith.constant 0.000000e+00 : f32
    %16 = vector.broadcast %cst_11 : f32 to vector<16x1x16xf32>
    %17 = vector.extract_strided_slice %11 {offsets = [0, 0, 0], sizes = [16, 15, 16], strides = [1, 1, 1]} : vector<16x16x16xf32> to vector<16x15x16xf32>
    %18 = tpu.concatenate %16, %17 in 1 : vector<16x1x16xf32>, vector<16x15x16xf32> -> vector<16x16x16xf32>
    %cst_12 = arith.constant 0.000000e+00 : f32
    %19 = vector.broadcast %cst_12 : f32 to vector<16x1x16xf32>
    %20 = vector.extract_strided_slice %11 {offsets = [0, 1, 0], sizes = [16, 15, 16], strides = [1, 1, 1]} : vector<16x16x16xf32> to vector<16x15x16xf32>
    %21 = tpu.concatenate %20, %19 in 1 : vector<16x15x16xf32>, vector<16x1x16xf32> -> vector<16x16x16xf32>
    %cst_13 = arith.constant 0.000000e+00 : f32
    %22 = vector.broadcast %cst_13 : f32 to vector<1x16x16xf32>
    %23 = vector.extract_strided_slice %18 {offsets = [0, 0, 0], sizes = [15, 16, 16], strides = [1, 1, 1]} : vector<16x16x16xf32> to vector<15x16x16xf32>
    %24 = tpu.concatenate %22, %23 in 0 : vector<1x16x16xf32>, vector<15x16x16xf32> -> vector<16x16x16xf32>
    %25 = vector.shape_cast %24 : vector<16x16x16xf32> to vector<256x16xf32>
    %cst_14 = arith.constant 0.000000e+00 : f32
    %26 = vector.broadcast %cst_14 : f32 to vector<1x16x16xf32>
    %27 = vector.extract_strided_slice %11 {offsets = [0, 0, 0], sizes = [15, 16, 16], strides = [1, 1, 1]} : vector<16x16x16xf32> to vector<15x16x16xf32>
    %28 = tpu.concatenate %26, %27 in 0 : vector<1x16x16xf32>, vector<15x16x16xf32> -> vector<16x16x16xf32>
    %29 = vector.shape_cast %28 : vector<16x16x16xf32> to vector<256x16xf32>
    %cst_15 = arith.constant 0.000000e+00 : f32
    %30 = vector.broadcast %cst_15 : f32 to vector<1x16x16xf32>
    %31 = vector.extract_strided_slice %21 {offsets = [0, 0, 0], sizes = [15, 16, 16], strides = [1, 1, 1]} : vector<16x16x16xf32> to vector<15x16x16xf32>
    %32 = tpu.concatenate %30, %31 in 0 : vector<1x16x16xf32>, vector<15x16x16xf32> -> vector<16x16x16xf32>
    %33 = vector.shape_cast %32 : vector<16x16x16xf32> to vector<256x16xf32>
    %34 = vector.shape_cast %18 : vector<16x16x16xf32> to vector<256x16xf32>
    %35 = vector.shape_cast %11 : vector<16x16x16xf32> to vector<256x16xf32>
    %36 = vector.shape_cast %21 : vector<16x16x16xf32> to vector<256x16xf32>
    %cst_16 = arith.constant 0.000000e+00 : f32
    %37 = vector.broadcast %cst_16 : f32 to vector<1x16x16xf32>
    %38 = vector.extract_strided_slice %18 {offsets = [1, 0, 0], sizes = [15, 16, 16], strides = [1, 1, 1]} : vector<16x16x16xf32> to vector<15x16x16xf32>
    %39 = tpu.concatenate %38, %37 in 0 : vector<15x16x16xf32>, vector<1x16x16xf32> -> vector<16x16x16xf32>
    %40 = vector.shape_cast %39 : vector<16x16x16xf32> to vector<256x16xf32>
    %cst_17 = arith.constant 0.000000e+00 : f32
    %41 = vector.broadcast %cst_17 : f32 to vector<1x16x16xf32>
    %42 = vector.extract_strided_slice %11 {offsets = [1, 0, 0], sizes = [15, 16, 16], strides = [1, 1, 1]} : vector<16x16x16xf32> to vector<15x16x16xf32>
    %43 = tpu.concatenate %42, %41 in 0 : vector<15x16x16xf32>, vector<1x16x16xf32> -> vector<16x16x16xf32>
    %44 = vector.shape_cast %43 : vector<16x16x16xf32> to vector<256x16xf32>
    %cst_18 = arith.constant 0.000000e+00 : f32
    %45 = vector.broadcast %cst_18 : f32 to vector<1x16x16xf32>
    %46 = vector.extract_strided_slice %21 {offsets = [1, 0, 0], sizes = [15, 16, 16], strides = [1, 1, 1]} : vector<16x16x16xf32> to vector<15x16x16xf32>
    %47 = tpu.concatenate %46, %45 in 0 : vector<15x16x16xf32>, vector<1x16x16xf32> -> vector<16x16x16xf32>
    %48 = vector.shape_cast %47 : vector<16x16x16xf32> to vector<256x16xf32>
    %49 = tpu.concatenate %25, %29, %33, %34, %35, %36, %40, %44 in 1 : vector<256x16xf32>, vector<256x16xf32>, vector<256x16xf32>, vector<256x16xf32>, vector<256x16xf32>, vector<256x16xf32>, vector<256x16xf32>, vector<256x16xf32> -> vector<256x128xf32>
    %50 = arith.truncf %49 : vector<256x128xf32> to vector<256x128xbf16>
    %51 = vector.extract_strided_slice %14 {offsets = [0, 0], sizes = [128, 32], strides = [1, 1]} : vector<144x32xbf16> to vector<128x32xbf16>
    %cst_19 = arith.constant dense<0.000000e+00> : vector<256x32xf32>
    %52 = tpu.matmul %50, %51, %cst_19 {dimension_numbers = #tpu.dot_dimension_numbers<[1], [0], [0], [1], [0, 0, 1, 1], [], []>} : vector<256x128xbf16>, vector<128x32xbf16>, vector<256x32xf32> -> vector<256x32xf32>
    %53 = arith.truncf %48 : vector<256x16xf32> to vector<256x16xbf16>
    %54 = vector.extract_strided_slice %14 {offsets = [128, 0], sizes = [16, 32], strides = [1, 1]} : vector<144x32xbf16> to vector<16x32xbf16>
    %cst_20 = arith.constant dense<0.000000e+00> : vector<256x32xf32>
    %55 = tpu.matmul %53, %54, %cst_20 {dimension_numbers = #tpu.dot_dimension_numbers<[1], [0], [0], [1], [0, 0, 1, 1], [], []>} : vector<256x16xbf16>, vector<16x32xbf16>, vector<256x32xf32> -> vector<256x32xf32>
    %56 = arith.addf %52, %55 : vector<256x32xf32>
    %57 = vector.broadcast %15 : vector<1x32xf32> to vector<256x32xf32>
    %58 = arith.addf %56, %57 : vector<256x32xf32>
    %c0_21 = arith.constant 0 : index
    %c0_22 = arith.constant 0 : index
    %59 = vector.load %arg6[%c0_21, %c0_22] : memref<400x32xbf16, #tpu.memory_space<vmem>>, vector<400x32xbf16>
    %c0_23 = arith.constant 0 : index
    %c0_24 = arith.constant 0 : index
    %60 = vector.load %arg7[%c0_23, %c0_24] : memref<1x32xf32, #tpu.memory_space<vmem>>, vector<1x32xf32>
    %cst_25 = arith.constant 0.000000e+00 : f32
    %61 = vector.broadcast %cst_25 : f32 to vector<16x2x16xf32>
    %62 = vector.extract_strided_slice %13 {offsets = [0, 0, 0], sizes = [16, 14, 16], strides = [1, 1, 1]} : vector<16x16x16xf32> to vector<16x14x16xf32>
    %63 = tpu.concatenate %61, %62 in 1 : vector<16x2x16xf32>, vector<16x14x16xf32> -> vector<16x16x16xf32>
    %cst_26 = arith.constant 0.000000e+00 : f32
    %64 = vector.broadcast %cst_26 : f32 to vector<16x1x16xf32>
    %65 = vector.extract_strided_slice %13 {offsets = [0, 0, 0], sizes = [16, 15, 16], strides = [1, 1, 1]} : vector<16x16x16xf32> to vector<16x15x16xf32>
    %66 = tpu.concatenate %64, %65 in 1 : vector<16x1x16xf32>, vector<16x15x16xf32> -> vector<16x16x16xf32>
    %cst_27 = arith.constant 0.000000e+00 : f32
    %67 = vector.broadcast %cst_27 : f32 to vector<16x1x16xf32>
    %68 = vector.extract_strided_slice %13 {offsets = [0, 1, 0], sizes = [16, 15, 16], strides = [1, 1, 1]} : vector<16x16x16xf32> to vector<16x15x16xf32>
    %69 = tpu.concatenate %68, %67 in 1 : vector<16x15x16xf32>, vector<16x1x16xf32> -> vector<16x16x16xf32>
    %cst_28 = arith.constant 0.000000e+00 : f32
    %70 = vector.broadcast %cst_28 : f32 to vector<16x2x16xf32>
    %71 = vector.extract_strided_slice %13 {offsets = [0, 2, 0], sizes = [16, 14, 16], strides = [1, 1, 1]} : vector<16x16x16xf32> to vector<16x14x16xf32>
    %72 = tpu.concatenate %71, %70 in 1 : vector<16x14x16xf32>, vector<16x2x16xf32> -> vector<16x16x16xf32>
    %cst_29 = arith.constant 0.000000e+00 : f32
    %73 = vector.broadcast %cst_29 : f32 to vector<2x16x16xf32>
    %74 = vector.extract_strided_slice %63 {offsets = [0, 0, 0], sizes = [14, 16, 16], strides = [1, 1, 1]} : vector<16x16x16xf32> to vector<14x16x16xf32>
    %75 = tpu.concatenate %73, %74 in 0 : vector<2x16x16xf32>, vector<14x16x16xf32> -> vector<16x16x16xf32>
    %76 = vector.shape_cast %75 : vector<16x16x16xf32> to vector<256x16xf32>
    %cst_30 = arith.constant 0.000000e+00 : f32
    %77 = vector.broadcast %cst_30 : f32 to vector<2x16x16xf32>
    %78 = vector.extract_strided_slice %66 {offsets = [0, 0, 0], sizes = [14, 16, 16], strides = [1, 1, 1]} : vector<16x16x16xf32> to vector<14x16x16xf32>
    %79 = tpu.concatenate %77, %78 in 0 : vector<2x16x16xf32>, vector<14x16x16xf32> -> vector<16x16x16xf32>
    %80 = vector.shape_cast %79 : vector<16x16x16xf32> to vector<256x16xf32>
    %cst_31 = arith.constant 0.000000e+00 : f32
    %81 = vector.broadcast %cst_31 : f32 to vector<2x16x16xf32>
    %82 = vector.extract_strided_slice %13 {offsets = [0, 0, 0], sizes = [14, 16, 16], strides = [1, 1, 1]} : vector<16x16x16xf32> to vector<14x16x16xf32>
    %83 = tpu.concatenate %81, %82 in 0 : vector<2x16x16xf32>, vector<14x16x16xf32> -> vector<16x16x16xf32>
    %84 = vector.shape_cast %83 : vector<16x16x16xf32> to vector<256x16xf32>
    %cst_32 = arith.constant 0.000000e+00 : f32
    %85 = vector.broadcast %cst_32 : f32 to vector<2x16x16xf32>
    %86 = vector.extract_strided_slice %69 {offsets = [0, 0, 0], sizes = [14, 16, 16], strides = [1, 1, 1]} : vector<16x16x16xf32> to vector<14x16x16xf32>
    %87 = tpu.concatenate %85, %86 in 0 : vector<2x16x16xf32>, vector<14x16x16xf32> -> vector<16x16x16xf32>
    %88 = vector.shape_cast %87 : vector<16x16x16xf32> to vector<256x16xf32>
    %cst_33 = arith.constant 0.000000e+00 : f32
    %89 = vector.broadcast %cst_33 : f32 to vector<2x16x16xf32>
    %90 = vector.extract_strided_slice %72 {offsets = [0, 0, 0], sizes = [14, 16, 16], strides = [1, 1, 1]} : vector<16x16x16xf32> to vector<14x16x16xf32>
    %91 = tpu.concatenate %89, %90 in 0 : vector<2x16x16xf32>, vector<14x16x16xf32> -> vector<16x16x16xf32>
    %92 = vector.shape_cast %91 : vector<16x16x16xf32> to vector<256x16xf32>
    %cst_34 = arith.constant 0.000000e+00 : f32
    %93 = vector.broadcast %cst_34 : f32 to vector<1x16x16xf32>
    %94 = vector.extract_strided_slice %63 {offsets = [0, 0, 0], sizes = [15, 16, 16], strides = [1, 1, 1]} : vector<16x16x16xf32> to vector<15x16x16xf32>
    %95 = tpu.concatenate %93, %94 in 0 : vector<1x16x16xf32>, vector<15x16x16xf32> -> vector<16x16x16xf32>
    %96 = vector.shape_cast %95 : vector<16x16x16xf32> to vector<256x16xf32>
    %cst_35 = arith.constant 0.000000e+00 : f32
    %97 = vector.broadcast %cst_35 : f32 to vector<1x16x16xf32>
    %98 = vector.extract_strided_slice %66 {offsets = [0, 0, 0], sizes = [15, 16, 16], strides = [1, 1, 1]} : vector<16x16x16xf32> to vector<15x16x16xf32>
    %99 = tpu.concatenate %97, %98 in 0 : vector<1x16x16xf32>, vector<15x16x16xf32> -> vector<16x16x16xf32>
    %100 = vector.shape_cast %99 : vector<16x16x16xf32> to vector<256x16xf32>
    %cst_36 = arith.constant 0.000000e+00 : f32
    %101 = vector.broadcast %cst_36 : f32 to vector<1x16x16xf32>
    %102 = vector.extract_strided_slice %13 {offsets = [0, 0, 0], sizes = [15, 16, 16], strides = [1, 1, 1]} : vector<16x16x16xf32> to vector<15x16x16xf32>
    %103 = tpu.concatenate %101, %102 in 0 : vector<1x16x16xf32>, vector<15x16x16xf32> -> vector<16x16x16xf32>
    %104 = vector.shape_cast %103 : vector<16x16x16xf32> to vector<256x16xf32>
    %cst_37 = arith.constant 0.000000e+00 : f32
    %105 = vector.broadcast %cst_37 : f32 to vector<1x16x16xf32>
    %106 = vector.extract_strided_slice %69 {offsets = [0, 0, 0], sizes = [15, 16, 16], strides = [1, 1, 1]} : vector<16x16x16xf32> to vector<15x16x16xf32>
    %107 = tpu.concatenate %105, %106 in 0 : vector<1x16x16xf32>, vector<15x16x16xf32> -> vector<16x16x16xf32>
    %108 = vector.shape_cast %107 : vector<16x16x16xf32> to vector<256x16xf32>
    %cst_38 = arith.constant 0.000000e+00 : f32
    %109 = vector.broadcast %cst_38 : f32 to vector<1x16x16xf32>
    %110 = vector.extract_strided_slice %72 {offsets = [0, 0, 0], sizes = [15, 16, 16], strides = [1, 1, 1]} : vector<16x16x16xf32> to vector<15x16x16xf32>
    %111 = tpu.concatenate %109, %110 in 0 : vector<1x16x16xf32>, vector<15x16x16xf32> -> vector<16x16x16xf32>
    %112 = vector.shape_cast %111 : vector<16x16x16xf32> to vector<256x16xf32>
    %113 = vector.shape_cast %63 : vector<16x16x16xf32> to vector<256x16xf32>
    %114 = vector.shape_cast %66 : vector<16x16x16xf32> to vector<256x16xf32>
    %115 = vector.shape_cast %13 : vector<16x16x16xf32> to vector<256x16xf32>
    %116 = vector.shape_cast %69 : vector<16x16x16xf32> to vector<256x16xf32>
    %117 = vector.shape_cast %72 : vector<16x16x16xf32> to vector<256x16xf32>
    %cst_39 = arith.constant 0.000000e+00 : f32
    %118 = vector.broadcast %cst_39 : f32 to vector<1x16x16xf32>
    %119 = vector.extract_strided_slice %63 {offsets = [1, 0, 0], sizes = [15, 16, 16], strides = [1, 1, 1]} : vector<16x16x16xf32> to vector<15x16x16xf32>
    %120 = tpu.concatenate %119, %118 in 0 : vector<15x16x16xf32>, vector<1x16x16xf32> -> vector<16x16x16xf32>
    %121 = vector.shape_cast %120 : vector<16x16x16xf32> to vector<256x16xf32>
    %cst_40 = arith.constant 0.000000e+00 : f32
    %122 = vector.broadcast %cst_40 : f32 to vector<1x16x16xf32>
    %123 = vector.extract_strided_slice %66 {offsets = [1, 0, 0], sizes = [15, 16, 16], strides = [1, 1, 1]} : vector<16x16x16xf32> to vector<15x16x16xf32>
    %124 = tpu.concatenate %123, %122 in 0 : vector<15x16x16xf32>, vector<1x16x16xf32> -> vector<16x16x16xf32>
    %125 = vector.shape_cast %124 : vector<16x16x16xf32> to vector<256x16xf32>
    %cst_41 = arith.constant 0.000000e+00 : f32
    %126 = vector.broadcast %cst_41 : f32 to vector<1x16x16xf32>
    %127 = vector.extract_strided_slice %13 {offsets = [1, 0, 0], sizes = [15, 16, 16], strides = [1, 1, 1]} : vector<16x16x16xf32> to vector<15x16x16xf32>
    %128 = tpu.concatenate %127, %126 in 0 : vector<15x16x16xf32>, vector<1x16x16xf32> -> vector<16x16x16xf32>
    %129 = vector.shape_cast %128 : vector<16x16x16xf32> to vector<256x16xf32>
    %cst_42 = arith.constant 0.000000e+00 : f32
    %130 = vector.broadcast %cst_42 : f32 to vector<1x16x16xf32>
    %131 = vector.extract_strided_slice %69 {offsets = [1, 0, 0], sizes = [15, 16, 16], strides = [1, 1, 1]} : vector<16x16x16xf32> to vector<15x16x16xf32>
    %132 = tpu.concatenate %131, %130 in 0 : vector<15x16x16xf32>, vector<1x16x16xf32> -> vector<16x16x16xf32>
    %133 = vector.shape_cast %132 : vector<16x16x16xf32> to vector<256x16xf32>
    %cst_43 = arith.constant 0.000000e+00 : f32
    %134 = vector.broadcast %cst_43 : f32 to vector<1x16x16xf32>
    %135 = vector.extract_strided_slice %72 {offsets = [1, 0, 0], sizes = [15, 16, 16], strides = [1, 1, 1]} : vector<16x16x16xf32> to vector<15x16x16xf32>
    %136 = tpu.concatenate %135, %134 in 0 : vector<15x16x16xf32>, vector<1x16x16xf32> -> vector<16x16x16xf32>
    %137 = vector.shape_cast %136 : vector<16x16x16xf32> to vector<256x16xf32>
    %cst_44 = arith.constant 0.000000e+00 : f32
    %138 = vector.broadcast %cst_44 : f32 to vector<2x16x16xf32>
    %139 = vector.extract_strided_slice %63 {offsets = [2, 0, 0], sizes = [14, 16, 16], strides = [1, 1, 1]} : vector<16x16x16xf32> to vector<14x16x16xf32>
    %140 = tpu.concatenate %139, %138 in 0 : vector<14x16x16xf32>, vector<2x16x16xf32> -> vector<16x16x16xf32>
    %141 = vector.shape_cast %140 : vector<16x16x16xf32> to vector<256x16xf32>
    %cst_45 = arith.constant 0.000000e+00 : f32
    %142 = vector.broadcast %cst_45 : f32 to vector<2x16x16xf32>
    %143 = vector.extract_strided_slice %66 {offsets = [2, 0, 0], sizes = [14, 16, 16], strides = [1, 1, 1]} : vector<16x16x16xf32> to vector<14x16x16xf32>
    %144 = tpu.concatenate %143, %142 in 0 : vector<14x16x16xf32>, vector<2x16x16xf32> -> vector<16x16x16xf32>
    %145 = vector.shape_cast %144 : vector<16x16x16xf32> to vector<256x16xf32>
    %cst_46 = arith.constant 0.000000e+00 : f32
    %146 = vector.broadcast %cst_46 : f32 to vector<2x16x16xf32>
    %147 = vector.extract_strided_slice %13 {offsets = [2, 0, 0], sizes = [14, 16, 16], strides = [1, 1, 1]} : vector<16x16x16xf32> to vector<14x16x16xf32>
    %148 = tpu.concatenate %147, %146 in 0 : vector<14x16x16xf32>, vector<2x16x16xf32> -> vector<16x16x16xf32>
    %149 = vector.shape_cast %148 : vector<16x16x16xf32> to vector<256x16xf32>
    %cst_47 = arith.constant 0.000000e+00 : f32
    %150 = vector.broadcast %cst_47 : f32 to vector<2x16x16xf32>
    %151 = vector.extract_strided_slice %69 {offsets = [2, 0, 0], sizes = [14, 16, 16], strides = [1, 1, 1]} : vector<16x16x16xf32> to vector<14x16x16xf32>
    %152 = tpu.concatenate %151, %150 in 0 : vector<14x16x16xf32>, vector<2x16x16xf32> -> vector<16x16x16xf32>
    %153 = vector.shape_cast %152 : vector<16x16x16xf32> to vector<256x16xf32>
    %cst_48 = arith.constant 0.000000e+00 : f32
    %154 = vector.broadcast %cst_48 : f32 to vector<2x16x16xf32>
    %155 = vector.extract_strided_slice %72 {offsets = [2, 0, 0], sizes = [14, 16, 16], strides = [1, 1, 1]} : vector<16x16x16xf32> to vector<14x16x16xf32>
    %156 = tpu.concatenate %155, %154 in 0 : vector<14x16x16xf32>, vector<2x16x16xf32> -> vector<16x16x16xf32>
    %157 = vector.shape_cast %156 : vector<16x16x16xf32> to vector<256x16xf32>
    %158 = tpu.concatenate %76, %80, %84, %88, %92, %96, %100, %104 in 1 : vector<256x16xf32>, vector<256x16xf32>, vector<256x16xf32>, vector<256x16xf32>, vector<256x16xf32>, vector<256x16xf32>, vector<256x16xf32>, vector<256x16xf32> -> vector<256x128xf32>
    %159 = arith.truncf %158 : vector<256x128xf32> to vector<256x128xbf16>
    %160 = vector.extract_strided_slice %59 {offsets = [0, 0], sizes = [128, 32], strides = [1, 1]} : vector<400x32xbf16> to vector<128x32xbf16>
    %cst_49 = arith.constant dense<0.000000e+00> : vector<256x32xf32>
    %161 = tpu.matmul %159, %160, %cst_49 {dimension_numbers = #tpu.dot_dimension_numbers<[1], [0], [0], [1], [0, 0, 1, 1], [], []>} : vector<256x128xbf16>, vector<128x32xbf16>, vector<256x32xf32> -> vector<256x32xf32>
    %162 = tpu.concatenate %108, %112, %113, %114, %115, %116, %117, %121 in 1 : vector<256x16xf32>, vector<256x16xf32>, vector<256x16xf32>, vector<256x16xf32>, vector<256x16xf32>, vector<256x16xf32>, vector<256x16xf32>, vector<256x16xf32> -> vector<256x128xf32>
    %163 = arith.truncf %162 : vector<256x128xf32> to vector<256x128xbf16>
    %164 = vector.extract_strided_slice %59 {offsets = [128, 0], sizes = [128, 32], strides = [1, 1]} : vector<400x32xbf16> to vector<128x32xbf16>
    %cst_50 = arith.constant dense<0.000000e+00> : vector<256x32xf32>
    %165 = tpu.matmul %163, %164, %cst_50 {dimension_numbers = #tpu.dot_dimension_numbers<[1], [0], [0], [1], [0, 0, 1, 1], [], []>} : vector<256x128xbf16>, vector<128x32xbf16>, vector<256x32xf32> -> vector<256x32xf32>
    %166 = arith.addf %161, %165 : vector<256x32xf32>
    %167 = tpu.concatenate %125, %129, %133, %137, %141, %145, %149, %153 in 1 : vector<256x16xf32>, vector<256x16xf32>, vector<256x16xf32>, vector<256x16xf32>, vector<256x16xf32>, vector<256x16xf32>, vector<256x16xf32>, vector<256x16xf32> -> vector<256x128xf32>
    %168 = arith.truncf %167 : vector<256x128xf32> to vector<256x128xbf16>
    %169 = vector.extract_strided_slice %59 {offsets = [256, 0], sizes = [128, 32], strides = [1, 1]} : vector<400x32xbf16> to vector<128x32xbf16>
    %cst_51 = arith.constant dense<0.000000e+00> : vector<256x32xf32>
    %170 = tpu.matmul %168, %169, %cst_51 {dimension_numbers = #tpu.dot_dimension_numbers<[1], [0], [0], [1], [0, 0, 1, 1], [], []>} : vector<256x128xbf16>, vector<128x32xbf16>, vector<256x32xf32> -> vector<256x32xf32>
    %171 = arith.addf %166, %170 : vector<256x32xf32>
    %172 = arith.truncf %157 : vector<256x16xf32> to vector<256x16xbf16>
    %173 = vector.extract_strided_slice %59 {offsets = [384, 0], sizes = [16, 32], strides = [1, 1]} : vector<400x32xbf16> to vector<16x32xbf16>
    %cst_52 = arith.constant dense<0.000000e+00> : vector<256x32xf32>
    %174 = tpu.matmul %172, %173, %cst_52 {dimension_numbers = #tpu.dot_dimension_numbers<[1], [0], [0], [1], [0, 0, 1, 1], [], []>} : vector<256x16xbf16>, vector<16x32xbf16>, vector<256x32xf32> -> vector<256x32xf32>
    %175 = arith.addf %171, %174 : vector<256x32xf32>
    %176 = vector.broadcast %60 : vector<1x32xf32> to vector<256x32xf32>
    %177 = arith.addf %175, %176 : vector<256x32xf32>
    %178 = vector.extract_strided_slice %1 {offsets = [1, 0, 0], sizes = [15, 16, 8], strides = [1, 1, 1]} : vector<16x16x8xf32> to vector<15x16x8xf32>
    %179 = vector.extract_strided_slice %1 {offsets = [15, 0, 0], sizes = [1, 16, 8], strides = [1, 1, 1]} : vector<16x16x8xf32> to vector<1x16x8xf32>
    %180 = tpu.concatenate %178, %179 in 0 : vector<15x16x8xf32>, vector<1x16x8xf32> -> vector<16x16x8xf32>
    %181 = vector.extract_strided_slice %1 {offsets = [0, 0, 0], sizes = [1, 16, 8], strides = [1, 1, 1]} : vector<16x16x8xf32> to vector<1x16x8xf32>
    %182 = vector.extract_strided_slice %1 {offsets = [0, 0, 0], sizes = [15, 16, 8], strides = [1, 1, 1]} : vector<16x16x8xf32> to vector<15x16x8xf32>
    %183 = tpu.concatenate %181, %182 in 0 : vector<1x16x8xf32>, vector<15x16x8xf32> -> vector<16x16x8xf32>
    %184 = arith.maximumf %180, %1 : vector<16x16x8xf32>
    %185 = arith.maximumf %184, %183 : vector<16x16x8xf32>
    %186 = vector.extract_strided_slice %185 {offsets = [0, 1, 0], sizes = [16, 15, 8], strides = [1, 1, 1]} : vector<16x16x8xf32> to vector<16x15x8xf32>
    %187 = vector.extract_strided_slice %185 {offsets = [0, 15, 0], sizes = [16, 1, 8], strides = [1, 1, 1]} : vector<16x16x8xf32> to vector<16x1x8xf32>
    %188 = tpu.concatenate %186, %187 in 1 : vector<16x15x8xf32>, vector<16x1x8xf32> -> vector<16x16x8xf32>
    %189 = vector.extract_strided_slice %185 {offsets = [0, 0, 0], sizes = [16, 1, 8], strides = [1, 1, 1]} : vector<16x16x8xf32> to vector<16x1x8xf32>
    %190 = vector.extract_strided_slice %185 {offsets = [0, 0, 0], sizes = [16, 15, 8], strides = [1, 1, 1]} : vector<16x16x8xf32> to vector<16x15x8xf32>
    %191 = tpu.concatenate %189, %190 in 1 : vector<16x1x8xf32>, vector<16x15x8xf32> -> vector<16x16x8xf32>
    %192 = arith.maximumf %188, %185 : vector<16x16x8xf32>
    %193 = arith.maximumf %192, %191 : vector<16x16x8xf32>
    %194 = vector.shape_cast %193 : vector<16x16x8xf32> to vector<256x8xf32>
    %195 = arith.truncf %194 : vector<256x8xf32> to vector<256x8xbf16>
    %c0_53 = arith.constant 0 : index
    %c0_54 = arith.constant 0 : index
    %196 = vector.load %arg8[%c0_53, %c0_54] : memref<8x32xbf16, #tpu.memory_space<vmem>>, vector<8x32xbf16>
    %cst_55 = arith.constant dense<0.000000e+00> : vector<256x32xf32>
    %197 = tpu.matmul %195, %196, %cst_55 {dimension_numbers = #tpu.dot_dimension_numbers<[1], [0], [0], [1], [0, 0, 1, 1], [], []>} : vector<256x8xbf16>, vector<8x32xbf16>, vector<256x32xf32> -> vector<256x32xf32>
    %c0_56 = arith.constant 0 : index
    %c0_57 = arith.constant 0 : index
    %198 = vector.load %arg9[%c0_56, %c0_57] : memref<1x32xf32, #tpu.memory_space<vmem>>, vector<1x32xf32>
    %199 = vector.broadcast %198 : vector<1x32xf32> to vector<256x32xf32>
    %200 = arith.addf %197, %199 : vector<256x32xf32>
    %201 = tpu.concatenate %9, %58, %177, %200 in 1 : vector<256x32xf32>, vector<256x32xf32>, vector<256x32xf32>, vector<256x32xf32> -> vector<256x128xf32>
    %cst_58 = arith.constant dense<0.000000e+00> : vector<128xf32>
    %202 = vector.multi_reduction <add>, %201, %cst_58 [0] : vector<256x128xf32> to vector<128xf32>
    %203 = vector.shape_cast %202 : vector<128xf32> to vector<1x128xf32>
    %cst_59 = arith.constant 3.906250e-03 : f32
    %204 = vector.broadcast %cst_59 : f32 to vector<1x128xf32>
    %205 = arith.mulf %203, %204 : vector<1x128xf32>
    %c0_60 = arith.constant 0 : index
    %c0_61 = arith.constant 0 : index
    %206 = vector.load %arg10[%c0_60, %c0_61] : memref<128x16xf32, #tpu.memory_space<vmem>>, vector<128x16xf32>
    %cst_62 = arith.constant dense<0.000000e+00> : vector<1x16xf32>
    %207 = tpu.matmul %205, %206, %cst_62 {dimension_numbers = #tpu.dot_dimension_numbers<[1], [0], [0], [1], [0, 0, 1, 1], [], []>} : vector<1x128xf32>, vector<128x16xf32>, vector<1x16xf32> -> vector<1x16xf32>
    %c0_63 = arith.constant 0 : index
    %c0_64 = arith.constant 0 : index
    %208 = vector.load %arg11[%c0_63, %c0_64] : memref<1x16xf32, #tpu.memory_space<vmem>>, vector<1x16xf32>
    %209 = arith.addf %207, %208 : vector<1x16xf32>
    %210 = vector.shape_cast %201 : vector<256x128xf32> to vector<16x16x128xf32>
    %211 = vector.extract_strided_slice %210 {offsets = [1, 0, 0], sizes = [15, 16, 128], strides = [1, 1, 1]} : vector<16x16x128xf32> to vector<15x16x128xf32>
    %212 = vector.extract_strided_slice %210 {offsets = [15, 0, 0], sizes = [1, 16, 128], strides = [1, 1, 1]} : vector<16x16x128xf32> to vector<1x16x128xf32>
    %213 = tpu.concatenate %211, %212 in 0 : vector<15x16x128xf32>, vector<1x16x128xf32> -> vector<16x16x128xf32>
    %214 = vector.extract_strided_slice %210 {offsets = [0, 0, 0], sizes = [1, 16, 128], strides = [1, 1, 1]} : vector<16x16x128xf32> to vector<1x16x128xf32>
    %215 = vector.extract_strided_slice %210 {offsets = [0, 0, 0], sizes = [15, 16, 128], strides = [1, 1, 1]} : vector<16x16x128xf32> to vector<15x16x128xf32>
    %216 = tpu.concatenate %214, %215 in 0 : vector<1x16x128xf32>, vector<15x16x128xf32> -> vector<16x16x128xf32>
    %217 = arith.maximumf %213, %210 : vector<16x16x128xf32>
    %218 = arith.maximumf %217, %216 : vector<16x16x128xf32>
    %219 = vector.extract_strided_slice %218 {offsets = [0, 1, 0], sizes = [16, 15, 128], strides = [1, 1, 1]} : vector<16x16x128xf32> to vector<16x15x128xf32>
    %220 = vector.extract_strided_slice %218 {offsets = [0, 15, 0], sizes = [16, 1, 128], strides = [1, 1, 1]} : vector<16x16x128xf32> to vector<16x1x128xf32>
    %221 = tpu.concatenate %219, %220 in 1 : vector<16x15x128xf32>, vector<16x1x128xf32> -> vector<16x16x128xf32>
    %222 = vector.extract_strided_slice %218 {offsets = [0, 0, 0], sizes = [16, 1, 128], strides = [1, 1, 1]} : vector<16x16x128xf32> to vector<16x1x128xf32>
    %223 = vector.extract_strided_slice %218 {offsets = [0, 0, 0], sizes = [16, 15, 128], strides = [1, 1, 1]} : vector<16x16x128xf32> to vector<16x15x128xf32>
    %224 = tpu.concatenate %222, %223 in 1 : vector<16x1x128xf32>, vector<16x15x128xf32> -> vector<16x16x128xf32>
    %225 = arith.maximumf %221, %218 : vector<16x16x128xf32>
    %226 = arith.maximumf %225, %224 : vector<16x16x128xf32>
    %227 = vector.shape_cast %226 : vector<16x16x128xf32> to vector<256x128xf32>
    %cst_65 = arith.constant dense<0.000000e+00> : vector<128xf32>
    %228 = vector.multi_reduction <add>, %227, %cst_65 [0] : vector<256x128xf32> to vector<128xf32>
    %229 = vector.shape_cast %228 : vector<128xf32> to vector<1x128xf32>
    %cst_66 = arith.constant 3.906250e-03 : f32
    %230 = vector.broadcast %cst_66 : f32 to vector<1x128xf32>
    %231 = arith.mulf %229, %230 : vector<1x128xf32>
    %c0_67 = arith.constant 0 : index
    %c0_68 = arith.constant 0 : index
    %232 = vector.load %arg18[%c0_67, %c0_68] : memref<128x24xf32, #tpu.memory_space<vmem>>, vector<128x24xf32>
    %cst_69 = arith.constant dense<0.000000e+00> : vector<1x24xf32>
    %233 = tpu.matmul %231, %232, %cst_69 {dimension_numbers = #tpu.dot_dimension_numbers<[1], [0], [0], [1], [0, 0, 1, 1], [], []>} : vector<1x128xf32>, vector<128x24xf32>, vector<1x24xf32> -> vector<1x24xf32>
    %c0_70 = arith.constant 0 : index
    %c0_71 = arith.constant 0 : index
    %234 = vector.load %arg19[%c0_70, %c0_71] : memref<1x24xf32, #tpu.memory_space<vmem>>, vector<1x24xf32>
    %235 = arith.addf %233, %234 : vector<1x24xf32>
    %236 = arith.truncf %201 : vector<256x128xf32> to vector<256x128xbf16>
    %c0_72 = arith.constant 0 : index
    %c0_73 = arith.constant 0 : index
    %237 = vector.load %arg12[%c0_72, %c0_73] : memref<128x32xbf16, #tpu.memory_space<vmem>>, vector<128x32xbf16>
    %cst_74 = arith.constant dense<0.000000e+00> : vector<256x32xf32>
    %238 = tpu.matmul %236, %237, %cst_74 {dimension_numbers = #tpu.dot_dimension_numbers<[1], [0], [0], [1], [0, 0, 1, 1], [], []>} : vector<256x128xbf16>, vector<128x32xbf16>, vector<256x32xf32> -> vector<256x32xf32>
    %c0_75 = arith.constant 0 : index
    %c0_76 = arith.constant 0 : index
    %239 = vector.load %arg13[%c0_75, %c0_76] : memref<1x32xf32, #tpu.memory_space<vmem>>, vector<1x32xf32>
    %240 = vector.broadcast %239 : vector<1x32xf32> to vector<256x32xf32>
    %241 = arith.addf %238, %240 : vector<256x32xf32>
    %242 = vector.extract_strided_slice %241 {offsets = [0, 0], sizes = [256, 16], strides = [1, 1]} : vector<256x32xf32> to vector<256x16xf32>
    %243 = vector.shape_cast %242 : vector<256x16xf32> to vector<16x16x16xf32>
    %244 = vector.extract_strided_slice %241 {offsets = [0, 16], sizes = [256, 16], strides = [1, 1]} : vector<256x32xf32> to vector<256x16xf32>
    %245 = vector.shape_cast %244 : vector<256x16xf32> to vector<16x16x16xf32>
    %c0_77 = arith.constant 0 : index
    %c0_78 = arith.constant 0 : index
    %246 = vector.load %arg14[%c0_77, %c0_78] : memref<144x24xf32, #tpu.memory_space<vmem>>, vector<144x24xf32>
    %c0_79 = arith.constant 0 : index
    %c0_80 = arith.constant 0 : index
    %247 = vector.load %arg15[%c0_79, %c0_80] : memref<1x24xf32, #tpu.memory_space<vmem>>, vector<1x24xf32>
    %248 = vector.extract_strided_slice %243 {offsets = [0, 0, 0], sizes = [15, 15, 16], strides = [1, 1, 1]} : vector<16x16x16xf32> to vector<15x15x16xf32>
    %cst_81 = arith.constant dense<0.000000e+00> : vector<15x16xf32>
    %249 = vector.multi_reduction <add>, %248, %cst_81 [0] : vector<15x15x16xf32> to vector<15x16xf32>
    %cst_82 = arith.constant dense<0.000000e+00> : vector<16xf32>
    %250 = vector.multi_reduction <add>, %249, %cst_82 [0] : vector<15x16xf32> to vector<16xf32>
    %251 = vector.shape_cast %250 : vector<16xf32> to vector<1x16xf32>
    %252 = vector.extract_strided_slice %243 {offsets = [0, 0, 0], sizes = [15, 16, 16], strides = [1, 1, 1]} : vector<16x16x16xf32> to vector<15x16x16xf32>
    %cst_83 = arith.constant dense<0.000000e+00> : vector<16x16xf32>
    %253 = vector.multi_reduction <add>, %252, %cst_83 [0] : vector<15x16x16xf32> to vector<16x16xf32>
    %cst_84 = arith.constant dense<0.000000e+00> : vector<16xf32>
    %254 = vector.multi_reduction <add>, %253, %cst_84 [0] : vector<16x16xf32> to vector<16xf32>
    %255 = vector.shape_cast %254 : vector<16xf32> to vector<1x16xf32>
    %256 = vector.extract_strided_slice %243 {offsets = [0, 1, 0], sizes = [15, 15, 16], strides = [1, 1, 1]} : vector<16x16x16xf32> to vector<15x15x16xf32>
    %cst_85 = arith.constant dense<0.000000e+00> : vector<15x16xf32>
    %257 = vector.multi_reduction <add>, %256, %cst_85 [0] : vector<15x15x16xf32> to vector<15x16xf32>
    %cst_86 = arith.constant dense<0.000000e+00> : vector<16xf32>
    %258 = vector.multi_reduction <add>, %257, %cst_86 [0] : vector<15x16xf32> to vector<16xf32>
    %259 = vector.shape_cast %258 : vector<16xf32> to vector<1x16xf32>
    %260 = vector.extract_strided_slice %243 {offsets = [0, 0, 0], sizes = [16, 15, 16], strides = [1, 1, 1]} : vector<16x16x16xf32> to vector<16x15x16xf32>
    %cst_87 = arith.constant dense<0.000000e+00> : vector<15x16xf32>
    %261 = vector.multi_reduction <add>, %260, %cst_87 [0] : vector<16x15x16xf32> to vector<15x16xf32>
    %cst_88 = arith.constant dense<0.000000e+00> : vector<16xf32>
    %262 = vector.multi_reduction <add>, %261, %cst_88 [0] : vector<15x16xf32> to vector<16xf32>
    %263 = vector.shape_cast %262 : vector<16xf32> to vector<1x16xf32>
    %cst_89 = arith.constant dense<0.000000e+00> : vector<16x16xf32>
    %264 = vector.multi_reduction <add>, %243, %cst_89 [0] : vector<16x16x16xf32> to vector<16x16xf32>
    %cst_90 = arith.constant dense<0.000000e+00> : vector<16xf32>
    %265 = vector.multi_reduction <add>, %264, %cst_90 [0] : vector<16x16xf32> to vector<16xf32>
    %266 = vector.shape_cast %265 : vector<16xf32> to vector<1x16xf32>
    %267 = vector.extract_strided_slice %243 {offsets = [0, 1, 0], sizes = [16, 15, 16], strides = [1, 1, 1]} : vector<16x16x16xf32> to vector<16x15x16xf32>
    %cst_91 = arith.constant dense<0.000000e+00> : vector<15x16xf32>
    %268 = vector.multi_reduction <add>, %267, %cst_91 [0] : vector<16x15x16xf32> to vector<15x16xf32>
    %cst_92 = arith.constant dense<0.000000e+00> : vector<16xf32>
    %269 = vector.multi_reduction <add>, %268, %cst_92 [0] : vector<15x16xf32> to vector<16xf32>
    %270 = vector.shape_cast %269 : vector<16xf32> to vector<1x16xf32>
    %271 = vector.extract_strided_slice %243 {offsets = [1, 0, 0], sizes = [15, 15, 16], strides = [1, 1, 1]} : vector<16x16x16xf32> to vector<15x15x16xf32>
    %cst_93 = arith.constant dense<0.000000e+00> : vector<15x16xf32>
    %272 = vector.multi_reduction <add>, %271, %cst_93 [0] : vector<15x15x16xf32> to vector<15x16xf32>
    %cst_94 = arith.constant dense<0.000000e+00> : vector<16xf32>
    %273 = vector.multi_reduction <add>, %272, %cst_94 [0] : vector<15x16xf32> to vector<16xf32>
    %274 = vector.shape_cast %273 : vector<16xf32> to vector<1x16xf32>
    %275 = vector.extract_strided_slice %243 {offsets = [1, 0, 0], sizes = [15, 16, 16], strides = [1, 1, 1]} : vector<16x16x16xf32> to vector<15x16x16xf32>
    %cst_95 = arith.constant dense<0.000000e+00> : vector<16x16xf32>
    %276 = vector.multi_reduction <add>, %275, %cst_95 [0] : vector<15x16x16xf32> to vector<16x16xf32>
    %cst_96 = arith.constant dense<0.000000e+00> : vector<16xf32>
    %277 = vector.multi_reduction <add>, %276, %cst_96 [0] : vector<16x16xf32> to vector<16xf32>
    %278 = vector.shape_cast %277 : vector<16xf32> to vector<1x16xf32>
    %279 = vector.extract_strided_slice %243 {offsets = [1, 1, 0], sizes = [15, 15, 16], strides = [1, 1, 1]} : vector<16x16x16xf32> to vector<15x15x16xf32>
    %cst_97 = arith.constant dense<0.000000e+00> : vector<15x16xf32>
    %280 = vector.multi_reduction <add>, %279, %cst_97 [0] : vector<15x15x16xf32> to vector<15x16xf32>
    %cst_98 = arith.constant dense<0.000000e+00> : vector<16xf32>
    %281 = vector.multi_reduction <add>, %280, %cst_98 [0] : vector<15x16xf32> to vector<16xf32>
    %282 = vector.shape_cast %281 : vector<16xf32> to vector<1x16xf32>
    %283 = tpu.concatenate %251, %255, %259, %263, %266, %270, %274, %278, %282 in 1 : vector<1x16xf32>, vector<1x16xf32>, vector<1x16xf32>, vector<1x16xf32>, vector<1x16xf32>, vector<1x16xf32>, vector<1x16xf32>, vector<1x16xf32>, vector<1x16xf32> -> vector<1x144xf32>
    %cst_99 = arith.constant dense<0.000000e+00> : vector<1x24xf32>
    %284 = tpu.matmul %283, %246, %cst_99 {dimension_numbers = #tpu.dot_dimension_numbers<[1], [0], [0], [1], [0, 0, 1, 1], [], []>} : vector<1x144xf32>, vector<144x24xf32>, vector<1x24xf32> -> vector<1x24xf32>
    %cst_100 = arith.constant 3.906250e-03 : f32
    %285 = vector.broadcast %cst_100 : f32 to vector<1x24xf32>
    %286 = arith.mulf %284, %285 : vector<1x24xf32>
    %287 = arith.addf %286, %247 : vector<1x24xf32>
    %c0_101 = arith.constant 0 : index
    %c0_102 = arith.constant 0 : index
    %288 = vector.load %arg16[%c0_101, %c0_102] : memref<400x24xf32, #tpu.memory_space<vmem>>, vector<400x24xf32>
    %c0_103 = arith.constant 0 : index
    %c0_104 = arith.constant 0 : index
    %289 = vector.load %arg17[%c0_103, %c0_104] : memref<1x24xf32, #tpu.memory_space<vmem>>, vector<1x24xf32>
    %290 = vector.extract_strided_slice %245 {offsets = [0, 0, 0], sizes = [14, 14, 16], strides = [1, 1, 1]} : vector<16x16x16xf32> to vector<14x14x16xf32>
    %cst_105 = arith.constant dense<0.000000e+00> : vector<14x16xf32>
    %291 = vector.multi_reduction <add>, %290, %cst_105 [0] : vector<14x14x16xf32> to vector<14x16xf32>
    %cst_106 = arith.constant dense<0.000000e+00> : vector<16xf32>
    %292 = vector.multi_reduction <add>, %291, %cst_106 [0] : vector<14x16xf32> to vector<16xf32>
    %293 = vector.shape_cast %292 : vector<16xf32> to vector<1x16xf32>
    %294 = vector.extract_strided_slice %245 {offsets = [0, 0, 0], sizes = [14, 15, 16], strides = [1, 1, 1]} : vector<16x16x16xf32> to vector<14x15x16xf32>
    %cst_107 = arith.constant dense<0.000000e+00> : vector<15x16xf32>
    %295 = vector.multi_reduction <add>, %294, %cst_107 [0] : vector<14x15x16xf32> to vector<15x16xf32>
    %cst_108 = arith.constant dense<0.000000e+00> : vector<16xf32>
    %296 = vector.multi_reduction <add>, %295, %cst_108 [0] : vector<15x16xf32> to vector<16xf32>
    %297 = vector.shape_cast %296 : vector<16xf32> to vector<1x16xf32>
    %298 = vector.extract_strided_slice %245 {offsets = [0, 0, 0], sizes = [14, 16, 16], strides = [1, 1, 1]} : vector<16x16x16xf32> to vector<14x16x16xf32>
    %cst_109 = arith.constant dense<0.000000e+00> : vector<16x16xf32>
    %299 = vector.multi_reduction <add>, %298, %cst_109 [0] : vector<14x16x16xf32> to vector<16x16xf32>
    %cst_110 = arith.constant dense<0.000000e+00> : vector<16xf32>
    %300 = vector.multi_reduction <add>, %299, %cst_110 [0] : vector<16x16xf32> to vector<16xf32>
    %301 = vector.shape_cast %300 : vector<16xf32> to vector<1x16xf32>
    %302 = vector.extract_strided_slice %245 {offsets = [0, 1, 0], sizes = [14, 15, 16], strides = [1, 1, 1]} : vector<16x16x16xf32> to vector<14x15x16xf32>
    %cst_111 = arith.constant dense<0.000000e+00> : vector<15x16xf32>
    %303 = vector.multi_reduction <add>, %302, %cst_111 [0] : vector<14x15x16xf32> to vector<15x16xf32>
    %cst_112 = arith.constant dense<0.000000e+00> : vector<16xf32>
    %304 = vector.multi_reduction <add>, %303, %cst_112 [0] : vector<15x16xf32> to vector<16xf32>
    %305 = vector.shape_cast %304 : vector<16xf32> to vector<1x16xf32>
    %306 = vector.extract_strided_slice %245 {offsets = [0, 2, 0], sizes = [14, 14, 16], strides = [1, 1, 1]} : vector<16x16x16xf32> to vector<14x14x16xf32>
    %cst_113 = arith.constant dense<0.000000e+00> : vector<14x16xf32>
    %307 = vector.multi_reduction <add>, %306, %cst_113 [0] : vector<14x14x16xf32> to vector<14x16xf32>
    %cst_114 = arith.constant dense<0.000000e+00> : vector<16xf32>
    %308 = vector.multi_reduction <add>, %307, %cst_114 [0] : vector<14x16xf32> to vector<16xf32>
    %309 = vector.shape_cast %308 : vector<16xf32> to vector<1x16xf32>
    %310 = vector.extract_strided_slice %245 {offsets = [0, 0, 0], sizes = [15, 14, 16], strides = [1, 1, 1]} : vector<16x16x16xf32> to vector<15x14x16xf32>
    %cst_115 = arith.constant dense<0.000000e+00> : vector<14x16xf32>
    %311 = vector.multi_reduction <add>, %310, %cst_115 [0] : vector<15x14x16xf32> to vector<14x16xf32>
    %cst_116 = arith.constant dense<0.000000e+00> : vector<16xf32>
    %312 = vector.multi_reduction <add>, %311, %cst_116 [0] : vector<14x16xf32> to vector<16xf32>
    %313 = vector.shape_cast %312 : vector<16xf32> to vector<1x16xf32>
    %314 = vector.extract_strided_slice %245 {offsets = [0, 0, 0], sizes = [15, 15, 16], strides = [1, 1, 1]} : vector<16x16x16xf32> to vector<15x15x16xf32>
    %cst_117 = arith.constant dense<0.000000e+00> : vector<15x16xf32>
    %315 = vector.multi_reduction <add>, %314, %cst_117 [0] : vector<15x15x16xf32> to vector<15x16xf32>
    %cst_118 = arith.constant dense<0.000000e+00> : vector<16xf32>
    %316 = vector.multi_reduction <add>, %315, %cst_118 [0] : vector<15x16xf32> to vector<16xf32>
    %317 = vector.shape_cast %316 : vector<16xf32> to vector<1x16xf32>
    %318 = vector.extract_strided_slice %245 {offsets = [0, 0, 0], sizes = [15, 16, 16], strides = [1, 1, 1]} : vector<16x16x16xf32> to vector<15x16x16xf32>
    %cst_119 = arith.constant dense<0.000000e+00> : vector<16x16xf32>
    %319 = vector.multi_reduction <add>, %318, %cst_119 [0] : vector<15x16x16xf32> to vector<16x16xf32>
    %cst_120 = arith.constant dense<0.000000e+00> : vector<16xf32>
    %320 = vector.multi_reduction <add>, %319, %cst_120 [0] : vector<16x16xf32> to vector<16xf32>
    %321 = vector.shape_cast %320 : vector<16xf32> to vector<1x16xf32>
    %322 = vector.extract_strided_slice %245 {offsets = [0, 1, 0], sizes = [15, 15, 16], strides = [1, 1, 1]} : vector<16x16x16xf32> to vector<15x15x16xf32>
    %cst_121 = arith.constant dense<0.000000e+00> : vector<15x16xf32>
    %323 = vector.multi_reduction <add>, %322, %cst_121 [0] : vector<15x15x16xf32> to vector<15x16xf32>
    %cst_122 = arith.constant dense<0.000000e+00> : vector<16xf32>
    %324 = vector.multi_reduction <add>, %323, %cst_122 [0] : vector<15x16xf32> to vector<16xf32>
    %325 = vector.shape_cast %324 : vector<16xf32> to vector<1x16xf32>
    %326 = vector.extract_strided_slice %245 {offsets = [0, 2, 0], sizes = [15, 14, 16], strides = [1, 1, 1]} : vector<16x16x16xf32> to vector<15x14x16xf32>
    %cst_123 = arith.constant dense<0.000000e+00> : vector<14x16xf32>
    %327 = vector.multi_reduction <add>, %326, %cst_123 [0] : vector<15x14x16xf32> to vector<14x16xf32>
    %cst_124 = arith.constant dense<0.000000e+00> : vector<16xf32>
    %328 = vector.multi_reduction <add>, %327, %cst_124 [0] : vector<14x16xf32> to vector<16xf32>
    %329 = vector.shape_cast %328 : vector<16xf32> to vector<1x16xf32>
    %330 = vector.extract_strided_slice %245 {offsets = [0, 0, 0], sizes = [16, 14, 16], strides = [1, 1, 1]} : vector<16x16x16xf32> to vector<16x14x16xf32>
    %cst_125 = arith.constant dense<0.000000e+00> : vector<14x16xf32>
    %331 = vector.multi_reduction <add>, %330, %cst_125 [0] : vector<16x14x16xf32> to vector<14x16xf32>
    %cst_126 = arith.constant dense<0.000000e+00> : vector<16xf32>
    %332 = vector.multi_reduction <add>, %331, %cst_126 [0] : vector<14x16xf32> to vector<16xf32>
    %333 = vector.shape_cast %332 : vector<16xf32> to vector<1x16xf32>
    %334 = vector.extract_strided_slice %245 {offsets = [0, 0, 0], sizes = [16, 15, 16], strides = [1, 1, 1]} : vector<16x16x16xf32> to vector<16x15x16xf32>
    %cst_127 = arith.constant dense<0.000000e+00> : vector<15x16xf32>
    %335 = vector.multi_reduction <add>, %334, %cst_127 [0] : vector<16x15x16xf32> to vector<15x16xf32>
    %cst_128 = arith.constant dense<0.000000e+00> : vector<16xf32>
    %336 = vector.multi_reduction <add>, %335, %cst_128 [0] : vector<15x16xf32> to vector<16xf32>
    %337 = vector.shape_cast %336 : vector<16xf32> to vector<1x16xf32>
    %cst_129 = arith.constant dense<0.000000e+00> : vector<16x16xf32>
    %338 = vector.multi_reduction <add>, %245, %cst_129 [0] : vector<16x16x16xf32> to vector<16x16xf32>
    %cst_130 = arith.constant dense<0.000000e+00> : vector<16xf32>
    %339 = vector.multi_reduction <add>, %338, %cst_130 [0] : vector<16x16xf32> to vector<16xf32>
    %340 = vector.shape_cast %339 : vector<16xf32> to vector<1x16xf32>
    %341 = vector.extract_strided_slice %245 {offsets = [0, 1, 0], sizes = [16, 15, 16], strides = [1, 1, 1]} : vector<16x16x16xf32> to vector<16x15x16xf32>
    %cst_131 = arith.constant dense<0.000000e+00> : vector<15x16xf32>
    %342 = vector.multi_reduction <add>, %341, %cst_131 [0] : vector<16x15x16xf32> to vector<15x16xf32>
    %cst_132 = arith.constant dense<0.000000e+00> : vector<16xf32>
    %343 = vector.multi_reduction <add>, %342, %cst_132 [0] : vector<15x16xf32> to vector<16xf32>
    %344 = vector.shape_cast %343 : vector<16xf32> to vector<1x16xf32>
    %345 = vector.extract_strided_slice %245 {offsets = [0, 2, 0], sizes = [16, 14, 16], strides = [1, 1, 1]} : vector<16x16x16xf32> to vector<16x14x16xf32>
    %cst_133 = arith.constant dense<0.000000e+00> : vector<14x16xf32>
    %346 = vector.multi_reduction <add>, %345, %cst_133 [0] : vector<16x14x16xf32> to vector<14x16xf32>
    %cst_134 = arith.constant dense<0.000000e+00> : vector<16xf32>
    %347 = vector.multi_reduction <add>, %346, %cst_134 [0] : vector<14x16xf32> to vector<16xf32>
    %348 = vector.shape_cast %347 : vector<16xf32> to vector<1x16xf32>
    %349 = vector.extract_strided_slice %245 {offsets = [1, 0, 0], sizes = [15, 14, 16], strides = [1, 1, 1]} : vector<16x16x16xf32> to vector<15x14x16xf32>
    %cst_135 = arith.constant dense<0.000000e+00> : vector<14x16xf32>
    %350 = vector.multi_reduction <add>, %349, %cst_135 [0] : vector<15x14x16xf32> to vector<14x16xf32>
    %cst_136 = arith.constant dense<0.000000e+00> : vector<16xf32>
    %351 = vector.multi_reduction <add>, %350, %cst_136 [0] : vector<14x16xf32> to vector<16xf32>
    %352 = vector.shape_cast %351 : vector<16xf32> to vector<1x16xf32>
    %353 = vector.extract_strided_slice %245 {offsets = [1, 0, 0], sizes = [15, 15, 16], strides = [1, 1, 1]} : vector<16x16x16xf32> to vector<15x15x16xf32>
    %cst_137 = arith.constant dense<0.000000e+00> : vector<15x16xf32>
    %354 = vector.multi_reduction <add>, %353, %cst_137 [0] : vector<15x15x16xf32> to vector<15x16xf32>
    %cst_138 = arith.constant dense<0.000000e+00> : vector<16xf32>
    %355 = vector.multi_reduction <add>, %354, %cst_138 [0] : vector<15x16xf32> to vector<16xf32>
    %356 = vector.shape_cast %355 : vector<16xf32> to vector<1x16xf32>
    %357 = vector.extract_strided_slice %245 {offsets = [1, 0, 0], sizes = [15, 16, 16], strides = [1, 1, 1]} : vector<16x16x16xf32> to vector<15x16x16xf32>
    %cst_139 = arith.constant dense<0.000000e+00> : vector<16x16xf32>
    %358 = vector.multi_reduction <add>, %357, %cst_139 [0] : vector<15x16x16xf32> to vector<16x16xf32>
    %cst_140 = arith.constant dense<0.000000e+00> : vector<16xf32>
    %359 = vector.multi_reduction <add>, %358, %cst_140 [0] : vector<16x16xf32> to vector<16xf32>
    %360 = vector.shape_cast %359 : vector<16xf32> to vector<1x16xf32>
    %361 = vector.extract_strided_slice %245 {offsets = [1, 1, 0], sizes = [15, 15, 16], strides = [1, 1, 1]} : vector<16x16x16xf32> to vector<15x15x16xf32>
    %cst_141 = arith.constant dense<0.000000e+00> : vector<15x16xf32>
    %362 = vector.multi_reduction <add>, %361, %cst_141 [0] : vector<15x15x16xf32> to vector<15x16xf32>
    %cst_142 = arith.constant dense<0.000000e+00> : vector<16xf32>
    %363 = vector.multi_reduction <add>, %362, %cst_142 [0] : vector<15x16xf32> to vector<16xf32>
    %364 = vector.shape_cast %363 : vector<16xf32> to vector<1x16xf32>
    %365 = vector.extract_strided_slice %245 {offsets = [1, 2, 0], sizes = [15, 14, 16], strides = [1, 1, 1]} : vector<16x16x16xf32> to vector<15x14x16xf32>
    %cst_143 = arith.constant dense<0.000000e+00> : vector<14x16xf32>
    %366 = vector.multi_reduction <add>, %365, %cst_143 [0] : vector<15x14x16xf32> to vector<14x16xf32>
    %cst_144 = arith.constant dense<0.000000e+00> : vector<16xf32>
    %367 = vector.multi_reduction <add>, %366, %cst_144 [0] : vector<14x16xf32> to vector<16xf32>
    %368 = vector.shape_cast %367 : vector<16xf32> to vector<1x16xf32>
    %369 = vector.extract_strided_slice %245 {offsets = [2, 0, 0], sizes = [14, 14, 16], strides = [1, 1, 1]} : vector<16x16x16xf32> to vector<14x14x16xf32>
    %cst_145 = arith.constant dense<0.000000e+00> : vector<14x16xf32>
    %370 = vector.multi_reduction <add>, %369, %cst_145 [0] : vector<14x14x16xf32> to vector<14x16xf32>
    %cst_146 = arith.constant dense<0.000000e+00> : vector<16xf32>
    %371 = vector.multi_reduction <add>, %370, %cst_146 [0] : vector<14x16xf32> to vector<16xf32>
    %372 = vector.shape_cast %371 : vector<16xf32> to vector<1x16xf32>
    %373 = vector.extract_strided_slice %245 {offsets = [2, 0, 0], sizes = [14, 15, 16], strides = [1, 1, 1]} : vector<16x16x16xf32> to vector<14x15x16xf32>
    %cst_147 = arith.constant dense<0.000000e+00> : vector<15x16xf32>
    %374 = vector.multi_reduction <add>, %373, %cst_147 [0] : vector<14x15x16xf32> to vector<15x16xf32>
    %cst_148 = arith.constant dense<0.000000e+00> : vector<16xf32>
    %375 = vector.multi_reduction <add>, %374, %cst_148 [0] : vector<15x16xf32> to vector<16xf32>
    %376 = vector.shape_cast %375 : vector<16xf32> to vector<1x16xf32>
    %377 = vector.extract_strided_slice %245 {offsets = [2, 0, 0], sizes = [14, 16, 16], strides = [1, 1, 1]} : vector<16x16x16xf32> to vector<14x16x16xf32>
    %cst_149 = arith.constant dense<0.000000e+00> : vector<16x16xf32>
    %378 = vector.multi_reduction <add>, %377, %cst_149 [0] : vector<14x16x16xf32> to vector<16x16xf32>
    %cst_150 = arith.constant dense<0.000000e+00> : vector<16xf32>
    %379 = vector.multi_reduction <add>, %378, %cst_150 [0] : vector<16x16xf32> to vector<16xf32>
    %380 = vector.shape_cast %379 : vector<16xf32> to vector<1x16xf32>
    %381 = vector.extract_strided_slice %245 {offsets = [2, 1, 0], sizes = [14, 15, 16], strides = [1, 1, 1]} : vector<16x16x16xf32> to vector<14x15x16xf32>
    %cst_151 = arith.constant dense<0.000000e+00> : vector<15x16xf32>
    %382 = vector.multi_reduction <add>, %381, %cst_151 [0] : vector<14x15x16xf32> to vector<15x16xf32>
    %cst_152 = arith.constant dense<0.000000e+00> : vector<16xf32>
    %383 = vector.multi_reduction <add>, %382, %cst_152 [0] : vector<15x16xf32> to vector<16xf32>
    %384 = vector.shape_cast %383 : vector<16xf32> to vector<1x16xf32>
    %385 = vector.extract_strided_slice %245 {offsets = [2, 2, 0], sizes = [14, 14, 16], strides = [1, 1, 1]} : vector<16x16x16xf32> to vector<14x14x16xf32>
    %cst_153 = arith.constant dense<0.000000e+00> : vector<14x16xf32>
    %386 = vector.multi_reduction <add>, %385, %cst_153 [0] : vector<14x14x16xf32> to vector<14x16xf32>
    %cst_154 = arith.constant dense<0.000000e+00> : vector<16xf32>
    %387 = vector.multi_reduction <add>, %386, %cst_154 [0] : vector<14x16xf32> to vector<16xf32>
    %388 = vector.shape_cast %387 : vector<16xf32> to vector<1x16xf32>
    %389 = tpu.concatenate %293, %297, %301, %305, %309, %313, %317, %321, %325, %329, %333, %337, %340, %344, %348, %352 in 1 : vector<1x16xf32>, vector<1x16xf32>, vector<1x16xf32>, vector<1x16xf32>, vector<1x16xf32>, vector<1x16xf32>, vector<1x16xf32>, vector<1x16xf32>, vector<1x16xf32>, vector<1x16xf32>, vector<1x16xf32>, vector<1x16xf32>, vector<1x16xf32>, vector<1x16xf32>, vector<1x16xf32>, vector<1x16xf32> -> vector<1x256xf32>
    %390 = tpu.concatenate %356, %360, %364, %368, %372, %376, %380, %384, %388 in 1 : vector<1x16xf32>, vector<1x16xf32>, vector<1x16xf32>, vector<1x16xf32>, vector<1x16xf32>, vector<1x16xf32>, vector<1x16xf32>, vector<1x16xf32>, vector<1x16xf32> -> vector<1x144xf32>
    %391 = tpu.concatenate %389, %390 in 1 : vector<1x256xf32>, vector<1x144xf32> -> vector<1x400xf32>
    %cst_155 = arith.constant dense<0.000000e+00> : vector<1x24xf32>
    %392 = tpu.matmul %391, %288, %cst_155 {dimension_numbers = #tpu.dot_dimension_numbers<[1], [0], [0], [1], [0, 0, 1, 1], [], []>} : vector<1x400xf32>, vector<400x24xf32>, vector<1x24xf32> -> vector<1x24xf32>
    %cst_156 = arith.constant 3.906250e-03 : f32
    %393 = vector.broadcast %cst_156 : f32 to vector<1x24xf32>
    %394 = arith.mulf %392, %393 : vector<1x24xf32>
    %395 = arith.addf %394, %289 : vector<1x24xf32>
    %396 = tpu.concatenate %209, %287, %395, %235 in 1 : vector<1x16xf32>, vector<1x24xf32>, vector<1x24xf32>, vector<1x24xf32> -> vector<1x88xf32>
    %c0_157 = arith.constant 0 : index
    %c0_158 = arith.constant 0 : index
    %397 = vector.load %arg20[%c0_157, %c0_158] : memref<88x8xf32, #tpu.memory_space<vmem>>, vector<88x8xf32>
    %cst_159 = arith.constant dense<0.000000e+00> : vector<1x8xf32>
    %398 = tpu.matmul %396, %397, %cst_159 {dimension_numbers = #tpu.dot_dimension_numbers<[1], [0], [0], [1], [0, 0, 1, 1], [], []>} : vector<1x88xf32>, vector<88x8xf32>, vector<1x8xf32> -> vector<1x8xf32>
    %c0_160 = arith.constant 0 : index
    %c0_161 = arith.constant 0 : index
    %399 = vector.load %arg21[%c0_160, %c0_161] : memref<1x8xf32, #tpu.memory_space<vmem>>, vector<1x8xf32>
    %400 = arith.addf %398, %399 : vector<1x8xf32>
    %c0_162 = arith.constant 0 : index
    %c0_163 = arith.constant 0 : index
    %c0_164 = arith.constant 0 : index
    %401 = vector.load %arg22[%c0_162, %c0_163, %c0_164] : memref<1x1x8xf32, #tpu.memory_space<vmem>>, vector<1x1x8xf32>
    %402 = vector.shape_cast %401 : vector<1x1x8xf32> to vector<1x8xf32>
    %403 = vector.shape_cast %400 : vector<1x8xf32> to vector<1x1x8xf32>
    tpu.vector_store %arg22[%c0_162, %c0_163, %c0_164], %403 {strides = array<i32>} : memref<1x1x8xf32, #tpu.memory_space<vmem>>, vector<1x1x8xf32>,
    return
  }
  func.func @transform_0(%arg0: i32) -> (i32, i32, i32, i32) {
    %c0_i32 = arith.constant 0 : i32
    %c0_i32_0 = arith.constant 0 : i32
    %c0_i32_1 = arith.constant 0 : i32
    %c0_i32_2 = arith.constant 0 : i32
    return %arg0, %c0_i32, %c0_i32_0, %c0_i32_1 : i32, i32, i32, i32
  }
  func.func @transform_1(%arg0: i32) -> (i32, i32) {
    %c0_i32 = arith.constant 0 : i32
    %c0_i32_0 = arith.constant 0 : i32
    %c0_i32_1 = arith.constant 0 : i32
    return %c0_i32, %c0_i32_0 : i32, i32
  }
  func.func @transform_2(%arg0: i32) -> (i32, i32) {
    %c0_i32 = arith.constant 0 : i32
    %c0_i32_0 = arith.constant 0 : i32
    %c0_i32_1 = arith.constant 0 : i32
    return %c0_i32, %c0_i32_0 : i32, i32
  }
  func.func @transform_3(%arg0: i32) -> (i32, i32) {
    %c0_i32 = arith.constant 0 : i32
    %c0_i32_0 = arith.constant 0 : i32
    %c0_i32_1 = arith.constant 0 : i32
    return %c0_i32, %c0_i32_0 : i32, i32
  }
  func.func @transform_4(%arg0: i32) -> (i32, i32) {
    %c0_i32 = arith.constant 0 : i32
    %c0_i32_0 = arith.constant 0 : i32
    %c0_i32_1 = arith.constant 0 : i32
    return %c0_i32, %c0_i32_0 : i32, i32
  }
  func.func @transform_5(%arg0: i32) -> (i32, i32) {
    %c0_i32 = arith.constant 0 : i32
    %c0_i32_0 = arith.constant 0 : i32
    %c0_i32_1 = arith.constant 0 : i32
    return %c0_i32, %c0_i32_0 : i32, i32
  }
  func.func @transform_6(%arg0: i32) -> (i32, i32) {
    %c0_i32 = arith.constant 0 : i32
    %c0_i32_0 = arith.constant 0 : i32
    %c0_i32_1 = arith.constant 0 : i32
    return %c0_i32, %c0_i32_0 : i32, i32
  }
  func.func @transform_7(%arg0: i32) -> (i32, i32) {
    %c0_i32 = arith.constant 0 : i32
    %c0_i32_0 = arith.constant 0 : i32
    %c0_i32_1 = arith.constant 0 : i32
    return %c0_i32, %c0_i32_0 : i32, i32
  }
  func.func @transform_8(%arg0: i32) -> (i32, i32) {
    %c0_i32 = arith.constant 0 : i32
    %c0_i32_0 = arith.constant 0 : i32
    %c0_i32_1 = arith.constant 0 : i32
    return %c0_i32, %c0_i32_0 : i32, i32
  }
  func.func @transform_9(%arg0: i32) -> (i32, i32) {
    %c0_i32 = arith.constant 0 : i32
    %c0_i32_0 = arith.constant 0 : i32
    %c0_i32_1 = arith.constant 0 : i32
    return %c0_i32, %c0_i32_0 : i32, i32
  }
  func.func @transform_10(%arg0: i32) -> (i32, i32) {
    %c0_i32 = arith.constant 0 : i32
    %c0_i32_0 = arith.constant 0 : i32
    %c0_i32_1 = arith.constant 0 : i32
    return %c0_i32, %c0_i32_0 : i32, i32
  }
  func.func @transform_11(%arg0: i32) -> (i32, i32) {
    %c0_i32 = arith.constant 0 : i32
    %c0_i32_0 = arith.constant 0 : i32
    %c0_i32_1 = arith.constant 0 : i32
    return %c0_i32, %c0_i32_0 : i32, i32
  }
  func.func @transform_12(%arg0: i32) -> (i32, i32) {
    %c0_i32 = arith.constant 0 : i32
    %c0_i32_0 = arith.constant 0 : i32
    %c0_i32_1 = arith.constant 0 : i32
    return %c0_i32, %c0_i32_0 : i32, i32
  }
  func.func @transform_13(%arg0: i32) -> (i32, i32) {
    %c0_i32 = arith.constant 0 : i32
    %c0_i32_0 = arith.constant 0 : i32
    %c0_i32_1 = arith.constant 0 : i32
    return %c0_i32, %c0_i32_0 : i32, i32
  }
  func.func @transform_14(%arg0: i32) -> (i32, i32) {
    %c0_i32 = arith.constant 0 : i32
    %c0_i32_0 = arith.constant 0 : i32
    %c0_i32_1 = arith.constant 0 : i32
    return %c0_i32, %c0_i32_0 : i32, i32
  }
  func.func @transform_15(%arg0: i32) -> (i32, i32) {
    %c0_i32 = arith.constant 0 : i32
    %c0_i32_0 = arith.constant 0 : i32
    %c0_i32_1 = arith.constant 0 : i32
    return %c0_i32, %c0_i32_0 : i32, i32
  }
  func.func @transform_16(%arg0: i32) -> (i32, i32) {
    %c0_i32 = arith.constant 0 : i32
    %c0_i32_0 = arith.constant 0 : i32
    %c0_i32_1 = arith.constant 0 : i32
    return %c0_i32, %c0_i32_0 : i32, i32
  }
  func.func @transform_17(%arg0: i32) -> (i32, i32) {
    %c0_i32 = arith.constant 0 : i32
    %c0_i32_0 = arith.constant 0 : i32
    %c0_i32_1 = arith.constant 0 : i32
    return %c0_i32, %c0_i32_0 : i32, i32
  }
  func.func @transform_18(%arg0: i32) -> (i32, i32) {
    %c0_i32 = arith.constant 0 : i32
    %c0_i32_0 = arith.constant 0 : i32
    %c0_i32_1 = arith.constant 0 : i32
    return %c0_i32, %c0_i32_0 : i32, i32
  }
  func.func @transform_19(%arg0: i32) -> (i32, i32) {
    %c0_i32 = arith.constant 0 : i32
    %c0_i32_0 = arith.constant 0 : i32
    %c0_i32_1 = arith.constant 0 : i32
    return %c0_i32, %c0_i32_0 : i32, i32
  }
  func.func @transform_20(%arg0: i32) -> (i32, i32) {
    %c0_i32 = arith.constant 0 : i32
    %c0_i32_0 = arith.constant 0 : i32
    %c0_i32_1 = arith.constant 0 : i32
    return %c0_i32, %c0_i32_0 : i32, i32
  }
  func.func @transform_21(%arg0: i32) -> (i32, i32, i32) {
    %c0_i32 = arith.constant 0 : i32
    %c0_i32_0 = arith.constant 0 : i32
    %c0_i32_1 = arith.constant 0 : i32
    return %arg0, %c0_i32, %c0_i32_0 : i32, i32, i32
  }
}

</mosaic_0001>

<llo_original>
// kernel: forward.1
$region0: #{forward.1}
  #allocation0 [shape = 'u32[]', space=smem, size = 0x4, offset = 0x4, fixed_abs, tag = 'smem constant byte address 0x4 - core index']
  #allocation1 [shape = 'u32[144,128]{1,0:T(1,128)}', space=vmem, size = 0x12000, scoped, tag = 'internal scratch']
  %s0 = inlined_call_operand.vmem [shape: f32[2,16,16,8], index: 0, kind: input, shape index: {}]
  %s1 = inlined_call_operand.vmem [shape: bf16[8,64], index: 1, kind: input, shape index: {}]
  %s2 = inlined_call_operand.vmem [shape: f32[1,64], index: 2, kind: input, shape index: {}]
  %s3 = inlined_call_operand.vmem [shape: bf16[144,32], index: 3, kind: input, shape index: {}]
  %s4 = inlined_call_operand.vmem [shape: f32[1,32], index: 4, kind: input, shape index: {}]
  %s5 = inlined_call_operand.vmem [shape: bf16[400,32], index: 5, kind: input, shape index: {}]
  %s6 = inlined_call_operand.vmem [shape: f32[1,32], index: 6, kind: input, shape index: {}]
  %s7 = inlined_call_operand.vmem [shape: bf16[8,32], index: 7, kind: input, shape index: {}]
  %s8 = inlined_call_operand.vmem [shape: f32[1,32], index: 8, kind: input, shape index: {}]
  %s9 = inlined_call_operand.vmem [shape: f32[128,16], index: 9, kind: input, shape index: {}]
  %s10 = inlined_call_operand.vmem [shape: f32[1,16], index: 10, kind: input, shape index: {}]
  %s11 = inlined_call_operand.vmem [shape: bf16[128,32], index: 11, kind: input, shape index: {}]
  %s12 = inlined_call_operand.vmem [shape: f32[1,32], index: 12, kind: input, shape index: {}]
  %s13 = inlined_call_operand.vmem [shape: f32[144,24], index: 13, kind: input, shape index: {}]
  %s14 = inlined_call_operand.vmem [shape: f32[1,24], index: 14, kind: input, shape index: {}]
  %s15 = inlined_call_operand.vmem [shape: f32[400,24], index: 15, kind: input, shape index: {}]
  %s16 = inlined_call_operand.vmem [shape: f32[1,24], index: 16, kind: input, shape index: {}]
  %s17 = inlined_call_operand.vmem [shape: f32[128,24], index: 17, kind: input, shape index: {}]
  %s18 = inlined_call_operand.vmem [shape: f32[1,24], index: 18, kind: input, shape index: {}]
  %s19 = inlined_call_operand.vmem [shape: f32[88,8], index: 19, kind: input, shape index: {}]
  %s20 = inlined_call_operand.vmem [shape: f32[1,8], index: 20, kind: input, shape index: {}]
  %s21 = inlined_call_operand.hbm [shape: f32[2,1,8], index: 21, kind: output, shape index: {}]
  %s22 = sld [smem:[#allocation0]]
  $region117: #{forward.1} parent=0
    _
  %s24 = ssub.s32 1, %s22
  %s25 = scalar_select 0, %s24, %s22
  $region1: #{forward.1} parent=0
    #allocation2 [shape = 'u8[1024]{0}', space=vmem, size = 0x400, scoped, tag = 'output window, operand 0']
    #allocation3 [shape = 's32[2]{0}', space=sflag, size = 0x8, scoped, tag = 'scoped memory for forward.1']
    %26 = vsyncpa [#allocation3], 0
    %s27 = scalar_lea.sflag [#allocation3], 1
    %28 = vsyncpa %s27, 0
    loop: start=0, step=1, limit=4
    $region2: #{forward.1} parent=1 // loop_pre_header
      _
    $region3: #{forward.1} parent=1 // loop_header
      %s30 = sphi 0, %s34
      %p31 = scmp.ge.s32.totalorder %s30, 4
      %s40 = sphi 0, %s42
      %s43 = sphi 0, %s40
      %s44 = sphi 0, %s43
      %s60 = sphi 0, %s44
      %s64 = sphi 0, %s64
      %s66 = sphi 0, %s64
      %s67 = sphi 0, %s66
      %s81 = sphi 0, %s67
      %s85 = sphi 0, %s85
      %s87 = sphi 0, %s85
      %s88 = sphi 0, %s87
      %s102 = sphi 0, %s88
      %s106 = sphi 0, %s106
      %s108 = sphi 0, %s106
      %s109 = sphi 0, %s108
      %s123 = sphi 0, %s109
      %s127 = sphi 0, %s127
      %s129 = sphi 0, %s127
      %s130 = sphi 0, %s129
      %s144 = sphi 0, %s130
      %s148 = sphi 0, %s148
      %s150 = sphi 0, %s148
      %s151 = sphi 0, %s150
      %s165 = sphi 0, %s151
      %s169 = sphi 0, %s169
      %s171 = sphi 0, %s169
      %s172 = sphi 0, %s171
      %s186 = sphi 0, %s172
      %s190 = sphi 0, %s190
      %s192 = sphi 0, %s190
      %s193 = sphi 0, %s192
      %s207 = sphi 0, %s193
      %s211 = sphi 0, %s211
      %s213 = sphi 0, %s211
      %s214 = sphi 0, %s213
      %s228 = sphi 0, %s214
      %s232 = sphi 0, %s232
      %s234 = sphi 0, %s232
      %s235 = sphi 0, %s234
      %s249 = sphi 0, %s235
      %s253 = sphi 0, %s253
      %s255 = sphi 0, %s253
      %s256 = sphi 0, %s255
      %s270 = sphi 0, %s256
      %s274 = sphi 0, %s274
      %s276 = sphi 0, %s274
      %s277 = sphi 0, %s276
      %s291 = sphi 0, %s277
      %s295 = sphi 0, %s295
      %s297 = sphi 0, %s295
      %s298 = sphi 0, %s297
      %s312 = sphi 0, %s298
      %s316 = sphi 0, %s316
      %s318 = sphi 0, %s316
      %s319 = sphi 0, %s318
      %s333 = sphi 0, %s319
      %s337 = sphi 0, %s337
      %s339 = sphi 0, %s337
      %s340 = sphi 0, %s339
      %s354 = sphi 0, %s340
      %s358 = sphi 0, %s358
      %s360 = sphi 0, %s358
      %s361 = sphi 0, %s360
      %s375 = sphi 0, %s361
      %s379 = sphi 0, %s379
      %s381 = sphi 0, %s379
      %s382 = sphi 0, %s381
      %s396 = sphi 0, %s382
      %s400 = sphi 0, %s400
      %s402 = sphi 0, %s400
      %s403 = sphi 0, %s402
      %s417 = sphi 0, %s403
      %s421 = sphi 0, %s421
      %s423 = sphi 0, %s421
      %s424 = sphi 0, %s423
      %s438 = sphi 0, %s424
      %s442 = sphi 0, %s442
      %s444 = sphi 0, %s442
      %s445 = sphi 0, %s444
      %s459 = sphi 0, %s445
      %s463 = sphi 0, %s463
      %s465 = sphi 0, %s463
      %s466 = sphi 0, %s465
      %s480 = sphi 0, %s466
      %s486 = sphi 0, %s488
      %s489 = sphi 0, %s486
      %s490 = sphi 0, %s489
      %s506 = sphi 0, %s490
    $region4: #{forward.1} parent=1 // loop_header_branch
      %33 = sbr.rel (%p31) target = $region8
    $region5: #{forward.1} parent=1 // loop_body
      %s35 = ssub.s32 %s30, 1
      %s36 = ssub.s32 %s30, 2
      %s37 = sadd.s32 %s30, 1
      %s38 = ssub.s32 %s30, %s37
      %p39 = scmp.eq.s32.totalorder %s38, 0
      %s41 = sadd.s32 %s40, 1
      %s42 = scalar_select %p39, %s40, %s41
      %p45 = pneg %p39
      %p46 = scmp.eq.s32.totalorder %s30, 1
      %p47 = por %p45, %p46
      %p48 = scmp.ne.s32.totalorder %s40, %s43
      %p49 = scmp.eq.s32.totalorder %s30, 0
      %p50 = por %p48, %p49
      %p51 = scmp.ne.s32.totalorder %s40, %s43
      %p52 = scmp.eq.s32.totalorder %s35, 1
      %p53 = por %p51, %p52
      %p54 = scmp.ne.s32.totalorder %s43, %s44
      %p55 = scmp.eq.s32.totalorder %s35, 0
      %p56 = por %p54, %p55
      %p57 = scmp.ne.s32.totalorder %s43, %s44
      %p58 = scmp.eq.s32.totalorder %s36, 1
      %p59 = por %p57, %p58
      %p61 = scmp.ne.s32.totalorder %s44, %s60
      %p62 = scmp.eq.s32.totalorder %s36, 0
      %p63 = por %p61, %p62
      %s65 = sadd.s32 %s64, 1
      %p68 = scmp.eq.s32.totalorder %s30, 1
      %p69 = scmp.ne.s32.totalorder %s64, %s66
      %p70 = scmp.eq.s32.totalorder %s30, 0
      %p71 = por %p69, %p70
      %p72 = scmp.ne.s32.totalorder %s64, %s66
      %p73 = scmp.eq.s32.totalorder %s35, 1
      %p74 = por %p72, %p73
      %p75 = scmp.ne.s32.totalorder %s66, %s67
      %p76 = scmp.eq.s32.totalorder %s35, 0
      %p77 = por %p75, %p76
      %p78 = scmp.ne.s32.totalorder %s66, %s67
      %p79 = scmp.eq.s32.totalorder %s36, 1
      %p80 = por %p78, %p79
      %p82 = scmp.ne.s32.totalorder %s67, %s81
      %p83 = scmp.eq.s32.totalorder %s36, 0
      %p84 = por %p82, %p83
      %s86 = sadd.s32 %s85, 1
      %p89 = scmp.eq.s32.totalorder %s30, 1
      %p90 = scmp.ne.s32.totalorder %s85, %s87
      %p91 = scmp.eq.s32.totalorder %s30, 0
      %p92 = por %p90, %p91
      %p93 = scmp.ne.s32.totalorder %s85, %s87
      %p94 = scmp.eq.s32.totalorder %s35, 1
      %p95 = por %p93, %p94
      %p96 = scmp.ne.s32.totalorder %s87, %s88
      %p97 = scmp.eq.s32.totalorder %s35, 0
      %p98 = por %p96, %p97
      %p99 = scmp.ne.s32.totalorder %s87, %s88
      %p100 = scmp.eq.s32.totalorder %s36, 1
      %p101 = por %p99, %p100
      %p103 = scmp.ne.s32.totalorder %s88, %s102
      %p104 = scmp.eq.s32.totalorder %s36, 0
      %p105 = por %p103, %p104
      %s107 = sadd.s32 %s106, 1
      %p110 = scmp.eq.s32.totalorder %s30, 1
      %p111 = scmp.ne.s32.totalorder %s106, %s108
      %p112 = scmp.eq.s32.totalorder %s30, 0
      %p113 = por %p111, %p112
      %p114 = scmp.ne.s32.totalorder %s106, %s108
      %p115 = scmp.eq.s32.totalorder %s35, 1
      %p116 = por %p114, %p115
      %p117 = scmp.ne.s32.totalorder %s108, %s109
      %p118 = scmp.eq.s32.totalorder %s35, 0
      %p119 = por %p117, %p118
      %p120 = scmp.ne.s32.totalorder %s108, %s109
      %p121 = scmp.eq.s32.totalorder %s36, 1
      %p122 = por %p120, %p121
      %p124 = scmp.ne.s32.totalorder %s109, %s123
      %p125 = scmp.eq.s32.totalorder %s36, 0
      %p126 = por %p124, %p125
      %s128 = sadd.s32 %s127, 1
      %p131 = scmp.eq.s32.totalorder %s30, 1
      %p132 = scmp.ne.s32.totalorder %s127, %s129
      %p133 = scmp.eq.s32.totalorder %s30, 0
      %p134 = por %p132, %p133
      %p135 = scmp.ne.s32.totalorder %s127, %s129
      %p136 = scmp.eq.s32.totalorder %s35, 1
      %p137 = por %p135, %p136
      %p138 = scmp.ne.s32.totalorder %s129, %s130
      %p139 = scmp.eq.s32.totalorder %s35, 0
      %p140 = por %p138, %p139
      %p141 = scmp.ne.s32.totalorder %s129, %s130
      %p142 = scmp.eq.s32.totalorder %s36, 1
      %p143 = por %p141, %p142
      %p145 = scmp.ne.s32.totalorder %s130, %s144
      %p146 = scmp.eq.s32.totalorder %s36, 0
      %p147 = por %p145, %p146
      %s149 = sadd.s32 %s148, 1
      %p152 = scmp.eq.s32.totalorder %s30, 1
      %p153 = scmp.ne.s32.totalorder %s148, %s150
      %p154 = scmp.eq.s32.totalorder %s30, 0
      %p155 = por %p153, %p154
      %p156 = scmp.ne.s32.totalorder %s148, %s150
      %p157 = scmp.eq.s32.totalorder %s35, 1
      %p158 = por %p156, %p157
      %p159 = scmp.ne.s32.totalorder %s150, %s151
      %p160 = scmp.eq.s32.totalorder %s35, 0
      %p161 = por %p159, %p160
      %p162 = scmp.ne.s32.totalorder %s150, %s151
      %p163 = scmp.eq.s32.totalorder %s36, 1
      %p164 = por %p162, %p163
      %p166 = scmp.ne.s32.totalorder %s151, %s165
      %p167 = scmp.eq.s32.totalorder %s36, 0
      %p168 = por %p166, %p167
      %s170 = sadd.s32 %s169, 1
      %p173 = scmp.eq.s32.totalorder %s30, 1
      %p174 = scmp.ne.s32.totalorder %s169, %s171
      %p175 = scmp.eq.s32.totalorder %s30, 0
      %p176 = por %p174, %p175
      %p177 = scmp.ne.s32.totalorder %s169, %s171
      %p178 = scmp.eq.s32.totalorder %s35, 1
      %p179 = por %p177, %p178
      %p180 = scmp.ne.s32.totalorder %s171, %s172
      %p181 = scmp.eq.s32.totalorder %s35, 0
      %p182 = por %p180, %p181
      %p183 = scmp.ne.s32.totalorder %s171, %s172
      %p184 = scmp.eq.s32.totalorder %s36, 1
      %p185 = por %p183, %p184
      %p187 = scmp.ne.s32.totalorder %s172, %s186
      %p188 = scmp.eq.s32.totalorder %s36, 0
      %p189 = por %p187, %p188
      %s191 = sadd.s32 %s190, 1
      %p194 = scmp.eq.s32.totalorder %s30, 1
      %p195 = scmp.ne.s32.totalorder %s190, %s192
      %p196 = scmp.eq.s32.totalorder %s30, 0
      %p197 = por %p195, %p196
      %p198 = scmp.ne.s32.totalorder %s190, %s192
      %p199 = scmp.eq.s32.totalorder %s35, 1
      %p200 = por %p198, %p199
      %p201 = scmp.ne.s32.totalorder %s192, %s193
      %p202 = scmp.eq.s32.totalorder %s35, 0
      %p203 = por %p201, %p202
      %p204 = scmp.ne.s32.totalorder %s192, %s193
      %p205 = scmp.eq.s32.totalorder %s36, 1
      %p206 = por %p204, %p205
      %p208 = scmp.ne.s32.totalorder %s193, %s207
      %p209 = scmp.eq.s32.totalorder %s36, 0
      %p210 = por %p208, %p209
      %s212 = sadd.s32 %s211, 1
      %p215 = scmp.eq.s32.totalorder %s30, 1
      %p216 = scmp.ne.s32.totalorder %s211, %s213
      %p217 = scmp.eq.s32.totalorder %s30, 0
      %p218 = por %p216, %p217
      %p219 = scmp.ne.s32.totalorder %s211, %s213
      %p220 = scmp.eq.s32.totalorder %s35, 1
      %p221 = por %p219, %p220
      %p222 = scmp.ne.s32.totalorder %s213, %s214
      %p223 = scmp.eq.s32.totalorder %s35, 0
      %p224 = por %p222, %p223
      %p225 = scmp.ne.s32.totalorder %s213, %s214
      %p226 = scmp.eq.s32.totalorder %s36, 1
      %p227 = por %p225, %p226
      %p229 = scmp.ne.s32.totalorder %s214, %s228
      %p230 = scmp.eq.s32.totalorder %s36, 0
      %p231 = por %p229, %p230
      %s233 = sadd.s32 %s232, 1
      %p236 = scmp.eq.s32.totalorder %s30, 1
      %p237 = scmp.ne.s32.totalorder %s232, %s234
      %p238 = scmp.eq.s32.totalorder %s30, 0
      %p239 = por %p237, %p238
      %p240 = scmp.ne.s32.totalorder %s232, %s234
      %p241 = scmp.eq.s32.totalorder %s35, 1
      %p242 = por %p240, %p241
      %p243 = scmp.ne.s32.totalorder %s234, %s235
      %p244 = scmp.eq.s32.totalorder %s35, 0
      %p245 = por %p243, %p244
      %p246 = scmp.ne.s32.totalorder %s234, %s235
      %p247 = scmp.eq.s32.totalorder %s36, 1
      %p248 = por %p246, %p247
      %p250 = scmp.ne.s32.totalorder %s235, %s249
      %p251 = scmp.eq.s32.totalorder %s36, 0
      %p252 = por %p250, %p251
      %s254 = sadd.s32 %s253, 1
      %p257 = scmp.eq.s32.totalorder %s30, 1
      %p258 = scmp.ne.s32.totalorder %s253, %s255
      %p259 = scmp.eq.s32.totalorder %s30, 0
      %p260 = por %p258, %p259
      %p261 = scmp.ne.s32.totalorder %s253, %s255
      %p262 = scmp.eq.s32.totalorder %s35, 1
      %p263 = por %p261, %p262
      %p264 = scmp.ne.s32.totalorder %s255, %s256
      %p265 = scmp.eq.s32.totalorder %s35, 0
      %p266 = por %p264, %p265
      %p267 = scmp.ne.s32.totalorder %s255, %s256
      %p268 = scmp.eq.s32.totalorder %s36, 1
      %p269 = por %p267, %p268
      %p271 = scmp.ne.s32.totalorder %s256, %s270
      %p272 = scmp.eq.s32.totalorder %s36, 0
      %p273 = por %p271, %p272
      %s275 = sadd.s32 %s274, 1
      %p278 = scmp.eq.s32.totalorder %s30, 1
      %p279 = scmp.ne.s32.totalorder %s274, %s276
      %p280 = scmp.eq.s32.totalorder %s30, 0
      %p281 = por %p279, %p280
      %p282 = scmp.ne.s32.totalorder %s274, %s276
      %p283 = scmp.eq.s32.totalorder %s35, 1
      %p284 = por %p282, %p283
      %p285 = scmp.ne.s32.totalorder %s276, %s277
      %p286 = scmp.eq.s32.totalorder %s35, 0
      %p287 = por %p285, %p286
      %p288 = scmp.ne.s32.totalorder %s276, %s277
      %p289 = scmp.eq.s32.totalorder %s36, 1
      %p290 = por %p288, %p289
      %p292 = scmp.ne.s32.totalorder %s277, %s291
      %p293 = scmp.eq.s32.totalorder %s36, 0
      %p294 = por %p292, %p293
      %s296 = sadd.s32 %s295, 1
      %p299 = scmp.eq.s32.totalorder %s30, 1
      %p300 = scmp.ne.s32.totalorder %s295, %s297
      %p301 = scmp.eq.s32.totalorder %s30, 0
      %p302 = por %p300, %p301
      %p303 = scmp.ne.s32.totalorder %s295, %s297
      %p304 = scmp.eq.s32.totalorder %s35, 1
      %p305 = por %p303, %p304
      %p306 = scmp.ne.s32.totalorder %s297, %s298
      %p307 = scmp.eq.s32.totalorder %s35, 0
      %p308 = por %p306, %p307
      %p309 = scmp.ne.s32.totalorder %s297, %s298
      %p310 = scmp.eq.s32.totalorder %s36, 1
      %p311 = por %p309, %p310
      %p313 = scmp.ne.s32.totalorder %s298, %s312
      %p314 = scmp.eq.s32.totalorder %s36, 0
      %p315 = por %p313, %p314
      %s317 = sadd.s32 %s316, 1
      %p320 = scmp.eq.s32.totalorder %s30, 1
      %p321 = scmp.ne.s32.totalorder %s316, %s318
      %p322 = scmp.eq.s32.totalorder %s30, 0
      %p323 = por %p321, %p322
      %p324 = scmp.ne.s32.totalorder %s316, %s318
      %p325 = scmp.eq.s32.totalorder %s35, 1
      %p326 = por %p324, %p325
      %p327 = scmp.ne.s32.totalorder %s318, %s319
      %p328 = scmp.eq.s32.totalorder %s35, 0
      %p329 = por %p327, %p328
      %p330 = scmp.ne.s32.totalorder %s318, %s319
      %p331 = scmp.eq.s32.totalorder %s36, 1
      %p332 = por %p330, %p331
      %p334 = scmp.ne.s32.totalorder %s319, %s333
      %p335 = scmp.eq.s32.totalorder %s36, 0
      %p336 = por %p334, %p335
      %s338 = sadd.s32 %s337, 1
      %p341 = scmp.eq.s32.totalorder %s30, 1
      %p342 = scmp.ne.s32.totalorder %s337, %s339
      %p343 = scmp.eq.s32.totalorder %s30, 0
      %p344 = por %p342, %p343
      %p345 = scmp.ne.s32.totalorder %s337, %s339
      %p346 = scmp.eq.s32.totalorder %s35, 1
      %p347 = por %p345, %p346
      %p348 = scmp.ne.s32.totalorder %s339, %s340
      %p349 = scmp.eq.s32.totalorder %s35, 0
      %p350 = por %p348, %p349
      %p351 = scmp.ne.s32.totalorder %s339, %s340
      %p352 = scmp.eq.s32.totalorder %s36, 1
      %p353 = por %p351, %p352
      %p355 = scmp.ne.s32.totalorder %s340, %s354
      %p356 = scmp.eq.s32.totalorder %s36, 0
      %p357 = por %p355, %p356
      %s359 = sadd.s32 %s358, 1
      %p362 = scmp.eq.s32.totalorder %s30, 1
      %p363 = scmp.ne.s32.totalorder %s358, %s360
      %p364 = scmp.eq.s32.totalorder %s30, 0
      %p365 = por %p363, %p364
      %p366 = scmp.ne.s32.totalorder %s358, %s360
      %p367 = scmp.eq.s32.totalorder %s35, 1
      %p368 = por %p366, %p367
      %p369 = scmp.ne.s32.totalorder %s360, %s361
      %p370 = scmp.eq.s32.totalorder %s35, 0
      %p371 = por %p369, %p370
      %p372 = scmp.ne.s32.totalorder %s360, %s361
      %p373 = scmp.eq.s32.totalorder %s36, 1
      %p374 = por %p372, %p373
      %p376 = scmp.ne.s32.totalorder %s361, %s375
      %p377 = scmp.eq.s32.totalorder %s36, 0
      %p378 = por %p376, %p377
      %s380 = sadd.s32 %s379, 1
      %p383 = scmp.eq.s32.totalorder %s30, 1
      %p384 = scmp.ne.s32.totalorder %s379, %s381
      %p385 = scmp.eq.s32.totalorder %s30, 0
      %p386 = por %p384, %p385
      %p387 = scmp.ne.s32.totalorder %s379, %s381
      %p388 = scmp.eq.s32.totalorder %s35, 1
      %p389 = por %p387, %p388
      %p390 = scmp.ne.s32.totalorder %s381, %s382
      %p391 = scmp.eq.s32.totalorder %s35, 0
      %p392 = por %p390, %p391
      %p393 = scmp.ne.s32.totalorder %s381, %s382
      %p394 = scmp.eq.s32.totalorder %s36, 1
      %p395 = por %p393, %p394
      %p397 = scmp.ne.s32.totalorder %s382, %s396
      %p398 = scmp.eq.s32.totalorder %s36, 0
      %p399 = por %p397, %p398
      %s401 = sadd.s32 %s400, 1
      %p404 = scmp.eq.s32.totalorder %s30, 1
      %p405 = scmp.ne.s32.totalorder %s400, %s402
      %p406 = scmp.eq.s32.totalorder %s30, 0
      %p407 = por %p405, %p406
      %p408 = scmp.ne.s32.totalorder %s400, %s402
      %p409 = scmp.eq.s32.totalorder %s35, 1
      %p410 = por %p408, %p409
      %p411 = scmp.ne.s32.totalorder %s402, %s403
      %p412 = scmp.eq.s32.totalorder %s35, 0
      %p413 = por %p411, %p412
      %p414 = scmp.ne.s32.totalorder %s402, %s403
      %p415 = scmp.eq.s32.totalorder %s36, 1
      %p416 = por %p414, %p415
      %p418 = scmp.ne.s32.totalorder %s403, %s417
      %p419 = scmp.eq.s32.totalorder %s36, 0
      %p420 = por %p418, %p419
      %s422 = sadd.s32 %s421, 1
      %p425 = scmp.eq.s32.totalorder %s30, 1
      %p426 = scmp.ne.s32.totalorder %s421, %s423
      %p427 = scmp.eq.s32.totalorder %s30, 0
      %p428 = por %p426, %p427
      %p429 = scmp.ne.s32.totalorder %s421, %s423
      %p430 = scmp.eq.s32.totalorder %s35, 1
      %p431 = por %p429, %p430
      %p432 = scmp.ne.s32.totalorder %s423, %s424
      %p433 = scmp.eq.s32.totalorder %s35, 0
      %p434 = por %p432, %p433
      %p435 = scmp.ne.s32.totalorder %s423, %s424
      %p436 = scmp.eq.s32.totalorder %s36, 1
      %p437 = por %p435, %p436
      %p439 = scmp.ne.s32.totalorder %s424, %s438
      %p440 = scmp.eq.s32.totalorder %s36, 0
      %p441 = por %p439, %p440
      %s443 = sadd.s32 %s442, 1
      %p446 = scmp.eq.s32.totalorder %s30, 1
      %p447 = scmp.ne.s32.totalorder %s442, %s444
      %p448 = scmp.eq.s32.totalorder %s30, 0
      %p449 = por %p447, %p448
      %p450 = scmp.ne.s32.totalorder %s442, %s444
      %p451 = scmp.eq.s32.totalorder %s35, 1
      %p452 = por %p450, %p451
      %p453 = scmp.ne.s32.totalorder %s444, %s445
      %p454 = scmp.eq.s32.totalorder %s35, 0
      %p455 = por %p453, %p454
      %p456 = scmp.ne.s32.totalorder %s444, %s445
      %p457 = scmp.eq.s32.totalorder %s36, 1
      %p458 = por %p456, %p457
      %p460 = scmp.ne.s32.totalorder %s445, %s459
      %p461 = scmp.eq.s32.totalorder %s36, 0
      %p462 = por %p460, %p461
      %s464 = sadd.s32 %s463, 1
      %p467 = scmp.eq.s32.totalorder %s30, 1
      %p468 = scmp.ne.s32.totalorder %s463, %s465
      %p469 = scmp.eq.s32.totalorder %s30, 0
      %p470 = por %p468, %p469
      %p471 = scmp.ne.s32.totalorder %s463, %s465
      %p472 = scmp.eq.s32.totalorder %s35, 1
      %p473 = por %p471, %p472
      %p474 = scmp.ne.s32.totalorder %s465, %s466
      %p475 = scmp.eq.s32.totalorder %s35, 0
      %p476 = por %p474, %p475
      %p477 = scmp.ne.s32.totalorder %s465, %s466
      %p478 = scmp.eq.s32.totalorder %s36, 1
      %p479 = por %p477, %p478
      %p481 = scmp.ne.s32.totalorder %s466, %s480
      %p482 = scmp.eq.s32.totalorder %s36, 0
      %p483 = por %p481, %p482
      %s484 = ssub.s32 %s30, %s37
      %p485 = scmp.eq.s32.totalorder %s484, 0
      %s487 = sadd.s32 %s486, 1
      %s488 = scalar_select %p485, %s486, %s487
      %p491 = pneg %p485
      %p492 = scmp.eq.s32.totalorder %s30, 1
      %p493 = por %p491, %p492
      %p494 = scmp.ne.s32.totalorder %s486, %s489
      %p495 = scmp.eq.s32.totalorder %s30, 0
      %p496 = por %p494, %p495
      %p497 = scmp.ne.s32.totalorder %s486, %s489
      %p498 = scmp.eq.s32.totalorder %s35, 1
      %p499 = por %p497, %p498
      %p500 = scmp.ne.s32.totalorder %s489, %s490
      %p501 = scmp.eq.s32.totalorder %s35, 0
      %p502 = por %p500, %p501
      %p503 = scmp.ne.s32.totalorder %s489, %s490
      %p504 = scmp.eq.s32.totalorder %s36, 1
      %p505 = por %p503, %p504
      %p507 = scmp.ne.s32.totalorder %s490, %s506
      %p508 = scmp.eq.s32.totalorder %s36, 0
      %p509 = por %p507, %p508
      %p510 = scmp.le.s32.totalorder 1, %s30
      %p511 = scmp.lt.s32.totalorder %s30, 3
      %p512 = pnand %p510, %p511
      %p513 = pneg %p512
      // Predicated region
      $region9: #{forward.1} parent=5 // pred_check
        _
      $region10: #{forward.1} parent=5 // pred_check_branch
        %515 = sbr.rel (%p512) target = $region12
      $region11: #{forward.1} parent=5 // pred_region
        %s516 = ssub.s32 %s30, 1
        // Predicated region
        $region13: #{forward.1} parent=11 // pred_check
          %p517 = pneg %p77
        $region14: #{forward.1} parent=11 // pred_check_branch
          %519 = sbr.rel (%p517) target = $region16
        $region15: #{forward.1} parent=11 // pred_region
          _
        $region16: #{forward.1} parent=11 // pred_fallthru
          _
        // Predicated region
        $region17: #{forward.1} parent=11 // pred_check
          %p520 = pneg %p98
        $region18: #{forward.1} parent=11 // pred_check_branch
          %522 = sbr.rel (%p520) target = $region20
        $region19: #{forward.1} parent=11 // pred_region
          _
        $region20: #{forward.1} parent=11 // pred_fallthru
          _
        // Predicated region
        $region21: #{forward.1} parent=11 // pred_check
          %p523 = pneg %p119
        $region22: #{forward.1} parent=11 // pred_check_branch
          %525 = sbr.rel (%p523) target = $region24
        $region23: #{forward.1} parent=11 // pred_region
          _
        $region24: #{forward.1} parent=11 // pred_fallthru
          _
        // Predicated region
        $region25: #{forward.1} parent=11 // pred_check
          %p526 = pneg %p140
        $region26: #{forward.1} parent=11 // pred_check_branch
          %528 = sbr.rel (%p526) target = $region28
        $region27: #{forward.1} parent=11 // pred_region
          _
        $region28: #{forward.1} parent=11 // pred_fallthru
          _
        // Predicated region
        $region29: #{forward.1} parent=11 // pred_check
          %p529 = pneg %p161
        $region30: #{forward.1} parent=11 // pred_check_branch
          %531 = sbr.rel (%p529) target = $region32
        $region31: #{forward.1} parent=11 // pred_region
          _
        $region32: #{forward.1} parent=11 // pred_fallthru
          _
        // Predicated region
        $region33: #{forward.1} parent=11 // pred_check
          %p532 = pneg %p182
        $region34: #{forward.1} parent=11 // pred_check_branch
          %534 = sbr.rel (%p532) target = $region36
        $region35: #{forward.1} parent=11 // pred_region
          _
        $region36: #{forward.1} parent=11 // pred_fallthru
          _
        // Predicated region
        $region37: #{forward.1} parent=11 // pred_check
          %p535 = pneg %p203
        $region38: #{forward.1} parent=11 // pred_check_branch
          %537 = sbr.rel (%p535) target = $region40
        $region39: #{forward.1} parent=11 // pred_region
          _
        $region40: #{forward.1} parent=11 // pred_fallthru
          _
        // Predicated region
        $region41: #{forward.1} parent=11 // pred_check
          %p538 = pneg %p224
        $region42: #{forward.1} parent=11 // pred_check_branch
          %540 = sbr.rel (%p538) target = $region44
        $region43: #{forward.1} parent=11 // pred_region
          _
        $region44: #{forward.1} parent=11 // pred_fallthru
          _
        // Predicated region
        $region45: #{forward.1} parent=11 // pred_check
          %p541 = pneg %p245
        $region46: #{forward.1} parent=11 // pred_check_branch
          %543 = sbr.rel (%p541) target = $region48
        $region47: #{forward.1} parent=11 // pred_region
          _
        $region48: #{forward.1} parent=11 // pred_fallthru
          _
        // Predicated region
        $region49: #{forward.1} parent=11 // pred_check
          %p544 = pneg %p266
        $region50: #{forward.1} parent=11 // pred_check_branch
          %546 = sbr.rel (%p544) target = $region52
        $region51: #{forward.1} parent=11 // pred_region
          _
        $region52: #{forward.1} parent=11 // pred_fallthru
          _
        // Predicated region
        $region53: #{forward.1} parent=11 // pred_check
          %p547 = pneg %p287
        $region54: #{forward.1} parent=11 // pred_check_branch
          %549 = sbr.rel (%p547) target = $region56
        $region55: #{forward.1} parent=11 // pred_region
          _
        $region56: #{forward.1} parent=11 // pred_fallthru
          _
        // Predicated region
        $region57: #{forward.1} parent=11 // pred_check
          %p550 = pneg %p308
        $region58: #{forward.1} parent=11 // pred_check_branch
          %552 = sbr.rel (%p550) target = $region60
        $region59: #{forward.1} parent=11 // pred_region
          _
        $region60: #{forward.1} parent=11 // pred_fallthru
          _
        // Predicated region
        $region61: #{forward.1} parent=11 // pred_check
          %p553 = pneg %p329
        $region62: #{forward.1} parent=11 // pred_check_branch
          %555 = sbr.rel (%p553) target = $region64
        $region63: #{forward.1} parent=11 // pred_region
          _
        $region64: #{forward.1} parent=11 // pred_fallthru
          _
        // Predicated region
        $region65: #{forward.1} parent=11 // pred_check
          %p556 = pneg %p350
        $region66: #{forward.1} parent=11 // pred_check_branch
          %558 = sbr.rel (%p556) target = $region68
        $region67: #{forward.1} parent=11 // pred_region
          _
        $region68: #{forward.1} parent=11 // pred_fallthru
          _
        // Predicated region
        $region69: #{forward.1} parent=11 // pred_check
          %p559 = pneg %p371
        $region70: #{forward.1} parent=11 // pred_check_branch
          %561 = sbr.rel (%p559) target = $region72
        $region71: #{forward.1} parent=11 // pred_region
          _
        $region72: #{forward.1} parent=11 // pred_fallthru
          _
        // Predicated region
        $region73: #{forward.1} parent=11 // pred_check
          %p562 = pneg %p392
        $region74: #{forward.1} parent=11 // pred_check_branch
          %564 = sbr.rel (%p562) target = $region76
        $region75: #{forward.1} parent=11 // pred_region
          _
        $region76: #{forward.1} parent=11 // pred_fallthru
          _
        // Predicated region
        $region77: #{forward.1} parent=11 // pred_check
          %p565 = pneg %p413
        $region78: #{forward.1} parent=11 // pred_check_branch
          %567 = sbr.rel (%p565) target = $region80
        $region79: #{forward.1} parent=11 // pred_region
          _
        $region80: #{forward.1} parent=11 // pred_fallthru
          _
        // Predicated region
        $region81: #{forward.1} parent=11 // pred_check
          %p568 = pneg %p434
        $region82: #{forward.1} parent=11 // pred_check_branch
          %570 = sbr.rel (%p568) target = $region84
        $region83: #{forward.1} parent=11 // pred_region
          _
        $region84: #{forward.1} parent=11 // pred_fallthru
          _
        // Predicated region
        $region85: #{forward.1} parent=11 // pred_check
          %p571 = pneg %p455
        $region86: #{forward.1} parent=11 // pred_check_branch
          %573 = sbr.rel (%p571) target = $region88
        $region87: #{forward.1} parent=11 // pred_region
          _
        $region88: #{forward.1} parent=11 // pred_fallthru
          _
        // Predicated region
        $region89: #{forward.1} parent=11 // pred_check
          %p574 = pneg %p476
        $region90: #{forward.1} parent=11 // pred_check_branch
          %576 = sbr.rel (%p574) target = $region92
        $region91: #{forward.1} parent=11 // pred_region
          _
        $region92: #{forward.1} parent=11 // pred_fallthru
          _
      $region12: #{forward.1} parent=5 // pred_fallthru
        _
      %p577 = scmp.lt.s32.totalorder %s30, 2
      // Predicated region
      $region93: #{forward.1} parent=5 // pred_check
        %p578 = pneg %p577
      $region94: #{forward.1} parent=5 // pred_check_branch
        %580 = sbr.rel (%p578) target = $region96
      $region95: #{forward.1} parent=5 // pred_region
        // Predicated region
        $region97: #{forward.1} parent=95 // pred_check
          %p581 = pneg %p50
        $region98: #{forward.1} parent=95 // pred_check_branch
          %583 = sbr.rel (%p581) target = $region100
        $region99: #{forward.1} parent=95 // pred_region
          %p584 = scmp.lt.s32.totalorder %s30, 1
          %s585 = scalar_select %p584, %s30, 1
          %s586 = smul.addr %s585, 32
          %s587 = smul.addr %s586, 8
          %s588 = scalar_lea.vmem %s0, %s587
        $region100: #{forward.1} parent=95 // pred_fallthru
          _
      $region96: #{forward.1} parent=5 // pred_fallthru
        _
      %p589 = scmp.le.s32.totalorder 1, %s30
      %p590 = scmp.lt.s32.totalorder %s30, 3
      %p591 = pnand %p589, %p590
      %p592 = pneg %p591
      // Predicated region
      $region101: #{forward.1} parent=5 // pred_check
        _
      $region102: #{forward.1} parent=5 // pred_check_branch
        %594 = sbr.rel (%p591) target = $region104
      $region103: #{forward.1} parent=5 // pred_region
        %s595 = ssub.s32 %s30, 1
        %p596 = scmp.lt.s32.totalorder %s35, 1
        %s597 = scalar_select %p596, %s35, 1
        %s598 = smul.addr %s597, 32
        %s599 = smul.addr %s598, 8
        %s600 = scalar_lea.vmem %s0, %s599
        %p601 = pneg %p56
        %p602 = pneg %p53
        %p603 = pneg %p77
        %p604 = pneg %p74
        %p605 = pneg %p98
        %p606 = pneg %p95
        %p607 = pneg %p119
        %p608 = pneg %p116
        %p609 = pneg %p140
        %p610 = pneg %p137
        %p611 = pneg %p161
        %p612 = pneg %p158
        %p613 = pneg %p182
        %p614 = pneg %p179
        %p615 = pneg %p203
        %p616 = pneg %p200
        %p617 = pneg %p224
        %p618 = pneg %p221
        %p619 = pneg %p245
        %p620 = pneg %p242
        %p621 = pneg %p266
        %p622 = pneg %p263
        %p623 = pneg %p287
        %p624 = pneg %p284
        %p625 = pneg %p308
        %p626 = pneg %p305
        %p627 = pneg %p329
        %p628 = pneg %p326
        %p629 = pneg %p350
        %p630 = pneg %p347
        %p631 = pneg %p371
        %p632 = pneg %p368
        %p633 = pneg %p392
        %p634 = pneg %p389
        %p635 = pneg %p413
        %p636 = pneg %p410
        %p637 = pneg %p434
        %p638 = pneg %p431
        %p639 = pneg %p455
        %p640 = pneg %p452
        %p641 = pneg %p476
        %p642 = pneg %p473
        %p643 = pneg %p502
        %p644 = pneg %p499
        %s645 = sand.u32 %s489, 1
        %s646 = scalar_lea.sflag [#allocation3], %s645
        %s647 = sand.u32 %s489, 1
        %s648 = scalar_lea.vmem [#allocation2], %s647
        %p649 = scmp.lt.s32.totalorder %s35, 1
        %s650 = scalar_select %p649, %s35, 1
        %s651 = smul.addr %s650, 32
        %s652 = smul.addr %s651, 8
        %s653 = scalar_lea.vmem %s0, %s652
        %v655 = vld [vmem:[%s653] sm:$0xff]
        %v656 = vld [vmem:[%s653 + $0x8] sm:$0xff]
        %v657 = vld [vmem:[%s653 + $0x10] sm:$0xff]
        %v658 = vld [vmem:[%s653 + $0x18] sm:$0xff]
        %v659 = vld [vmem:[%s653 + $0x20] sm:$0xff]
        %v660 = vld [vmem:[%s653 + $0x28] sm:$0xff]
        %v661 = vld [vmem:[%s653 + $0x30] sm:$0xff]
        %v662 = vld [vmem:[%s653 + $0x38] sm:$0xff]
        %v663 = vld [vmem:[%s653 + $0x40] sm:$0xff]
        %v664 = vld [vmem:[%s653 + $0x48] sm:$0xff]
        %v665 = vld [vmem:[%s653 + $0x50] sm:$0xff]
        %v666 = vld [vmem:[%s653 + $0x58] sm:$0xff]
        %v667 = vld [vmem:[%s653 + $0x60] sm:$0xff]
        %v668 = vld [vmem:[%s653 + $0x68] sm:$0xff]
        %v669 = vld [vmem:[%s653 + $0x70] sm:$0xff]
        %v670 = vld [vmem:[%s653 + $0x78] sm:$0xff]
        %v671 = vld [vmem:[%s653 + $0x80] sm:$0xff]
        %v672 = vld [vmem:[%s653 + $0x88] sm:$0xff]
        %v673 = vld [vmem:[%s653 + $0x90] sm:$0xff]
        %v674 = vld [vmem:[%s653 + $0x98] sm:$0xff]
        %v675 = vld [vmem:[%s653 + $0xa0] sm:$0xff]
        %v676 = vld [vmem:[%s653 + $0xa8] sm:$0xff]
        %v677 = vld [vmem:[%s653 + $0xb0] sm:$0xff]
        %v678 = vld [vmem:[%s653 + $0xb8] sm:$0xff]
        %v679 = vld [vmem:[%s653 + $0xc0] sm:$0xff]
        %v680 = vld [vmem:[%s653 + $0xc8] sm:$0xff]
        %v681 = vld [vmem:[%s653 + $0xd0] sm:$0xff]
        %v682 = vld [vmem:[%s653 + $0xd8] sm:$0xff]
        %v683 = vld [vmem:[%s653 + $0xe0] sm:$0xff]
        %v684 = vld [vmem:[%s653 + $0xe8] sm:$0xff]
        %v685 = vld [vmem:[%s653 + $0xf0] sm:$0xff]
        %v686 = vld [vmem:[%s653 + $0xf8] sm:$0xff]
        %v687 = vpack.c.bf16 %v656, %v655
        %v688 = vpack.c.bf16 %v658, %v657
        %v689 = vpack.c.bf16 %v660, %v659
        %v690 = vpack.c.bf16 %v662, %v661
        %v691 = vpack.c.bf16 %v664, %v663
        %v692 = vpack.c.bf16 %v666, %v665
        %v693 = vpack.c.bf16 %v668, %v667
        %v694 = vpack.c.bf16 %v670, %v669
        %v695 = vpack.c.bf16 %v672, %v671
        %v696 = vpack.c.bf16 %v674, %v673
        %v697 = vpack.c.bf16 %v676, %v675
        %v698 = vpack.c.bf16 %v678, %v677
        %v699 = vpack.c.bf16 %v680, %v679
        %v700 = vpack.c.bf16 %v682, %v681
        %v701 = vpack.c.bf16 %v684, %v683
        %v702 = vpack.c.bf16 %v686, %v685
        %v703 = vld [vmem:[%s1] sm:$0xf]
        %v704 = vld [vmem:[%s2] sm:$0x1]
        %v706 = vlaneseq
        %v707 = vshrl.u32 %v706, 7
        %v708 = vsub.s32 0, %v707
        %v709 = vrot.slane %v704, %v708
        %vm711 = vcmask 64512
        %v713 = vsel %vm711, %v687, 0
        %v716 = vsel %vm711, %v688, 0
        %v719 = vsel %vm711, %v689, 0
        %v722 = vsel %vm711, %v690, 0
        %v725 = vsel %vm711, %v691, 0
        %v728 = vsel %vm711, %v692, 0
        %v731 = vsel %vm711, %v693, 0
        %v734 = vsel %vm711, %v694, 0
        %v737 = vsel %vm711, %v695, 0
        %v740 = vsel %vm711, %v696, 0
        %v743 = vsel %vm711, %v697, 0
        %v746 = vsel %vm711, %v698, 0
        %v749 = vsel %vm711, %v699, 0
        %v752 = vsel %vm711, %v700, 0
        %v755 = vsel %vm711, %v701, 0
        %v758 = vsel %vm711, %v702, 0
        %vm760 = vcmask 1043456
        %v762 = vsel %vm760, %v703, 0
        %764 = vmatprep.subr.bf16.mxu0 0
        %765 = vmatpush1.bf16.msra.mxu0 0
        %766 = vmatprep.subr.bf16.mxu0 0
        %767 = vmatpush1.bf16.msra.mxu0 0
        %768 = vmatprep.subr.bf16.mxu0 0
        %769 = vmatpush1.bf16.msra.mxu0 0
        %770 = vmatprep.subr.bf16.mxu0 0
        %771 = vmatpush1.bf16.msra.mxu0 0
        %772 = vmatprep.subr.bf16.mxu0 0
        %773 = vmatpush1.bf16.msra.mxu0 0
        %774 = vmatprep.subr.bf16.mxu0 0
        %775 = vmatpush1.bf16.msra.mxu0 0
        %776 = vmatprep.subr.bf16.mxu0 0
        %777 = vmatpush1.bf16.msra.mxu0 0
        %778 = vmatprep.subr.bf16.mxu0 0
        %779 = vmatpush1.bf16.msra.mxu0 %v762
        %780 = vmatprep.subr.bf16.mxu0 0
        %781 = vmatpush2.bf16.msra.mxu0 0
        %782 = vmatprep.subr.bf16.mxu0 0
        %783 = vmatpush2.bf16.msra.mxu0 0
        %784 = vmatprep.subr.bf16.mxu0 0
        %785 = vmatpush2.bf16.msra.mxu0 0
        %786 = vmatprep.subr.bf16.mxu0 0
        %787 = vmatpush2.bf16.msra.mxu0 0
        %788 = vmatprep.subr.bf16.mxu0 0
        %789 = vmatpush2.bf16.msra.mxu0 0
        %790 = vmatprep.subr.bf16.mxu0 0
        %791 = vmatpush2.bf16.msra.mxu0 0
        %792 = vmatprep.subr.bf16.mxu0 0
        %793 = vmatpush2.bf16.msra.mxu0 0
        %794 = vmatprep.subr.bf16.mxu0 0
        %795 = vmatpush2.bf16.msra.mxu0 0
        %796 = vmatprep.mubr.bf16.mxu0 0
        %797 = vmatmul.mubr.bf16.gmra.mxu0 %v713
        %v798 = vpop.f32.mrf.mxu0
        %v799 = vadd.f32 %v709, %v798
        %v800 = vpop.f32.mrf.mxu0
        %v801 = vpop.f32.mrf.mxu0
        %v802 = vadd.f32 %v709, %v801
        %v803 = vpop.f32.mrf.mxu0
        %804 = vmatprep.mubr.bf16.mxu0 0
        %805 = vmatmul.mubr.bf16.gmra.mxu0 %v716
        %v806 = vpop.f32.mrf.mxu0
        %v807 = vadd.f32 %v709, %v806
        %v808 = vpop.f32.mrf.mxu0
        %v809 = vpop.f32.mrf.mxu0
        %v810 = vadd.f32 %v709, %v809
        %v811 = vpop.f32.mrf.mxu0
        %812 = vmatprep.mubr.bf16.mxu0 0
        %813 = vmatmul.mubr.bf16.gmra.mxu0 %v719
        %v814 = vpop.f32.mrf.mxu0
        %v815 = vadd.f32 %v709, %v814
        %v816 = vpop.f32.mrf.mxu0
        %v817 = vpop.f32.mrf.mxu0
        %v818 = vadd.f32 %v709, %v817
        %v819 = vpop.f32.mrf.mxu0
        %820 = vmatprep.mubr.bf16.mxu0 0
        %821 = vmatmul.mubr.bf16.gmra.mxu0 %v722
        %v822 = vpop.f32.mrf.mxu0
        %v823 = vadd.f32 %v709, %v822
        %v824 = vpop.f32.mrf.mxu0
        %v825 = vpop.f32.mrf.mxu0
        %v826 = vadd.f32 %v709, %v825
        %v827 = vpop.f32.mrf.mxu0
        %828 = vmatprep.mubr.bf16.mxu0 0
        %829 = vmatmul.mubr.bf16.gmra.mxu0 %v725
        %v830 = vpop.f32.mrf.mxu0
        %v831 = vadd.f32 %v709, %v830
        %v832 = vpop.f32.mrf.mxu0
        %v833 = vpop.f32.mrf.mxu0
        %v834 = vadd.f32 %v709, %v833
        %v835 = vpop.f32.mrf.mxu0
        %836 = vmatprep.mubr.bf16.mxu0 0
        %837 = vmatmul.mubr.bf16.gmra.mxu0 %v728
        %v838 = vpop.f32.mrf.mxu0
        %v839 = vadd.f32 %v709, %v838
        %v840 = vpop.f32.mrf.mxu0
        %v841 = vpop.f32.mrf.mxu0
        %v842 = vadd.f32 %v709, %v841
        %v843 = vpop.f32.mrf.mxu0
        %844 = vmatprep.mubr.bf16.mxu0 0
        %845 = vmatmul.mubr.bf16.gmra.mxu0 %v731
        %v846 = vpop.f32.mrf.mxu0
        %v847 = vadd.f32 %v709, %v846
        %v848 = vpop.f32.mrf.mxu0
        %v849 = vpop.f32.mrf.mxu0
        %v850 = vadd.f32 %v709, %v849
        %v851 = vpop.f32.mrf.mxu0
        %852 = vmatprep.mubr.bf16.mxu0 0
        %853 = vmatmul.mubr.bf16.gmra.mxu0 %v734
        %v854 = vpop.f32.mrf.mxu0
        %v855 = vadd.f32 %v709, %v854
        %v856 = vpop.f32.mrf.mxu0
        %v857 = vpop.f32.mrf.mxu0
        %v858 = vadd.f32 %v709, %v857
        %v859 = vpop.f32.mrf.mxu0
        %860 = vmatprep.mubr.bf16.mxu0 0
        %861 = vmatmul.mubr.bf16.gmra.mxu0 %v737
        %v862 = vpop.f32.mrf.mxu0
        %v863 = vadd.f32 %v709, %v862
        %v864 = vpop.f32.mrf.mxu0
        %v865 = vpop.f32.mrf.mxu0
        %v866 = vadd.f32 %v709, %v865
        %v867 = vpop.f32.mrf.mxu0
        %868 = vmatprep.mubr.bf16.mxu0 0
        %869 = vmatmul.mubr.bf16.gmra.mxu0 %v740
        %v870 = vpop.f32.mrf.mxu0
        %v871 = vadd.f32 %v709, %v870
        %v872 = vpop.f32.mrf.mxu0
        %v873 = vpop.f32.mrf.mxu0
        %v874 = vadd.f32 %v709, %v873
        %v875 = vpop.f32.mrf.mxu0
        %876 = vmatprep.mubr.bf16.mxu0 0
        %877 = vmatmul.mubr.bf16.gmra.mxu0 %v743
        %v878 = vpop.f32.mrf.mxu0
        %v879 = vadd.f32 %v709, %v878
        %v880 = vpop.f32.mrf.mxu0
        %v881 = vpop.f32.mrf.mxu0
        %v882 = vadd.f32 %v709, %v881
        %v883 = vpop.f32.mrf.mxu0
        %884 = vmatprep.mubr.bf16.mxu0 0
        %885 = vmatmul.mubr.bf16.gmra.mxu0 %v746
        %v886 = vpop.f32.mrf.mxu0
        %v887 = vadd.f32 %v709, %v886
        %v888 = vpop.f32.mrf.mxu0
        %v889 = vpop.f32.mrf.mxu0
        %v890 = vadd.f32 %v709, %v889
        %v891 = vpop.f32.mrf.mxu0
        %892 = vmatprep.mubr.bf16.mxu0 0
        %893 = vmatmul.mubr.bf16.gmra.mxu0 %v749
        %v894 = vpop.f32.mrf.mxu0
        %v895 = vadd.f32 %v709, %v894
        %v896 = vpop.f32.mrf.mxu0
        %v897 = vpop.f32.mrf.mxu0
        %v898 = vadd.f32 %v709, %v897
        %v899 = vpop.f32.mrf.mxu0
        %900 = vmatprep.mubr.bf16.mxu0 0
        %901 = vmatmul.mubr.bf16.gmra.mxu0 %v752
        %v902 = vpop.f32.mrf.mxu0
        %v903 = vadd.f32 %v709, %v902
        %v904 = vpop.f32.mrf.mxu0
        %v905 = vpop.f32.mrf.mxu0
        %v906 = vadd.f32 %v709, %v905
        %v907 = vpop.f32.mrf.mxu0
        %908 = vmatprep.mubr.bf16.mxu0 0
        %909 = vmatmul.mubr.bf16.gmra.mxu0 %v755
        %v910 = vpop.f32.mrf.mxu0
        %v911 = vadd.f32 %v709, %v910
        %v912 = vpop.f32.mrf.mxu0
        %v913 = vpop.f32.mrf.mxu0
        %v914 = vadd.f32 %v709, %v913
        %v915 = vpop.f32.mrf.mxu0
        %916 = vmatprep.mubr.bf16.mxu0 0
        %917 = vmatmul.mubr.bf16.gmra.mxu0 %v758
        %v918 = vpop.f32.mrf.mxu0
        %v919 = vadd.f32 %v709, %v918
        %v920 = vpop.f32.mrf.mxu0
        %v921 = vpop.f32.mrf.mxu0
        %v922 = vadd.f32 %v709, %v921
        %v923 = vpop.f32.mrf.mxu0
        %924 = vdwg.mxu0
        %v925 = vld [vmem:[%s3] sm:$0xf]
        %v926 = vld [vmem:[%s3 + $0x4] sm:$0xf]
        %v927 = vld [vmem:[%s3 + $0x8] sm:$0xf]
        %v928 = vld [vmem:[%s3 + $0xc] sm:$0xf]
        %v929 = vld [vmem:[%s3 + $0x10] sm:$0xf]
        %v930 = vld [vmem:[%s3 + $0x14] sm:$0xf]
        %v931 = vld [vmem:[%s3 + $0x18] sm:$0xf]
        %v932 = vld [vmem:[%s3 + $0x1c] sm:$0xf]
        %v933 = vld [vmem:[%s3 + $0x20] sm:$0xf]
        %v934 = vld [vmem:[%s3 + $0x24] sm:$0xf]
        %v935 = vld [vmem:[%s3 + $0x28] sm:$0xf]
        %v936 = vld [vmem:[%s3 + $0x2c] sm:$0xf]
        %v937 = vld [vmem:[%s3 + $0x30] sm:$0xf]
        %v938 = vld [vmem:[%s3 + $0x34] sm:$0xf]
        %v939 = vld [vmem:[%s3 + $0x38] sm:$0xf]
        %v940 = vld [vmem:[%s3 + $0x3c] sm:$0xf]
        %v941 = vld [vmem:[%s3 + $0x40] sm:$0xf]
        %v942 = vld [vmem:[%s3 + $0x44] sm:$0xf]
        %v943 = vld [vmem:[%s4] sm:$0x1]
        %vm976 = vcmask 1040384
        %v977 = vrot.slane %v799, 7
        %v978 = vrot.slane %v802, 7
        %v979 = vsel %vm976, %v977, %v978
        %v980 = vrot.slane %v807, 7
        %v981 = vrot.slane %v810, 7
        %v982 = vsel %vm976, %v980, %v981
        %v983 = vrot.slane %v815, 7
        %v984 = vrot.slane %v818, 7
        %v985 = vsel %vm976, %v983, %v984
        %v986 = vrot.slane %v823, 7
        %v987 = vrot.slane %v826, 7
        %v988 = vsel %vm976, %v986, %v987
        %v989 = vrot.slane %v831, 7
        %v990 = vrot.slane %v834, 7
        %v991 = vsel %vm976, %v989, %v990
        %v992 = vrot.slane %v839, 7
        %v993 = vrot.slane %v842, 7
        %v994 = vsel %vm976, %v992, %v993
        %v995 = vrot.slane %v847, 7
        %v996 = vrot.slane %v850, 7
        %v997 = vsel %vm976, %v995, %v996
        %v998 = vrot.slane %v855, 7
        %v999 = vrot.slane %v858, 7
        %v1000 = vsel %vm976, %v998, %v999
        %v1001 = vrot.slane %v863, 7
        %v1002 = vrot.slane %v866, 7
        %v1003 = vsel %vm976, %v1001, %v1002
        %v1004 = vrot.slane %v871, 7
        %v1005 = vrot.slane %v874, 7
        %v1006 = vsel %vm976, %v1004, %v1005
        %v1007 = vrot.slane %v879, 7
        %v1008 = vrot.slane %v882, 7
        %v1009 = vsel %vm976, %v1007, %v1008
        %v1010 = vrot.slane %v887, 7
        %v1011 = vrot.slane %v890, 7
        %v1012 = vsel %vm976, %v1010, %v1011
        %v1013 = vrot.slane %v895, 7
        %v1014 = vrot.slane %v898, 7
        %v1015 = vsel %vm976, %v1013, %v1014
        %v1016 = vrot.slane %v903, 7
        %v1017 = vrot.slane %v906, 7
        %v1018 = vsel %vm976, %v1016, %v1017
        %v1019 = vrot.slane %v911, 7
        %v1020 = vrot.slane %v914, 7
        %v1021 = vsel %vm976, %v1019, %v1020
        %v1022 = vrot.slane %v919, 7
        %v1023 = vrot.slane %v922, 7
        %v1024 = vsel %vm976, %v1022, %v1023
        %1025 = vrot.lane.b32.xlu0 %v977, 96
        %v1026 = vpop.permute.xlu0 %1025
        %1027 = vrot.lane.b32.xlu0 %v979, 96
        %v1028 = vpop.permute.xlu0 %1027
        %1029 = vrot.lane.b32.xlu0 %v980, 96
        %v1030 = vpop.permute.xlu0 %1029
        %1031 = vrot.lane.b32.xlu0 %v982, 96
        %v1032 = vpop.permute.xlu0 %1031
        %1033 = vrot.lane.b32.xlu0 %v983, 96
        %v1034 = vpop.permute.xlu0 %1033
        %1035 = vrot.lane.b32.xlu0 %v985, 96
        %v1036 = vpop.permute.xlu0 %1035
        %1037 = vrot.lane.b32.xlu0 %v986, 96
        %v1038 = vpop.permute.xlu0 %1037
        %1039 = vrot.lane.b32.xlu0 %v988, 96
        %v1040 = vpop.permute.xlu0 %1039
        %1041 = vrot.lane.b32.xlu0 %v989, 96
        %v1042 = vpop.permute.xlu0 %1041
        %1043 = vrot.lane.b32.xlu0 %v991, 96
        %v1044 = vpop.permute.xlu0 %1043
        %1045 = vrot.lane.b32.xlu0 %v992, 96
        %v1046 = vpop.permute.xlu0 %1045
        %1047 = vrot.lane.b32.xlu0 %v994, 96
        %v1048 = vpop.permute.xlu0 %1047
        %1049 = vrot.lane.b32.xlu0 %v995, 96
        %v1050 = vpop.permute.xlu0 %1049
        %1051 = vrot.lane.b32.xlu0 %v997, 96
        %v1052 = vpop.permute.xlu0 %1051
        %1053 = vrot.lane.b32.xlu0 %v998, 96
        %v1054 = vpop.permute.xlu0 %1053
        %1055 = vrot.lane.b32.xlu0 %v1000, 96
        %v1056 = vpop.permute.xlu0 %1055
        %1057 = vrot.lane.b32.xlu0 %v1001, 96
        %v1058 = vpop.permute.xlu0 %1057
        %1059 = vrot.lane.b32.xlu0 %v1003, 96
        %v1060 = vpop.permute.xlu0 %1059
        %1061 = vrot.lane.b32.xlu0 %v1004, 96
        %v1062 = vpop.permute.xlu0 %1061
        %1063 = vrot.lane.b32.xlu0 %v1006, 96
        %v1064 = vpop.permute.xlu0 %1063
        %1065 = vrot.lane.b32.xlu0 %v1007, 96
        %v1066 = vpop.permute.xlu0 %1065
        %1067 = vrot.lane.b32.xlu0 %v1009, 96
        %v1068 = vpop.permute.xlu0 %1067
        %1069 = vrot.lane.b32.xlu0 %v1010, 96
        %v1070 = vpop.permute.xlu0 %1069
        %1071 = vrot.lane.b32.xlu0 %v1012, 96
        %v1072 = vpop.permute.xlu0 %1071
        %1073 = vrot.lane.b32.xlu0 %v1013, 96
        %v1074 = vpop.permute.xlu0 %1073
        %1075 = vrot.lane.b32.xlu0 %v1015, 96
        %v1076 = vpop.permute.xlu0 %1075
        %1077 = vrot.lane.b32.xlu0 %v1016, 96
        %v1078 = vpop.permute.xlu0 %1077
        %1079 = vrot.lane.b32.xlu0 %v1018, 96
        %v1080 = vpop.permute.xlu0 %1079
        %1081 = vrot.lane.b32.xlu0 %v1019, 96
        %v1082 = vpop.permute.xlu0 %1081
        %1083 = vrot.lane.b32.xlu0 %v1021, 96
        %v1084 = vpop.permute.xlu0 %1083
        %1085 = vrot.lane.b32.xlu0 %v1022, 96
        %v1086 = vpop.permute.xlu0 %1085
        %1087 = vrot.lane.b32.xlu0 %v1024, 96
        %v1088 = vpop.permute.xlu0 %1087
        %v1120 = vsel %vm976, 0.0, %v1026
        %v1121 = vsel %vm976, 0.0, %v1030
        %v1122 = vsel %vm976, 0.0, %v1034
        %v1123 = vsel %vm976, 0.0, %v1038
        %v1124 = vsel %vm976, 0.0, %v1042
        %v1125 = vsel %vm976, 0.0, %v1046
        %v1126 = vsel %vm976, 0.0, %v1050
        %v1127 = vsel %vm976, 0.0, %v1054
        %v1128 = vsel %vm976, 0.0, %v1058
        %v1129 = vsel %vm976, 0.0, %v1062
        %v1130 = vsel %vm976, 0.0, %v1066
        %v1131 = vsel %vm976, 0.0, %v1070
        %v1132 = vsel %vm976, 0.0, %v1074
        %v1133 = vsel %vm976, 0.0, %v1078
        %v1134 = vsel %vm976, 0.0, %v1082
        %v1135 = vsel %vm976, 0.0, %v1086
        %vm1136 = vcmask 1046528
        %v1137 = vrot.slane %v799, 1
        %v1138 = vrot.slane %v802, 1
        %v1139 = vsel %vm1136, %v1137, %v1138
        %v1140 = vrot.slane %v807, 1
        %v1141 = vrot.slane %v810, 1
        %v1142 = vsel %vm1136, %v1140, %v1141
        %v1143 = vrot.slane %v815, 1
        %v1144 = vrot.slane %v818, 1
        %v1145 = vsel %vm1136, %v1143, %v1144
        %v1146 = vrot.slane %v823, 1
        %v1147 = vrot.slane %v826, 1
        %v1148 = vsel %vm1136, %v1146, %v1147
        %v1149 = vrot.slane %v831, 1
        %v1150 = vrot.slane %v834, 1
        %v1151 = vsel %vm1136, %v1149, %v1150
        %v1152 = vrot.slane %v839, 1
        %v1153 = vrot.slane %v842, 1
        %v1154 = vsel %vm1136, %v1152, %v1153
        %v1155 = vrot.slane %v847, 1
        %v1156 = vrot.slane %v850, 1
        %v1157 = vsel %vm1136, %v1155, %v1156
        %v1158 = vrot.slane %v855, 1
        %v1159 = vrot.slane %v858, 1
        %v1160 = vsel %vm1136, %v1158, %v1159
        %v1161 = vrot.slane %v863, 1
        %v1162 = vrot.slane %v866, 1
        %v1163 = vsel %vm1136, %v1161, %v1162
        %v1164 = vrot.slane %v871, 1
        %v1165 = vrot.slane %v874, 1
        %v1166 = vsel %vm1136, %v1164, %v1165
        %v1167 = vrot.slane %v879, 1
        %v1168 = vrot.slane %v882, 1
        %v1169 = vsel %vm1136, %v1167, %v1168
        %v1170 = vrot.slane %v887, 1
        %v1171 = vrot.slane %v890, 1
        %v1172 = vsel %vm1136, %v1170, %v1171
        %v1173 = vrot.slane %v895, 1
        %v1174 = vrot.slane %v898, 1
        %v1175 = vsel %vm1136, %v1173, %v1174
        %v1176 = vrot.slane %v903, 1
        %v1177 = vrot.slane %v906, 1
        %v1178 = vsel %vm1136, %v1176, %v1177
        %v1179 = vrot.slane %v911, 1
        %v1180 = vrot.slane %v914, 1
        %v1181 = vsel %vm1136, %v1179, %v1180
        %v1182 = vrot.slane %v919, 1
        %v1183 = vrot.slane %v922, 1
        %v1184 = vsel %vm1136, %v1182, %v1183
        %v1216 = vsel %vm1136, %v1138, 0.0
        %v1217 = vsel %vm1136, %v1141, 0.0
        %v1218 = vsel %vm1136, %v1144, 0.0
        %v1219 = vsel %vm1136, %v1147, 0.0
        %v1220 = vsel %vm1136, %v1150, 0.0
        %v1221 = vsel %vm1136, %v1153, 0.0
        %v1222 = vsel %vm1136, %v1156, 0.0
        %v1223 = vsel %vm1136, %v1159, 0.0
        %v1224 = vsel %vm1136, %v1162, 0.0
        %v1225 = vsel %vm1136, %v1165, 0.0
        %v1226 = vsel %vm1136, %v1168, 0.0
        %v1227 = vsel %vm1136, %v1171, 0.0
        %v1228 = vsel %vm1136, %v1174, 0.0
        %v1229 = vsel %vm1136, %v1177, 0.0
        %v1230 = vsel %vm1136, %v1180, 0.0
        %v1231 = vsel %vm1136, %v1183, 0.0
        %1232 = vrot.lane.b32.xlu0 %v799, 96
        %v1233 = vpop.permute.xlu0 %1232
        %1234 = vrot.lane.b32.xlu0 %v802, 96
        %v1235 = vpop.permute.xlu0 %1234
        %1236 = vrot.lane.b32.xlu0 %v807, 96
        %v1237 = vpop.permute.xlu0 %1236
        %1238 = vrot.lane.b32.xlu0 %v810, 96
        %v1239 = vpop.permute.xlu0 %1238
        %1240 = vrot.lane.b32.xlu0 %v815, 96
        %v1241 = vpop.permute.xlu0 %1240
        %1242 = vrot.lane.b32.xlu0 %v818, 96
        %v1243 = vpop.permute.xlu0 %1242
        %1244 = vrot.lane.b32.xlu0 %v823, 96
        %v1245 = vpop.permute.xlu0 %1244
        %1246 = vrot.lane.b32.xlu0 %v826, 96
        %v1247 = vpop.permute.xlu0 %1246
        %1248 = vrot.lane.b32.xlu0 %v831, 96
        %v1249 = vpop.permute.xlu0 %1248
        %1250 = vrot.lane.b32.xlu0 %v834, 96
        %v1251 = vpop.permute.xlu0 %1250
        %1252 = vrot.lane.b32.xlu0 %v839, 96
        %v1253 = vpop.permute.xlu0 %1252
        %1254 = vrot.lane.b32.xlu0 %v842, 96
        %v1255 = vpop.permute.xlu0 %1254
        %1256 = vrot.lane.b32.xlu0 %v847, 96
        %v1257 = vpop.permute.xlu0 %1256
        %1258 = vrot.lane.b32.xlu0 %v850, 96
        %v1259 = vpop.permute.xlu0 %1258
        %1260 = vrot.lane.b32.xlu0 %v855, 96
        %v1261 = vpop.permute.xlu0 %1260
        %1262 = vrot.lane.b32.xlu0 %v858, 96
        %v1263 = vpop.permute.xlu0 %1262
        %1264 = vrot.lane.b32.xlu0 %v863, 96
        %v1265 = vpop.permute.xlu0 %1264
        %1266 = vrot.lane.b32.xlu0 %v866, 96
        %v1267 = vpop.permute.xlu0 %1266
        %1268 = vrot.lane.b32.xlu0 %v871, 96
        %v1269 = vpop.permute.xlu0 %1268
        %1270 = vrot.lane.b32.xlu0 %v874, 96
        %v1271 = vpop.permute.xlu0 %1270
        %1272 = vrot.lane.b32.xlu0 %v879, 96
        %v1273 = vpop.permute.xlu0 %1272
        %1274 = vrot.lane.b32.xlu0 %v882, 96
        %v1275 = vpop.permute.xlu0 %1274
        %1276 = vrot.lane.b32.xlu0 %v887, 96
        %v1277 = vpop.permute.xlu0 %1276
        %1278 = vrot.lane.b32.xlu0 %v890, 96
        %v1279 = vpop.permute.xlu0 %1278
        %1280 = vrot.lane.b32.xlu0 %v895, 96
        %v1281 = vpop.permute.xlu0 %1280
        %1282 = vrot.lane.b32.xlu0 %v898, 96
        %v1283 = vpop.permute.xlu0 %1282
        %1284 = vrot.lane.b32.xlu0 %v903, 96
        %v1285 = vpop.permute.xlu0 %1284
        %1286 = vrot.lane.b32.xlu0 %v906, 96
        %v1287 = vpop.permute.xlu0 %1286
        %1288 = vrot.lane.b32.xlu0 %v911, 96
        %v1289 = vpop.permute.xlu0 %1288
        %1290 = vrot.lane.b32.xlu0 %v914, 96
        %v1291 = vpop.permute.xlu0 %1290
        %1307 = vrot.lane.b32.xlu0 %v1139, 96
        %v1308 = vpop.permute.xlu0 %1307
        %1309 = vrot.lane.b32.xlu0 %v1216, 96
        %v1310 = vpop.permute.xlu0 %1309
        %1311 = vrot.lane.b32.xlu0 %v1142, 96
        %v1312 = vpop.permute.xlu0 %1311
        %1313 = vrot.lane.b32.xlu0 %v1217, 96
        %v1314 = vpop.permute.xlu0 %1313
        %1315 = vrot.lane.b32.xlu0 %v1145, 96
        %v1316 = vpop.permute.xlu0 %1315
        %1317 = vrot.lane.b32.xlu0 %v1218, 96
        %v1318 = vpop.permute.xlu0 %1317
        %1319 = vrot.lane.b32.xlu0 %v1148, 96
        %v1320 = vpop.permute.xlu0 %1319
        %1321 = vrot.lane.b32.xlu0 %v1219, 96
        %v1322 = vpop.permute.xlu0 %1321
        %1323 = vrot.lane.b32.xlu0 %v1151, 96
        %v1324 = vpop.permute.xlu0 %1323
        %1325 = vrot.lane.b32.xlu0 %v1220, 96
        %v1326 = vpop.permute.xlu0 %1325
        %1327 = vrot.lane.b32.xlu0 %v1154, 96
        %v1328 = vpop.permute.xlu0 %1327
        %1329 = vrot.lane.b32.xlu0 %v1221, 96
        %v1330 = vpop.permute.xlu0 %1329
        %1331 = vrot.lane.b32.xlu0 %v1157, 96
        %v1332 = vpop.permute.xlu0 %1331
        %1333 = vrot.lane.b32.xlu0 %v1222, 96
        %v1334 = vpop.permute.xlu0 %1333
        %1335 = vrot.lane.b32.xlu0 %v1160, 96
        %v1336 = vpop.permute.xlu0 %1335
        %1337 = vrot.lane.b32.xlu0 %v1223, 96
        %v1338 = vpop.permute.xlu0 %1337
        %1339 = vrot.lane.b32.xlu0 %v1163, 96
        %v1340 = vpop.permute.xlu0 %1339
        %1341 = vrot.lane.b32.xlu0 %v1224, 96
        %v1342 = vpop.permute.xlu0 %1341
        %1343 = vrot.lane.b32.xlu0 %v1166, 96
        %v1344 = vpop.permute.xlu0 %1343
        %1345 = vrot.lane.b32.xlu0 %v1225, 96
        %v1346 = vpop.permute.xlu0 %1345
        %1347 = vrot.lane.b32.xlu0 %v1169, 96
        %v1348 = vpop.permute.xlu0 %1347
        %1349 = vrot.lane.b32.xlu0 %v1226, 96
        %v1350 = vpop.permute.xlu0 %1349
        %1351 = vrot.lane.b32.xlu0 %v1172, 96
        %v1352 = vpop.permute.xlu0 %1351
        %1353 = vrot.lane.b32.xlu0 %v1227, 96
        %v1354 = vpop.permute.xlu0 %1353
        %1355 = vrot.lane.b32.xlu0 %v1175, 96
        %v1356 = vpop.permute.xlu0 %1355
        %1357 = vrot.lane.b32.xlu0 %v1228, 96
        %v1358 = vpop.permute.xlu0 %1357
        %1359 = vrot.lane.b32.xlu0 %v1178, 96
        %v1360 = vpop.permute.xlu0 %1359
        %1361 = vrot.lane.b32.xlu0 %v1229, 96
        %v1362 = vpop.permute.xlu0 %1361
        %1363 = vrot.lane.b32.xlu0 %v1181, 96
        %v1364 = vpop.permute.xlu0 %1363
        %1365 = vrot.lane.b32.xlu0 %v1230, 96
        %v1366 = vpop.permute.xlu0 %1365
        %1368 = vrot.lane.b32.xlu0 0.0, 16
        %v1369 = vpop.permute.xlu0 %1368
        %1370 = vrot.lane.b32.xlu0 %v1233, 16
        %v1371 = vpop.permute.xlu0 %1370
        %1372 = vrot.lane.b32.xlu0 %v1235, 16
        %v1373 = vpop.permute.xlu0 %1372
        %1374 = vrot.lane.b32.xlu0 %v1237, 16
        %v1375 = vpop.permute.xlu0 %1374
        %1376 = vrot.lane.b32.xlu0 %v1239, 16
        %v1377 = vpop.permute.xlu0 %1376
        %1378 = vrot.lane.b32.xlu0 %v1241, 16
        %v1379 = vpop.permute.xlu0 %1378
        %1380 = vrot.lane.b32.xlu0 %v1243, 16
        %v1381 = vpop.permute.xlu0 %1380
        %1382 = vrot.lane.b32.xlu0 %v1245, 16
        %v1383 = vpop.permute.xlu0 %1382
        %1384 = vrot.lane.b32.xlu0 %v1247, 16
        %v1385 = vpop.permute.xlu0 %1384
        %1386 = vrot.lane.b32.xlu0 %v1249, 16
        %v1387 = vpop.permute.xlu0 %1386
        %1388 = vrot.lane.b32.xlu0 %v1251, 16
        %v1389 = vpop.permute.xlu0 %1388
        %1390 = vrot.lane.b32.xlu0 %v1253, 16
        %v1391 = vpop.permute.xlu0 %1390
        %1392 = vrot.lane.b32.xlu0 %v1255, 16
        %v1393 = vpop.permute.xlu0 %1392
        %1394 = vrot.lane.b32.xlu0 %v1257, 16
        %v1395 = vpop.permute.xlu0 %1394
        %1396 = vrot.lane.b32.xlu0 %v1259, 16
        %v1397 = vpop.permute.xlu0 %1396
        %1398 = vrot.lane.b32.xlu0 %v1261, 16
        %v1399 = vpop.permute.xlu0 %1398
        %1400 = vrot.lane.b32.xlu0 %v1263, 16
        %v1401 = vpop.permute.xlu0 %1400
        %1402 = vrot.lane.b32.xlu0 %v1265, 16
        %v1403 = vpop.permute.xlu0 %1402
        %1404 = vrot.lane.b32.xlu0 %v1267, 16
        %v1405 = vpop.permute.xlu0 %1404
        %1406 = vrot.lane.b32.xlu0 %v1269, 16
        %v1407 = vpop.permute.xlu0 %1406
        %1408 = vrot.lane.b32.xlu0 %v1271, 16
        %v1409 = vpop.permute.xlu0 %1408
        %1410 = vrot.lane.b32.xlu0 %v1273, 16
        %v1411 = vpop.permute.xlu0 %1410
        %1412 = vrot.lane.b32.xlu0 %v1275, 16
        %v1413 = vpop.permute.xlu0 %1412
        %1414 = vrot.lane.b32.xlu0 %v1277, 16
        %v1415 = vpop.permute.xlu0 %1414
        %1416 = vrot.lane.b32.xlu0 %v1279, 16
        %v1417 = vpop.permute.xlu0 %1416
        %1418 = vrot.lane.b32.xlu0 %v1281, 16
        %v1419 = vpop.permute.xlu0 %1418
        %1420 = vrot.lane.b32.xlu0 %v1283, 16
        %v1421 = vpop.permute.xlu0 %1420
        %1422 = vrot.lane.b32.xlu0 %v1285, 16
        %v1423 = vpop.permute.xlu0 %1422
        %1424 = vrot.lane.b32.xlu0 %v1287, 16
        %v1425 = vpop.permute.xlu0 %1424
        %1426 = vrot.lane.b32.xlu0 %v1289, 16
        %v1427 = vpop.permute.xlu0 %1426
        %1428 = vrot.lane.b32.xlu0 %v1291, 16
        %v1429 = vpop.permute.xlu0 %1428
        %1461 = vrot.lane.b32.xlu0 0.0, 32
        %v1462 = vpop.permute.xlu0 %1461
        %1463 = vrot.lane.b32.xlu0 %v1308, 32
        %v1464 = vpop.permute.xlu0 %1463
        %1465 = vrot.lane.b32.xlu0 %v1310, 32
        %v1466 = vpop.permute.xlu0 %1465
        %1467 = vrot.lane.b32.xlu0 %v1312, 32
        %v1468 = vpop.permute.xlu0 %1467
        %1469 = vrot.lane.b32.xlu0 %v1314, 32
        %v1470 = vpop.permute.xlu0 %1469
        %1471 = vrot.lane.b32.xlu0 %v1316, 32
        %v1472 = vpop.permute.xlu0 %1471
        %1473 = vrot.lane.b32.xlu0 %v1318, 32
        %v1474 = vpop.permute.xlu0 %1473
        %1475 = vrot.lane.b32.xlu0 %v1320, 32
        %v1476 = vpop.permute.xlu0 %1475
        %1477 = vrot.lane.b32.xlu0 %v1322, 32
        %v1478 = vpop.permute.xlu0 %1477
        %1479 = vrot.lane.b32.xlu0 %v1324, 32
        %v1480 = vpop.permute.xlu0 %1479
        %1481 = vrot.lane.b32.xlu0 %v1326, 32
        %v1482 = vpop.permute.xlu0 %1481
        %1483 = vrot.lane.b32.xlu0 %v1328, 32
        %v1484 = vpop.permute.xlu0 %1483
        %1485 = vrot.lane.b32.xlu0 %v1330, 32
        %v1486 = vpop.permute.xlu0 %1485
        %1487 = vrot.lane.b32.xlu0 %v1332, 32
        %v1488 = vpop.permute.xlu0 %1487
        %1489 = vrot.lane.b32.xlu0 %v1334, 32
        %v1490 = vpop.permute.xlu0 %1489
        %1491 = vrot.lane.b32.xlu0 %v1336, 32
        %v1492 = vpop.permute.xlu0 %1491
        %1493 = vrot.lane.b32.xlu0 %v1338, 32
        %v1494 = vpop.permute.xlu0 %1493
        %1495 = vrot.lane.b32.xlu0 %v1340, 32
        %v1496 = vpop.permute.xlu0 %1495
        %1497 = vrot.lane.b32.xlu0 %v1342, 32
        %v1498 = vpop.permute.xlu0 %1497
        %1499 = vrot.lane.b32.xlu0 %v1344, 32
        %v1500 = vpop.permute.xlu0 %1499
        %1501 = vrot.lane.b32.xlu0 %v1346, 32
        %v1502 = vpop.permute.xlu0 %1501
        %1503 = vrot.lane.b32.xlu0 %v1348, 32
        %v1504 = vpop.permute.xlu0 %1503
        %1505 = vrot.lane.b32.xlu0 %v1350, 32
        %v1506 = vpop.permute.xlu0 %1505
        %1507 = vrot.lane.b32.xlu0 %v1352, 32
        %v1508 = vpop.permute.xlu0 %1507
        %1509 = vrot.lane.b32.xlu0 %v1354, 32
        %v1510 = vpop.permute.xlu0 %1509
        %1511 = vrot.lane.b32.xlu0 %v1356, 32
        %v1512 = vpop.permute.xlu0 %1511
        %1513 = vrot.lane.b32.xlu0 %v1358, 32
        %v1514 = vpop.permute.xlu0 %1513
        %1515 = vrot.lane.b32.xlu0 %v1360, 32
        %v1516 = vpop.permute.xlu0 %1515
        %1517 = vrot.lane.b32.xlu0 %v1362, 32
        %v1518 = vpop.permute.xlu0 %1517
        %1519 = vrot.lane.b32.xlu0 %v1364, 32
        %v1520 = vpop.permute.xlu0 %1519
        %1521 = vrot.lane.b32.xlu0 %v1366, 32
        %v1522 = vpop.permute.xlu0 %1521
        %1570 = vrot.lane.b32.xlu0 %v1120, 48
        %v1571 = vpop.permute.xlu0 %1570
        %1572 = vrot.lane.b32.xlu0 %v1028, 48
        %v1573 = vpop.permute.xlu0 %1572
        %1574 = vrot.lane.b32.xlu0 %v1121, 48
        %v1575 = vpop.permute.xlu0 %1574
        %1576 = vrot.lane.b32.xlu0 %v1032, 48
        %v1577 = vpop.permute.xlu0 %1576
        %1578 = vrot.lane.b32.xlu0 %v1122, 48
        %v1579 = vpop.permute.xlu0 %1578
        %1580 = vrot.lane.b32.xlu0 %v1036, 48
        %v1581 = vpop.permute.xlu0 %1580
        %1582 = vrot.lane.b32.xlu0 %v1123, 48
        %v1583 = vpop.permute.xlu0 %1582
        %1584 = vrot.lane.b32.xlu0 %v1040, 48
        %v1585 = vpop.permute.xlu0 %1584
        %1586 = vrot.lane.b32.xlu0 %v1124, 48
        %v1587 = vpop.permute.xlu0 %1586
        %1588 = vrot.lane.b32.xlu0 %v1044, 48
        %v1589 = vpop.permute.xlu0 %1588
        %1590 = vrot.lane.b32.xlu0 %v1125, 48
        %v1591 = vpop.permute.xlu0 %1590
        %1592 = vrot.lane.b32.xlu0 %v1048, 48
        %v1593 = vpop.permute.xlu0 %1592
        %1594 = vrot.lane.b32.xlu0 %v1126, 48
        %v1595 = vpop.permute.xlu0 %1594
        %1596 = vrot.lane.b32.xlu0 %v1052, 48
        %v1597 = vpop.permute.xlu0 %1596
        %1598 = vrot.lane.b32.xlu0 %v1127, 48
        %v1599 = vpop.permute.xlu0 %1598
        %1600 = vrot.lane.b32.xlu0 %v1056, 48
        %v1601 = vpop.permute.xlu0 %1600
        %1602 = vrot.lane.b32.xlu0 %v1128, 48
        %v1603 = vpop.permute.xlu0 %1602
        %1604 = vrot.lane.b32.xlu0 %v1060, 48
        %v1605 = vpop.permute.xlu0 %1604
        %1606 = vrot.lane.b32.xlu0 %v1129, 48
        %v1607 = vpop.permute.xlu0 %1606
        %1608 = vrot.lane.b32.xlu0 %v1064, 48
        %v1609 = vpop.permute.xlu0 %1608
        %1610 = vrot.lane.b32.xlu0 %v1130, 48
        %v1611 = vpop.permute.xlu0 %1610
        %1612 = vrot.lane.b32.xlu0 %v1068, 48
        %v1613 = vpop.permute.xlu0 %1612
        %1614 = vrot.lane.b32.xlu0 %v1131, 48
        %v1615 = vpop.permute.xlu0 %1614
        %1616 = vrot.lane.b32.xlu0 %v1072, 48
        %v1617 = vpop.permute.xlu0 %1616
        %1618 = vrot.lane.b32.xlu0 %v1132, 48
        %v1619 = vpop.permute.xlu0 %1618
        %1620 = vrot.lane.b32.xlu0 %v1076, 48
        %v1621 = vpop.permute.xlu0 %1620
        %1622 = vrot.lane.b32.xlu0 %v1133, 48
        %v1623 = vpop.permute.xlu0 %1622
        %1624 = vrot.lane.b32.xlu0 %v1080, 48
        %v1625 = vpop.permute.xlu0 %1624
        %1626 = vrot.lane.b32.xlu0 %v1134, 48
        %v1627 = vpop.permute.xlu0 %1626
        %1628 = vrot.lane.b32.xlu0 %v1084, 48
        %v1629 = vpop.permute.xlu0 %1628
        %1630 = vrot.lane.b32.xlu0 %v1135, 48
        %v1631 = vpop.permute.xlu0 %1630
        %1632 = vrot.lane.b32.xlu0 %v1088, 48
        %v1633 = vpop.permute.xlu0 %1632
        %1666 = vrot.lane.b32.xlu0 %v799, 32
        %v1667 = vpop.permute.xlu0 %1666
        %1668 = vrot.lane.b32.xlu0 %v802, 32
        %v1669 = vpop.permute.xlu0 %1668
        %1670 = vrot.lane.b32.xlu0 %v807, 32
        %v1671 = vpop.permute.xlu0 %1670
        %1672 = vrot.lane.b32.xlu0 %v810, 32
        %v1673 = vpop.permute.xlu0 %1672
        %1674 = vrot.lane.b32.xlu0 %v815, 32
        %v1675 = vpop.permute.xlu0 %1674
        %1676 = vrot.lane.b32.xlu0 %v818, 32
        %v1677 = vpop.permute.xlu0 %1676
        %1678 = vrot.lane.b32.xlu0 %v823, 32
        %v1679 = vpop.permute.xlu0 %1678
        %1680 = vrot.lane.b32.xlu0 %v826, 32
        %v1681 = vpop.permute.xlu0 %1680
        %1682 = vrot.lane.b32.xlu0 %v831, 32
        %v1683 = vpop.permute.xlu0 %1682
        %1684 = vrot.lane.b32.xlu0 %v834, 32
        %v1685 = vpop.permute.xlu0 %1684
        %1686 = vrot.lane.b32.xlu0 %v839, 32
        %v1687 = vpop.permute.xlu0 %1686
        %1688 = vrot.lane.b32.xlu0 %v842, 32
        %v1689 = vpop.permute.xlu0 %1688
        %1690 = vrot.lane.b32.xlu0 %v847, 32
        %v1691 = vpop.permute.xlu0 %1690
        %1692 = vrot.lane.b32.xlu0 %v850, 32
        %v1693 = vpop.permute.xlu0 %1692
        %1694 = vrot.lane.b32.xlu0 %v855, 32
        %v1695 = vpop.permute.xlu0 %1694
        %1696 = vrot.lane.b32.xlu0 %v858, 32
        %v1697 = vpop.permute.xlu0 %1696
        %1698 = vrot.lane.b32.xlu0 %v863, 32
        %v1699 = vpop.permute.xlu0 %1698
        %1700 = vrot.lane.b32.xlu0 %v866, 32
        %v1701 = vpop.permute.xlu0 %1700
        %1702 = vrot.lane.b32.xlu0 %v871, 32
        %v1703 = vpop.permute.xlu0 %1702
        %1704 = vrot.lane.b32.xlu0 %v874, 32
        %v1705 = vpop.permute.xlu0 %1704
        %1706 = vrot.lane.b32.xlu0 %v879, 32
        %v1707 = vpop.permute.xlu0 %1706
        %1708 = vrot.lane.b32.xlu0 %v882, 32
        %v1709 = vpop.permute.xlu0 %1708
        %1710 = vrot.lane.b32.xlu0 %v887, 32
        %v1711 = vpop.permute.xlu0 %1710
        %1712 = vrot.lane.b32.xlu0 %v890, 32
        %v1713 = vpop.permute.xlu0 %1712
        %1714 = vrot.lane.b32.xlu0 %v895, 32
        %v1715 = vpop.permute.xlu0 %1714
        %1716 = vrot.lane.b32.xlu0 %v898, 32
        %v1717 = vpop.permute.xlu0 %1716
        %1718 = vrot.lane.b32.xlu0 %v903, 32
        %v1719 = vpop.permute.xlu0 %1718
        %1720 = vrot.lane.b32.xlu0 %v906, 32
        %v1721 = vpop.permute.xlu0 %1720
        %1722 = vrot.lane.b32.xlu0 %v911, 32
        %v1723 = vpop.permute.xlu0 %1722
        %1724 = vrot.lane.b32.xlu0 %v914, 32
        %v1725 = vpop.permute.xlu0 %1724
        %1726 = vrot.lane.b32.xlu0 %v919, 32
        %v1727 = vpop.permute.xlu0 %1726
        %1728 = vrot.lane.b32.xlu0 %v922, 32
        %v1729 = vpop.permute.xlu0 %1728
        %1763 = vrot.lane.b32.xlu0 %v1139, 48
        %v1764 = vpop.permute.xlu0 %1763
        %1765 = vrot.lane.b32.xlu0 %v1216, 48
        %v1766 = vpop.permute.xlu0 %1765
        %1767 = vrot.lane.b32.xlu0 %v1142, 48
        %v1768 = vpop.permute.xlu0 %1767
        %1769 = vrot.lane.b32.xlu0 %v1217, 48
        %v1770 = vpop.permute.xlu0 %1769
        %1771 = vrot.lane.b32.xlu0 %v1145, 48
        %v1772 = vpop.permute.xlu0 %1771
        %1773 = vrot.lane.b32.xlu0 %v1218, 48
        %v1774 = vpop.permute.xlu0 %1773
        %1775 = vrot.lane.b32.xlu0 %v1148, 48
        %v1776 = vpop.permute.xlu0 %1775
        %1777 = vrot.lane.b32.xlu0 %v1219, 48
        %v1778 = vpop.permute.xlu0 %1777
        %1779 = vrot.lane.b32.xlu0 %v1151, 48
        %v1780 = vpop.permute.xlu0 %1779
        %1781 = vrot.lane.b32.xlu0 %v1220, 48
        %v1782 = vpop.permute.xlu0 %1781
        %1783 = vrot.lane.b32.xlu0 %v1154, 48
        %v1784 = vpop.permute.xlu0 %1783
        %1785 = vrot.lane.b32.xlu0 %v1221, 48
        %v1786 = vpop.permute.xlu0 %1785
        %1787 = vrot.lane.b32.xlu0 %v1157, 48
        %v1788 = vpop.permute.xlu0 %1787
        %1789 = vrot.lane.b32.xlu0 %v1222, 48
        %v1790 = vpop.permute.xlu0 %1789
        %1791 = vrot.lane.b32.xlu0 %v1160, 48
        %v1792 = vpop.permute.xlu0 %1791
        %1793 = vrot.lane.b32.xlu0 %v1223, 48
        %v1794 = vpop.permute.xlu0 %1793
        %1795 = vrot.lane.b32.xlu0 %v1163, 48
        %v1796 = vpop.permute.xlu0 %1795
        %1797 = vrot.lane.b32.xlu0 %v1224, 48
        %v1798 = vpop.permute.xlu0 %1797
        %1799 = vrot.lane.b32.xlu0 %v1166, 48
        %v1800 = vpop.permute.xlu0 %1799
        %1801 = vrot.lane.b32.xlu0 %v1225, 48
        %v1802 = vpop.permute.xlu0 %1801
        %1803 = vrot.lane.b32.xlu0 %v1169, 48
        %v1804 = vpop.permute.xlu0 %1803
        %1805 = vrot.lane.b32.xlu0 %v1226, 48
        %v1806 = vpop.permute.xlu0 %1805
        %1807 = vrot.lane.b32.xlu0 %v1172, 48
        %v1808 = vpop.permute.xlu0 %1807
        %1809 = vrot.lane.b32.xlu0 %v1227, 48
        %v1810 = vpop.permute.xlu0 %1809
        %1811 = vrot.lane.b32.xlu0 %v1175, 48
        %v1812 = vpop.permute.xlu0 %1811
        %1813 = vrot.lane.b32.xlu0 %v1228, 48
        %v1814 = vpop.permute.xlu0 %1813
        %1815 = vrot.lane.b32.xlu0 %v1178, 48
        %v1816 = vpop.permute.xlu0 %1815
        %1817 = vrot.lane.b32.xlu0 %v1229, 48
        %v1818 = vpop.permute.xlu0 %1817
        %1819 = vrot.lane.b32.xlu0 %v1181, 48
        %v1820 = vpop.permute.xlu0 %1819
        %1821 = vrot.lane.b32.xlu0 %v1230, 48
        %v1822 = vpop.permute.xlu0 %1821
        %1823 = vrot.lane.b32.xlu0 %v1184, 48
        %v1824 = vpop.permute.xlu0 %1823
        %1825 = vrot.lane.b32.xlu0 %v1231, 48
        %v1826 = vpop.permute.xlu0 %1825
        %1859 = vrot.lane.b32.xlu0 %v1121, 96
        %v1860 = vpop.permute.xlu0 %1859
        %1861 = vrot.lane.b32.xlu0 %v1032, 96
        %v1862 = vpop.permute.xlu0 %1861
        %1863 = vrot.lane.b32.xlu0 %v1122, 96
        %v1864 = vpop.permute.xlu0 %1863
        %1865 = vrot.lane.b32.xlu0 %v1036, 96
        %v1866 = vpop.permute.xlu0 %1865
        %1867 = vrot.lane.b32.xlu0 %v1123, 96
        %v1868 = vpop.permute.xlu0 %1867
        %1869 = vrot.lane.b32.xlu0 %v1040, 96
        %v1870 = vpop.permute.xlu0 %1869
        %1871 = vrot.lane.b32.xlu0 %v1124, 96
        %v1872 = vpop.permute.xlu0 %1871
        %1873 = vrot.lane.b32.xlu0 %v1044, 96
        %v1874 = vpop.permute.xlu0 %1873
        %1875 = vrot.lane.b32.xlu0 %v1125, 96
        %v1876 = vpop.permute.xlu0 %1875
        %1877 = vrot.lane.b32.xlu0 %v1048, 96
        %v1878 = vpop.permute.xlu0 %1877
        %1879 = vrot.lane.b32.xlu0 %v1126, 96
        %v1880 = vpop.permute.xlu0 %1879
        %1881 = vrot.lane.b32.xlu0 %v1052, 96
        %v1882 = vpop.permute.xlu0 %1881
        %1883 = vrot.lane.b32.xlu0 %v1127, 96
        %v1884 = vpop.permute.xlu0 %1883
        %1885 = vrot.lane.b32.xlu0 %v1056, 96
        %v1886 = vpop.permute.xlu0 %1885
        %1887 = vrot.lane.b32.xlu0 %v1128, 96
        %v1888 = vpop.permute.xlu0 %1887
        %1889 = vrot.lane.b32.xlu0 %v1060, 96
        %v1890 = vpop.permute.xlu0 %1889
        %1891 = vrot.lane.b32.xlu0 %v1129, 96
        %v1892 = vpop.permute.xlu0 %1891
        %1893 = vrot.lane.b32.xlu0 %v1064, 96
        %v1894 = vpop.permute.xlu0 %1893
        %1895 = vrot.lane.b32.xlu0 %v1130, 96
        %v1896 = vpop.permute.xlu0 %1895
        %1897 = vrot.lane.b32.xlu0 %v1068, 96
        %v1898 = vpop.permute.xlu0 %1897
        %1899 = vrot.lane.b32.xlu0 %v1131, 96
        %v1900 = vpop.permute.xlu0 %1899
        %1901 = vrot.lane.b32.xlu0 %v1072, 96
        %v1902 = vpop.permute.xlu0 %1901
        %1903 = vrot.lane.b32.xlu0 %v1132, 96
        %v1904 = vpop.permute.xlu0 %1903
        %1905 = vrot.lane.b32.xlu0 %v1076, 96
        %v1906 = vpop.permute.xlu0 %1905
        %1907 = vrot.lane.b32.xlu0 %v1133, 96
        %v1908 = vpop.permute.xlu0 %1907
        %1909 = vrot.lane.b32.xlu0 %v1080, 96
        %v1910 = vpop.permute.xlu0 %1909
        %1911 = vrot.lane.b32.xlu0 %v1134, 96
        %v1912 = vpop.permute.xlu0 %1911
        %1913 = vrot.lane.b32.xlu0 %v1084, 96
        %v1914 = vpop.permute.xlu0 %1913
        %1915 = vrot.lane.b32.xlu0 %v1135, 96
        %v1916 = vpop.permute.xlu0 %1915
        %1917 = vrot.lane.b32.xlu0 %v1088, 96
        %v1918 = vpop.permute.xlu0 %1917
        %1919 = vrot.lane.b32.xlu0 0.0, 96
        %v1920 = vpop.permute.xlu0 %1919
        %1952 = vrot.lane.b32.xlu0 %v807, 80
        %v1953 = vpop.permute.xlu0 %1952
        %1954 = vrot.lane.b32.xlu0 %v810, 80
        %v1955 = vpop.permute.xlu0 %1954
        %1956 = vrot.lane.b32.xlu0 %v815, 80
        %v1957 = vpop.permute.xlu0 %1956
        %1958 = vrot.lane.b32.xlu0 %v818, 80
        %v1959 = vpop.permute.xlu0 %1958
        %1960 = vrot.lane.b32.xlu0 %v823, 80
        %v1961 = vpop.permute.xlu0 %1960
        %1962 = vrot.lane.b32.xlu0 %v826, 80
        %v1963 = vpop.permute.xlu0 %1962
        %1964 = vrot.lane.b32.xlu0 %v831, 80
        %v1965 = vpop.permute.xlu0 %1964
        %1966 = vrot.lane.b32.xlu0 %v834, 80
        %v1967 = vpop.permute.xlu0 %1966
        %1968 = vrot.lane.b32.xlu0 %v839, 80
        %v1969 = vpop.permute.xlu0 %1968
        %1970 = vrot.lane.b32.xlu0 %v842, 80
        %v1971 = vpop.permute.xlu0 %1970
        %1972 = vrot.lane.b32.xlu0 %v847, 80
        %v1973 = vpop.permute.xlu0 %1972
        %1974 = vrot.lane.b32.xlu0 %v850, 80
        %v1975 = vpop.permute.xlu0 %1974
        %1976 = vrot.lane.b32.xlu0 %v855, 80
        %v1977 = vpop.permute.xlu0 %1976
        %1978 = vrot.lane.b32.xlu0 %v858, 80
        %v1979 = vpop.permute.xlu0 %1978
        %1980 = vrot.lane.b32.xlu0 %v863, 80
        %v1981 = vpop.permute.xlu0 %1980
        %1982 = vrot.lane.b32.xlu0 %v866, 80
        %v1983 = vpop.permute.xlu0 %1982
        %1984 = vrot.lane.b32.xlu0 %v871, 80
        %v1985 = vpop.permute.xlu0 %1984
        %1986 = vrot.lane.b32.xlu0 %v874, 80
        %v1987 = vpop.permute.xlu0 %1986
        %1988 = vrot.lane.b32.xlu0 %v879, 80
        %v1989 = vpop.permute.xlu0 %1988
        %1990 = vrot.lane.b32.xlu0 %v882, 80
        %v1991 = vpop.permute.xlu0 %1990
        %1992 = vrot.lane.b32.xlu0 %v887, 80
        %v1993 = vpop.permute.xlu0 %1992
        %1994 = vrot.lane.b32.xlu0 %v890, 80
        %v1995 = vpop.permute.xlu0 %1994
        %1996 = vrot.lane.b32.xlu0 %v895, 80
        %v1997 = vpop.permute.xlu0 %1996
        %1998 = vrot.lane.b32.xlu0 %v898, 80
        %v1999 = vpop.permute.xlu0 %1998
        %2000 = vrot.lane.b32.xlu0 %v903, 80
        %v2001 = vpop.permute.xlu0 %2000
        %2002 = vrot.lane.b32.xlu0 %v906, 80
        %v2003 = vpop.permute.xlu0 %2002
        %2004 = vrot.lane.b32.xlu0 %v911, 80
        %v2005 = vpop.permute.xlu0 %2004
        %2006 = vrot.lane.b32.xlu0 %v914, 80
        %v2007 = vpop.permute.xlu0 %2006
        %2008 = vrot.lane.b32.xlu0 %v919, 80
        %v2009 = vpop.permute.xlu0 %2008
        %2010 = vrot.lane.b32.xlu0 %v922, 80
        %v2011 = vpop.permute.xlu0 %2010
        %2012 = vrot.lane.b32.xlu0 0.0, 80
        %v2013 = vpop.permute.xlu0 %2012
        %vm2045 = vcmask 130048
        %v2046 = vsel %vm2045, 0.0, %v1369
        %v2047 = vsel %vm2045, %v1120, %v1371
        %v2048 = vsel %vm2045, %v1028, %v1373
        %v2049 = vsel %vm2045, %v1121, %v1375
        %v2050 = vsel %vm2045, %v1032, %v1377
        %v2051 = vsel %vm2045, %v1122, %v1379
        %v2052 = vsel %vm2045, %v1036, %v1381
        %v2053 = vsel %vm2045, %v1123, %v1383
        %v2054 = vsel %vm2045, %v1040, %v1385
        %v2055 = vsel %vm2045, %v1124, %v1387
        %v2056 = vsel %vm2045, %v1044, %v1389
        %v2057 = vsel %vm2045, %v1125, %v1391
        %v2058 = vsel %vm2045, %v1048, %v1393
        %v2059 = vsel %vm2045, %v1126, %v1395
        %v2060 = vsel %vm2045, %v1052, %v1397
        %v2061 = vsel %vm2045, %v1127, %v1399
        %v2062 = vsel %vm2045, %v1056, %v1401
        %v2063 = vsel %vm2045, %v1128, %v1403
        %v2064 = vsel %vm2045, %v1060, %v1405
        %v2065 = vsel %vm2045, %v1129, %v1407
        %v2066 = vsel %vm2045, %v1064, %v1409
        %v2067 = vsel %vm2045, %v1130, %v1411
        %v2068 = vsel %vm2045, %v1068, %v1413
        %v2069 = vsel %vm2045, %v1131, %v1415
        %v2070 = vsel %vm2045, %v1072, %v1417
        %v2071 = vsel %vm2045, %v1132, %v1419
        %v2072 = vsel %vm2045, %v1076, %v1421
        %v2073 = vsel %vm2045, %v1133, %v1423
        %v2074 = vsel %vm2045, %v1080, %v1425
        %v2075 = vsel %vm2045, %v1134, %v1427
        %v2076 = vsel %vm2045, %v1084, %v1429
        %vm2077 = vcmask 261120
        %v2078 = vsel %vm2077, %v2046, %v1462
        %v2079 = vsel %vm2077, %v2047, %v1464
        %v2080 = vsel %vm2077, %v2048, %v1466
        %v2081 = vsel %vm2077, %v2049, %v1468
        %v2082 = vsel %vm2077, %v2050, %v1470
        %v2083 = vsel %vm2077, %v2051, %v1472
        %v2084 = vsel %vm2077, %v2052, %v1474
        %v2085 = vsel %vm2077, %v2053, %v1476
        %v2086 = vsel %vm2077, %v2054, %v1478
        %v2087 = vsel %vm2077, %v2055, %v1480
        %v2088 = vsel %vm2077, %v2056, %v1482
        %v2089 = vsel %vm2077, %v2057, %v1484
        %v2090 = vsel %vm2077, %v2058, %v1486
        %v2091 = vsel %vm2077, %v2059, %v1488
        %v2092 = vsel %vm2077, %v2060, %v1490
        %v2093 = vsel %vm2077, %v2061, %v1492
        %v2094 = vsel %vm2077, %v2062, %v1494
        %v2095 = vsel %vm2077, %v2063, %v1496
        %v2096 = vsel %vm2077, %v2064, %v1498
        %v2097 = vsel %vm2077, %v2065, %v1500
        %v2098 = vsel %vm2077, %v2066, %v1502
        %v2099 = vsel %vm2077, %v2067, %v1504
        %v2100 = vsel %vm2077, %v2068, %v1506
        %v2101 = vsel %vm2077, %v2069, %v1508
        %v2102 = vsel %vm2077, %v2070, %v1510
        %v2103 = vsel %vm2077, %v2071, %v1512
        %v2104 = vsel %vm2077, %v2072, %v1514
        %v2105 = vsel %vm2077, %v2073, %v1516
        %v2106 = vsel %vm2077, %v2074, %v1518
        %v2107 = vsel %vm2077, %v2075, %v1520
        %v2108 = vsel %vm2077, %v2076, %v1522
        %vm2109 = vcmask 392192
        %v2110 = vsel %vm2109, %v2078, %v1571
        %v2111 = vsel %vm2109, %v2078, %v1573
        %v2112 = vsel %vm2109, %v2079, %v1575
        %v2113 = vsel %vm2109, %v2080, %v1577
        %v2114 = vsel %vm2109, %v2081, %v1579
        %v2115 = vsel %vm2109, %v2082, %v1581
        %v2116 = vsel %vm2109, %v2083, %v1583
        %v2117 = vsel %vm2109, %v2084, %v1585
        %v2118 = vsel %vm2109, %v2085, %v1587
        %v2119 = vsel %vm2109, %v2086, %v1589
        %v2120 = vsel %vm2109, %v2087, %v1591
        %v2121 = vsel %vm2109, %v2088, %v1593
        %v2122 = vsel %vm2109, %v2089, %v1595
        %v2123 = vsel %vm2109, %v2090, %v1597
        %v2124 = vsel %vm2109, %v2091, %v1599
        %v2125 = vsel %vm2109, %v2092, %v1601
        %v2126 = vsel %vm2109, %v2093, %v1603
        %v2127 = vsel %vm2109, %v2094, %v1605
        %v2128 = vsel %vm2109, %v2095, %v1607
        %v2129 = vsel %vm2109, %v2096, %v1609
        %v2130 = vsel %vm2109, %v2097, %v1611
        %v2131 = vsel %vm2109, %v2098, %v1613
        %v2132 = vsel %vm2109, %v2099, %v1615
        %v2133 = vsel %vm2109, %v2100, %v1617
        %v2134 = vsel %vm2109, %v2101, %v1619
        %v2135 = vsel %vm2109, %v2102, %v1621
        %v2136 = vsel %vm2109, %v2103, %v1623
        %v2137 = vsel %vm2109, %v2104, %v1625
        %v2138 = vsel %vm2109, %v2105, %v1627
        %v2139 = vsel %vm2109, %v2106, %v1629
        %v2140 = vsel %vm2109, %v2107, %v1631
        %v2141 = vsel %vm2109, %v2108, %v1633
        %vm2142 = vcmask 523264
        %v2143 = vsel %vm2142, %v2110, %v1667
        %v2144 = vsel %vm2142, %v2111, %v1669
        %v2145 = vsel %vm2142, %v2112, %v1671
        %v2146 = vsel %vm2142, %v2113, %v1673
        %v2147 = vsel %vm2142, %v2114, %v1675
        %v2148 = vsel %vm2142, %v2115, %v1677
        %v2149 = vsel %vm2142, %v2116, %v1679
        %v2150 = vsel %vm2142, %v2117, %v1681
        %v2151 = vsel %vm2142, %v2118, %v1683
        %v2152 = vsel %vm2142, %v2119, %v1685
        %v2153 = vsel %vm2142, %v2120, %v1687
        %v2154 = vsel %vm2142, %v2121, %v1689
        %v2155 = vsel %vm2142, %v2122, %v1691
        %v2156 = vsel %vm2142, %v2123, %v1693
        %v2157 = vsel %vm2142, %v2124, %v1695
        %v2158 = vsel %vm2142, %v2125, %v1697
        %v2159 = vsel %vm2142, %v2126, %v1699
        %v2160 = vsel %vm2142, %v2127, %v1701
        %v2161 = vsel %vm2142, %v2128, %v1703
        %v2162 = vsel %vm2142, %v2129, %v1705
        %v2163 = vsel %vm2142, %v2130, %v1707
        %v2164 = vsel %vm2142, %v2131, %v1709
        %v2165 = vsel %vm2142, %v2132, %v1711
        %v2166 = vsel %vm2142, %v2133, %v1713
        %v2167 = vsel %vm2142, %v2134, %v1715
        %v2168 = vsel %vm2142, %v2135, %v1717
        %v2169 = vsel %vm2142, %v2136, %v1719
        %v2170 = vsel %vm2142, %v2137, %v1721
        %v2171 = vsel %vm2142, %v2138, %v1723
        %v2172 = vsel %vm2142, %v2139, %v1725
        %v2173 = vsel %vm2142, %v2140, %v1727
        %v2174 = vsel %vm2142, %v2141, %v1729
        %vm2175 = vcmask 654336
        %v2176 = vsel %vm2175, %v2143, %v1764
        %v2177 = vsel %vm2175, %v2144, %v1766
        %v2178 = vsel %vm2175, %v2145, %v1768
        %v2179 = vsel %vm2175, %v2146, %v1770
        %v2180 = vsel %vm2175, %v2147, %v1772
        %v2181 = vsel %vm2175, %v2148, %v1774
        %v2182 = vsel %vm2175, %v2149, %v1776
        %v2183 = vsel %vm2175, %v2150, %v1778
        %v2184 = vsel %vm2175, %v2151, %v1780
        %v2185 = vsel %vm2175, %v2152, %v1782
        %v2186 = vsel %vm2175, %v2153, %v1784
        %v2187 = vsel %vm2175, %v2154, %v1786
        %v2188 = vsel %vm2175, %v2155, %v1788
        %v2189 = vsel %vm2175, %v2156, %v1790
        %v2190 = vsel %vm2175, %v2157, %v1792
        %v2191 = vsel %vm2175, %v2158, %v1794
        %v2192 = vsel %vm2175, %v2159, %v1796
        %v2193 = vsel %vm2175, %v2160, %v1798
        %v2194 = vsel %vm2175, %v2161, %v1800
        %v2195 = vsel %vm2175, %v2162, %v1802
        %v2196 = vsel %vm2175, %v2163, %v1804
        %v2197 = vsel %vm2175, %v2164, %v1806
        %v2198 = vsel %vm2175, %v2165, %v1808
        %v2199 = vsel %vm2175, %v2166, %v1810
        %v2200 = vsel %vm2175, %v2167, %v1812
        %v2201 = vsel %vm2175, %v2168, %v1814
        %v2202 = vsel %vm2175, %v2169, %v1816
        %v2203 = vsel %vm2175, %v2170, %v1818
        %v2204 = vsel %vm2175, %v2171, %v1820
        %v2205 = vsel %vm2175, %v2172, %v1822
        %v2206 = vsel %vm2175, %v2173, %v1824
        %v2207 = vsel %vm2175, %v2174, %v1826
        %vm2208 = vcmask 785408
        %v2209 = vsel %vm2208, %v2176, %v1860
        %v2210 = vsel %vm2208, %v2177, %v1862
        %v2211 = vsel %vm2208, %v2178, %v1864
        %v2212 = vsel %vm2208, %v2179, %v1866
        %v2213 = vsel %vm2208, %v2180, %v1868
        %v2214 = vsel %vm2208, %v2181, %v1870
        %v2215 = vsel %vm2208, %v2182, %v1872
        %v2216 = vsel %vm2208, %v2183, %v1874
        %v2217 = vsel %vm2208, %v2184, %v1876
        %v2218 = vsel %vm2208, %v2185, %v1878
        %v2219 = vsel %vm2208, %v2186, %v1880
        %v2220 = vsel %vm2208, %v2187, %v1882
        %v2221 = vsel %vm2208, %v2188, %v1884
        %v2222 = vsel %vm2208, %v2189, %v1886
        %v2223 = vsel %vm2208, %v2190, %v1888
        %v2224 = vsel %vm2208, %v2191, %v1890
        %v2225 = vsel %vm2208, %v2192, %v1892
        %v2226 = vsel %vm2208, %v2193, %v1894
        %v2227 = vsel %vm2208, %v2194, %v1896
        %v2228 = vsel %vm2208, %v2195, %v1898
        %v2229 = vsel %vm2208, %v2196, %v1900
        %v2230 = vsel %vm2208, %v2197, %v1902
        %v2231 = vsel %vm2208, %v2198, %v1904
        %v2232 = vsel %vm2208, %v2199, %v1906
        %v2233 = vsel %vm2208, %v2200, %v1908
        %v2234 = vsel %vm2208, %v2201, %v1910
        %v2235 = vsel %vm2208, %v2202, %v1912
        %v2236 = vsel %vm2208, %v2203, %v1914
        %v2237 = vsel %vm2208, %v2204, %v1916
        %v2238 = vsel %vm2208, %v2205, %v1918
        %v2239 = vsel %vm2208, %v2206, %v1920
        %v2240 = vsel %vm2208, %v2207, %v1920
        %vm2241 = vcmask 916480
        %v2242 = vsel %vm2241, %v2209, %v1953
        %v2243 = vsel %vm2241, %v2210, %v1955
        %v2244 = vsel %vm2241, %v2211, %v1957
        %v2245 = vsel %vm2241, %v2212, %v1959
        %v2246 = vsel %vm2241, %v2213, %v1961
        %v2247 = vsel %vm2241, %v2214, %v1963
        %v2248 = vsel %vm2241, %v2215, %v1965
        %v2249 = vsel %vm2241, %v2216, %v1967
        %v2250 = vsel %vm2241, %v2217, %v1969
        %v2251 = vsel %vm2241, %v2218, %v1971
        %v2252 = vsel %vm2241, %v2219, %v1973
        %v2253 = vsel %vm2241, %v2220, %v1975
        %v2254 = vsel %vm2241, %v2221, %v1977
        %v2255 = vsel %vm2241, %v2222, %v1979
        %v2256 = vsel %vm2241, %v2223, %v1981
        %v2257 = vsel %vm2241, %v2224, %v1983
        %v2258 = vsel %vm2241, %v2225, %v1985
        %v2259 = vsel %vm2241, %v2226, %v1987
        %v2260 = vsel %vm2241, %v2227, %v1989
        %v2261 = vsel %vm2241, %v2228, %v1991
        %v2262 = vsel %vm2241, %v2229, %v1993
        %v2263 = vsel %vm2241, %v2230, %v1995
        %v2264 = vsel %vm2241, %v2231, %v1997
        %v2265 = vsel %vm2241, %v2232, %v1999
        %v2266 = vsel %vm2241, %v2233, %v2001
        %v2267 = vsel %vm2241, %v2234, %v2003
        %v2268 = vsel %vm2241, %v2235, %v2005
        %v2269 = vsel %vm2241, %v2236, %v2007
        %v2270 = vsel %vm2241, %v2237, %v2009
        %v2271 = vsel %vm2241, %v2238, %v2011
        %v2272 = vsel %vm2241, %v2239, %v2013
        %v2273 = vsel %vm2241, %v2240, %v2013
        %v2274 = vpack.c.bf16 %v2243, %v2242
        %v2275 = vpack.c.bf16 %v2245, %v2244
        %v2276 = vpack.c.bf16 %v2247, %v2246
        %v2277 = vpack.c.bf16 %v2249, %v2248
        %v2278 = vpack.c.bf16 %v2251, %v2250
        %v2279 = vpack.c.bf16 %v2253, %v2252
        %v2280 = vpack.c.bf16 %v2255, %v2254
        %v2281 = vpack.c.bf16 %v2257, %v2256
        %v2282 = vpack.c.bf16 %v2259, %v2258
        %v2283 = vpack.c.bf16 %v2261, %v2260
        %v2284 = vpack.c.bf16 %v2263, %v2262
        %v2285 = vpack.c.bf16 %v2265, %v2264
        %v2286 = vpack.c.bf16 %v2267, %v2266
        %v2287 = vpack.c.bf16 %v2269, %v2268
        %v2288 = vpack.c.bf16 %v2271, %v2270
        %v2289 = vpack.c.bf16 %v2273, %v2272
        %v2290 = vpack.c.bf16 %v1217, %v1142
        %v2291 = vpack.c.bf16 %v1218, %v1145
        %v2292 = vpack.c.bf16 %v1219, %v1148
        %v2293 = vpack.c.bf16 %v1220, %v1151
        %v2294 = vpack.c.bf16 %v1221, %v1154
        %v2295 = vpack.c.bf16 %v1222, %v1157
        %v2296 = vpack.c.bf16 %v1223, %v1160
        %v2297 = vpack.c.bf16 %v1224, %v1163
        %v2298 = vpack.c.bf16 %v1225, %v1166
        %v2299 = vpack.c.bf16 %v1226, %v1169
        %v2300 = vpack.c.bf16 %v1227, %v1172
        %v2301 = vpack.c.bf16 %v1228, %v1175
        %v2302 = vpack.c.bf16 %v1229, %v1178
        %v2303 = vpack.c.bf16 %v1230, %v1181
        %v2304 = vpack.c.bf16 %v1231, %v1184
        %v2305 = vpack.c.bf16 0.0, 0.0
        %2322 = vrot.lane.b32.xlu0 %v2290, 96
        %v2323 = vpop.permute.xlu0 %2322
        %2324 = vrot.lane.b32.xlu0 %v2291, 96
        %v2325 = vpop.permute.xlu0 %2324
        %2326 = vrot.lane.b32.xlu0 %v2292, 96
        %v2327 = vpop.permute.xlu0 %2326
        %2328 = vrot.lane.b32.xlu0 %v2293, 96
        %v2329 = vpop.permute.xlu0 %2328
        %2330 = vrot.lane.b32.xlu0 %v2294, 96
        %v2331 = vpop.permute.xlu0 %2330
        %2332 = vrot.lane.b32.xlu0 %v2295, 96
        %v2333 = vpop.permute.xlu0 %2332
        %2334 = vrot.lane.b32.xlu0 %v2296, 96
        %v2335 = vpop.permute.xlu0 %2334
        %2336 = vrot.lane.b32.xlu0 %v2297, 96
        %v2337 = vpop.permute.xlu0 %2336
        %2338 = vrot.lane.b32.xlu0 %v2298, 96
        %v2339 = vpop.permute.xlu0 %2338
        %2340 = vrot.lane.b32.xlu0 %v2299, 96
        %v2341 = vpop.permute.xlu0 %2340
        %2342 = vrot.lane.b32.xlu0 %v2300, 96
        %v2343 = vpop.permute.xlu0 %2342
        %2344 = vrot.lane.b32.xlu0 %v2301, 96
        %v2345 = vpop.permute.xlu0 %2344
        %2346 = vrot.lane.b32.xlu0 %v2302, 96
        %v2347 = vpop.permute.xlu0 %2346
        %2348 = vrot.lane.b32.xlu0 %v2303, 96
        %v2349 = vpop.permute.xlu0 %2348
        %2350 = vrot.lane.b32.xlu0 %v2304, 96
        %v2351 = vpop.permute.xlu0 %2350
        %2352 = vrot.lane.b32.xlu0 %v2305, 96
        %v2353 = vpop.permute.xlu0 %2352
        %v2356 = vunpack.c.l.b16 %v941
        %v2357 = vunpack.c.l.b16 %v942
        %v2358 = vpack.c.b16 %v2357, %v2356
        %v2361 = vsel %vm2045, %v2323, 0
        %v2364 = vsel %vm2045, %v2325, 0
        %v2367 = vsel %vm2045, %v2327, 0
        %v2370 = vsel %vm2045, %v2329, 0
        %v2373 = vsel %vm2045, %v2331, 0
        %v2376 = vsel %vm2045, %v2333, 0
        %v2379 = vsel %vm2045, %v2335, 0
        %v2382 = vsel %vm2045, %v2337, 0
        %v2385 = vsel %vm2045, %v2339, 0
        %v2388 = vsel %vm2045, %v2341, 0
        %v2391 = vsel %vm2045, %v2343, 0
        %v2394 = vsel %vm2045, %v2345, 0
        %v2397 = vsel %vm2045, %v2347, 0
        %v2400 = vsel %vm2045, %v2349, 0
        %v2403 = vsel %vm2045, %v2351, 0
        %v2406 = vsel %vm2045, %v2353, 0
        %2408 = vmatprep.subr.bf16.mxu0 0
        %2409 = vmatpush1.bf16.msra.mxu0 0
        %2410 = vmatprep.subr.bf16.mxu0 0
        %2411 = vmatpush1.bf16.msra.mxu0 0
        %2412 = vmatprep.subr.bf16.mxu0 0
        %2413 = vmatpush1.bf16.msra.mxu0 0
        %2414 = vmatprep.subr.bf16.mxu0 0
        %2415 = vmatpush1.bf16.msra.mxu0 0
        %2416 = vmatprep.subr.bf16.mxu0 0
        %2417 = vmatpush1.bf16.msra.mxu0 0
        %2418 = vmatprep.subr.bf16.mxu0 0
        %2419 = vmatpush1.bf16.msra.mxu0 0
        %2420 = vmatprep.subr.bf16.mxu0 0
        %2421 = vmatpush1.bf16.msra.mxu0 0
        %2422 = vmatprep.subr.bf16.mxu0 0
        %2423 = vmatpush1.bf16.msra.mxu0 %v2358
        %2424 = vmatprep.subr.bf16.mxu0 0
        %2425 = vmatpush2.bf16.msra.mxu0 0
        %2426 = vmatprep.subr.bf16.mxu0 0
        %2427 = vmatpush2.bf16.msra.mxu0 0
        %2428 = vmatprep.subr.bf16.mxu0 0
        %2429 = vmatpush2.bf16.msra.mxu0 0
        %2430 = vmatprep.subr.bf16.mxu0 0
        %2431 = vmatpush2.bf16.msra.mxu0 0
        %2432 = vmatprep.subr.bf16.mxu0 0
        %2433 = vmatpush2.bf16.msra.mxu0 0
        %2434 = vmatprep.subr.bf16.mxu0 0
        %2435 = vmatpush2.bf16.msra.mxu0 0
        %2436 = vmatprep.subr.bf16.mxu0 0
        %2437 = vmatpush2.bf16.msra.mxu0 0
        %2438 = vmatprep.subr.bf16.mxu0 0
        %2439 = vmatpush2.bf16.msra.mxu0 0
        %2440 = vmatprep.mubr.bf16.mxu0 0
        %2441 = vmatmul.mubr.bf16.gmra.mxu0 %v2361
        %v2442 = vpop.f32.mrf.mxu0
        %v2443 = vadd.f32 0.0, %v2442
        %v2444 = vpop.f32.mrf.mxu0
        %v2445 = vpop.f32.mrf.mxu0
        %v2446 = vadd.f32 0.0, %v2445
        %v2447 = vpop.f32.mrf.mxu0
        %2448 = vmatprep.mubr.bf16.mxu0 0
        %2449 = vmatmul.mubr.bf16.gmra.mxu0 %v2364
        %v2450 = vpop.f32.mrf.mxu0
        %v2451 = vadd.f32 0.0, %v2450
        %v2452 = vpop.f32.mrf.mxu0
        %v2453 = vpop.f32.mrf.mxu0
        %v2454 = vadd.f32 0.0, %v2453
        %v2455 = vpop.f32.mrf.mxu0
        %2456 = vmatprep.mubr.bf16.mxu0 0
        %2457 = vmatmul.mubr.bf16.gmra.mxu0 %v2367
        %v2458 = vpop.f32.mrf.mxu0
        %v2459 = vadd.f32 0.0, %v2458
        %v2460 = vpop.f32.mrf.mxu0
        %v2461 = vpop.f32.mrf.mxu0
        %v2462 = vadd.f32 0.0, %v2461
        %v2463 = vpop.f32.mrf.mxu0
        %2464 = vmatprep.mubr.bf16.mxu0 0
        %2465 = vmatmul.mubr.bf16.gmra.mxu0 %v2370
        %v2466 = vpop.f32.mrf.mxu0
        %v2467 = vadd.f32 0.0, %v2466
        %v2468 = vpop.f32.mrf.mxu0
        %v2469 = vpop.f32.mrf.mxu0
        %v2470 = vadd.f32 0.0, %v2469
        %v2471 = vpop.f32.mrf.mxu0
        %2472 = vmatprep.mubr.bf16.mxu0 0
        %2473 = vmatmul.mubr.bf16.gmra.mxu0 %v2373
        %v2474 = vpop.f32.mrf.mxu0
        %v2475 = vadd.f32 0.0, %v2474
        %v2476 = vpop.f32.mrf.mxu0
        %v2477 = vpop.f32.mrf.mxu0
        %v2478 = vadd.f32 0.0, %v2477
        %v2479 = vpop.f32.mrf.mxu0
        %2480 = vmatprep.mubr.bf16.mxu0 0
        %2481 = vmatmul.mubr.bf16.gmra.mxu0 %v2376
        %v2482 = vpop.f32.mrf.mxu0
        %v2483 = vadd.f32 0.0, %v2482
        %v2484 = vpop.f32.mrf.mxu0
        %v2485 = vpop.f32.mrf.mxu0
        %v2486 = vadd.f32 0.0, %v2485
        %v2487 = vpop.f32.mrf.mxu0
        %2488 = vmatprep.mubr.bf16.mxu0 0
        %2489 = vmatmul.mubr.bf16.gmra.mxu0 %v2379
        %v2490 = vpop.f32.mrf.mxu0
        %v2491 = vadd.f32 0.0, %v2490
        %v2492 = vpop.f32.mrf.mxu0
        %v2493 = vpop.f32.mrf.mxu0
        %v2494 = vadd.f32 0.0, %v2493
        %v2495 = vpop.f32.mrf.mxu0
        %2496 = vmatprep.mubr.bf16.mxu0 0
        %2497 = vmatmul.mubr.bf16.gmra.mxu0 %v2382
        %v2498 = vpop.f32.mrf.mxu0
        %v2499 = vadd.f32 0.0, %v2498
        %v2500 = vpop.f32.mrf.mxu0
        %v2501 = vpop.f32.mrf.mxu0
        %v2502 = vadd.f32 0.0, %v2501
        %v2503 = vpop.f32.mrf.mxu0
        %2504 = vmatprep.mubr.bf16.mxu0 0
        %2505 = vmatmul.mubr.bf16.gmra.mxu0 %v2385
        %v2506 = vpop.f32.mrf.mxu0
        %v2507 = vadd.f32 0.0, %v2506
        %v2508 = vpop.f32.mrf.mxu0
        %v2509 = vpop.f32.mrf.mxu0
        %v2510 = vadd.f32 0.0, %v2509
        %v2511 = vpop.f32.mrf.mxu0
        %2512 = vmatprep.mubr.bf16.mxu0 0
        %2513 = vmatmul.mubr.bf16.gmra.mxu0 %v2388
        %v2514 = vpop.f32.mrf.mxu0
        %v2515 = vadd.f32 0.0, %v2514
        %v2516 = vpop.f32.mrf.mxu0
        %v2517 = vpop.f32.mrf.mxu0
        %v2518 = vadd.f32 0.0, %v2517
        %v2519 = vpop.f32.mrf.mxu0
        %2520 = vmatprep.mubr.bf16.mxu0 0
        %2521 = vmatmul.mubr.bf16.gmra.mxu0 %v2391
        %v2522 = vpop.f32.mrf.mxu0
        %v2523 = vadd.f32 0.0, %v2522
        %v2524 = vpop.f32.mrf.mxu0
        %v2525 = vpop.f32.mrf.mxu0
        %v2526 = vadd.f32 0.0, %v2525
        %v2527 = vpop.f32.mrf.mxu0
        %2528 = vmatprep.mubr.bf16.mxu0 0
        %2529 = vmatmul.mubr.bf16.gmra.mxu0 %v2394
        %v2530 = vpop.f32.mrf.mxu0
        %v2531 = vadd.f32 0.0, %v2530
        %v2532 = vpop.f32.mrf.mxu0
        %v2533 = vpop.f32.mrf.mxu0
        %v2534 = vadd.f32 0.0, %v2533
        %v2535 = vpop.f32.mrf.mxu0
        %2536 = vmatprep.mubr.bf16.mxu0 0
        %2537 = vmatmul.mubr.bf16.gmra.mxu0 %v2397
        %v2538 = vpop.f32.mrf.mxu0
        %v2539 = vadd.f32 0.0, %v2538
        %v2540 = vpop.f32.mrf.mxu0
        %v2541 = vpop.f32.mrf.mxu0
        %v2542 = vadd.f32 0.0, %v2541
        %v2543 = vpop.f32.mrf.mxu0
        %2544 = vmatprep.mubr.bf16.mxu0 0
        %2545 = vmatmul.mubr.bf16.gmra.mxu0 %v2400
        %v2546 = vpop.f32.mrf.mxu0
        %v2547 = vadd.f32 0.0, %v2546
        %v2548 = vpop.f32.mrf.mxu0
        %v2549 = vpop.f32.mrf.mxu0
        %v2550 = vadd.f32 0.0, %v2549
        %v2551 = vpop.f32.mrf.mxu0
        %2552 = vmatprep.mubr.bf16.mxu0 0
        %2553 = vmatmul.mubr.bf16.gmra.mxu0 %v2403
        %v2554 = vpop.f32.mrf.mxu0
        %v2555 = vadd.f32 0.0, %v2554
        %v2556 = vpop.f32.mrf.mxu0
        %v2557 = vpop.f32.mrf.mxu0
        %v2558 = vadd.f32 0.0, %v2557
        %v2559 = vpop.f32.mrf.mxu0
        %2560 = vmatprep.mubr.bf16.mxu0 0
        %2561 = vmatmul.mubr.bf16.gmra.mxu0 %v2406
        %v2562 = vpop.f32.mrf.mxu0
        %v2563 = vadd.f32 0.0, %v2562
        %v2564 = vpop.f32.mrf.mxu0
        %v2565 = vpop.f32.mrf.mxu0
        %v2566 = vadd.f32 0.0, %v2565
        %v2567 = vpop.f32.mrf.mxu0
        %2568 = vdwg.mxu0
        %v2585 = vunpack.c.l.b16 %v925
        %v2586 = vunpack.c.l.b16 %v926
        %v2587 = vunpack.c.l.b16 %v927
        %v2588 = vunpack.c.l.b16 %v928
        %v2589 = vunpack.c.l.b16 %v929
        %v2590 = vunpack.c.l.b16 %v930
        %v2591 = vunpack.c.l.b16 %v931
        %v2592 = vunpack.c.l.b16 %v932
        %v2593 = vunpack.c.l.b16 %v933
        %v2594 = vunpack.c.l.b16 %v934
        %v2595 = vunpack.c.l.b16 %v935
        %v2596 = vunpack.c.l.b16 %v936
        %v2597 = vunpack.c.l.b16 %v937
        %v2598 = vunpack.c.l.b16 %v938
        %v2599 = vunpack.c.l.b16 %v939
        %v2600 = vunpack.c.l.b16 %v940
        %v2601 = vpack.c.b16 %v2586, %v2585
        %v2602 = vpack.c.b16 %v2588, %v2587
        %v2603 = vpack.c.b16 %v2590, %v2589
        %v2604 = vpack.c.b16 %v2592, %v2591
        %v2605 = vpack.c.b16 %v2594, %v2593
        %v2606 = vpack.c.b16 %v2596, %v2595
        %v2607 = vpack.c.b16 %v2598, %v2597
        %v2608 = vpack.c.b16 %v2600, %v2599
        %2617 = vmatprep.subr.bf16.mxu0 0
        %2618 = vmatpush1.bf16.msra.mxu0 %v2608
        %2619 = vmatprep.subr.bf16.mxu0 0
        %2620 = vmatpush1.bf16.msra.mxu0 %v2607
        %2621 = vmatprep.subr.bf16.mxu0 0
        %2622 = vmatpush1.bf16.msra.mxu0 %v2606
        %2623 = vmatprep.subr.bf16.mxu0 0
        %2624 = vmatpush1.bf16.msra.mxu0 %v2605
        %2625 = vmatprep.subr.bf16.mxu0 0
        %2626 = vmatpush1.bf16.msra.mxu0 %v2604
        %2627 = vmatprep.subr.bf16.mxu0 0
        %2628 = vmatpush1.bf16.msra.mxu0 %v2603
        %2629 = vmatprep.subr.bf16.mxu0 0
        %2630 = vmatpush1.bf16.msra.mxu0 %v2602
        %2631 = vmatprep.subr.bf16.mxu0 0
        %2632 = vmatpush1.bf16.msra.mxu0 %v2601
        %2633 = vmatprep.subr.bf16.mxu0 0
        %2634 = vmatpush2.bf16.msra.mxu0 0
        %2635 = vmatprep.subr.bf16.mxu0 0
        %2636 = vmatpush2.bf16.msra.mxu0 0
        %2637 = vmatprep.subr.bf16.mxu0 0
        %2638 = vmatpush2.bf16.msra.mxu0 0
        %2639 = vmatprep.subr.bf16.mxu0 0
        %2640 = vmatpush2.bf16.msra.mxu0 0
        %2641 = vmatprep.subr.bf16.mxu0 0
        %2642 = vmatpush2.bf16.msra.mxu0 0
        %2643 = vmatprep.subr.bf16.mxu0 0
        %2644 = vmatpush2.bf16.msra.mxu0 0
        %2645 = vmatprep.subr.bf16.mxu0 0
        %2646 = vmatpush2.bf16.msra.mxu0 0
        %2647 = vmatprep.subr.bf16.mxu0 0
        %2648 = vmatpush2.bf16.msra.mxu0 0
        %2649 = vmatprep.mubr.bf16.mxu0 0
        %2650 = vmatmul.mubr.bf16.gmra.mxu0 %v2274
        %v2651 = vpop.f32.mrf.mxu0
        %v2652 = vadd.f32 %v2443, %v2651
        %v2653 = vpop.f32.mrf.mxu0
        %v2654 = vpop.f32.mrf.mxu0
        %v2655 = vadd.f32 %v2446, %v2654
        %v2656 = vpop.f32.mrf.mxu0
        %2657 = vmatprep.mubr.bf16.mxu0 0
        %2658 = vmatmul.mubr.bf16.gmra.mxu0 %v2275
        %v2659 = vpop.f32.mrf.mxu0
        %v2660 = vadd.f32 %v2451, %v2659
        %v2661 = vpop.f32.mrf.mxu0
        %v2662 = vpop.f32.mrf.mxu0
        %v2663 = vadd.f32 %v2454, %v2662
        %v2664 = vpop.f32.mrf.mxu0
        %2665 = vmatprep.mubr.bf16.mxu0 0
        %2666 = vmatmul.mubr.bf16.gmra.mxu0 %v2276
        %v2667 = vpop.f32.mrf.mxu0
        %v2668 = vadd.f32 %v2459, %v2667
        %v2669 = vpop.f32.mrf.mxu0
        %v2670 = vpop.f32.mrf.mxu0
        %v2671 = vadd.f32 %v2462, %v2670
        %v2672 = vpop.f32.mrf.mxu0
        %2673 = vmatprep.mubr.bf16.mxu0 0
        %2674 = vmatmul.mubr.bf16.gmra.mxu0 %v2277
        %v2675 = vpop.f32.mrf.mxu0
        %v2676 = vadd.f32 %v2467, %v2675
        %v2677 = vpop.f32.mrf.mxu0
        %v2678 = vpop.f32.mrf.mxu0
        %v2679 = vadd.f32 %v2470, %v2678
        %v2680 = vpop.f32.mrf.mxu0
        %2681 = vmatprep.mubr.bf16.mxu0 0
        %2682 = vmatmul.mubr.bf16.gmra.mxu0 %v2278
        %v2683 = vpop.f32.mrf.mxu0
        %v2684 = vadd.f32 %v2475, %v2683
        %v2685 = vpop.f32.mrf.mxu0
        %v2686 = vpop.f32.mrf.mxu0
        %v2687 = vadd.f32 %v2478, %v2686
        %v2688 = vpop.f32.mrf.mxu0
        %2689 = vmatprep.mubr.bf16.mxu0 0
        %2690 = vmatmul.mubr.bf16.gmra.mxu0 %v2279
        %v2691 = vpop.f32.mrf.mxu0
        %v2692 = vadd.f32 %v2483, %v2691
        %v2693 = vpop.f32.mrf.mxu0
        %v2694 = vpop.f32.mrf.mxu0
        %v2695 = vadd.f32 %v2486, %v2694
        %v2696 = vpop.f32.mrf.mxu0
        %2697 = vmatprep.mubr.bf16.mxu0 0
        %2698 = vmatmul.mubr.bf16.gmra.mxu0 %v2280
        %v2699 = vpop.f32.mrf.mxu0
        %v2700 = vadd.f32 %v2491, %v2699
        %v2701 = vpop.f32.mrf.mxu0
        %v2702 = vpop.f32.mrf.mxu0
        %v2703 = vadd.f32 %v2494, %v2702
        %v2704 = vpop.f32.mrf.mxu0
        %2705 = vmatprep.mubr.bf16.mxu0 0
        %2706 = vmatmul.mubr.bf16.gmra.mxu0 %v2281
        %v2707 = vpop.f32.mrf.mxu0
        %v2708 = vadd.f32 %v2499, %v2707
        %v2709 = vpop.f32.mrf.mxu0
        %v2710 = vpop.f32.mrf.mxu0
        %v2711 = vadd.f32 %v2502, %v2710
        %v2712 = vpop.f32.mrf.mxu0
        %2713 = vmatprep.mubr.bf16.mxu0 0
        %2714 = vmatmul.mubr.bf16.gmra.mxu0 %v2282
        %v2715 = vpop.f32.mrf.mxu0
        %v2716 = vadd.f32 %v2507, %v2715
        %v2717 = vpop.f32.mrf.mxu0
        %v2718 = vpop.f32.mrf.mxu0
        %v2719 = vadd.f32 %v2510, %v2718
        %v2720 = vpop.f32.mrf.mxu0
        %2721 = vmatprep.mubr.bf16.mxu0 0
        %2722 = vmatmul.mubr.bf16.gmra.mxu0 %v2283
        %v2723 = vpop.f32.mrf.mxu0
        %v2724 = vadd.f32 %v2515, %v2723
        %v2725 = vpop.f32.mrf.mxu0
        %v2726 = vpop.f32.mrf.mxu0
        %v2727 = vadd.f32 %v2518, %v2726
        %v2728 = vpop.f32.mrf.mxu0
        %2729 = vmatprep.mubr.bf16.mxu0 0
        %2730 = vmatmul.mubr.bf16.gmra.mxu0 %v2284
        %v2731 = vpop.f32.mrf.mxu0
        %v2732 = vadd.f32 %v2523, %v2731
        %v2733 = vpop.f32.mrf.mxu0
        %v2734 = vpop.f32.mrf.mxu0
        %v2735 = vadd.f32 %v2526, %v2734
        %v2736 = vpop.f32.mrf.mxu0
        %2737 = vmatprep.mubr.bf16.mxu0 0
        %2738 = vmatmul.mubr.bf16.gmra.mxu0 %v2285
        %v2739 = vpop.f32.mrf.mxu0
        %v2740 = vadd.f32 %v2531, %v2739
        %v2741 = vpop.f32.mrf.mxu0
        %v2742 = vpop.f32.mrf.mxu0
        %v2743 = vadd.f32 %v2534, %v2742
        %v2744 = vpop.f32.mrf.mxu0
        %2745 = vmatprep.mubr.bf16.mxu0 0
        %2746 = vmatmul.mubr.bf16.gmra.mxu0 %v2286
        %v2747 = vpop.f32.mrf.mxu0
        %v2748 = vadd.f32 %v2539, %v2747
        %v2749 = vpop.f32.mrf.mxu0
        %v2750 = vpop.f32.mrf.mxu0
        %v2751 = vadd.f32 %v2542, %v2750
        %v2752 = vpop.f32.mrf.mxu0
        %2753 = vmatprep.mubr.bf16.mxu0 0
        %2754 = vmatmul.mubr.bf16.gmra.mxu0 %v2287
        %v2755 = vpop.f32.mrf.mxu0
        %v2756 = vadd.f32 %v2547, %v2755
        %v2757 = vpop.f32.mrf.mxu0
        %v2758 = vpop.f32.mrf.mxu0
        %v2759 = vadd.f32 %v2550, %v2758
        %v2760 = vpop.f32.mrf.mxu0
        %2761 = vmatprep.mubr.bf16.mxu0 0
        %2762 = vmatmul.mubr.bf16.gmra.mxu0 %v2288
        %v2763 = vpop.f32.mrf.mxu0
        %v2764 = vadd.f32 %v2555, %v2763
        %v2765 = vpop.f32.mrf.mxu0
        %v2766 = vpop.f32.mrf.mxu0
        %v2767 = vadd.f32 %v2558, %v2766
        %v2768 = vpop.f32.mrf.mxu0
        %2769 = vmatprep.mubr.bf16.mxu0 0
        %2770 = vmatmul.mubr.bf16.gmra.mxu0 %v2289
        %v2771 = vpop.f32.mrf.mxu0
        %v2772 = vadd.f32 %v2563, %v2771
        %v2773 = vpop.f32.mrf.mxu0
        %v2774 = vpop.f32.mrf.mxu0
        %v2775 = vadd.f32 %v2566, %v2774
        %v2776 = vpop.f32.mrf.mxu0
        %2777 = vdwg.mxu0
        %v2779 = vlaneseq
        %v2780 = vshrl.u32 %v2779, 7
        %v2781 = vsub.s32 0, %v2780
        %v2782 = vrot.slane %v943, %v2781
        %v2784 = vadd.f32 %v2652, %v2782
        %v2785 = vadd.f32 %v2655, %v2782
        %v2786 = vadd.f32 %v2660, %v2782
        %v2787 = vadd.f32 %v2663, %v2782
        %v2788 = vadd.f32 %v2668, %v2782
        %v2789 = vadd.f32 %v2671, %v2782
        %v2790 = vadd.f32 %v2676, %v2782
        %v2791 = vadd.f32 %v2679, %v2782
        %v2792 = vadd.f32 %v2684, %v2782
        %v2793 = vadd.f32 %v2687, %v2782
        %v2794 = vadd.f32 %v2692, %v2782
        %v2795 = vadd.f32 %v2695, %v2782
        %v2796 = vadd.f32 %v2700, %v2782
        %v2797 = vadd.f32 %v2703, %v2782
        %v2798 = vadd.f32 %v2708, %v2782
        %v2799 = vadd.f32 %v2711, %v2782
        %v2800 = vadd.f32 %v2716, %v2782
        %v2801 = vadd.f32 %v2719, %v2782
        %v2802 = vadd.f32 %v2724, %v2782
        %v2803 = vadd.f32 %v2727, %v2782
        %v2804 = vadd.f32 %v2732, %v2782
        %v2805 = vadd.f32 %v2735, %v2782
        %v2806 = vadd.f32 %v2740, %v2782
        %v2807 = vadd.f32 %v2743, %v2782
        %v2808 = vadd.f32 %v2748, %v2782
        %v2809 = vadd.f32 %v2751, %v2782
        %v2810 = vadd.f32 %v2756, %v2782
        %v2811 = vadd.f32 %v2759, %v2782
        %v2812 = vadd.f32 %v2764, %v2782
        %v2813 = vadd.f32 %v2767, %v2782
        %v2814 = vadd.f32 %v2772, %v2782
        %v2815 = vadd.f32 %v2775, %v2782
        %v2816 = vld [vmem:[%s5] sm:$0xf]
        %v2817 = vld [vmem:[%s5 + $0x4] sm:$0xf]
        %v2818 = vld [vmem:[%s5 + $0x8] sm:$0xf]
        %v2819 = vld [vmem:[%s5 + $0xc] sm:$0xf]
        %v2820 = vld [vmem:[%s5 + $0x10] sm:$0xf]
        %v2821 = vld [vmem:[%s5 + $0x14] sm:$0xf]
        %v2822 = vld [vmem:[%s5 + $0x18] sm:$0xf]
        %v2823 = vld [vmem:[%s5 + $0x1c] sm:$0xf]
        %v2824 = vld [vmem:[%s5 + $0x20] sm:$0xf]
        %v2825 = vld [vmem:[%s5 + $0x24] sm:$0xf]
        %v2826 = vld [vmem:[%s5 + $0x28] sm:$0xf]
        %v2827 = vld [vmem:[%s5 + $0x2c] sm:$0xf]
        %v2828 = vld [vmem:[%s5 + $0x30] sm:$0xf]
        %v2829 = vld [vmem:[%s5 + $0x34] sm:$0xf]
        %v2830 = vld [vmem:[%s5 + $0x38] sm:$0xf]
        %v2831 = vld [vmem:[%s5 + $0x3c] sm:$0xf]
        %v2832 = vld [vmem:[%s5 + $0x40] sm:$0xf]
        %v2833 = vld [vmem:[%s5 + $0x44] sm:$0xf]
        %v2834 = vld [vmem:[%s5 + $0x48] sm:$0xf]
        %v2835 = vld [vmem:[%s5 + $0x4c] sm:$0xf]
        %v2836 = vld [vmem:[%s5 + $0x50] sm:$0xf]
        %v2837 = vld [vmem:[%s5 + $0x54] sm:$0xf]
        %v2838 = vld [vmem:[%s5 + $0x58] sm:$0xf]
        %v2839 = vld [vmem:[%s5 + $0x5c] sm:$0xf]
        %v2840 = vld [vmem:[%s5 + $0x60] sm:$0xf]
        %v2841 = vld [vmem:[%s5 + $0x64] sm:$0xf]
        %v2842 = vld [vmem:[%s5 + $0x68] sm:$0xf]
        %v2843 = vld [vmem:[%s5 + $0x6c] sm:$0xf]
        %v2844 = vld [vmem:[%s5 + $0x70] sm:$0xf]
        %v2845 = vld [vmem:[%s5 + $0x74] sm:$0xf]
        %v2846 = vld [vmem:[%s5 + $0x78] sm:$0xf]
        %v2847 = vld [vmem:[%s5 + $0x7c] sm:$0xf]
        %v2848 = vld [vmem:[%s5 + $0x80] sm:$0xf]
        %v2849 = vld [vmem:[%s5 + $0x84] sm:$0xf]
        %v2850 = vld [vmem:[%s5 + $0x88] sm:$0xf]
        %v2851 = vld [vmem:[%s5 + $0x8c] sm:$0xf]
        %v2852 = vld [vmem:[%s5 + $0x90] sm:$0xf]
        %v2853 = vld [vmem:[%s5 + $0x94] sm:$0xf]
        %v2854 = vld [vmem:[%s5 + $0x98] sm:$0xf]
        %v2855 = vld [vmem:[%s5 + $0x9c] sm:$0xf]
        %v2856 = vld [vmem:[%s5 + $0xa0] sm:$0xf]
        %v2857 = vld [vmem:[%s5 + $0xa4] sm:$0xf]
        %v2858 = vld [vmem:[%s5 + $0xa8] sm:$0xf]
        %v2859 = vld [vmem:[%s5 + $0xac] sm:$0xf]
        %v2860 = vld [vmem:[%s5 + $0xb0] sm:$0xf]
        %v2861 = vld [vmem:[%s5 + $0xb4] sm:$0xf]
        %v2862 = vld [vmem:[%s5 + $0xb8] sm:$0xf]
        %v2863 = vld [vmem:[%s5 + $0xbc] sm:$0xf]
        %v2864 = vld [vmem:[%s5 + $0xc0] sm:$0xf]
        %v2865 = vld [vmem:[%s5 + $0xc4] sm:$0xf]
        %v2866 = vld [vmem:[%s6] sm:$0x1]
        %vm2867 = vcmask 1041408
        %v2868 = vrot.slane %v799, 6
        %v2869 = vrot.slane %v802, 6
        %v2870 = vsel %vm2867, %v2868, %v2869
        %v2871 = vrot.slane %v807, 6
        %v2872 = vrot.slane %v810, 6
        %v2873 = vsel %vm2867, %v2871, %v2872
        %v2874 = vrot.slane %v815, 6
        %v2875 = vrot.slane %v818, 6
        %v2876 = vsel %vm2867, %v2874, %v2875
        %v2877 = vrot.slane %v823, 6
        %v2878 = vrot.slane %v826, 6
        %v2879 = vsel %vm2867, %v2877, %v2878
        %v2880 = vrot.slane %v831, 6
        %v2881 = vrot.slane %v834, 6
        %v2882 = vsel %vm2867, %v2880, %v2881
        %v2883 = vrot.slane %v839, 6
        %v2884 = vrot.slane %v842, 6
        %v2885 = vsel %vm2867, %v2883, %v2884
        %v2886 = vrot.slane %v847, 6
        %v2887 = vrot.slane %v850, 6
        %v2888 = vsel %vm2867, %v2886, %v2887
        %v2889 = vrot.slane %v855, 6
        %v2890 = vrot.slane %v858, 6
        %v2891 = vsel %vm2867, %v2889, %v2890
        %v2892 = vrot.slane %v863, 6
        %v2893 = vrot.slane %v866, 6
        %v2894 = vsel %vm2867, %v2892, %v2893
        %v2895 = vrot.slane %v871, 6
        %v2896 = vrot.slane %v874, 6
        %v2897 = vsel %vm2867, %v2895, %v2896
        %v2898 = vrot.slane %v879, 6
        %v2899 = vrot.slane %v882, 6
        %v2900 = vsel %vm2867, %v2898, %v2899
        %v2901 = vrot.slane %v887, 6
        %v2902 = vrot.slane %v890, 6
        %v2903 = vsel %vm2867, %v2901, %v2902
        %v2904 = vrot.slane %v895, 6
        %v2905 = vrot.slane %v898, 6
        %v2906 = vsel %vm2867, %v2904, %v2905
        %v2907 = vrot.slane %v903, 6
        %v2908 = vrot.slane %v906, 6
        %v2909 = vsel %vm2867, %v2907, %v2908
        %v2910 = vrot.slane %v911, 6
        %v2911 = vrot.slane %v914, 6
        %v2912 = vsel %vm2867, %v2910, %v2911
        %v2913 = vrot.slane %v919, 6
        %v2914 = vrot.slane %v922, 6
        %v2915 = vsel %vm2867, %v2913, %v2914
        %2916 = vrot.lane.b32.xlu0 %v2868, 80
        %v2917 = vpop.permute.xlu0 %2916
        %2918 = vrot.lane.b32.xlu0 %v2870, 80
        %v2919 = vpop.permute.xlu0 %2918
        %2920 = vrot.lane.b32.xlu0 %v2871, 80
        %v2921 = vpop.permute.xlu0 %2920
        %2922 = vrot.lane.b32.xlu0 %v2873, 80
        %v2923 = vpop.permute.xlu0 %2922
        %2924 = vrot.lane.b32.xlu0 %v2874, 80
        %v2925 = vpop.permute.xlu0 %2924
        %2926 = vrot.lane.b32.xlu0 %v2876, 80
        %v2927 = vpop.permute.xlu0 %2926
        %2928 = vrot.lane.b32.xlu0 %v2877, 80
        %v2929 = vpop.permute.xlu0 %2928
        %2930 = vrot.lane.b32.xlu0 %v2879, 80
        %v2931 = vpop.permute.xlu0 %2930
        %2932 = vrot.lane.b32.xlu0 %v2880, 80
        %v2933 = vpop.permute.xlu0 %2932
        %2934 = vrot.lane.b32.xlu0 %v2882, 80
        %v2935 = vpop.permute.xlu0 %2934
        %2936 = vrot.lane.b32.xlu0 %v2883, 80
        %v2937 = vpop.permute.xlu0 %2936
        %2938 = vrot.lane.b32.xlu0 %v2885, 80
        %v2939 = vpop.permute.xlu0 %2938
        %2940 = vrot.lane.b32.xlu0 %v2886, 80
        %v2941 = vpop.permute.xlu0 %2940
        %2942 = vrot.lane.b32.xlu0 %v2888, 80
        %v2943 = vpop.permute.xlu0 %2942
        %2944 = vrot.lane.b32.xlu0 %v2889, 80
        %v2945 = vpop.permute.xlu0 %2944
        %2946 = vrot.lane.b32.xlu0 %v2891, 80
        %v2947 = vpop.permute.xlu0 %2946
        %2948 = vrot.lane.b32.xlu0 %v2892, 80
        %v2949 = vpop.permute.xlu0 %2948
        %2950 = vrot.lane.b32.xlu0 %v2894, 80
        %v2951 = vpop.permute.xlu0 %2950
        %2952 = vrot.lane.b32.xlu0 %v2895, 80
        %v2953 = vpop.permute.xlu0 %2952
        %2954 = vrot.lane.b32.xlu0 %v2897, 80
        %v2955 = vpop.permute.xlu0 %2954
        %2956 = vrot.lane.b32.xlu0 %v2898, 80
        %v2957 = vpop.permute.xlu0 %2956
        %2958 = vrot.lane.b32.xlu0 %v2900, 80
        %v2959 = vpop.permute.xlu0 %2958
        %2960 = vrot.lane.b32.xlu0 %v2901, 80
        %v2961 = vpop.permute.xlu0 %2960
        %2962 = vrot.lane.b32.xlu0 %v2903, 80
        %v2963 = vpop.permute.xlu0 %2962
        %2964 = vrot.lane.b32.xlu0 %v2904, 80
        %v2965 = vpop.permute.xlu0 %2964
        %2966 = vrot.lane.b32.xlu0 %v2906, 80
        %v2967 = vpop.permute.xlu0 %2966
        %2968 = vrot.lane.b32.xlu0 %v2907, 80
        %v2969 = vpop.permute.xlu0 %2968
        %2970 = vrot.lane.b32.xlu0 %v2909, 80
        %v2971 = vpop.permute.xlu0 %2970
        %2972 = vrot.lane.b32.xlu0 %v2910, 80
        %v2973 = vpop.permute.xlu0 %2972
        %2974 = vrot.lane.b32.xlu0 %v2912, 80
        %v2975 = vpop.permute.xlu0 %2974
        %2976 = vrot.lane.b32.xlu0 %v2913, 80
        %v2977 = vpop.permute.xlu0 %2976
        %2978 = vrot.lane.b32.xlu0 %v2915, 80
        %v2979 = vpop.permute.xlu0 %2978
        %v3010 = vsel %vm2867, 0.0, %v2917
        %v3011 = vsel %vm2867, 0.0, %v2921
        %v3012 = vsel %vm2867, 0.0, %v2925
        %v3013 = vsel %vm2867, 0.0, %v2929
        %v3014 = vsel %vm2867, 0.0, %v2933
        %v3015 = vsel %vm2867, 0.0, %v2937
        %v3016 = vsel %vm2867, 0.0, %v2941
        %v3017 = vsel %vm2867, 0.0, %v2945
        %v3018 = vsel %vm2867, 0.0, %v2949
        %v3019 = vsel %vm2867, 0.0, %v2953
        %v3020 = vsel %vm2867, 0.0, %v2957
        %v3021 = vsel %vm2867, 0.0, %v2961
        %v3022 = vsel %vm2867, 0.0, %v2965
        %v3023 = vsel %vm2867, 0.0, %v2969
        %v3024 = vsel %vm2867, 0.0, %v2973
        %v3025 = vsel %vm2867, 0.0, %v2977
        %3026 = vrot.lane.b32.xlu0 %v977, 80
        %v3027 = vpop.permute.xlu0 %3026
        %3028 = vrot.lane.b32.xlu0 %v979, 80
        %v3029 = vpop.permute.xlu0 %3028
        %3030 = vrot.lane.b32.xlu0 %v980, 80
        %v3031 = vpop.permute.xlu0 %3030
        %3032 = vrot.lane.b32.xlu0 %v982, 80
        %v3033 = vpop.permute.xlu0 %3032
        %3034 = vrot.lane.b32.xlu0 %v983, 80
        %v3035 = vpop.permute.xlu0 %3034
        %3036 = vrot.lane.b32.xlu0 %v985, 80
        %v3037 = vpop.permute.xlu0 %3036
        %3038 = vrot.lane.b32.xlu0 %v986, 80
        %v3039 = vpop.permute.xlu0 %3038
        %3040 = vrot.lane.b32.xlu0 %v988, 80
        %v3041 = vpop.permute.xlu0 %3040
        %3042 = vrot.lane.b32.xlu0 %v989, 80
        %v3043 = vpop.permute.xlu0 %3042
        %3044 = vrot.lane.b32.xlu0 %v991, 80
        %v3045 = vpop.permute.xlu0 %3044
        %3046 = vrot.lane.b32.xlu0 %v992, 80
        %v3047 = vpop.permute.xlu0 %3046
        %3048 = vrot.lane.b32.xlu0 %v994, 80
        %v3049 = vpop.permute.xlu0 %3048
        %3050 = vrot.lane.b32.xlu0 %v995, 80
        %v3051 = vpop.permute.xlu0 %3050
        %3052 = vrot.lane.b32.xlu0 %v997, 80
        %v3053 = vpop.permute.xlu0 %3052
        %3054 = vrot.lane.b32.xlu0 %v998, 80
        %v3055 = vpop.permute.xlu0 %3054
        %3056 = vrot.lane.b32.xlu0 %v1000, 80
        %v3057 = vpop.permute.xlu0 %3056
        %3058 = vrot.lane.b32.xlu0 %v1001, 80
        %v3059 = vpop.permute.xlu0 %3058
        %3060 = vrot.lane.b32.xlu0 %v1003, 80
        %v3061 = vpop.permute.xlu0 %3060
        %3062 = vrot.lane.b32.xlu0 %v1004, 80
        %v3063 = vpop.permute.xlu0 %3062
        %3064 = vrot.lane.b32.xlu0 %v1006, 80
        %v3065 = vpop.permute.xlu0 %3064
        %3066 = vrot.lane.b32.xlu0 %v1007, 80
        %v3067 = vpop.permute.xlu0 %3066
        %3068 = vrot.lane.b32.xlu0 %v1009, 80
        %v3069 = vpop.permute.xlu0 %3068
        %3070 = vrot.lane.b32.xlu0 %v1010, 80
        %v3071 = vpop.permute.xlu0 %3070
        %3072 = vrot.lane.b32.xlu0 %v1012, 80
        %v3073 = vpop.permute.xlu0 %3072
        %3074 = vrot.lane.b32.xlu0 %v1013, 80
        %v3075 = vpop.permute.xlu0 %3074
        %3076 = vrot.lane.b32.xlu0 %v1015, 80
        %v3077 = vpop.permute.xlu0 %3076
        %3078 = vrot.lane.b32.xlu0 %v1016, 80
        %v3079 = vpop.permute.xlu0 %3078
        %3080 = vrot.lane.b32.xlu0 %v1018, 80
        %v3081 = vpop.permute.xlu0 %3080
        %3082 = vrot.lane.b32.xlu0 %v1019, 80
        %v3083 = vpop.permute.xlu0 %3082
        %3084 = vrot.lane.b32.xlu0 %v1021, 80
        %v3085 = vpop.permute.xlu0 %3084
        %3086 = vrot.lane.b32.xlu0 %v1022, 80
        %v3087 = vpop.permute.xlu0 %3086
        %3088 = vrot.lane.b32.xlu0 %v1024, 80
        %v3089 = vpop.permute.xlu0 %3088
        %v3121 = vsel %vm976, 0.0, %v3027
        %v3122 = vsel %vm976, 0.0, %v3031
        %v3123 = vsel %vm976, 0.0, %v3035
        %v3124 = vsel %vm976, 0.0, %v3039
        %v3125 = vsel %vm976, 0.0, %v3043
        %v3126 = vsel %vm976, 0.0, %v3047
        %v3127 = vsel %vm976, 0.0, %v3051
        %v3128 = vsel %vm976, 0.0, %v3055
        %v3129 = vsel %vm976, 0.0, %v3059
        %v3130 = vsel %vm976, 0.0, %v3063
        %v3131 = vsel %vm976, 0.0, %v3067
        %v3132 = vsel %vm976, 0.0, %v3071
        %v3133 = vsel %vm976, 0.0, %v3075
        %v3134 = vsel %vm976, 0.0, %v3079
        %v3135 = vsel %vm976, 0.0, %v3083
        %v3136 = vsel %vm976, 0.0, %v3087
        %vm3137 = vcmask 1045504
        %v3138 = vrot.slane %v799, 2
        %v3139 = vrot.slane %v802, 2
        %v3140 = vsel %vm3137, %v3138, %v3139
        %v3141 = vrot.slane %v807, 2
        %v3142 = vrot.slane %v810, 2
        %v3143 = vsel %vm3137, %v3141, %v3142
        %v3144 = vrot.slane %v815, 2
        %v3145 = vrot.slane %v818, 2
        %v3146 = vsel %vm3137, %v3144, %v3145
        %v3147 = vrot.slane %v823, 2
        %v3148 = vrot.slane %v826, 2
        %v3149 = vsel %vm3137, %v3147, %v3148
        %v3150 = vrot.slane %v831, 2
        %v3151 = vrot.slane %v834, 2
        %v3152 = vsel %vm3137, %v3150, %v3151
        %v3153 = vrot.slane %v839, 2
        %v3154 = vrot.slane %v842, 2
        %v3155 = vsel %vm3137, %v3153, %v3154
        %v3156 = vrot.slane %v847, 2
        %v3157 = vrot.slane %v850, 2
        %v3158 = vsel %vm3137, %v3156, %v3157
        %v3159 = vrot.slane %v855, 2
        %v3160 = vrot.slane %v858, 2
        %v3161 = vsel %vm3137, %v3159, %v3160
        %v3162 = vrot.slane %v863, 2
        %v3163 = vrot.slane %v866, 2
        %v3164 = vsel %vm3137, %v3162, %v3163
        %v3165 = vrot.slane %v871, 2
        %v3166 = vrot.slane %v874, 2
        %v3167 = vsel %vm3137, %v3165, %v3166
        %v3168 = vrot.slane %v879, 2
        %v3169 = vrot.slane %v882, 2
        %v3170 = vsel %vm3137, %v3168, %v3169
        %v3171 = vrot.slane %v887, 2
        %v3172 = vrot.slane %v890, 2
        %v3173 = vsel %vm3137, %v3171, %v3172
        %v3174 = vrot.slane %v895, 2
        %v3175 = vrot.slane %v898, 2
        %v3176 = vsel %vm3137, %v3174, %v3175
        %v3177 = vrot.slane %v903, 2
        %v3178 = vrot.slane %v906, 2
        %v3179 = vsel %vm3137, %v3177, %v3178
        %v3180 = vrot.slane %v911, 2
        %v3181 = vrot.slane %v914, 2
        %v3182 = vsel %vm3137, %v3180, %v3181
        %v3183 = vrot.slane %v919, 2
        %v3184 = vrot.slane %v922, 2
        %v3185 = vsel %vm3137, %v3183, %v3184
        %v3217 = vsel %vm3137, %v3139, 0.0
        %v3218 = vsel %vm3137, %v3142, 0.0
        %v3219 = vsel %vm3137, %v3145, 0.0
        %v3220 = vsel %vm3137, %v3148, 0.0
        %v3221 = vsel %vm3137, %v3151, 0.0
        %v3222 = vsel %vm3137, %v3154, 0.0
        %v3223 = vsel %vm3137, %v3157, 0.0
        %v3224 = vsel %vm3137, %v3160, 0.0
        %v3225 = vsel %vm3137, %v3163, 0.0
        %v3226 = vsel %vm3137, %v3166, 0.0
        %v3227 = vsel %vm3137, %v3169, 0.0
        %v3228 = vsel %vm3137, %v3172, 0.0
        %v3229 = vsel %vm3137, %v3175, 0.0
        %v3230 = vsel %vm3137, %v3178, 0.0
        %v3231 = vsel %vm3137, %v3181, 0.0
        %v3232 = vsel %vm3137, %v3184, 0.0
        %3233 = vrot.lane.b32.xlu0 %v799, 80
        %v3234 = vpop.permute.xlu0 %3233
        %3235 = vrot.lane.b32.xlu0 %v802, 80
        %v3236 = vpop.permute.xlu0 %3235
        %3237 = vrot.lane.b32.xlu0 %v1139, 80
        %v3238 = vpop.permute.xlu0 %3237
        %3239 = vrot.lane.b32.xlu0 %v1216, 80
        %v3240 = vpop.permute.xlu0 %3239
        %3241 = vrot.lane.b32.xlu0 %v1142, 80
        %v3242 = vpop.permute.xlu0 %3241
        %3243 = vrot.lane.b32.xlu0 %v1217, 80
        %v3244 = vpop.permute.xlu0 %3243
        %3245 = vrot.lane.b32.xlu0 %v1145, 80
        %v3246 = vpop.permute.xlu0 %3245
        %3247 = vrot.lane.b32.xlu0 %v1218, 80
        %v3248 = vpop.permute.xlu0 %3247
        %3249 = vrot.lane.b32.xlu0 %v1148, 80
        %v3250 = vpop.permute.xlu0 %3249
        %3251 = vrot.lane.b32.xlu0 %v1219, 80
        %v3252 = vpop.permute.xlu0 %3251
        %3253 = vrot.lane.b32.xlu0 %v1151, 80
        %v3254 = vpop.permute.xlu0 %3253
        %3255 = vrot.lane.b32.xlu0 %v1220, 80
        %v3256 = vpop.permute.xlu0 %3255
        %3257 = vrot.lane.b32.xlu0 %v1154, 80
        %v3258 = vpop.permute.xlu0 %3257
        %3259 = vrot.lane.b32.xlu0 %v1221, 80
        %v3260 = vpop.permute.xlu0 %3259
        %3261 = vrot.lane.b32.xlu0 %v1157, 80
        %v3262 = vpop.permute.xlu0 %3261
        %3263 = vrot.lane.b32.xlu0 %v1222, 80
        %v3264 = vpop.permute.xlu0 %3263
        %3265 = vrot.lane.b32.xlu0 %v1160, 80
        %v3266 = vpop.permute.xlu0 %3265
        %3267 = vrot.lane.b32.xlu0 %v1223, 80
        %v3268 = vpop.permute.xlu0 %3267
        %3269 = vrot.lane.b32.xlu0 %v1163, 80
        %v3270 = vpop.permute.xlu0 %3269
        %3271 = vrot.lane.b32.xlu0 %v1224, 80
        %v3272 = vpop.permute.xlu0 %3271
        %3273 = vrot.lane.b32.xlu0 %v1166, 80
        %v3274 = vpop.permute.xlu0 %3273
        %3275 = vrot.lane.b32.xlu0 %v1225, 80
        %v3276 = vpop.permute.xlu0 %3275
        %3277 = vrot.lane.b32.xlu0 %v1169, 80
        %v3278 = vpop.permute.xlu0 %3277
        %3279 = vrot.lane.b32.xlu0 %v1226, 80
        %v3280 = vpop.permute.xlu0 %3279
        %3281 = vrot.lane.b32.xlu0 %v1172, 80
        %v3282 = vpop.permute.xlu0 %3281
        %3283 = vrot.lane.b32.xlu0 %v1227, 80
        %v3284 = vpop.permute.xlu0 %3283
        %3285 = vrot.lane.b32.xlu0 %v1175, 80
        %v3286 = vpop.permute.xlu0 %3285
        %3287 = vrot.lane.b32.xlu0 %v1228, 80
        %v3288 = vpop.permute.xlu0 %3287
        %3289 = vrot.lane.b32.xlu0 %v1178, 80
        %v3290 = vpop.permute.xlu0 %3289
        %3291 = vrot.lane.b32.xlu0 %v1229, 80
        %v3292 = vpop.permute.xlu0 %3291
        %3307 = vrot.lane.b32.xlu0 %v3140, 80
        %v3308 = vpop.permute.xlu0 %3307
        %3309 = vrot.lane.b32.xlu0 %v3217, 80
        %v3310 = vpop.permute.xlu0 %3309
        %3311 = vrot.lane.b32.xlu0 %v3143, 80
        %v3312 = vpop.permute.xlu0 %3311
        %3313 = vrot.lane.b32.xlu0 %v3218, 80
        %v3314 = vpop.permute.xlu0 %3313
        %3315 = vrot.lane.b32.xlu0 %v3146, 80
        %v3316 = vpop.permute.xlu0 %3315
        %3317 = vrot.lane.b32.xlu0 %v3219, 80
        %v3318 = vpop.permute.xlu0 %3317
        %3319 = vrot.lane.b32.xlu0 %v3149, 80
        %v3320 = vpop.permute.xlu0 %3319
        %3321 = vrot.lane.b32.xlu0 %v3220, 80
        %v3322 = vpop.permute.xlu0 %3321
        %3323 = vrot.lane.b32.xlu0 %v3152, 80
        %v3324 = vpop.permute.xlu0 %3323
        %3325 = vrot.lane.b32.xlu0 %v3221, 80
        %v3326 = vpop.permute.xlu0 %3325
        %3327 = vrot.lane.b32.xlu0 %v3155, 80
        %v3328 = vpop.permute.xlu0 %3327
        %3329 = vrot.lane.b32.xlu0 %v3222, 80
        %v3330 = vpop.permute.xlu0 %3329
        %3331 = vrot.lane.b32.xlu0 %v3158, 80
        %v3332 = vpop.permute.xlu0 %3331
        %3333 = vrot.lane.b32.xlu0 %v3223, 80
        %v3334 = vpop.permute.xlu0 %3333
        %3335 = vrot.lane.b32.xlu0 %v3161, 80
        %v3336 = vpop.permute.xlu0 %3335
        %3337 = vrot.lane.b32.xlu0 %v3224, 80
        %v3338 = vpop.permute.xlu0 %3337
        %3339 = vrot.lane.b32.xlu0 %v3164, 80
        %v3340 = vpop.permute.xlu0 %3339
        %3341 = vrot.lane.b32.xlu0 %v3225, 80
        %v3342 = vpop.permute.xlu0 %3341
        %3343 = vrot.lane.b32.xlu0 %v3167, 80
        %v3344 = vpop.permute.xlu0 %3343
        %3345 = vrot.lane.b32.xlu0 %v3226, 80
        %v3346 = vpop.permute.xlu0 %3345
        %3347 = vrot.lane.b32.xlu0 %v3170, 80
        %v3348 = vpop.permute.xlu0 %3347
        %3349 = vrot.lane.b32.xlu0 %v3227, 80
        %v3350 = vpop.permute.xlu0 %3349
        %3351 = vrot.lane.b32.xlu0 %v3173, 80
        %v3352 = vpop.permute.xlu0 %3351
        %3353 = vrot.lane.b32.xlu0 %v3228, 80
        %v3354 = vpop.permute.xlu0 %3353
        %3355 = vrot.lane.b32.xlu0 %v3176, 80
        %v3356 = vpop.permute.xlu0 %3355
        %3357 = vrot.lane.b32.xlu0 %v3229, 80
        %v3358 = vpop.permute.xlu0 %3357
        %3359 = vrot.lane.b32.xlu0 %v3179, 80
        %v3360 = vpop.permute.xlu0 %3359
        %3361 = vrot.lane.b32.xlu0 %v3230, 80
        %v3362 = vpop.permute.xlu0 %3361
        %3363 = vrot.lane.b32.xlu0 %v1181, 80
        %v3364 = vpop.permute.xlu0 %3363
        %3365 = vrot.lane.b32.xlu0 %v1230, 80
        %v3366 = vpop.permute.xlu0 %3365
        %3398 = vrot.lane.b32.xlu0 %v3182, 80
        %v3399 = vpop.permute.xlu0 %3398
        %3400 = vrot.lane.b32.xlu0 %v3231, 80
        %v3401 = vpop.permute.xlu0 %3400
        %3416 = vrot.lane.b32.xlu0 %v3121, 16
        %v3417 = vpop.permute.xlu0 %3416
        %3418 = vrot.lane.b32.xlu0 %v3029, 16
        %v3419 = vpop.permute.xlu0 %3418
        %3420 = vrot.lane.b32.xlu0 %v3122, 16
        %v3421 = vpop.permute.xlu0 %3420
        %3422 = vrot.lane.b32.xlu0 %v3033, 16
        %v3423 = vpop.permute.xlu0 %3422
        %3424 = vrot.lane.b32.xlu0 %v3123, 16
        %v3425 = vpop.permute.xlu0 %3424
        %3426 = vrot.lane.b32.xlu0 %v3037, 16
        %v3427 = vpop.permute.xlu0 %3426
        %3428 = vrot.lane.b32.xlu0 %v3124, 16
        %v3429 = vpop.permute.xlu0 %3428
        %3430 = vrot.lane.b32.xlu0 %v3041, 16
        %v3431 = vpop.permute.xlu0 %3430
        %3432 = vrot.lane.b32.xlu0 %v3125, 16
        %v3433 = vpop.permute.xlu0 %3432
        %3434 = vrot.lane.b32.xlu0 %v3045, 16
        %v3435 = vpop.permute.xlu0 %3434
        %3436 = vrot.lane.b32.xlu0 %v3126, 16
        %v3437 = vpop.permute.xlu0 %3436
        %3438 = vrot.lane.b32.xlu0 %v3049, 16
        %v3439 = vpop.permute.xlu0 %3438
        %3440 = vrot.lane.b32.xlu0 %v3127, 16
        %v3441 = vpop.permute.xlu0 %3440
        %3442 = vrot.lane.b32.xlu0 %v3053, 16
        %v3443 = vpop.permute.xlu0 %3442
        %3444 = vrot.lane.b32.xlu0 %v3128, 16
        %v3445 = vpop.permute.xlu0 %3444
        %3446 = vrot.lane.b32.xlu0 %v3057, 16
        %v3447 = vpop.permute.xlu0 %3446
        %3448 = vrot.lane.b32.xlu0 %v3129, 16
        %v3449 = vpop.permute.xlu0 %3448
        %3450 = vrot.lane.b32.xlu0 %v3061, 16
        %v3451 = vpop.permute.xlu0 %3450
        %3452 = vrot.lane.b32.xlu0 %v3130, 16
        %v3453 = vpop.permute.xlu0 %3452
        %3454 = vrot.lane.b32.xlu0 %v3065, 16
        %v3455 = vpop.permute.xlu0 %3454
        %3456 = vrot.lane.b32.xlu0 %v3131, 16
        %v3457 = vpop.permute.xlu0 %3456
        %3458 = vrot.lane.b32.xlu0 %v3069, 16
        %v3459 = vpop.permute.xlu0 %3458
        %3460 = vrot.lane.b32.xlu0 %v3132, 16
        %v3461 = vpop.permute.xlu0 %3460
        %3462 = vrot.lane.b32.xlu0 %v3073, 16
        %v3463 = vpop.permute.xlu0 %3462
        %3464 = vrot.lane.b32.xlu0 %v3133, 16
        %v3465 = vpop.permute.xlu0 %3464
        %3466 = vrot.lane.b32.xlu0 %v3077, 16
        %v3467 = vpop.permute.xlu0 %3466
        %3468 = vrot.lane.b32.xlu0 %v3134, 16
        %v3469 = vpop.permute.xlu0 %3468
        %3470 = vrot.lane.b32.xlu0 %v3081, 16
        %v3471 = vpop.permute.xlu0 %3470
        %3500 = vrot.lane.b32.xlu0 %v3234, 32
        %v3501 = vpop.permute.xlu0 %3500
        %3502 = vrot.lane.b32.xlu0 %v3236, 32
        %v3503 = vpop.permute.xlu0 %3502
        %3504 = vrot.lane.b32.xlu0 %v1953, 32
        %v3505 = vpop.permute.xlu0 %3504
        %3506 = vrot.lane.b32.xlu0 %v1955, 32
        %v3507 = vpop.permute.xlu0 %3506
        %3508 = vrot.lane.b32.xlu0 %v1957, 32
        %v3509 = vpop.permute.xlu0 %3508
        %3510 = vrot.lane.b32.xlu0 %v1959, 32
        %v3511 = vpop.permute.xlu0 %3510
        %3512 = vrot.lane.b32.xlu0 %v1961, 32
        %v3513 = vpop.permute.xlu0 %3512
        %3514 = vrot.lane.b32.xlu0 %v1963, 32
        %v3515 = vpop.permute.xlu0 %3514
        %3516 = vrot.lane.b32.xlu0 %v1965, 32
        %v3517 = vpop.permute.xlu0 %3516
        %3518 = vrot.lane.b32.xlu0 %v1967, 32
        %v3519 = vpop.permute.xlu0 %3518
        %3520 = vrot.lane.b32.xlu0 %v1969, 32
        %v3521 = vpop.permute.xlu0 %3520
        %3522 = vrot.lane.b32.xlu0 %v1971, 32
        %v3523 = vpop.permute.xlu0 %3522
        %3524 = vrot.lane.b32.xlu0 %v1973, 32
        %v3525 = vpop.permute.xlu0 %3524
        %3526 = vrot.lane.b32.xlu0 %v1975, 32
        %v3527 = vpop.permute.xlu0 %3526
        %3528 = vrot.lane.b32.xlu0 %v1977, 32
        %v3529 = vpop.permute.xlu0 %3528
        %3530 = vrot.lane.b32.xlu0 %v1979, 32
        %v3531 = vpop.permute.xlu0 %3530
        %3532 = vrot.lane.b32.xlu0 %v1981, 32
        %v3533 = vpop.permute.xlu0 %3532
        %3534 = vrot.lane.b32.xlu0 %v1983, 32
        %v3535 = vpop.permute.xlu0 %3534
        %3536 = vrot.lane.b32.xlu0 %v1985, 32
        %v3537 = vpop.permute.xlu0 %3536
        %3538 = vrot.lane.b32.xlu0 %v1987, 32
        %v3539 = vpop.permute.xlu0 %3538
        %3540 = vrot.lane.b32.xlu0 %v1989, 32
        %v3541 = vpop.permute.xlu0 %3540
        %3542 = vrot.lane.b32.xlu0 %v1991, 32
        %v3543 = vpop.permute.xlu0 %3542
        %3544 = vrot.lane.b32.xlu0 %v1993, 32
        %v3545 = vpop.permute.xlu0 %3544
        %3546 = vrot.lane.b32.xlu0 %v1995, 32
        %v3547 = vpop.permute.xlu0 %3546
        %3548 = vrot.lane.b32.xlu0 %v1997, 32
        %v3549 = vpop.permute.xlu0 %3548
        %3550 = vrot.lane.b32.xlu0 %v1999, 32
        %v3551 = vpop.permute.xlu0 %3550
        %3552 = vrot.lane.b32.xlu0 %v2001, 32
        %v3553 = vpop.permute.xlu0 %3552
        %3554 = vrot.lane.b32.xlu0 %v2003, 32
        %v3555 = vpop.permute.xlu0 %3554
        %3584 = vrot.lane.b32.xlu0 0.0, 48
        %v3585 = vpop.permute.xlu0 %3584
        %3586 = vrot.lane.b32.xlu0 %v3238, 48
        %v3587 = vpop.permute.xlu0 %3586
        %3588 = vrot.lane.b32.xlu0 %v3240, 48
        %v3589 = vpop.permute.xlu0 %3588
        %3590 = vrot.lane.b32.xlu0 %v3242, 48
        %v3591 = vpop.permute.xlu0 %3590
        %3592 = vrot.lane.b32.xlu0 %v3244, 48
        %v3593 = vpop.permute.xlu0 %3592
        %3594 = vrot.lane.b32.xlu0 %v3246, 48
        %v3595 = vpop.permute.xlu0 %3594
        %3596 = vrot.lane.b32.xlu0 %v3248, 48
        %v3597 = vpop.permute.xlu0 %3596
        %3598 = vrot.lane.b32.xlu0 %v3250, 48
        %v3599 = vpop.permute.xlu0 %3598
        %3600 = vrot.lane.b32.xlu0 %v3252, 48
        %v3601 = vpop.permute.xlu0 %3600
        %3602 = vrot.lane.b32.xlu0 %v3254, 48
        %v3603 = vpop.permute.xlu0 %3602
        %3604 = vrot.lane.b32.xlu0 %v3256, 48
        %v3605 = vpop.permute.xlu0 %3604
        %3606 = vrot.lane.b32.xlu0 %v3258, 48
        %v3607 = vpop.permute.xlu0 %3606
        %3608 = vrot.lane.b32.xlu0 %v3260, 48
        %v3609 = vpop.permute.xlu0 %3608
        %3610 = vrot.lane.b32.xlu0 %v3262, 48
        %v3611 = vpop.permute.xlu0 %3610
        %3612 = vrot.lane.b32.xlu0 %v3264, 48
        %v3613 = vpop.permute.xlu0 %3612
        %3614 = vrot.lane.b32.xlu0 %v3266, 48
        %v3615 = vpop.permute.xlu0 %3614
        %3616 = vrot.lane.b32.xlu0 %v3268, 48
        %v3617 = vpop.permute.xlu0 %3616
        %3618 = vrot.lane.b32.xlu0 %v3270, 48
        %v3619 = vpop.permute.xlu0 %3618
        %3620 = vrot.lane.b32.xlu0 %v3272, 48
        %v3621 = vpop.permute.xlu0 %3620
        %3622 = vrot.lane.b32.xlu0 %v3274, 48
        %v3623 = vpop.permute.xlu0 %3622
        %3624 = vrot.lane.b32.xlu0 %v3276, 48
        %v3625 = vpop.permute.xlu0 %3624
        %3626 = vrot.lane.b32.xlu0 %v3278, 48
        %v3627 = vpop.permute.xlu0 %3626
        %3628 = vrot.lane.b32.xlu0 %v3280, 48
        %v3629 = vpop.permute.xlu0 %3628
        %3630 = vrot.lane.b32.xlu0 %v3282, 48
        %v3631 = vpop.permute.xlu0 %3630
        %3632 = vrot.lane.b32.xlu0 %v3284, 48
        %v3633 = vpop.permute.xlu0 %3632
        %3634 = vrot.lane.b32.xlu0 %v3286, 48
        %v3635 = vpop.permute.xlu0 %3634
        %3636 = vrot.lane.b32.xlu0 %v3288, 48
        %v3637 = vpop.permute.xlu0 %3636
        %3638 = vrot.lane.b32.xlu0 %v3290, 48
        %v3639 = vpop.permute.xlu0 %3638
        %3640 = vrot.lane.b32.xlu0 %v3292, 48
        %v3641 = vpop.permute.xlu0 %3640
        %3671 = vrot.lane.b32.xlu0 0.0, 64
        %v3672 = vpop.permute.xlu0 %3671
        %3673 = vrot.lane.b32.xlu0 %v3308, 64
        %v3674 = vpop.permute.xlu0 %3673
        %3675 = vrot.lane.b32.xlu0 %v3310, 64
        %v3676 = vpop.permute.xlu0 %3675
        %3677 = vrot.lane.b32.xlu0 %v3312, 64
        %v3678 = vpop.permute.xlu0 %3677
        %3679 = vrot.lane.b32.xlu0 %v3314, 64
        %v3680 = vpop.permute.xlu0 %3679
        %3681 = vrot.lane.b32.xlu0 %v3316, 64
        %v3682 = vpop.permute.xlu0 %3681
        %3683 = vrot.lane.b32.xlu0 %v3318, 64
        %v3684 = vpop.permute.xlu0 %3683
        %3685 = vrot.lane.b32.xlu0 %v3320, 64
        %v3686 = vpop.permute.xlu0 %3685
        %3687 = vrot.lane.b32.xlu0 %v3322, 64
        %v3688 = vpop.permute.xlu0 %3687
        %3689 = vrot.lane.b32.xlu0 %v3324, 64
        %v3690 = vpop.permute.xlu0 %3689
        %3691 = vrot.lane.b32.xlu0 %v3326, 64
        %v3692 = vpop.permute.xlu0 %3691
        %3693 = vrot.lane.b32.xlu0 %v3328, 64
        %v3694 = vpop.permute.xlu0 %3693
        %3695 = vrot.lane.b32.xlu0 %v3330, 64
        %v3696 = vpop.permute.xlu0 %3695
        %3697 = vrot.lane.b32.xlu0 %v3332, 64
        %v3698 = vpop.permute.xlu0 %3697
        %3699 = vrot.lane.b32.xlu0 %v3334, 64
        %v3700 = vpop.permute.xlu0 %3699
        %3701 = vrot.lane.b32.xlu0 %v3336, 64
        %v3702 = vpop.permute.xlu0 %3701
        %3703 = vrot.lane.b32.xlu0 %v3338, 64
        %v3704 = vpop.permute.xlu0 %3703
        %3705 = vrot.lane.b32.xlu0 %v3340, 64
        %v3706 = vpop.permute.xlu0 %3705
        %3707 = vrot.lane.b32.xlu0 %v3342, 64
        %v3708 = vpop.permute.xlu0 %3707
        %3709 = vrot.lane.b32.xlu0 %v3344, 64
        %v3710 = vpop.permute.xlu0 %3709
        %3711 = vrot.lane.b32.xlu0 %v3346, 64
        %v3712 = vpop.permute.xlu0 %3711
        %3713 = vrot.lane.b32.xlu0 %v3348, 64
        %v3714 = vpop.permute.xlu0 %3713
        %3715 = vrot.lane.b32.xlu0 %v3350, 64
        %v3716 = vpop.permute.xlu0 %3715
        %3717 = vrot.lane.b32.xlu0 %v3352, 64
        %v3718 = vpop.permute.xlu0 %3717
        %3719 = vrot.lane.b32.xlu0 %v3354, 64
        %v3720 = vpop.permute.xlu0 %3719
        %3721 = vrot.lane.b32.xlu0 %v3356, 64
        %v3722 = vpop.permute.xlu0 %3721
        %3723 = vrot.lane.b32.xlu0 %v3358, 64
        %v3724 = vpop.permute.xlu0 %3723
        %3725 = vrot.lane.b32.xlu0 %v3360, 64
        %v3726 = vpop.permute.xlu0 %3725
        %3727 = vrot.lane.b32.xlu0 %v3362, 64
        %v3728 = vpop.permute.xlu0 %3727
        %3773 = vrot.lane.b32.xlu0 %v3010, 80
        %v3774 = vpop.permute.xlu0 %3773
        %3775 = vrot.lane.b32.xlu0 %v2919, 80
        %v3776 = vpop.permute.xlu0 %3775
        %3777 = vrot.lane.b32.xlu0 %v3011, 80
        %v3778 = vpop.permute.xlu0 %3777
        %3779 = vrot.lane.b32.xlu0 %v2923, 80
        %v3780 = vpop.permute.xlu0 %3779
        %3781 = vrot.lane.b32.xlu0 %v3012, 80
        %v3782 = vpop.permute.xlu0 %3781
        %3783 = vrot.lane.b32.xlu0 %v2927, 80
        %v3784 = vpop.permute.xlu0 %3783
        %3785 = vrot.lane.b32.xlu0 %v3013, 80
        %v3786 = vpop.permute.xlu0 %3785
        %3787 = vrot.lane.b32.xlu0 %v2931, 80
        %v3788 = vpop.permute.xlu0 %3787
        %3789 = vrot.lane.b32.xlu0 %v3014, 80
        %v3790 = vpop.permute.xlu0 %3789
        %3791 = vrot.lane.b32.xlu0 %v2935, 80
        %v3792 = vpop.permute.xlu0 %3791
        %3793 = vrot.lane.b32.xlu0 %v3015, 80
        %v3794 = vpop.permute.xlu0 %3793
        %3795 = vrot.lane.b32.xlu0 %v2939, 80
        %v3796 = vpop.permute.xlu0 %3795
        %3797 = vrot.lane.b32.xlu0 %v3016, 80
        %v3798 = vpop.permute.xlu0 %3797
        %3799 = vrot.lane.b32.xlu0 %v2943, 80
        %v3800 = vpop.permute.xlu0 %3799
        %3801 = vrot.lane.b32.xlu0 %v3017, 80
        %v3802 = vpop.permute.xlu0 %3801
        %3803 = vrot.lane.b32.xlu0 %v2947, 80
        %v3804 = vpop.permute.xlu0 %3803
        %3805 = vrot.lane.b32.xlu0 %v3018, 80
        %v3806 = vpop.permute.xlu0 %3805
        %3807 = vrot.lane.b32.xlu0 %v2951, 80
        %v3808 = vpop.permute.xlu0 %3807
        %3809 = vrot.lane.b32.xlu0 %v3019, 80
        %v3810 = vpop.permute.xlu0 %3809
        %3811 = vrot.lane.b32.xlu0 %v2955, 80
        %v3812 = vpop.permute.xlu0 %3811
        %3813 = vrot.lane.b32.xlu0 %v3020, 80
        %v3814 = vpop.permute.xlu0 %3813
        %3815 = vrot.lane.b32.xlu0 %v2959, 80
        %v3816 = vpop.permute.xlu0 %3815
        %3817 = vrot.lane.b32.xlu0 %v3021, 80
        %v3818 = vpop.permute.xlu0 %3817
        %3819 = vrot.lane.b32.xlu0 %v2963, 80
        %v3820 = vpop.permute.xlu0 %3819
        %3821 = vrot.lane.b32.xlu0 %v3022, 80
        %v3822 = vpop.permute.xlu0 %3821
        %3823 = vrot.lane.b32.xlu0 %v2967, 80
        %v3824 = vpop.permute.xlu0 %3823
        %3825 = vrot.lane.b32.xlu0 %v3023, 80
        %v3826 = vpop.permute.xlu0 %3825
        %3827 = vrot.lane.b32.xlu0 %v2971, 80
        %v3828 = vpop.permute.xlu0 %3827
        %3829 = vrot.lane.b32.xlu0 %v3024, 80
        %v3830 = vpop.permute.xlu0 %3829
        %3831 = vrot.lane.b32.xlu0 %v2975, 80
        %v3832 = vpop.permute.xlu0 %3831
        %3864 = vrot.lane.b32.xlu0 %v3121, 96
        %v3865 = vpop.permute.xlu0 %3864
        %3866 = vrot.lane.b32.xlu0 %v3029, 96
        %v3867 = vpop.permute.xlu0 %3866
        %3868 = vrot.lane.b32.xlu0 %v3122, 96
        %v3869 = vpop.permute.xlu0 %3868
        %3870 = vrot.lane.b32.xlu0 %v3033, 96
        %v3871 = vpop.permute.xlu0 %3870
        %3872 = vrot.lane.b32.xlu0 %v3123, 96
        %v3873 = vpop.permute.xlu0 %3872
        %3874 = vrot.lane.b32.xlu0 %v3037, 96
        %v3875 = vpop.permute.xlu0 %3874
        %3876 = vrot.lane.b32.xlu0 %v3124, 96
        %v3877 = vpop.permute.xlu0 %3876
        %3878 = vrot.lane.b32.xlu0 %v3041, 96
        %v3879 = vpop.permute.xlu0 %3878
        %3880 = vrot.lane.b32.xlu0 %v3125, 96
        %v3881 = vpop.permute.xlu0 %3880
        %3882 = vrot.lane.b32.xlu0 %v3045, 96
        %v3883 = vpop.permute.xlu0 %3882
        %3884 = vrot.lane.b32.xlu0 %v3126, 96
        %v3885 = vpop.permute.xlu0 %3884
        %3886 = vrot.lane.b32.xlu0 %v3049, 96
        %v3887 = vpop.permute.xlu0 %3886
        %3888 = vrot.lane.b32.xlu0 %v3127, 96
        %v3889 = vpop.permute.xlu0 %3888
        %3890 = vrot.lane.b32.xlu0 %v3053, 96
        %v3891 = vpop.permute.xlu0 %3890
        %3892 = vrot.lane.b32.xlu0 %v3128, 96
        %v3893 = vpop.permute.xlu0 %3892
        %3894 = vrot.lane.b32.xlu0 %v3057, 96
        %v3895 = vpop.permute.xlu0 %3894
        %3896 = vrot.lane.b32.xlu0 %v3129, 96
        %v3897 = vpop.permute.xlu0 %3896
        %3898 = vrot.lane.b32.xlu0 %v3061, 96
        %v3899 = vpop.permute.xlu0 %3898
        %3900 = vrot.lane.b32.xlu0 %v3130, 96
        %v3901 = vpop.permute.xlu0 %3900
        %3902 = vrot.lane.b32.xlu0 %v3065, 96
        %v3903 = vpop.permute.xlu0 %3902
        %3904 = vrot.lane.b32.xlu0 %v3131, 96
        %v3905 = vpop.permute.xlu0 %3904
        %3906 = vrot.lane.b32.xlu0 %v3069, 96
        %v3907 = vpop.permute.xlu0 %3906
        %3908 = vrot.lane.b32.xlu0 %v3132, 96
        %v3909 = vpop.permute.xlu0 %3908
        %3910 = vrot.lane.b32.xlu0 %v3073, 96
        %v3911 = vpop.permute.xlu0 %3910
        %3912 = vrot.lane.b32.xlu0 %v3133, 96
        %v3913 = vpop.permute.xlu0 %3912
        %3914 = vrot.lane.b32.xlu0 %v3077, 96
        %v3915 = vpop.permute.xlu0 %3914
        %3916 = vrot.lane.b32.xlu0 %v3134, 96
        %v3917 = vpop.permute.xlu0 %3916
        %3918 = vrot.lane.b32.xlu0 %v3081, 96
        %v3919 = vpop.permute.xlu0 %3918
        %3920 = vrot.lane.b32.xlu0 %v3135, 96
        %v3921 = vpop.permute.xlu0 %3920
        %3922 = vrot.lane.b32.xlu0 %v3085, 96
        %v3923 = vpop.permute.xlu0 %3922
        %3954 = vrot.lane.b32.xlu0 0.0, 112
        %v3955 = vpop.permute.xlu0 %3954
        %3956 = vrot.lane.b32.xlu0 %v3234, 112
        %v3957 = vpop.permute.xlu0 %3956
        %3958 = vrot.lane.b32.xlu0 %v3236, 112
        %v3959 = vpop.permute.xlu0 %3958
        %3960 = vrot.lane.b32.xlu0 %v1953, 112
        %v3961 = vpop.permute.xlu0 %3960
        %3962 = vrot.lane.b32.xlu0 %v1955, 112
        %v3963 = vpop.permute.xlu0 %3962
        %3964 = vrot.lane.b32.xlu0 %v1957, 112
        %v3965 = vpop.permute.xlu0 %3964
        %3966 = vrot.lane.b32.xlu0 %v1959, 112
        %v3967 = vpop.permute.xlu0 %3966
        %3968 = vrot.lane.b32.xlu0 %v1961, 112
        %v3969 = vpop.permute.xlu0 %3968
        %3970 = vrot.lane.b32.xlu0 %v1963, 112
        %v3971 = vpop.permute.xlu0 %3970
        %3972 = vrot.lane.b32.xlu0 %v1965, 112
        %v3973 = vpop.permute.xlu0 %3972
        %3974 = vrot.lane.b32.xlu0 %v1967, 112
        %v3975 = vpop.permute.xlu0 %3974
        %3976 = vrot.lane.b32.xlu0 %v1969, 112
        %v3977 = vpop.permute.xlu0 %3976
        %3978 = vrot.lane.b32.xlu0 %v1971, 112
        %v3979 = vpop.permute.xlu0 %3978
        %3980 = vrot.lane.b32.xlu0 %v1973, 112
        %v3981 = vpop.permute.xlu0 %3980
        %3982 = vrot.lane.b32.xlu0 %v1975, 112
        %v3983 = vpop.permute.xlu0 %3982
        %3984 = vrot.lane.b32.xlu0 %v1977, 112
        %v3985 = vpop.permute.xlu0 %3984
        %3986 = vrot.lane.b32.xlu0 %v1979, 112
        %v3987 = vpop.permute.xlu0 %3986
        %3988 = vrot.lane.b32.xlu0 %v1981, 112
        %v3989 = vpop.permute.xlu0 %3988
        %3990 = vrot.lane.b32.xlu0 %v1983, 112
        %v3991 = vpop.permute.xlu0 %3990
        %3992 = vrot.lane.b32.xlu0 %v1985, 112
        %v3993 = vpop.permute.xlu0 %3992
        %3994 = vrot.lane.b32.xlu0 %v1987, 112
        %v3995 = vpop.permute.xlu0 %3994
        %3996 = vrot.lane.b32.xlu0 %v1989, 112
        %v3997 = vpop.permute.xlu0 %3996
        %3998 = vrot.lane.b32.xlu0 %v1991, 112
        %v3999 = vpop.permute.xlu0 %3998
        %4000 = vrot.lane.b32.xlu0 %v1993, 112
        %v4001 = vpop.permute.xlu0 %4000
        %4002 = vrot.lane.b32.xlu0 %v1995, 112
        %v4003 = vpop.permute.xlu0 %4002
        %4004 = vrot.lane.b32.xlu0 %v1997, 112
        %v4005 = vpop.permute.xlu0 %4004
        %4006 = vrot.lane.b32.xlu0 %v1999, 112
        %v4007 = vpop.permute.xlu0 %4006
        %4008 = vrot.lane.b32.xlu0 %v2001, 112
        %v4009 = vpop.permute.xlu0 %4008
        %4010 = vrot.lane.b32.xlu0 %v2003, 112
        %v4011 = vpop.permute.xlu0 %4010
        %4012 = vrot.lane.b32.xlu0 %v2005, 112
        %v4013 = vpop.permute.xlu0 %4012
        %4014 = vrot.lane.b32.xlu0 %v2007, 112
        %v4015 = vpop.permute.xlu0 %4014
        %v4047 = vsel %vm2045, %v3010, %v3417
        %v4048 = vsel %vm2045, %v2919, %v3419
        %v4049 = vsel %vm2045, %v3011, %v3421
        %v4050 = vsel %vm2045, %v2923, %v3423
        %v4051 = vsel %vm2045, %v3012, %v3425
        %v4052 = vsel %vm2045, %v2927, %v3427
        %v4053 = vsel %vm2045, %v3013, %v3429
        %v4054 = vsel %vm2045, %v2931, %v3431
        %v4055 = vsel %vm2045, %v3014, %v3433
        %v4056 = vsel %vm2045, %v2935, %v3435
        %v4057 = vsel %vm2045, %v3015, %v3437
        %v4058 = vsel %vm2045, %v2939, %v3439
        %v4059 = vsel %vm2045, %v3016, %v3441
        %v4060 = vsel %vm2045, %v2943, %v3443
        %v4061 = vsel %vm2045, %v3017, %v3445
        %v4062 = vsel %vm2045, %v2947, %v3447
        %v4063 = vsel %vm2045, %v3018, %v3449
        %v4064 = vsel %vm2045, %v2951, %v3451
        %v4065 = vsel %vm2045, %v3019, %v3453
        %v4066 = vsel %vm2045, %v2955, %v3455
        %v4067 = vsel %vm2045, %v3020, %v3457
        %v4068 = vsel %vm2045, %v2959, %v3459
        %v4069 = vsel %vm2045, %v3021, %v3461
        %v4070 = vsel %vm2045, %v2963, %v3463
        %v4071 = vsel %vm2045, %v3022, %v3465
        %v4072 = vsel %vm2045, %v2967, %v3467
        %v4073 = vsel %vm2045, %v3023, %v3469
        %v4074 = vsel %vm2045, %v2971, %v3471
        %v4075 = vsel %vm2077, %v4047, %v3501
        %v4076 = vsel %vm2077, %v4048, %v3503
        %v4077 = vsel %vm2077, %v4049, %v3505
        %v4078 = vsel %vm2077, %v4050, %v3507
        %v4079 = vsel %vm2077, %v4051, %v3509
        %v4080 = vsel %vm2077, %v4052, %v3511
        %v4081 = vsel %vm2077, %v4053, %v3513
        %v4082 = vsel %vm2077, %v4054, %v3515
        %v4083 = vsel %vm2077, %v4055, %v3517
        %v4084 = vsel %vm2077, %v4056, %v3519
        %v4085 = vsel %vm2077, %v4057, %v3521
        %v4086 = vsel %vm2077, %v4058, %v3523
        %v4087 = vsel %vm2077, %v4059, %v3525
        %v4088 = vsel %vm2077, %v4060, %v3527
        %v4089 = vsel %vm2077, %v4061, %v3529
        %v4090 = vsel %vm2077, %v4062, %v3531
        %v4091 = vsel %vm2077, %v4063, %v3533
        %v4092 = vsel %vm2077, %v4064, %v3535
        %v4093 = vsel %vm2077, %v4065, %v3537
        %v4094 = vsel %vm2077, %v4066, %v3539
        %v4095 = vsel %vm2077, %v4067, %v3541
        %v4096 = vsel %vm2077, %v4068, %v3543
        %v4097 = vsel %vm2077, %v4069, %v3545
        %v4098 = vsel %vm2077, %v4070, %v3547
        %v4099 = vsel %vm2077, %v4071, %v3549
        %v4100 = vsel %vm2077, %v4072, %v3551
        %v4101 = vsel %vm2077, %v4073, %v3553
        %v4102 = vsel %vm2077, %v4074, %v3555
        %v4103 = vsel %vm2109, %v2078, %v3585
        %v4104 = vsel %vm2109, %v4075, %v3587
        %v4105 = vsel %vm2109, %v4076, %v3589
        %v4106 = vsel %vm2109, %v4077, %v3591
        %v4107 = vsel %vm2109, %v4078, %v3593
        %v4108 = vsel %vm2109, %v4079, %v3595
        %v4109 = vsel %vm2109, %v4080, %v3597
        %v4110 = vsel %vm2109, %v4081, %v3599
        %v4111 = vsel %vm2109, %v4082, %v3601
        %v4112 = vsel %vm2109, %v4083, %v3603
        %v4113 = vsel %vm2109, %v4084, %v3605
        %v4114 = vsel %vm2109, %v4085, %v3607
        %v4115 = vsel %vm2109, %v4086, %v3609
        %v4116 = vsel %vm2109, %v4087, %v3611
        %v4117 = vsel %vm2109, %v4088, %v3613
        %v4118 = vsel %vm2109, %v4089, %v3615
        %v4119 = vsel %vm2109, %v4090, %v3617
        %v4120 = vsel %vm2109, %v4091, %v3619
        %v4121 = vsel %vm2109, %v4092, %v3621
        %v4122 = vsel %vm2109, %v4093, %v3623
        %v4123 = vsel %vm2109, %v4094, %v3625
        %v4124 = vsel %vm2109, %v4095, %v3627
        %v4125 = vsel %vm2109, %v4096, %v3629
        %v4126 = vsel %vm2109, %v4097, %v3631
        %v4127 = vsel %vm2109, %v4098, %v3633
        %v4128 = vsel %vm2109, %v4099, %v3635
        %v4129 = vsel %vm2109, %v4100, %v3637
        %v4130 = vsel %vm2109, %v4101, %v3639
        %v4131 = vsel %vm2109, %v4102, %v3641
        %v4132 = vsel %vm2142, %v4103, %v3672
        %v4133 = vsel %vm2142, %v4104, %v3674
        %v4134 = vsel %vm2142, %v4105, %v3676
        %v4135 = vsel %vm2142, %v4106, %v3678
        %v4136 = vsel %vm2142, %v4107, %v3680
        %v4137 = vsel %vm2142, %v4108, %v3682
        %v4138 = vsel %vm2142, %v4109, %v3684
        %v4139 = vsel %vm2142, %v4110, %v3686
        %v4140 = vsel %vm2142, %v4111, %v3688
        %v4141 = vsel %vm2142, %v4112, %v3690
        %v4142 = vsel %vm2142, %v4113, %v3692
        %v4143 = vsel %vm2142, %v4114, %v3694
        %v4144 = vsel %vm2142, %v4115, %v3696
        %v4145 = vsel %vm2142, %v4116, %v3698
        %v4146 = vsel %vm2142, %v4117, %v3700
        %v4147 = vsel %vm2142, %v4118, %v3702
        %v4148 = vsel %vm2142, %v4119, %v3704
        %v4149 = vsel %vm2142, %v4120, %v3706
        %v4150 = vsel %vm2142, %v4121, %v3708
        %v4151 = vsel %vm2142, %v4122, %v3710
        %v4152 = vsel %vm2142, %v4123, %v3712
        %v4153 = vsel %vm2142, %v4124, %v3714
        %v4154 = vsel %vm2142, %v4125, %v3716
        %v4155 = vsel %vm2142, %v4126, %v3718
        %v4156 = vsel %vm2142, %v4127, %v3720
        %v4157 = vsel %vm2142, %v4128, %v3722
        %v4158 = vsel %vm2142, %v4129, %v3724
        %v4159 = vsel %vm2142, %v4130, %v3726
        %v4160 = vsel %vm2142, %v4131, %v3728
        %v4161 = vsel %vm2175, %v4132, %v2013
        %v4162 = vsel %vm2175, %v4132, %v3774
        %v4163 = vsel %vm2175, %v4132, %v3776
        %v4164 = vsel %vm2175, %v4133, %v3778
        %v4165 = vsel %vm2175, %v4134, %v3780
        %v4166 = vsel %vm2175, %v4135, %v3782
        %v4167 = vsel %vm2175, %v4136, %v3784
        %v4168 = vsel %vm2175, %v4137, %v3786
        %v4169 = vsel %vm2175, %v4138, %v3788
        %v4170 = vsel %vm2175, %v4139, %v3790
        %v4171 = vsel %vm2175, %v4140, %v3792
        %v4172 = vsel %vm2175, %v4141, %v3794
        %v4173 = vsel %vm2175, %v4142, %v3796
        %v4174 = vsel %vm2175, %v4143, %v3798
        %v4175 = vsel %vm2175, %v4144, %v3800
        %v4176 = vsel %vm2175, %v4145, %v3802
        %v4177 = vsel %vm2175, %v4146, %v3804
        %v4178 = vsel %vm2175, %v4147, %v3806
        %v4179 = vsel %vm2175, %v4148, %v3808
        %v4180 = vsel %vm2175, %v4149, %v3810
        %v4181 = vsel %vm2175, %v4150, %v3812
        %v4182 = vsel %vm2175, %v4151, %v3814
        %v4183 = vsel %vm2175, %v4152, %v3816
        %v4184 = vsel %vm2175, %v4153, %v3818
        %v4185 = vsel %vm2175, %v4154, %v3820
        %v4186 = vsel %vm2175, %v4155, %v3822
        %v4187 = vsel %vm2175, %v4156, %v3824
        %v4188 = vsel %vm2175, %v4157, %v3826
        %v4189 = vsel %vm2175, %v4158, %v3828
        %v4190 = vsel %vm2175, %v4159, %v3830
        %v4191 = vsel %vm2175, %v4160, %v3832
        %v4192 = vsel %vm2208, %v4161, %v1920
        %v4193 = vsel %vm2208, %v4162, %v3865
        %v4194 = vsel %vm2208, %v4163, %v3867
        %v4195 = vsel %vm2208, %v4164, %v3869
        %v4196 = vsel %vm2208, %v4165, %v3871
        %v4197 = vsel %vm2208, %v4166, %v3873
        %v4198 = vsel %vm2208, %v4167, %v3875
        %v4199 = vsel %vm2208, %v4168, %v3877
        %v4200 = vsel %vm2208, %v4169, %v3879
        %v4201 = vsel %vm2208, %v4170, %v3881
        %v4202 = vsel %vm2208, %v4171, %v3883
        %v4203 = vsel %vm2208, %v4172, %v3885
        %v4204 = vsel %vm2208, %v4173, %v3887
        %v4205 = vsel %vm2208, %v4174, %v3889
        %v4206 = vsel %vm2208, %v4175, %v3891
        %v4207 = vsel %vm2208, %v4176, %v3893
        %v4208 = vsel %vm2208, %v4177, %v3895
        %v4209 = vsel %vm2208, %v4178, %v3897
        %v4210 = vsel %vm2208, %v4179, %v3899
        %v4211 = vsel %vm2208, %v4180, %v3901
        %v4212 = vsel %vm2208, %v4181, %v3903
        %v4213 = vsel %vm2208, %v4182, %v3905
        %v4214 = vsel %vm2208, %v4183, %v3907
        %v4215 = vsel %vm2208, %v4184, %v3909
        %v4216 = vsel %vm2208, %v4185, %v3911
        %v4217 = vsel %vm2208, %v4186, %v3913
        %v4218 = vsel %vm2208, %v4187, %v3915
        %v4219 = vsel %vm2208, %v4188, %v3917
        %v4220 = vsel %vm2208, %v4189, %v3919
        %v4221 = vsel %vm2208, %v4190, %v3921
        %v4222 = vsel %vm2208, %v4191, %v3923
        %v4223 = vsel %vm2241, %v4192, %v3955
        %v4224 = vsel %vm2241, %v4193, %v3957
        %v4225 = vsel %vm2241, %v4194, %v3959
        %v4226 = vsel %vm2241, %v4195, %v3961
        %v4227 = vsel %vm2241, %v4196, %v3963
        %v4228 = vsel %vm2241, %v4197, %v3965
        %v4229 = vsel %vm2241, %v4198, %v3967
        %v4230 = vsel %vm2241, %v4199, %v3969
        %v4231 = vsel %vm2241, %v4200, %v3971
        %v4232 = vsel %vm2241, %v4201, %v3973
        %v4233 = vsel %vm2241, %v4202, %v3975
        %v4234 = vsel %vm2241, %v4203, %v3977
        %v4235 = vsel %vm2241, %v4204, %v3979
        %v4236 = vsel %vm2241, %v4205, %v3981
        %v4237 = vsel %vm2241, %v4206, %v3983
        %v4238 = vsel %vm2241, %v4207, %v3985
        %v4239 = vsel %vm2241, %v4208, %v3987
        %v4240 = vsel %vm2241, %v4209, %v3989
        %v4241 = vsel %vm2241, %v4210, %v3991
        %v4242 = vsel %vm2241, %v4211, %v3993
        %v4243 = vsel %vm2241, %v4212, %v3995
        %v4244 = vsel %vm2241, %v4213, %v3997
        %v4245 = vsel %vm2241, %v4214, %v3999
        %v4246 = vsel %vm2241, %v4215, %v4001
        %v4247 = vsel %vm2241, %v4216, %v4003
        %v4248 = vsel %vm2241, %v4217, %v4005
        %v4249 = vsel %vm2241, %v4218, %v4007
        %v4250 = vsel %vm2241, %v4219, %v4009
        %v4251 = vsel %vm2241, %v4220, %v4011
        %v4252 = vsel %vm2241, %v4221, %v4013
        %v4253 = vsel %vm2241, %v4222, %v4015
        %v4254 = vpack.c.bf16 %v4223, %v4223
        %v4255 = vpack.c.bf16 %v4225, %v4224
        %v4256 = vpack.c.bf16 %v4227, %v4226
        %v4257 = vpack.c.bf16 %v4229, %v4228
        %v4258 = vpack.c.bf16 %v4231, %v4230
        %v4259 = vpack.c.bf16 %v4233, %v4232
        %v4260 = vpack.c.bf16 %v4235, %v4234
        %v4261 = vpack.c.bf16 %v4237, %v4236
        %v4262 = vpack.c.bf16 %v4239, %v4238
        %v4263 = vpack.c.bf16 %v4241, %v4240
        %v4264 = vpack.c.bf16 %v4243, %v4242
        %v4265 = vpack.c.bf16 %v4245, %v4244
        %v4266 = vpack.c.bf16 %v4247, %v4246
        %v4267 = vpack.c.bf16 %v4249, %v4248
        %v4268 = vpack.c.bf16 %v4251, %v4250
        %v4269 = vpack.c.bf16 %v4253, %v4252
        %4270 = vrot.lane.b32.xlu0 %v3308, 16
        %v4271 = vpop.permute.xlu0 %4270
        %4272 = vrot.lane.b32.xlu0 %v3310, 16
        %v4273 = vpop.permute.xlu0 %4272
        %4274 = vrot.lane.b32.xlu0 %v3312, 16
        %v4275 = vpop.permute.xlu0 %4274
        %4276 = vrot.lane.b32.xlu0 %v3314, 16
        %v4277 = vpop.permute.xlu0 %4276
        %4278 = vrot.lane.b32.xlu0 %v3316, 16
        %v4279 = vpop.permute.xlu0 %4278
        %4280 = vrot.lane.b32.xlu0 %v3318, 16
        %v4281 = vpop.permute.xlu0 %4280
        %4282 = vrot.lane.b32.xlu0 %v3320, 16
        %v4283 = vpop.permute.xlu0 %4282
        %4284 = vrot.lane.b32.xlu0 %v3322, 16
        %v4285 = vpop.permute.xlu0 %4284
        %4286 = vrot.lane.b32.xlu0 %v3324, 16
        %v4287 = vpop.permute.xlu0 %4286
        %4288 = vrot.lane.b32.xlu0 %v3326, 16
        %v4289 = vpop.permute.xlu0 %4288
        %4290 = vrot.lane.b32.xlu0 %v3328, 16
        %v4291 = vpop.permute.xlu0 %4290
        %4292 = vrot.lane.b32.xlu0 %v3330, 16
        %v4293 = vpop.permute.xlu0 %4292
        %4294 = vrot.lane.b32.xlu0 %v3332, 16
        %v4295 = vpop.permute.xlu0 %4294
        %4296 = vrot.lane.b32.xlu0 %v3334, 16
        %v4297 = vpop.permute.xlu0 %4296
        %4298 = vrot.lane.b32.xlu0 %v3336, 16
        %v4299 = vpop.permute.xlu0 %4298
        %4300 = vrot.lane.b32.xlu0 %v3338, 16
        %v4301 = vpop.permute.xlu0 %4300
        %4302 = vrot.lane.b32.xlu0 %v3340, 16
        %v4303 = vpop.permute.xlu0 %4302
        %4304 = vrot.lane.b32.xlu0 %v3342, 16
        %v4305 = vpop.permute.xlu0 %4304
        %4306 = vrot.lane.b32.xlu0 %v3344, 16
        %v4307 = vpop.permute.xlu0 %4306
        %4308 = vrot.lane.b32.xlu0 %v3346, 16
        %v4309 = vpop.permute.xlu0 %4308
        %4310 = vrot.lane.b32.xlu0 %v3348, 16
        %v4311 = vpop.permute.xlu0 %4310
        %4312 = vrot.lane.b32.xlu0 %v3350, 16
        %v4313 = vpop.permute.xlu0 %4312
        %4314 = vrot.lane.b32.xlu0 %v3352, 16
        %v4315 = vpop.permute.xlu0 %4314
        %4316 = vrot.lane.b32.xlu0 %v3354, 16
        %v4317 = vpop.permute.xlu0 %4316
        %4318 = vrot.lane.b32.xlu0 %v3356, 16
        %v4319 = vpop.permute.xlu0 %4318
        %4320 = vrot.lane.b32.xlu0 %v3358, 16
        %v4321 = vpop.permute.xlu0 %4320
        %4322 = vrot.lane.b32.xlu0 %v3360, 16
        %v4323 = vpop.permute.xlu0 %4322
        %4324 = vrot.lane.b32.xlu0 %v3362, 16
        %v4325 = vpop.permute.xlu0 %4324
        %4326 = vrot.lane.b32.xlu0 %v3399, 16
        %v4327 = vpop.permute.xlu0 %4326
        %4328 = vrot.lane.b32.xlu0 %v3401, 16
        %v4329 = vpop.permute.xlu0 %4328
        %4361 = vrot.lane.b32.xlu0 %v3010, 32
        %v4362 = vpop.permute.xlu0 %4361
        %4363 = vrot.lane.b32.xlu0 %v2919, 32
        %v4364 = vpop.permute.xlu0 %4363
        %4365 = vrot.lane.b32.xlu0 %v3011, 32
        %v4366 = vpop.permute.xlu0 %4365
        %4367 = vrot.lane.b32.xlu0 %v2923, 32
        %v4368 = vpop.permute.xlu0 %4367
        %4369 = vrot.lane.b32.xlu0 %v3012, 32
        %v4370 = vpop.permute.xlu0 %4369
        %4371 = vrot.lane.b32.xlu0 %v2927, 32
        %v4372 = vpop.permute.xlu0 %4371
        %4373 = vrot.lane.b32.xlu0 %v3013, 32
        %v4374 = vpop.permute.xlu0 %4373
        %4375 = vrot.lane.b32.xlu0 %v2931, 32
        %v4376 = vpop.permute.xlu0 %4375
        %4377 = vrot.lane.b32.xlu0 %v3014, 32
        %v4378 = vpop.permute.xlu0 %4377
        %4379 = vrot.lane.b32.xlu0 %v2935, 32
        %v4380 = vpop.permute.xlu0 %4379
        %4381 = vrot.lane.b32.xlu0 %v3015, 32
        %v4382 = vpop.permute.xlu0 %4381
        %4383 = vrot.lane.b32.xlu0 %v2939, 32
        %v4384 = vpop.permute.xlu0 %4383
        %4385 = vrot.lane.b32.xlu0 %v3016, 32
        %v4386 = vpop.permute.xlu0 %4385
        %4387 = vrot.lane.b32.xlu0 %v2943, 32
        %v4388 = vpop.permute.xlu0 %4387
        %4389 = vrot.lane.b32.xlu0 %v3017, 32
        %v4390 = vpop.permute.xlu0 %4389
        %4391 = vrot.lane.b32.xlu0 %v2947, 32
        %v4392 = vpop.permute.xlu0 %4391
        %4393 = vrot.lane.b32.xlu0 %v3018, 32
        %v4394 = vpop.permute.xlu0 %4393
        %4395 = vrot.lane.b32.xlu0 %v2951, 32
        %v4396 = vpop.permute.xlu0 %4395
        %4397 = vrot.lane.b32.xlu0 %v3019, 32
        %v4398 = vpop.permute.xlu0 %4397
        %4399 = vrot.lane.b32.xlu0 %v2955, 32
        %v4400 = vpop.permute.xlu0 %4399
        %4401 = vrot.lane.b32.xlu0 %v3020, 32
        %v4402 = vpop.permute.xlu0 %4401
        %4403 = vrot.lane.b32.xlu0 %v2959, 32
        %v4404 = vpop.permute.xlu0 %4403
        %4405 = vrot.lane.b32.xlu0 %v3021, 32
        %v4406 = vpop.permute.xlu0 %4405
        %4407 = vrot.lane.b32.xlu0 %v2963, 32
        %v4408 = vpop.permute.xlu0 %4407
        %4409 = vrot.lane.b32.xlu0 %v3022, 32
        %v4410 = vpop.permute.xlu0 %4409
        %4411 = vrot.lane.b32.xlu0 %v2967, 32
        %v4412 = vpop.permute.xlu0 %4411
        %4413 = vrot.lane.b32.xlu0 %v3023, 32
        %v4414 = vpop.permute.xlu0 %4413
        %4415 = vrot.lane.b32.xlu0 %v2971, 32
        %v4416 = vpop.permute.xlu0 %4415
        %4417 = vrot.lane.b32.xlu0 %v3024, 32
        %v4418 = vpop.permute.xlu0 %4417
        %4419 = vrot.lane.b32.xlu0 %v2975, 32
        %v4420 = vpop.permute.xlu0 %4419
        %4421 = vrot.lane.b32.xlu0 %v3025, 32
        %v4422 = vpop.permute.xlu0 %4421
        %4423 = vrot.lane.b32.xlu0 %v2979, 32
        %v4424 = vpop.permute.xlu0 %4423
        %4458 = vrot.lane.b32.xlu0 %v3121, 48
        %v4459 = vpop.permute.xlu0 %4458
        %4460 = vrot.lane.b32.xlu0 %v3029, 48
        %v4461 = vpop.permute.xlu0 %4460
        %4462 = vrot.lane.b32.xlu0 %v3122, 48
        %v4463 = vpop.permute.xlu0 %4462
        %4464 = vrot.lane.b32.xlu0 %v3033, 48
        %v4465 = vpop.permute.xlu0 %4464
        %4466 = vrot.lane.b32.xlu0 %v3123, 48
        %v4467 = vpop.permute.xlu0 %4466
        %4468 = vrot.lane.b32.xlu0 %v3037, 48
        %v4469 = vpop.permute.xlu0 %4468
        %4470 = vrot.lane.b32.xlu0 %v3124, 48
        %v4471 = vpop.permute.xlu0 %4470
        %4472 = vrot.lane.b32.xlu0 %v3041, 48
        %v4473 = vpop.permute.xlu0 %4472
        %4474 = vrot.lane.b32.xlu0 %v3125, 48
        %v4475 = vpop.permute.xlu0 %4474
        %4476 = vrot.lane.b32.xlu0 %v3045, 48
        %v4477 = vpop.permute.xlu0 %4476
        %4478 = vrot.lane.b32.xlu0 %v3126, 48
        %v4479 = vpop.permute.xlu0 %4478
        %4480 = vrot.lane.b32.xlu0 %v3049, 48
        %v4481 = vpop.permute.xlu0 %4480
        %4482 = vrot.lane.b32.xlu0 %v3127, 48
        %v4483 = vpop.permute.xlu0 %4482
        %4484 = vrot.lane.b32.xlu0 %v3053, 48
        %v4485 = vpop.permute.xlu0 %4484
        %4486 = vrot.lane.b32.xlu0 %v3128, 48
        %v4487 = vpop.permute.xlu0 %4486
        %4488 = vrot.lane.b32.xlu0 %v3057, 48
        %v4489 = vpop.permute.xlu0 %4488
        %4490 = vrot.lane.b32.xlu0 %v3129, 48
        %v4491 = vpop.permute.xlu0 %4490
        %4492 = vrot.lane.b32.xlu0 %v3061, 48
        %v4493 = vpop.permute.xlu0 %4492
        %4494 = vrot.lane.b32.xlu0 %v3130, 48
        %v4495 = vpop.permute.xlu0 %4494
        %4496 = vrot.lane.b32.xlu0 %v3065, 48
        %v4497 = vpop.permute.xlu0 %4496
        %4498 = vrot.lane.b32.xlu0 %v3131, 48
        %v4499 = vpop.permute.xlu0 %4498
        %4500 = vrot.lane.b32.xlu0 %v3069, 48
        %v4501 = vpop.permute.xlu0 %4500
        %4502 = vrot.lane.b32.xlu0 %v3132, 48
        %v4503 = vpop.permute.xlu0 %4502
        %4504 = vrot.lane.b32.xlu0 %v3073, 48
        %v4505 = vpop.permute.xlu0 %4504
        %4506 = vrot.lane.b32.xlu0 %v3133, 48
        %v4507 = vpop.permute.xlu0 %4506
        %4508 = vrot.lane.b32.xlu0 %v3077, 48
        %v4509 = vpop.permute.xlu0 %4508
        %4510 = vrot.lane.b32.xlu0 %v3134, 48
        %v4511 = vpop.permute.xlu0 %4510
        %4512 = vrot.lane.b32.xlu0 %v3081, 48
        %v4513 = vpop.permute.xlu0 %4512
        %4514 = vrot.lane.b32.xlu0 %v3135, 48
        %v4515 = vpop.permute.xlu0 %4514
        %4516 = vrot.lane.b32.xlu0 %v3085, 48
        %v4517 = vpop.permute.xlu0 %4516
        %4518 = vrot.lane.b32.xlu0 %v3136, 48
        %v4519 = vpop.permute.xlu0 %4518
        %4520 = vrot.lane.b32.xlu0 %v3089, 48
        %v4521 = vpop.permute.xlu0 %4520
        %4554 = vrot.lane.b32.xlu0 %v799, 16
        %v4555 = vpop.permute.xlu0 %4554
        %4556 = vrot.lane.b32.xlu0 %v802, 16
        %v4557 = vpop.permute.xlu0 %4556
        %4558 = vrot.lane.b32.xlu0 %v807, 16
        %v4559 = vpop.permute.xlu0 %4558
        %4560 = vrot.lane.b32.xlu0 %v810, 16
        %v4561 = vpop.permute.xlu0 %4560
        %4562 = vrot.lane.b32.xlu0 %v815, 16
        %v4563 = vpop.permute.xlu0 %4562
        %4564 = vrot.lane.b32.xlu0 %v818, 16
        %v4565 = vpop.permute.xlu0 %4564
        %4566 = vrot.lane.b32.xlu0 %v823, 16
        %v4567 = vpop.permute.xlu0 %4566
        %4568 = vrot.lane.b32.xlu0 %v826, 16
        %v4569 = vpop.permute.xlu0 %4568
        %4570 = vrot.lane.b32.xlu0 %v831, 16
        %v4571 = vpop.permute.xlu0 %4570
        %4572 = vrot.lane.b32.xlu0 %v834, 16
        %v4573 = vpop.permute.xlu0 %4572
        %4574 = vrot.lane.b32.xlu0 %v839, 16
        %v4575 = vpop.permute.xlu0 %4574
        %4576 = vrot.lane.b32.xlu0 %v842, 16
        %v4577 = vpop.permute.xlu0 %4576
        %4578 = vrot.lane.b32.xlu0 %v847, 16
        %v4579 = vpop.permute.xlu0 %4578
        %4580 = vrot.lane.b32.xlu0 %v850, 16
        %v4581 = vpop.permute.xlu0 %4580
        %4582 = vrot.lane.b32.xlu0 %v855, 16
        %v4583 = vpop.permute.xlu0 %4582
        %4584 = vrot.lane.b32.xlu0 %v858, 16
        %v4585 = vpop.permute.xlu0 %4584
        %4586 = vrot.lane.b32.xlu0 %v863, 16
        %v4587 = vpop.permute.xlu0 %4586
        %4588 = vrot.lane.b32.xlu0 %v866, 16
        %v4589 = vpop.permute.xlu0 %4588
        %4590 = vrot.lane.b32.xlu0 %v871, 16
        %v4591 = vpop.permute.xlu0 %4590
        %4592 = vrot.lane.b32.xlu0 %v874, 16
        %v4593 = vpop.permute.xlu0 %4592
        %4594 = vrot.lane.b32.xlu0 %v879, 16
        %v4595 = vpop.permute.xlu0 %4594
        %4596 = vrot.lane.b32.xlu0 %v882, 16
        %v4597 = vpop.permute.xlu0 %4596
        %4598 = vrot.lane.b32.xlu0 %v887, 16
        %v4599 = vpop.permute.xlu0 %4598
        %4600 = vrot.lane.b32.xlu0 %v890, 16
        %v4601 = vpop.permute.xlu0 %4600
        %4602 = vrot.lane.b32.xlu0 %v895, 16
        %v4603 = vpop.permute.xlu0 %4602
        %4604 = vrot.lane.b32.xlu0 %v898, 16
        %v4605 = vpop.permute.xlu0 %4604
        %4606 = vrot.lane.b32.xlu0 %v903, 16
        %v4607 = vpop.permute.xlu0 %4606
        %4608 = vrot.lane.b32.xlu0 %v906, 16
        %v4609 = vpop.permute.xlu0 %4608
        %4610 = vrot.lane.b32.xlu0 %v911, 16
        %v4611 = vpop.permute.xlu0 %4610
        %4612 = vrot.lane.b32.xlu0 %v914, 16
        %v4613 = vpop.permute.xlu0 %4612
        %4614 = vrot.lane.b32.xlu0 %v919, 16
        %v4615 = vpop.permute.xlu0 %4614
        %4616 = vrot.lane.b32.xlu0 %v922, 16
        %v4617 = vpop.permute.xlu0 %4616
        %4650 = vrot.lane.b32.xlu0 %v1139, 32
        %v4651 = vpop.permute.xlu0 %4650
        %4652 = vrot.lane.b32.xlu0 %v1216, 32
        %v4653 = vpop.permute.xlu0 %4652
        %4654 = vrot.lane.b32.xlu0 %v1142, 32
        %v4655 = vpop.permute.xlu0 %4654
        %4656 = vrot.lane.b32.xlu0 %v1217, 32
        %v4657 = vpop.permute.xlu0 %4656
        %4658 = vrot.lane.b32.xlu0 %v1145, 32
        %v4659 = vpop.permute.xlu0 %4658
        %4660 = vrot.lane.b32.xlu0 %v1218, 32
        %v4661 = vpop.permute.xlu0 %4660
        %4662 = vrot.lane.b32.xlu0 %v1148, 32
        %v4663 = vpop.permute.xlu0 %4662
        %4664 = vrot.lane.b32.xlu0 %v1219, 32
        %v4665 = vpop.permute.xlu0 %4664
        %4666 = vrot.lane.b32.xlu0 %v1151, 32
        %v4667 = vpop.permute.xlu0 %4666
        %4668 = vrot.lane.b32.xlu0 %v1220, 32
        %v4669 = vpop.permute.xlu0 %4668
        %4670 = vrot.lane.b32.xlu0 %v1154, 32
        %v4671 = vpop.permute.xlu0 %4670
        %4672 = vrot.lane.b32.xlu0 %v1221, 32
        %v4673 = vpop.permute.xlu0 %4672
        %4674 = vrot.lane.b32.xlu0 %v1157, 32
        %v4675 = vpop.permute.xlu0 %4674
        %4676 = vrot.lane.b32.xlu0 %v1222, 32
        %v4677 = vpop.permute.xlu0 %4676
        %4678 = vrot.lane.b32.xlu0 %v1160, 32
        %v4679 = vpop.permute.xlu0 %4678
        %4680 = vrot.lane.b32.xlu0 %v1223, 32
        %v4681 = vpop.permute.xlu0 %4680
        %4682 = vrot.lane.b32.xlu0 %v1163, 32
        %v4683 = vpop.permute.xlu0 %4682
        %4684 = vrot.lane.b32.xlu0 %v1224, 32
        %v4685 = vpop.permute.xlu0 %4684
        %4686 = vrot.lane.b32.xlu0 %v1166, 32
        %v4687 = vpop.permute.xlu0 %4686
        %4688 = vrot.lane.b32.xlu0 %v1225, 32
        %v4689 = vpop.permute.xlu0 %4688
        %4690 = vrot.lane.b32.xlu0 %v1169, 32
        %v4691 = vpop.permute.xlu0 %4690
        %4692 = vrot.lane.b32.xlu0 %v1226, 32
        %v4693 = vpop.permute.xlu0 %4692
        %4694 = vrot.lane.b32.xlu0 %v1172, 32
        %v4695 = vpop.permute.xlu0 %4694
        %4696 = vrot.lane.b32.xlu0 %v1227, 32
        %v4697 = vpop.permute.xlu0 %4696
        %4698 = vrot.lane.b32.xlu0 %v1175, 32
        %v4699 = vpop.permute.xlu0 %4698
        %4700 = vrot.lane.b32.xlu0 %v1228, 32
        %v4701 = vpop.permute.xlu0 %4700
        %4702 = vrot.lane.b32.xlu0 %v1178, 32
        %v4703 = vpop.permute.xlu0 %4702
        %4704 = vrot.lane.b32.xlu0 %v1229, 32
        %v4705 = vpop.permute.xlu0 %4704
        %4706 = vrot.lane.b32.xlu0 %v1181, 32
        %v4707 = vpop.permute.xlu0 %4706
        %4708 = vrot.lane.b32.xlu0 %v1230, 32
        %v4709 = vpop.permute.xlu0 %4708
        %4710 = vrot.lane.b32.xlu0 %v1184, 32
        %v4711 = vpop.permute.xlu0 %4710
        %4712 = vrot.lane.b32.xlu0 %v1231, 32
        %v4713 = vpop.permute.xlu0 %4712
        %4747 = vrot.lane.b32.xlu0 %v3140, 48
        %v4748 = vpop.permute.xlu0 %4747
        %4749 = vrot.lane.b32.xlu0 %v3217, 48
        %v4750 = vpop.permute.xlu0 %4749
        %4751 = vrot.lane.b32.xlu0 %v3143, 48
        %v4752 = vpop.permute.xlu0 %4751
        %4753 = vrot.lane.b32.xlu0 %v3218, 48
        %v4754 = vpop.permute.xlu0 %4753
        %4755 = vrot.lane.b32.xlu0 %v3146, 48
        %v4756 = vpop.permute.xlu0 %4755
        %4757 = vrot.lane.b32.xlu0 %v3219, 48
        %v4758 = vpop.permute.xlu0 %4757
        %4759 = vrot.lane.b32.xlu0 %v3149, 48
        %v4760 = vpop.permute.xlu0 %4759
        %4761 = vrot.lane.b32.xlu0 %v3220, 48
        %v4762 = vpop.permute.xlu0 %4761
        %4763 = vrot.lane.b32.xlu0 %v3152, 48
        %v4764 = vpop.permute.xlu0 %4763
        %4765 = vrot.lane.b32.xlu0 %v3221, 48
        %v4766 = vpop.permute.xlu0 %4765
        %4767 = vrot.lane.b32.xlu0 %v3155, 48
        %v4768 = vpop.permute.xlu0 %4767
        %4769 = vrot.lane.b32.xlu0 %v3222, 48
        %v4770 = vpop.permute.xlu0 %4769
        %4771 = vrot.lane.b32.xlu0 %v3158, 48
        %v4772 = vpop.permute.xlu0 %4771
        %4773 = vrot.lane.b32.xlu0 %v3223, 48
        %v4774 = vpop.permute.xlu0 %4773
        %4775 = vrot.lane.b32.xlu0 %v3161, 48
        %v4776 = vpop.permute.xlu0 %4775
        %4777 = vrot.lane.b32.xlu0 %v3224, 48
        %v4778 = vpop.permute.xlu0 %4777
        %4779 = vrot.lane.b32.xlu0 %v3164, 48
        %v4780 = vpop.permute.xlu0 %4779
        %4781 = vrot.lane.b32.xlu0 %v3225, 48
        %v4782 = vpop.permute.xlu0 %4781
        %4783 = vrot.lane.b32.xlu0 %v3167, 48
        %v4784 = vpop.permute.xlu0 %4783
        %4785 = vrot.lane.b32.xlu0 %v3226, 48
        %v4786 = vpop.permute.xlu0 %4785
        %4787 = vrot.lane.b32.xlu0 %v3170, 48
        %v4788 = vpop.permute.xlu0 %4787
        %4789 = vrot.lane.b32.xlu0 %v3227, 48
        %v4790 = vpop.permute.xlu0 %4789
        %4791 = vrot.lane.b32.xlu0 %v3173, 48
        %v4792 = vpop.permute.xlu0 %4791
        %4793 = vrot.lane.b32.xlu0 %v3228, 48
        %v4794 = vpop.permute.xlu0 %4793
        %4795 = vrot.lane.b32.xlu0 %v3176, 48
        %v4796 = vpop.permute.xlu0 %4795
        %4797 = vrot.lane.b32.xlu0 %v3229, 48
        %v4798 = vpop.permute.xlu0 %4797
        %4799 = vrot.lane.b32.xlu0 %v3179, 48
        %v4800 = vpop.permute.xlu0 %4799
        %4801 = vrot.lane.b32.xlu0 %v3230, 48
        %v4802 = vpop.permute.xlu0 %4801
        %4803 = vrot.lane.b32.xlu0 %v3182, 48
        %v4804 = vpop.permute.xlu0 %4803
        %4805 = vrot.lane.b32.xlu0 %v3231, 48
        %v4806 = vpop.permute.xlu0 %4805
        %4807 = vrot.lane.b32.xlu0 %v3185, 48
        %v4808 = vpop.permute.xlu0 %4807
        %4809 = vrot.lane.b32.xlu0 %v3232, 48
        %v4810 = vpop.permute.xlu0 %4809
        %4843 = vrot.lane.b32.xlu0 %v3011, 112
        %v4844 = vpop.permute.xlu0 %4843
        %4845 = vrot.lane.b32.xlu0 %v2923, 112
        %v4846 = vpop.permute.xlu0 %4845
        %4847 = vrot.lane.b32.xlu0 %v3012, 112
        %v4848 = vpop.permute.xlu0 %4847
        %4849 = vrot.lane.b32.xlu0 %v2927, 112
        %v4850 = vpop.permute.xlu0 %4849
        %4851 = vrot.lane.b32.xlu0 %v3013, 112
        %v4852 = vpop.permute.xlu0 %4851
        %4853 = vrot.lane.b32.xlu0 %v2931, 112
        %v4854 = vpop.permute.xlu0 %4853
        %4855 = vrot.lane.b32.xlu0 %v3014, 112
        %v4856 = vpop.permute.xlu0 %4855
        %4857 = vrot.lane.b32.xlu0 %v2935, 112
        %v4858 = vpop.permute.xlu0 %4857
        %4859 = vrot.lane.b32.xlu0 %v3015, 112
        %v4860 = vpop.permute.xlu0 %4859
        %4861 = vrot.lane.b32.xlu0 %v2939, 112
        %v4862 = vpop.permute.xlu0 %4861
        %4863 = vrot.lane.b32.xlu0 %v3016, 112
        %v4864 = vpop.permute.xlu0 %4863
        %4865 = vrot.lane.b32.xlu0 %v2943, 112
        %v4866 = vpop.permute.xlu0 %4865
        %4867 = vrot.lane.b32.xlu0 %v3017, 112
        %v4868 = vpop.permute.xlu0 %4867
        %4869 = vrot.lane.b32.xlu0 %v2947, 112
        %v4870 = vpop.permute.xlu0 %4869
        %4871 = vrot.lane.b32.xlu0 %v3018, 112
        %v4872 = vpop.permute.xlu0 %4871
        %4873 = vrot.lane.b32.xlu0 %v2951, 112
        %v4874 = vpop.permute.xlu0 %4873
        %4875 = vrot.lane.b32.xlu0 %v3019, 112
        %v4876 = vpop.permute.xlu0 %4875
        %4877 = vrot.lane.b32.xlu0 %v2955, 112
        %v4878 = vpop.permute.xlu0 %4877
        %4879 = vrot.lane.b32.xlu0 %v3020, 112
        %v4880 = vpop.permute.xlu0 %4879
        %4881 = vrot.lane.b32.xlu0 %v2959, 112
        %v4882 = vpop.permute.xlu0 %4881
        %4883 = vrot.lane.b32.xlu0 %v3021, 112
        %v4884 = vpop.permute.xlu0 %4883
        %4885 = vrot.lane.b32.xlu0 %v2963, 112
        %v4886 = vpop.permute.xlu0 %4885
        %4887 = vrot.lane.b32.xlu0 %v3022, 112
        %v4888 = vpop.permute.xlu0 %4887
        %4889 = vrot.lane.b32.xlu0 %v2967, 112
        %v4890 = vpop.permute.xlu0 %4889
        %4891 = vrot.lane.b32.xlu0 %v3023, 112
        %v4892 = vpop.permute.xlu0 %4891
        %4893 = vrot.lane.b32.xlu0 %v2971, 112
        %v4894 = vpop.permute.xlu0 %4893
        %4895 = vrot.lane.b32.xlu0 %v3024, 112
        %v4896 = vpop.permute.xlu0 %4895
        %4897 = vrot.lane.b32.xlu0 %v2975, 112
        %v4898 = vpop.permute.xlu0 %4897
        %4899 = vrot.lane.b32.xlu0 %v3025, 112
        %v4900 = vpop.permute.xlu0 %4899
        %4901 = vrot.lane.b32.xlu0 %v2979, 112
        %v4902 = vpop.permute.xlu0 %4901
        %v4933 = vsel %vm2045, %v3238, %v4271
        %v4934 = vsel %vm2045, %v3240, %v4273
        %v4935 = vsel %vm2045, %v3242, %v4275
        %v4936 = vsel %vm2045, %v3244, %v4277
        %v4937 = vsel %vm2045, %v3246, %v4279
        %v4938 = vsel %vm2045, %v3248, %v4281
        %v4939 = vsel %vm2045, %v3250, %v4283
        %v4940 = vsel %vm2045, %v3252, %v4285
        %v4941 = vsel %vm2045, %v3254, %v4287
        %v4942 = vsel %vm2045, %v3256, %v4289
        %v4943 = vsel %vm2045, %v3258, %v4291
        %v4944 = vsel %vm2045, %v3260, %v4293
        %v4945 = vsel %vm2045, %v3262, %v4295
        %v4946 = vsel %vm2045, %v3264, %v4297
        %v4947 = vsel %vm2045, %v3266, %v4299
        %v4948 = vsel %vm2045, %v3268, %v4301
        %v4949 = vsel %vm2045, %v3270, %v4303
        %v4950 = vsel %vm2045, %v3272, %v4305
        %v4951 = vsel %vm2045, %v3274, %v4307
        %v4952 = vsel %vm2045, %v3276, %v4309
        %v4953 = vsel %vm2045, %v3278, %v4311
        %v4954 = vsel %vm2045, %v3280, %v4313
        %v4955 = vsel %vm2045, %v3282, %v4315
        %v4956 = vsel %vm2045, %v3284, %v4317
        %v4957 = vsel %vm2045, %v3286, %v4319
        %v4958 = vsel %vm2045, %v3288, %v4321
        %v4959 = vsel %vm2045, %v3290, %v4323
        %v4960 = vsel %vm2045, %v3292, %v4325
        %v4961 = vsel %vm2045, %v3364, %v4327
        %v4962 = vsel %vm2045, %v3366, %v4329
        %v4963 = vsel %vm2077, %v2046, %v4362
        %v4964 = vsel %vm2077, %v2046, %v4364
        %v4965 = vsel %vm2077, %v4933, %v4366
        %v4966 = vsel %vm2077, %v4934, %v4368
        %v4967 = vsel %vm2077, %v4935, %v4370
        %v4968 = vsel %vm2077, %v4936, %v4372
        %v4969 = vsel %vm2077, %v4937, %v4374
        %v4970 = vsel %vm2077, %v4938, %v4376
        %v4971 = vsel %vm2077, %v4939, %v4378
        %v4972 = vsel %vm2077, %v4940, %v4380
        %v4973 = vsel %vm2077, %v4941, %v4382
        %v4974 = vsel %vm2077, %v4942, %v4384
        %v4975 = vsel %vm2077, %v4943, %v4386
        %v4976 = vsel %vm2077, %v4944, %v4388
        %v4977 = vsel %vm2077, %v4945, %v4390
        %v4978 = vsel %vm2077, %v4946, %v4392
        %v4979 = vsel %vm2077, %v4947, %v4394
        %v4980 = vsel %vm2077, %v4948, %v4396
        %v4981 = vsel %vm2077, %v4949, %v4398
        %v4982 = vsel %vm2077, %v4950, %v4400
        %v4983 = vsel %vm2077, %v4951, %v4402
        %v4984 = vsel %vm2077, %v4952, %v4404
        %v4985 = vsel %vm2077, %v4953, %v4406
        %v4986 = vsel %vm2077, %v4954, %v4408
        %v4987 = vsel %vm2077, %v4955, %v4410
        %v4988 = vsel %vm2077, %v4956, %v4412
        %v4989 = vsel %vm2077, %v4957, %v4414
        %v4990 = vsel %vm2077, %v4958, %v4416
        %v4991 = vsel %vm2077, %v4959, %v4418
        %v4992 = vsel %vm2077, %v4960, %v4420
        %v4993 = vsel %vm2077, %v4961, %v4422
        %v4994 = vsel %vm2077, %v4962, %v4424
        %v4995 = vsel %vm2109, %v4963, %v4459
        %v4996 = vsel %vm2109, %v4964, %v4461
        %v4997 = vsel %vm2109, %v4965, %v4463
        %v4998 = vsel %vm2109, %v4966, %v4465
        %v4999 = vsel %vm2109, %v4967, %v4467
        %v5000 = vsel %vm2109, %v4968, %v4469
        %v5001 = vsel %vm2109, %v4969, %v4471
        %v5002 = vsel %vm2109, %v4970, %v4473
        %v5003 = vsel %vm2109, %v4971, %v4475
        %v5004 = vsel %vm2109, %v4972, %v4477
        %v5005 = vsel %vm2109, %v4973, %v4479
        %v5006 = vsel %vm2109, %v4974, %v4481
        %v5007 = vsel %vm2109, %v4975, %v4483
        %v5008 = vsel %vm2109, %v4976, %v4485
        %v5009 = vsel %vm2109, %v4977, %v4487
        %v5010 = vsel %vm2109, %v4978, %v4489
        %v5011 = vsel %vm2109, %v4979, %v4491
        %v5012 = vsel %vm2109, %v4980, %v4493
        %v5013 = vsel %vm2109, %v4981, %v4495
        %v5014 = vsel %vm2109, %v4982, %v4497
        %v5015 = vsel %vm2109, %v4983, %v4499
        %v5016 = vsel %vm2109, %v4984, %v4501
        %v5017 = vsel %vm2109, %v4985, %v4503
        %v5018 = vsel %vm2109, %v4986, %v4505
        %v5019 = vsel %vm2109, %v4987, %v4507
        %v5020 = vsel %vm2109, %v4988, %v4509
        %v5021 = vsel %vm2109, %v4989, %v4511
        %v5022 = vsel %vm2109, %v4990, %v4513
        %v5023 = vsel %vm2109, %v4991, %v4515
        %v5024 = vsel %vm2109, %v4992, %v4517
        %v5025 = vsel %vm2109, %v4993, %v4519
        %v5026 = vsel %vm2109, %v4994, %v4521
        %v5027 = vsel %vm2142, %v4995, %v4555
        %v5028 = vsel %vm2142, %v4996, %v4557
        %v5029 = vsel %vm2142, %v4997, %v4559
        %v5030 = vsel %vm2142, %v4998, %v4561
        %v5031 = vsel %vm2142, %v4999, %v4563
        %v5032 = vsel %vm2142, %v5000, %v4565
        %v5033 = vsel %vm2142, %v5001, %v4567
        %v5034 = vsel %vm2142, %v5002, %v4569
        %v5035 = vsel %vm2142, %v5003, %v4571
        %v5036 = vsel %vm2142, %v5004, %v4573
        %v5037 = vsel %vm2142, %v5005, %v4575
        %v5038 = vsel %vm2142, %v5006, %v4577
        %v5039 = vsel %vm2142, %v5007, %v4579
        %v5040 = vsel %vm2142, %v5008, %v4581
        %v5041 = vsel %vm2142, %v5009, %v4583
        %v5042 = vsel %vm2142, %v5010, %v4585
        %v5043 = vsel %vm2142, %v5011, %v4587
        %v5044 = vsel %vm2142, %v5012, %v4589
        %v5045 = vsel %vm2142, %v5013, %v4591
        %v5046 = vsel %vm2142, %v5014, %v4593
        %v5047 = vsel %vm2142, %v5015, %v4595
        %v5048 = vsel %vm2142, %v5016, %v4597
        %v5049 = vsel %vm2142, %v5017, %v4599
        %v5050 = vsel %vm2142, %v5018, %v4601
        %v5051 = vsel %vm2142, %v5019, %v4603
        %v5052 = vsel %vm2142, %v5020, %v4605
        %v5053 = vsel %vm2142, %v5021, %v4607
        %v5054 = vsel %vm2142, %v5022, %v4609
        %v5055 = vsel %vm2142, %v5023, %v4611
        %v5056 = vsel %vm2142, %v5024, %v4613
        %v5057 = vsel %vm2142, %v5025, %v4615
        %v5058 = vsel %vm2142, %v5026, %v4617
        %v5059 = vsel %vm2175, %v5027, %v4651
        %v5060 = vsel %vm2175, %v5028, %v4653
        %v5061 = vsel %vm2175, %v5029, %v4655
        %v5062 = vsel %vm2175, %v5030, %v4657
        %v5063 = vsel %vm2175, %v5031, %v4659
        %v5064 = vsel %vm2175, %v5032, %v4661
        %v5065 = vsel %vm2175, %v5033, %v4663
        %v5066 = vsel %vm2175, %v5034, %v4665
        %v5067 = vsel %vm2175, %v5035, %v4667
        %v5068 = vsel %vm2175, %v5036, %v4669
        %v5069 = vsel %vm2175, %v5037, %v4671
        %v5070 = vsel %vm2175, %v5038, %v4673
        %v5071 = vsel %vm2175, %v5039, %v4675
        %v5072 = vsel %vm2175, %v5040, %v4677
        %v5073 = vsel %vm2175, %v5041, %v4679
        %v5074 = vsel %vm2175, %v5042, %v4681
        %v5075 = vsel %vm2175, %v5043, %v4683
        %v5076 = vsel %vm2175, %v5044, %v4685
        %v5077 = vsel %vm2175, %v5045, %v4687
        %v5078 = vsel %vm2175, %v5046, %v4689
        %v5079 = vsel %vm2175, %v5047, %v4691
        %v5080 = vsel %vm2175, %v5048, %v4693
        %v5081 = vsel %vm2175, %v5049, %v4695
        %v5082 = vsel %vm2175, %v5050, %v4697
        %v5083 = vsel %vm2175, %v5051, %v4699
        %v5084 = vsel %vm2175, %v5052, %v4701
        %v5085 = vsel %vm2175, %v5053, %v4703
        %v5086 = vsel %vm2175, %v5054, %v4705
        %v5087 = vsel %vm2175, %v5055, %v4707
        %v5088 = vsel %vm2175, %v5056, %v4709
        %v5089 = vsel %vm2175, %v5057, %v4711
        %v5090 = vsel %vm2175, %v5058, %v4713
        %v5091 = vsel %vm2208, %v5059, %v4748
        %v5092 = vsel %vm2208, %v5060, %v4750
        %v5093 = vsel %vm2208, %v5061, %v4752
        %v5094 = vsel %vm2208, %v5062, %v4754
        %v5095 = vsel %vm2208, %v5063, %v4756
        %v5096 = vsel %vm2208, %v5064, %v4758
        %v5097 = vsel %vm2208, %v5065, %v4760
        %v5098 = vsel %vm2208, %v5066, %v4762
        %v5099 = vsel %vm2208, %v5067, %v4764
        %v5100 = vsel %vm2208, %v5068, %v4766
        %v5101 = vsel %vm2208, %v5069, %v4768
        %v5102 = vsel %vm2208, %v5070, %v4770
        %v5103 = vsel %vm2208, %v5071, %v4772
        %v5104 = vsel %vm2208, %v5072, %v4774
        %v5105 = vsel %vm2208, %v5073, %v4776
        %v5106 = vsel %vm2208, %v5074, %v4778
        %v5107 = vsel %vm2208, %v5075, %v4780
        %v5108 = vsel %vm2208, %v5076, %v4782
        %v5109 = vsel %vm2208, %v5077, %v4784
        %v5110 = vsel %vm2208, %v5078, %v4786
        %v5111 = vsel %vm2208, %v5079, %v4788
        %v5112 = vsel %vm2208, %v5080, %v4790
        %v5113 = vsel %vm2208, %v5081, %v4792
        %v5114 = vsel %vm2208, %v5082, %v4794
        %v5115 = vsel %vm2208, %v5083, %v4796
        %v5116 = vsel %vm2208, %v5084, %v4798
        %v5117 = vsel %vm2208, %v5085, %v4800
        %v5118 = vsel %vm2208, %v5086, %v4802
        %v5119 = vsel %vm2208, %v5087, %v4804
        %v5120 = vsel %vm2208, %v5088, %v4806
        %v5121 = vsel %vm2208, %v5089, %v4808
        %v5122 = vsel %vm2208, %v5090, %v4810
        %v5123 = vsel %vm2241, %v5091, %v4844
        %v5124 = vsel %vm2241, %v5092, %v4846
        %v5125 = vsel %vm2241, %v5093, %v4848
        %v5126 = vsel %vm2241, %v5094, %v4850
        %v5127 = vsel %vm2241, %v5095, %v4852
        %v5128 = vsel %vm2241, %v5096, %v4854
        %v5129 = vsel %vm2241, %v5097, %v4856
        %v5130 = vsel %vm2241, %v5098, %v4858
        %v5131 = vsel %vm2241, %v5099, %v4860
        %v5132 = vsel %vm2241, %v5100, %v4862
        %v5133 = vsel %vm2241, %v5101, %v4864
        %v5134 = vsel %vm2241, %v5102, %v4866
        %v5135 = vsel %vm2241, %v5103, %v4868
        %v5136 = vsel %vm2241, %v5104, %v4870
        %v5137 = vsel %vm2241, %v5105, %v4872
        %v5138 = vsel %vm2241, %v5106, %v4874
        %v5139 = vsel %vm2241, %v5107, %v4876
        %v5140 = vsel %vm2241, %v5108, %v4878
        %v5141 = vsel %vm2241, %v5109, %v4880
        %v5142 = vsel %vm2241, %v5110, %v4882
        %v5143 = vsel %vm2241, %v5111, %v4884
        %v5144 = vsel %vm2241, %v5112, %v4886
        %v5145 = vsel %vm2241, %v5113, %v4888
        %v5146 = vsel %vm2241, %v5114, %v4890
        %v5147 = vsel %vm2241, %v5115, %v4892
        %v5148 = vsel %vm2241, %v5116, %v4894
        %v5149 = vsel %vm2241, %v5117, %v4896
        %v5150 = vsel %vm2241, %v5118, %v4898
        %v5151 = vsel %vm2241, %v5119, %v4900
        %v5152 = vsel %vm2241, %v5120, %v4902
        %v5153 = vsel %vm2241, %v5121, %v3955
        %v5154 = vsel %vm2241, %v5122, %v3955
        %v5155 = vpack.c.bf16 %v5124, %v5123
        %v5156 = vpack.c.bf16 %v5126, %v5125
        %v5157 = vpack.c.bf16 %v5128, %v5127
        %v5158 = vpack.c.bf16 %v5130, %v5129
        %v5159 = vpack.c.bf16 %v5132, %v5131
        %v5160 = vpack.c.bf16 %v5134, %v5133
        %v5161 = vpack.c.bf16 %v5136, %v5135
        %v5162 = vpack.c.bf16 %v5138, %v5137
        %v5163 = vpack.c.bf16 %v5140, %v5139
        %v5164 = vpack.c.bf16 %v5142, %v5141
        %v5165 = vpack.c.bf16 %v5144, %v5143
        %v5166 = vpack.c.bf16 %v5146, %v5145
        %v5167 = vpack.c.bf16 %v5148, %v5147
        %v5168 = vpack.c.bf16 %v5150, %v5149
        %v5169 = vpack.c.bf16 %v5152, %v5151
        %v5170 = vpack.c.bf16 %v5154, %v5153
        %v5187 = vunpack.c.l.b16 %v2832
        %v5188 = vunpack.c.l.b16 %v2833
        %v5189 = vunpack.c.l.b16 %v2834
        %v5190 = vunpack.c.l.b16 %v2835
        %v5191 = vunpack.c.l.b16 %v2836
        %v5192 = vunpack.c.l.b16 %v2837
        %v5193 = vunpack.c.l.b16 %v2838
        %v5194 = vunpack.c.l.b16 %v2839
        %v5195 = vunpack.c.l.b16 %v2840
        %v5196 = vunpack.c.l.b16 %v2841
        %v5197 = vunpack.c.l.b16 %v2842
        %v5198 = vunpack.c.l.b16 %v2843
        %v5199 = vunpack.c.l.b16 %v2844
        %v5200 = vunpack.c.l.b16 %v2845
        %v5201 = vunpack.c.l.b16 %v2846
        %v5202 = vunpack.c.l.b16 %v2847
        %v5203 = vpack.c.b16 %v5188, %v5187
        %v5204 = vpack.c.b16 %v5190, %v5189
        %v5205 = vpack.c.b16 %v5192, %v5191
        %v5206 = vpack.c.b16 %v5194, %v5193
        %v5207 = vpack.c.b16 %v5196, %v5195
        %v5208 = vpack.c.b16 %v5198, %v5197
        %v5209 = vpack.c.b16 %v5200, %v5199
        %v5210 = vpack.c.b16 %v5202, %v5201
        %5219 = vmatprep.subr.bf16.mxu0 0
        %5220 = vmatpush1.bf16.msra.mxu0 %v5210
        %5221 = vmatprep.subr.bf16.mxu0 0
        %5222 = vmatpush1.bf16.msra.mxu0 %v5209
        %5223 = vmatprep.subr.bf16.mxu0 0
        %5224 = vmatpush1.bf16.msra.mxu0 %v5208
        %5225 = vmatprep.subr.bf16.mxu0 0
        %5226 = vmatpush1.bf16.msra.mxu0 %v5207
        %5227 = vmatprep.subr.bf16.mxu0 0
        %5228 = vmatpush1.bf16.msra.mxu0 %v5206
        %5229 = vmatprep.subr.bf16.mxu0 0
        %5230 = vmatpush1.bf16.msra.mxu0 %v5205
        %5231 = vmatprep.subr.bf16.mxu0 0
        %5232 = vmatpush1.bf16.msra.mxu0 %v5204
        %5233 = vmatprep.subr.bf16.mxu0 0
        %5234 = vmatpush1.bf16.msra.mxu0 %v5203
        %5235 = vmatprep.subr.bf16.mxu0 0
        %5236 = vmatpush2.bf16.msra.mxu0 0
        %5237 = vmatprep.subr.bf16.mxu0 0
        %5238 = vmatpush2.bf16.msra.mxu0 0
        %5239 = vmatprep.subr.bf16.mxu0 0
        %5240 = vmatpush2.bf16.msra.mxu0 0
        %5241 = vmatprep.subr.bf16.mxu0 0
        %5242 = vmatpush2.bf16.msra.mxu0 0
        %5243 = vmatprep.subr.bf16.mxu0 0
        %5244 = vmatpush2.bf16.msra.mxu0 0
        %5245 = vmatprep.subr.bf16.mxu0 0
        %5246 = vmatpush2.bf16.msra.mxu0 0
        %5247 = vmatprep.subr.bf16.mxu0 0
        %5248 = vmatpush2.bf16.msra.mxu0 0
        %5249 = vmatprep.subr.bf16.mxu0 0
        %5250 = vmatpush2.bf16.msra.mxu0 0
        %5251 = vmatprep.mubr.bf16.mxu0 0
        %5252 = vmatmul.mubr.bf16.gmra.mxu0 %v5155
        %v5253 = vpop.f32.mrf.mxu0
        %v5254 = vadd.f32 0.0, %v5253
        %v5255 = vpop.f32.mrf.mxu0
        %v5256 = vpop.f32.mrf.mxu0
        %v5257 = vadd.f32 0.0, %v5256
        %v5258 = vpop.f32.mrf.mxu0
        %5259 = vmatprep.mubr.bf16.mxu0 0
        %5260 = vmatmul.mubr.bf16.gmra.mxu0 %v5156
        %v5261 = vpop.f32.mrf.mxu0
        %v5262 = vadd.f32 0.0, %v5261
        %v5263 = vpop.f32.mrf.mxu0
        %v5264 = vpop.f32.mrf.mxu0
        %v5265 = vadd.f32 0.0, %v5264
        %v5266 = vpop.f32.mrf.mxu0
        %5267 = vmatprep.mubr.bf16.mxu0 0
        %5268 = vmatmul.mubr.bf16.gmra.mxu0 %v5157
        %v5269 = vpop.f32.mrf.mxu0
        %v5270 = vadd.f32 0.0, %v5269
        %v5271 = vpop.f32.mrf.mxu0
        %v5272 = vpop.f32.mrf.mxu0
        %v5273 = vadd.f32 0.0, %v5272
        %v5274 = vpop.f32.mrf.mxu0
        %5275 = vmatprep.mubr.bf16.mxu0 0
        %5276 = vmatmul.mubr.bf16.gmra.mxu0 %v5158
        %v5277 = vpop.f32.mrf.mxu0
        %v5278 = vadd.f32 0.0, %v5277
        %v5279 = vpop.f32.mrf.mxu0
        %v5280 = vpop.f32.mrf.mxu0
        %v5281 = vadd.f32 0.0, %v5280
        %v5282 = vpop.f32.mrf.mxu0
        %5283 = vmatprep.mubr.bf16.mxu0 0
        %5284 = vmatmul.mubr.bf16.gmra.mxu0 %v5159
        %v5285 = vpop.f32.mrf.mxu0
        %v5286 = vadd.f32 0.0, %v5285
        %v5287 = vpop.f32.mrf.mxu0
        %v5288 = vpop.f32.mrf.mxu0
        %v5289 = vadd.f32 0.0, %v5288
        %v5290 = vpop.f32.mrf.mxu0
        %5291 = vmatprep.mubr.bf16.mxu0 0
        %5292 = vmatmul.mubr.bf16.gmra.mxu0 %v5160
        %v5293 = vpop.f32.mrf.mxu0
        %v5294 = vadd.f32 0.0, %v5293
        %v5295 = vpop.f32.mrf.mxu0
        %v5296 = vpop.f32.mrf.mxu0
        %v5297 = vadd.f32 0.0, %v5296
        %v5298 = vpop.f32.mrf.mxu0
        %5299 = vmatprep.mubr.bf16.mxu0 0
        %5300 = vmatmul.mubr.bf16.gmra.mxu0 %v5161
        %v5301 = vpop.f32.mrf.mxu0
        %v5302 = vadd.f32 0.0, %v5301
        %v5303 = vpop.f32.mrf.mxu0
        %v5304 = vpop.f32.mrf.mxu0
        %v5305 = vadd.f32 0.0, %v5304
        %v5306 = vpop.f32.mrf.mxu0
        %5307 = vmatprep.mubr.bf16.mxu0 0
        %5308 = vmatmul.mubr.bf16.gmra.mxu0 %v5162
        %v5309 = vpop.f32.mrf.mxu0
        %v5310 = vadd.f32 0.0, %v5309
        %v5311 = vpop.f32.mrf.mxu0
        %v5312 = vpop.f32.mrf.mxu0
        %v5313 = vadd.f32 0.0, %v5312
        %v5314 = vpop.f32.mrf.mxu0
        %5315 = vmatprep.mubr.bf16.mxu0 0
        %5316 = vmatmul.mubr.bf16.gmra.mxu0 %v5163
        %v5317 = vpop.f32.mrf.mxu0
        %v5318 = vadd.f32 0.0, %v5317
        %v5319 = vpop.f32.mrf.mxu0
        %v5320 = vpop.f32.mrf.mxu0
        %v5321 = vadd.f32 0.0, %v5320
        %v5322 = vpop.f32.mrf.mxu0
        %5323 = vmatprep.mubr.bf16.mxu0 0
        %5324 = vmatmul.mubr.bf16.gmra.mxu0 %v5164
        %v5325 = vpop.f32.mrf.mxu0
        %v5326 = vadd.f32 0.0, %v5325
        %v5327 = vpop.f32.mrf.mxu0
        %v5328 = vpop.f32.mrf.mxu0
        %v5329 = vadd.f32 0.0, %v5328
        %v5330 = vpop.f32.mrf.mxu0
        %5331 = vmatprep.mubr.bf16.mxu0 0
        %5332 = vmatmul.mubr.bf16.gmra.mxu0 %v5165
        %v5333 = vpop.f32.mrf.mxu0
        %v5334 = vadd.f32 0.0, %v5333
        %v5335 = vpop.f32.mrf.mxu0
        %v5336 = vpop.f32.mrf.mxu0
        %v5337 = vadd.f32 0.0, %v5336
        %v5338 = vpop.f32.mrf.mxu0
        %5339 = vmatprep.mubr.bf16.mxu0 0
        %5340 = vmatmul.mubr.bf16.gmra.mxu0 %v5166
        %v5341 = vpop.f32.mrf.mxu0
        %v5342 = vadd.f32 0.0, %v5341
        %v5343 = vpop.f32.mrf.mxu0
        %v5344 = vpop.f32.mrf.mxu0
        %v5345 = vadd.f32 0.0, %v5344
        %v5346 = vpop.f32.mrf.mxu0
        %5347 = vmatprep.mubr.bf16.mxu0 0
        %5348 = vmatmul.mubr.bf16.gmra.mxu0 %v5167
        %v5349 = vpop.f32.mrf.mxu0
        %v5350 = vadd.f32 0.0, %v5349
        %v5351 = vpop.f32.mrf.mxu0
        %v5352 = vpop.f32.mrf.mxu0
        %v5353 = vadd.f32 0.0, %v5352
        %v5354 = vpop.f32.mrf.mxu0
        %5355 = vmatprep.mubr.bf16.mxu0 0
        %5356 = vmatmul.mubr.bf16.gmra.mxu0 %v5168
        %v5357 = vpop.f32.mrf.mxu0
        %v5358 = vadd.f32 0.0, %v5357
        %v5359 = vpop.f32.mrf.mxu0
        %v5360 = vpop.f32.mrf.mxu0
        %v5361 = vadd.f32 0.0, %v5360
        %v5362 = vpop.f32.mrf.mxu0
        %5363 = vmatprep.mubr.bf16.mxu0 0
        %5364 = vmatmul.mubr.bf16.gmra.mxu0 %v5169
        %v5365 = vpop.f32.mrf.mxu0
        %v5366 = vadd.f32 0.0, %v5365
        %v5367 = vpop.f32.mrf.mxu0
        %v5368 = vpop.f32.mrf.mxu0
        %v5369 = vadd.f32 0.0, %v5368
        %v5370 = vpop.f32.mrf.mxu0
        %5371 = vmatprep.mubr.bf16.mxu0 0
        %5372 = vmatmul.mubr.bf16.gmra.mxu0 %v5170
        %v5373 = vpop.f32.mrf.mxu0
        %v5374 = vadd.f32 0.0, %v5373
        %v5375 = vpop.f32.mrf.mxu0
        %v5376 = vpop.f32.mrf.mxu0
        %v5377 = vadd.f32 0.0, %v5376
        %v5378 = vpop.f32.mrf.mxu0
        %5379 = vdwg.mxu0
        %v5396 = vunpack.c.l.b16 %v2816
        %v5397 = vunpack.c.l.b16 %v2817
        %v5398 = vunpack.c.l.b16 %v2818
        %v5399 = vunpack.c.l.b16 %v2819
        %v5400 = vunpack.c.l.b16 %v2820
        %v5401 = vunpack.c.l.b16 %v2821
        %v5402 = vunpack.c.l.b16 %v2822
        %v5403 = vunpack.c.l.b16 %v2823
        %v5404 = vunpack.c.l.b16 %v2824
        %v5405 = vunpack.c.l.b16 %v2825
        %v5406 = vunpack.c.l.b16 %v2826
        %v5407 = vunpack.c.l.b16 %v2827
        %v5408 = vunpack.c.l.b16 %v2828
        %v5409 = vunpack.c.l.b16 %v2829
        %v5410 = vunpack.c.l.b16 %v2830
        %v5411 = vunpack.c.l.b16 %v2831
        %v5412 = vpack.c.b16 %v5397, %v5396
        %v5413 = vpack.c.b16 %v5399, %v5398
        %v5414 = vpack.c.b16 %v5401, %v5400
        %v5415 = vpack.c.b16 %v5403, %v5402
        %v5416 = vpack.c.b16 %v5405, %v5404
        %v5417 = vpack.c.b16 %v5407, %v5406
        %v5418 = vpack.c.b16 %v5409, %v5408
        %v5419 = vpack.c.b16 %v5411, %v5410
        %5428 = vmatprep.subr.bf16.mxu0 0
        %5429 = vmatpush1.bf16.msra.mxu0 %v5419
        %5430 = vmatprep.subr.bf16.mxu0 0
        %5431 = vmatpush1.bf16.msra.mxu0 %v5418
        %5432 = vmatprep.subr.bf16.mxu0 0
        %5433 = vmatpush1.bf16.msra.mxu0 %v5417
        %5434 = vmatprep.subr.bf16.mxu0 0
        %5435 = vmatpush1.bf16.msra.mxu0 %v5416
        %5436 = vmatprep.subr.bf16.mxu0 0
        %5437 = vmatpush1.bf16.msra.mxu0 %v5415
        %5438 = vmatprep.subr.bf16.mxu0 0
        %5439 = vmatpush1.bf16.msra.mxu0 %v5414
        %5440 = vmatprep.subr.bf16.mxu0 0
        %5441 = vmatpush1.bf16.msra.mxu0 %v5413
        %5442 = vmatprep.subr.bf16.mxu0 0
        %5443 = vmatpush1.bf16.msra.mxu0 %v5412
        %5444 = vmatprep.subr.bf16.mxu0 0
        %5445 = vmatpush2.bf16.msra.mxu0 0
        %5446 = vmatprep.subr.bf16.mxu0 0
        %5447 = vmatpush2.bf16.msra.mxu0 0
        %5448 = vmatprep.subr.bf16.mxu0 0
        %5449 = vmatpush2.bf16.msra.mxu0 0
        %5450 = vmatprep.subr.bf16.mxu0 0
        %5451 = vmatpush2.bf16.msra.mxu0 0
        %5452 = vmatprep.subr.bf16.mxu0 0
        %5453 = vmatpush2.bf16.msra.mxu0 0
        %5454 = vmatprep.subr.bf16.mxu0 0
        %5455 = vmatpush2.bf16.msra.mxu0 0
        %5456 = vmatprep.subr.bf16.mxu0 0
        %5457 = vmatpush2.bf16.msra.mxu0 0
        %5458 = vmatprep.subr.bf16.mxu0 0
        %5459 = vmatpush2.bf16.msra.mxu0 0
        %5460 = vmatprep.mubr.bf16.mxu0 0
        %5461 = vmatmul.mubr.bf16.gmra.mxu0 %v4254
        %v5462 = vpop.f32.mrf.mxu0
        %v5463 = vadd.f32 %v5254, %v5462
        %v5464 = vpop.f32.mrf.mxu0
        %v5465 = vpop.f32.mrf.mxu0
        %v5466 = vadd.f32 %v5257, %v5465
        %v5467 = vpop.f32.mrf.mxu0
        %5468 = vmatprep.mubr.bf16.mxu0 0
        %5469 = vmatmul.mubr.bf16.gmra.mxu0 %v4255
        %v5470 = vpop.f32.mrf.mxu0
        %v5471 = vadd.f32 %v5262, %v5470
        %v5472 = vpop.f32.mrf.mxu0
        %v5473 = vpop.f32.mrf.mxu0
        %v5474 = vadd.f32 %v5265, %v5473
        %v5475 = vpop.f32.mrf.mxu0
        %5476 = vmatprep.mubr.bf16.mxu0 0
        %5477 = vmatmul.mubr.bf16.gmra.mxu0 %v4256
        %v5478 = vpop.f32.mrf.mxu0
        %v5479 = vadd.f32 %v5270, %v5478
        %v5480 = vpop.f32.mrf.mxu0
        %v5481 = vpop.f32.mrf.mxu0
        %v5482 = vadd.f32 %v5273, %v5481
        %v5483 = vpop.f32.mrf.mxu0
        %5484 = vmatprep.mubr.bf16.mxu0 0
        %5485 = vmatmul.mubr.bf16.gmra.mxu0 %v4257
        %v5486 = vpop.f32.mrf.mxu0
        %v5487 = vadd.f32 %v5278, %v5486
        %v5488 = vpop.f32.mrf.mxu0
        %v5489 = vpop.f32.mrf.mxu0
        %v5490 = vadd.f32 %v5281, %v5489
        %v5491 = vpop.f32.mrf.mxu0
        %5492 = vmatprep.mubr.bf16.mxu0 0
        %5493 = vmatmul.mubr.bf16.gmra.mxu0 %v4258
        %v5494 = vpop.f32.mrf.mxu0
        %v5495 = vadd.f32 %v5286, %v5494
        %v5496 = vpop.f32.mrf.mxu0
        %v5497 = vpop.f32.mrf.mxu0
        %v5498 = vadd.f32 %v5289, %v5497
        %v5499 = vpop.f32.mrf.mxu0
        %5500 = vmatprep.mubr.bf16.mxu0 0
        %5501 = vmatmul.mubr.bf16.gmra.mxu0 %v4259
        %v5502 = vpop.f32.mrf.mxu0
        %v5503 = vadd.f32 %v5294, %v5502
        %v5504 = vpop.f32.mrf.mxu0
        %v5505 = vpop.f32.mrf.mxu0
        %v5506 = vadd.f32 %v5297, %v5505
        %v5507 = vpop.f32.mrf.mxu0
        %5508 = vmatprep.mubr.bf16.mxu0 0
        %5509 = vmatmul.mubr.bf16.gmra.mxu0 %v4260
        %v5510 = vpop.f32.mrf.mxu0
        %v5511 = vadd.f32 %v5302, %v5510
        %v5512 = vpop.f32.mrf.mxu0
        %v5513 = vpop.f32.mrf.mxu0
        %v5514 = vadd.f32 %v5305, %v5513
        %v5515 = vpop.f32.mrf.mxu0
        %5516 = vmatprep.mubr.bf16.mxu0 0
        %5517 = vmatmul.mubr.bf16.gmra.mxu0 %v4261
        %v5518 = vpop.f32.mrf.mxu0
        %v5519 = vadd.f32 %v5310, %v5518
        %v5520 = vpop.f32.mrf.mxu0
        %v5521 = vpop.f32.mrf.mxu0
        %v5522 = vadd.f32 %v5313, %v5521
        %v5523 = vpop.f32.mrf.mxu0
        %5524 = vmatprep.mubr.bf16.mxu0 0
        %5525 = vmatmul.mubr.bf16.gmra.mxu0 %v4262
        %v5526 = vpop.f32.mrf.mxu0
        %v5527 = vadd.f32 %v5318, %v5526
        %v5528 = vpop.f32.mrf.mxu0
        %v5529 = vpop.f32.mrf.mxu0
        %v5530 = vadd.f32 %v5321, %v5529
        %v5531 = vpop.f32.mrf.mxu0
        %5532 = vmatprep.mubr.bf16.mxu0 0
        %5533 = vmatmul.mubr.bf16.gmra.mxu0 %v4263
        %v5534 = vpop.f32.mrf.mxu0
        %v5535 = vadd.f32 %v5326, %v5534
        %v5536 = vpop.f32.mrf.mxu0
        %v5537 = vpop.f32.mrf.mxu0
        %v5538 = vadd.f32 %v5329, %v5537
        %v5539 = vpop.f32.mrf.mxu0
        %5540 = vmatprep.mubr.bf16.mxu0 0
        %5541 = vmatmul.mubr.bf16.gmra.mxu0 %v4264
        %v5542 = vpop.f32.mrf.mxu0
        %v5543 = vadd.f32 %v5334, %v5542
        %v5544 = vpop.f32.mrf.mxu0
        %v5545 = vpop.f32.mrf.mxu0
        %v5546 = vadd.f32 %v5337, %v5545
        %v5547 = vpop.f32.mrf.mxu0
        %5548 = vmatprep.mubr.bf16.mxu0 0
        %5549 = vmatmul.mubr.bf16.gmra.mxu0 %v4265
        %v5550 = vpop.f32.mrf.mxu0
        %v5551 = vadd.f32 %v5342, %v5550
        %v5552 = vpop.f32.mrf.mxu0
        %v5553 = vpop.f32.mrf.mxu0
        %v5554 = vadd.f32 %v5345, %v5553
        %v5555 = vpop.f32.mrf.mxu0
        %5556 = vmatprep.mubr.bf16.mxu0 0
        %5557 = vmatmul.mubr.bf16.gmra.mxu0 %v4266
        %v5558 = vpop.f32.mrf.mxu0
        %v5559 = vadd.f32 %v5350, %v5558
        %v5560 = vpop.f32.mrf.mxu0
        %v5561 = vpop.f32.mrf.mxu0
        %v5562 = vadd.f32 %v5353, %v5561
        %v5563 = vpop.f32.mrf.mxu0
        %5564 = vmatprep.mubr.bf16.mxu0 0
        %5565 = vmatmul.mubr.bf16.gmra.mxu0 %v4267
        %v5566 = vpop.f32.mrf.mxu0
        %v5567 = vadd.f32 %v5358, %v5566
        %v5568 = vpop.f32.mrf.mxu0
        %v5569 = vpop.f32.mrf.mxu0
        %v5570 = vadd.f32 %v5361, %v5569
        %v5571 = vpop.f32.mrf.mxu0
        %5572 = vmatprep.mubr.bf16.mxu0 0
        %5573 = vmatmul.mubr.bf16.gmra.mxu0 %v4268
        %v5574 = vpop.f32.mrf.mxu0
        %v5575 = vadd.f32 %v5366, %v5574
        %v5576 = vpop.f32.mrf.mxu0
        %v5577 = vpop.f32.mrf.mxu0
        %v5578 = vadd.f32 %v5369, %v5577
        %v5579 = vpop.f32.mrf.mxu0
        %5580 = vmatprep.mubr.bf16.mxu0 0
        %5581 = vmatmul.mubr.bf16.gmra.mxu0 %v4269
        %v5582 = vpop.f32.mrf.mxu0
        %v5583 = vadd.f32 %v5374, %v5582
        %v5584 = vpop.f32.mrf.mxu0
        %v5585 = vpop.f32.mrf.mxu0
        %v5586 = vadd.f32 %v5377, %v5585
        %v5587 = vpop.f32.mrf.mxu0
        %5588 = vdwg.mxu0
        %5589 = vrot.lane.b32.xlu0 %v919, 96
        %v5590 = vpop.permute.xlu0 %5589
        %5591 = vrot.lane.b32.xlu0 %v922, 96
        %v5592 = vpop.permute.xlu0 %5591
        %5623 = vrot.lane.b32.xlu0 %v1142, 112
        %v5624 = vpop.permute.xlu0 %5623
        %5625 = vrot.lane.b32.xlu0 %v1217, 112
        %v5626 = vpop.permute.xlu0 %5625
        %5627 = vrot.lane.b32.xlu0 %v1145, 112
        %v5628 = vpop.permute.xlu0 %5627
        %5629 = vrot.lane.b32.xlu0 %v1218, 112
        %v5630 = vpop.permute.xlu0 %5629
        %5631 = vrot.lane.b32.xlu0 %v1148, 112
        %v5632 = vpop.permute.xlu0 %5631
        %5633 = vrot.lane.b32.xlu0 %v1219, 112
        %v5634 = vpop.permute.xlu0 %5633
        %5635 = vrot.lane.b32.xlu0 %v1151, 112
        %v5636 = vpop.permute.xlu0 %5635
        %5637 = vrot.lane.b32.xlu0 %v1220, 112
        %v5638 = vpop.permute.xlu0 %5637
        %5639 = vrot.lane.b32.xlu0 %v1154, 112
        %v5640 = vpop.permute.xlu0 %5639
        %5641 = vrot.lane.b32.xlu0 %v1221, 112
        %v5642 = vpop.permute.xlu0 %5641
        %5643 = vrot.lane.b32.xlu0 %v1157, 112
        %v5644 = vpop.permute.xlu0 %5643
        %5645 = vrot.lane.b32.xlu0 %v1222, 112
        %v5646 = vpop.permute.xlu0 %5645
        %5647 = vrot.lane.b32.xlu0 %v1160, 112
        %v5648 = vpop.permute.xlu0 %5647
        %5649 = vrot.lane.b32.xlu0 %v1223, 112
        %v5650 = vpop.permute.xlu0 %5649
        %5651 = vrot.lane.b32.xlu0 %v1163, 112
        %v5652 = vpop.permute.xlu0 %5651
        %5653 = vrot.lane.b32.xlu0 %v1224, 112
        %v5654 = vpop.permute.xlu0 %5653
        %5655 = vrot.lane.b32.xlu0 %v1166, 112
        %v5656 = vpop.permute.xlu0 %5655
        %5657 = vrot.lane.b32.xlu0 %v1225, 112
        %v5658 = vpop.permute.xlu0 %5657
        %5659 = vrot.lane.b32.xlu0 %v1169, 112
        %v5660 = vpop.permute.xlu0 %5659
        %5661 = vrot.lane.b32.xlu0 %v1226, 112
        %v5662 = vpop.permute.xlu0 %5661
        %5663 = vrot.lane.b32.xlu0 %v1172, 112
        %v5664 = vpop.permute.xlu0 %5663
        %5665 = vrot.lane.b32.xlu0 %v1227, 112
        %v5666 = vpop.permute.xlu0 %5665
        %5667 = vrot.lane.b32.xlu0 %v1175, 112
        %v5668 = vpop.permute.xlu0 %5667
        %5669 = vrot.lane.b32.xlu0 %v1228, 112
        %v5670 = vpop.permute.xlu0 %5669
        %5671 = vrot.lane.b32.xlu0 %v1178, 112
        %v5672 = vpop.permute.xlu0 %5671
        %5673 = vrot.lane.b32.xlu0 %v1229, 112
        %v5674 = vpop.permute.xlu0 %5673
        %5675 = vrot.lane.b32.xlu0 %v1181, 112
        %v5676 = vpop.permute.xlu0 %5675
        %5677 = vrot.lane.b32.xlu0 %v1230, 112
        %v5678 = vpop.permute.xlu0 %5677
        %5679 = vrot.lane.b32.xlu0 %v1184, 112
        %v5680 = vpop.permute.xlu0 %5679
        %5681 = vrot.lane.b32.xlu0 %v1231, 112
        %v5682 = vpop.permute.xlu0 %5681
        %5713 = vrot.lane.b32.xlu0 %v3012, 64
        %v5714 = vpop.permute.xlu0 %5713
        %5715 = vrot.lane.b32.xlu0 %v2927, 64
        %v5716 = vpop.permute.xlu0 %5715
        %5717 = vrot.lane.b32.xlu0 %v3013, 64
        %v5718 = vpop.permute.xlu0 %5717
        %5719 = vrot.lane.b32.xlu0 %v2931, 64
        %v5720 = vpop.permute.xlu0 %5719
        %5721 = vrot.lane.b32.xlu0 %v3014, 64
        %v5722 = vpop.permute.xlu0 %5721
        %5723 = vrot.lane.b32.xlu0 %v2935, 64
        %v5724 = vpop.permute.xlu0 %5723
        %5725 = vrot.lane.b32.xlu0 %v3015, 64
        %v5726 = vpop.permute.xlu0 %5725
        %5727 = vrot.lane.b32.xlu0 %v2939, 64
        %v5728 = vpop.permute.xlu0 %5727
        %5729 = vrot.lane.b32.xlu0 %v3016, 64
        %v5730 = vpop.permute.xlu0 %5729
        %5731 = vrot.lane.b32.xlu0 %v2943, 64
        %v5732 = vpop.permute.xlu0 %5731
        %5733 = vrot.lane.b32.xlu0 %v3017, 64
        %v5734 = vpop.permute.xlu0 %5733
        %5735 = vrot.lane.b32.xlu0 %v2947, 64
        %v5736 = vpop.permute.xlu0 %5735
        %5737 = vrot.lane.b32.xlu0 %v3018, 64
        %v5738 = vpop.permute.xlu0 %5737
        %5739 = vrot.lane.b32.xlu0 %v2951, 64
        %v5740 = vpop.permute.xlu0 %5739
        %5741 = vrot.lane.b32.xlu0 %v3019, 64
        %v5742 = vpop.permute.xlu0 %5741
        %5743 = vrot.lane.b32.xlu0 %v2955, 64
        %v5744 = vpop.permute.xlu0 %5743
        %5745 = vrot.lane.b32.xlu0 %v3020, 64
        %v5746 = vpop.permute.xlu0 %5745
        %5747 = vrot.lane.b32.xlu0 %v2959, 64
        %v5748 = vpop.permute.xlu0 %5747
        %5749 = vrot.lane.b32.xlu0 %v3021, 64
        %v5750 = vpop.permute.xlu0 %5749
        %5751 = vrot.lane.b32.xlu0 %v2963, 64
        %v5752 = vpop.permute.xlu0 %5751
        %5753 = vrot.lane.b32.xlu0 %v3022, 64
        %v5754 = vpop.permute.xlu0 %5753
        %5755 = vrot.lane.b32.xlu0 %v2967, 64
        %v5756 = vpop.permute.xlu0 %5755
        %5757 = vrot.lane.b32.xlu0 %v3023, 64
        %v5758 = vpop.permute.xlu0 %5757
        %5759 = vrot.lane.b32.xlu0 %v2971, 64
        %v5760 = vpop.permute.xlu0 %5759
        %5761 = vrot.lane.b32.xlu0 %v3024, 64
        %v5762 = vpop.permute.xlu0 %5761
        %5763 = vrot.lane.b32.xlu0 %v2975, 64
        %v5764 = vpop.permute.xlu0 %5763
        %5765 = vrot.lane.b32.xlu0 %v3025, 64
        %v5766 = vpop.permute.xlu0 %5765
        %5767 = vrot.lane.b32.xlu0 %v2979, 64
        %v5768 = vpop.permute.xlu0 %5767
        %5797 = vrot.lane.b32.xlu0 %v3123, 80
        %v5798 = vpop.permute.xlu0 %5797
        %5799 = vrot.lane.b32.xlu0 %v3037, 80
        %v5800 = vpop.permute.xlu0 %5799
        %5801 = vrot.lane.b32.xlu0 %v3124, 80
        %v5802 = vpop.permute.xlu0 %5801
        %5803 = vrot.lane.b32.xlu0 %v3041, 80
        %v5804 = vpop.permute.xlu0 %5803
        %5805 = vrot.lane.b32.xlu0 %v3125, 80
        %v5806 = vpop.permute.xlu0 %5805
        %5807 = vrot.lane.b32.xlu0 %v3045, 80
        %v5808 = vpop.permute.xlu0 %5807
        %5809 = vrot.lane.b32.xlu0 %v3126, 80
        %v5810 = vpop.permute.xlu0 %5809
        %5811 = vrot.lane.b32.xlu0 %v3049, 80
        %v5812 = vpop.permute.xlu0 %5811
        %5813 = vrot.lane.b32.xlu0 %v3127, 80
        %v5814 = vpop.permute.xlu0 %5813
        %5815 = vrot.lane.b32.xlu0 %v3053, 80
        %v5816 = vpop.permute.xlu0 %5815
        %5817 = vrot.lane.b32.xlu0 %v3128, 80
        %v5818 = vpop.permute.xlu0 %5817
        %5819 = vrot.lane.b32.xlu0 %v3057, 80
        %v5820 = vpop.permute.xlu0 %5819
        %5821 = vrot.lane.b32.xlu0 %v3129, 80
        %v5822 = vpop.permute.xlu0 %5821
        %5823 = vrot.lane.b32.xlu0 %v3061, 80
        %v5824 = vpop.permute.xlu0 %5823
        %5825 = vrot.lane.b32.xlu0 %v3130, 80
        %v5826 = vpop.permute.xlu0 %5825
        %5827 = vrot.lane.b32.xlu0 %v3065, 80
        %v5828 = vpop.permute.xlu0 %5827
        %5829 = vrot.lane.b32.xlu0 %v3131, 80
        %v5830 = vpop.permute.xlu0 %5829
        %5831 = vrot.lane.b32.xlu0 %v3069, 80
        %v5832 = vpop.permute.xlu0 %5831
        %5833 = vrot.lane.b32.xlu0 %v3132, 80
        %v5834 = vpop.permute.xlu0 %5833
        %5835 = vrot.lane.b32.xlu0 %v3073, 80
        %v5836 = vpop.permute.xlu0 %5835
        %5837 = vrot.lane.b32.xlu0 %v3133, 80
        %v5838 = vpop.permute.xlu0 %5837
        %5839 = vrot.lane.b32.xlu0 %v3077, 80
        %v5840 = vpop.permute.xlu0 %5839
        %5841 = vrot.lane.b32.xlu0 %v3134, 80
        %v5842 = vpop.permute.xlu0 %5841
        %5843 = vrot.lane.b32.xlu0 %v3081, 80
        %v5844 = vpop.permute.xlu0 %5843
        %5845 = vrot.lane.b32.xlu0 %v3135, 80
        %v5846 = vpop.permute.xlu0 %5845
        %5847 = vrot.lane.b32.xlu0 %v3085, 80
        %v5848 = vpop.permute.xlu0 %5847
        %5849 = vrot.lane.b32.xlu0 %v3136, 80
        %v5850 = vpop.permute.xlu0 %5849
        %5851 = vrot.lane.b32.xlu0 %v3089, 80
        %v5852 = vpop.permute.xlu0 %5851
        %5881 = vrot.lane.b32.xlu0 %v815, 48
        %v5882 = vpop.permute.xlu0 %5881
        %5883 = vrot.lane.b32.xlu0 %v818, 48
        %v5884 = vpop.permute.xlu0 %5883
        %5885 = vrot.lane.b32.xlu0 %v823, 48
        %v5886 = vpop.permute.xlu0 %5885
        %5887 = vrot.lane.b32.xlu0 %v826, 48
        %v5888 = vpop.permute.xlu0 %5887
        %5889 = vrot.lane.b32.xlu0 %v831, 48
        %v5890 = vpop.permute.xlu0 %5889
        %5891 = vrot.lane.b32.xlu0 %v834, 48
        %v5892 = vpop.permute.xlu0 %5891
        %5893 = vrot.lane.b32.xlu0 %v839, 48
        %v5894 = vpop.permute.xlu0 %5893
        %5895 = vrot.lane.b32.xlu0 %v842, 48
        %v5896 = vpop.permute.xlu0 %5895
        %5897 = vrot.lane.b32.xlu0 %v847, 48
        %v5898 = vpop.permute.xlu0 %5897
        %5899 = vrot.lane.b32.xlu0 %v850, 48
        %v5900 = vpop.permute.xlu0 %5899
        %5901 = vrot.lane.b32.xlu0 %v855, 48
        %v5902 = vpop.permute.xlu0 %5901
        %5903 = vrot.lane.b32.xlu0 %v858, 48
        %v5904 = vpop.permute.xlu0 %5903
        %5905 = vrot.lane.b32.xlu0 %v863, 48
        %v5906 = vpop.permute.xlu0 %5905
        %5907 = vrot.lane.b32.xlu0 %v866, 48
        %v5908 = vpop.permute.xlu0 %5907
        %5909 = vrot.lane.b32.xlu0 %v871, 48
        %v5910 = vpop.permute.xlu0 %5909
        %5911 = vrot.lane.b32.xlu0 %v874, 48
        %v5912 = vpop.permute.xlu0 %5911
        %5913 = vrot.lane.b32.xlu0 %v879, 48
        %v5914 = vpop.permute.xlu0 %5913
        %5915 = vrot.lane.b32.xlu0 %v882, 48
        %v5916 = vpop.permute.xlu0 %5915
        %5917 = vrot.lane.b32.xlu0 %v887, 48
        %v5918 = vpop.permute.xlu0 %5917
        %5919 = vrot.lane.b32.xlu0 %v890, 48
        %v5920 = vpop.permute.xlu0 %5919
        %5921 = vrot.lane.b32.xlu0 %v895, 48
        %v5922 = vpop.permute.xlu0 %5921
        %5923 = vrot.lane.b32.xlu0 %v898, 48
        %v5924 = vpop.permute.xlu0 %5923
        %5925 = vrot.lane.b32.xlu0 %v903, 48
        %v5926 = vpop.permute.xlu0 %5925
        %5927 = vrot.lane.b32.xlu0 %v906, 48
        %v5928 = vpop.permute.xlu0 %5927
        %5929 = vrot.lane.b32.xlu0 %v911, 48
        %v5930 = vpop.permute.xlu0 %5929
        %5931 = vrot.lane.b32.xlu0 %v914, 48
        %v5932 = vpop.permute.xlu0 %5931
        %5933 = vrot.lane.b32.xlu0 %v919, 48
        %v5934 = vpop.permute.xlu0 %5933
        %5935 = vrot.lane.b32.xlu0 %v922, 48
        %v5936 = vpop.permute.xlu0 %5935
        %5965 = vrot.lane.b32.xlu0 %v1145, 64
        %v5966 = vpop.permute.xlu0 %5965
        %5967 = vrot.lane.b32.xlu0 %v1218, 64
        %v5968 = vpop.permute.xlu0 %5967
        %5969 = vrot.lane.b32.xlu0 %v1148, 64
        %v5970 = vpop.permute.xlu0 %5969
        %5971 = vrot.lane.b32.xlu0 %v1219, 64
        %v5972 = vpop.permute.xlu0 %5971
        %5973 = vrot.lane.b32.xlu0 %v1151, 64
        %v5974 = vpop.permute.xlu0 %5973
        %5975 = vrot.lane.b32.xlu0 %v1220, 64
        %v5976 = vpop.permute.xlu0 %5975
        %5977 = vrot.lane.b32.xlu0 %v1154, 64
        %v5978 = vpop.permute.xlu0 %5977
        %5979 = vrot.lane.b32.xlu0 %v1221, 64
        %v5980 = vpop.permute.xlu0 %5979
        %5981 = vrot.lane.b32.xlu0 %v1157, 64
        %v5982 = vpop.permute.xlu0 %5981
        %5983 = vrot.lane.b32.xlu0 %v1222, 64
        %v5984 = vpop.permute.xlu0 %5983
        %5985 = vrot.lane.b32.xlu0 %v1160, 64
        %v5986 = vpop.permute.xlu0 %5985
        %5987 = vrot.lane.b32.xlu0 %v1223, 64
        %v5988 = vpop.permute.xlu0 %5987
        %5989 = vrot.lane.b32.xlu0 %v1163, 64
        %v5990 = vpop.permute.xlu0 %5989
        %5991 = vrot.lane.b32.xlu0 %v1224, 64
        %v5992 = vpop.permute.xlu0 %5991
        %5993 = vrot.lane.b32.xlu0 %v1166, 64
        %v5994 = vpop.permute.xlu0 %5993
        %5995 = vrot.lane.b32.xlu0 %v1225, 64
        %v5996 = vpop.permute.xlu0 %5995
        %5997 = vrot.lane.b32.xlu0 %v1169, 64
        %v5998 = vpop.permute.xlu0 %5997
        %5999 = vrot.lane.b32.xlu0 %v1226, 64
        %v6000 = vpop.permute.xlu0 %5999
        %6001 = vrot.lane.b32.xlu0 %v1172, 64
        %v6002 = vpop.permute.xlu0 %6001
        %6003 = vrot.lane.b32.xlu0 %v1227, 64
        %v6004 = vpop.permute.xlu0 %6003
        %6005 = vrot.lane.b32.xlu0 %v1175, 64
        %v6006 = vpop.permute.xlu0 %6005
        %6007 = vrot.lane.b32.xlu0 %v1228, 64
        %v6008 = vpop.permute.xlu0 %6007
        %6009 = vrot.lane.b32.xlu0 %v1178, 64
        %v6010 = vpop.permute.xlu0 %6009
        %6011 = vrot.lane.b32.xlu0 %v1229, 64
        %v6012 = vpop.permute.xlu0 %6011
        %6013 = vrot.lane.b32.xlu0 %v1181, 64
        %v6014 = vpop.permute.xlu0 %6013
        %6015 = vrot.lane.b32.xlu0 %v1230, 64
        %v6016 = vpop.permute.xlu0 %6015
        %6017 = vrot.lane.b32.xlu0 %v1184, 64
        %v6018 = vpop.permute.xlu0 %6017
        %6019 = vrot.lane.b32.xlu0 %v1231, 64
        %v6020 = vpop.permute.xlu0 %6019
        %v6049 = vsel %vm2045, %v3122, %v1237
        %v6050 = vsel %vm2045, %v3033, %v1239
        %v6051 = vsel %vm2045, %v3123, %v1241
        %v6052 = vsel %vm2045, %v3037, %v1243
        %v6053 = vsel %vm2045, %v3124, %v1245
        %v6054 = vsel %vm2045, %v3041, %v1247
        %v6055 = vsel %vm2045, %v3125, %v1249
        %v6056 = vsel %vm2045, %v3045, %v1251
        %v6057 = vsel %vm2045, %v3126, %v1253
        %v6058 = vsel %vm2045, %v3049, %v1255
        %v6059 = vsel %vm2045, %v3127, %v1257
        %v6060 = vsel %vm2045, %v3053, %v1259
        %v6061 = vsel %vm2045, %v3128, %v1261
        %v6062 = vsel %vm2045, %v3057, %v1263
        %v6063 = vsel %vm2045, %v3129, %v1265
        %v6064 = vsel %vm2045, %v3061, %v1267
        %v6065 = vsel %vm2045, %v3130, %v1269
        %v6066 = vsel %vm2045, %v3065, %v1271
        %v6067 = vsel %vm2045, %v3131, %v1273
        %v6068 = vsel %vm2045, %v3069, %v1275
        %v6069 = vsel %vm2045, %v3132, %v1277
        %v6070 = vsel %vm2045, %v3073, %v1279
        %v6071 = vsel %vm2045, %v3133, %v1281
        %v6072 = vsel %vm2045, %v3077, %v1283
        %v6073 = vsel %vm2045, %v3134, %v1285
        %v6074 = vsel %vm2045, %v3081, %v1287
        %v6075 = vsel %vm2045, %v3135, %v1289
        %v6076 = vsel %vm2045, %v3085, %v1291
        %v6077 = vsel %vm2045, %v3136, %v5590
        %v6078 = vsel %vm2045, %v3089, %v5592
        %v6079 = vsel %vm2045, 0.0, %v1920
        %v6080 = vsel %vm2077, %v6049, %v5624
        %v6081 = vsel %vm2077, %v6050, %v5626
        %v6082 = vsel %vm2077, %v6051, %v5628
        %v6083 = vsel %vm2077, %v6052, %v5630
        %v6084 = vsel %vm2077, %v6053, %v5632
        %v6085 = vsel %vm2077, %v6054, %v5634
        %v6086 = vsel %vm2077, %v6055, %v5636
        %v6087 = vsel %vm2077, %v6056, %v5638
        %v6088 = vsel %vm2077, %v6057, %v5640
        %v6089 = vsel %vm2077, %v6058, %v5642
        %v6090 = vsel %vm2077, %v6059, %v5644
        %v6091 = vsel %vm2077, %v6060, %v5646
        %v6092 = vsel %vm2077, %v6061, %v5648
        %v6093 = vsel %vm2077, %v6062, %v5650
        %v6094 = vsel %vm2077, %v6063, %v5652
        %v6095 = vsel %vm2077, %v6064, %v5654
        %v6096 = vsel %vm2077, %v6065, %v5656
        %v6097 = vsel %vm2077, %v6066, %v5658
        %v6098 = vsel %vm2077, %v6067, %v5660
        %v6099 = vsel %vm2077, %v6068, %v5662
        %v6100 = vsel %vm2077, %v6069, %v5664
        %v6101 = vsel %vm2077, %v6070, %v5666
        %v6102 = vsel %vm2077, %v6071, %v5668
        %v6103 = vsel %vm2077, %v6072, %v5670
        %v6104 = vsel %vm2077, %v6073, %v5672
        %v6105 = vsel %vm2077, %v6074, %v5674
        %v6106 = vsel %vm2077, %v6075, %v5676
        %v6107 = vsel %vm2077, %v6076, %v5678
        %v6108 = vsel %vm2077, %v6077, %v5680
        %v6109 = vsel %vm2077, %v6078, %v5682
        %v6110 = vsel %vm2077, %v6079, %v3955
        %v6111 = vsel %vm2109, %v6080, %v3143
        %v6112 = vsel %vm2109, %v6081, %v3218
        %v6113 = vsel %vm2109, %v6082, %v3146
        %v6114 = vsel %vm2109, %v6083, %v3219
        %v6115 = vsel %vm2109, %v6084, %v3149
        %v6116 = vsel %vm2109, %v6085, %v3220
        %v6117 = vsel %vm2109, %v6086, %v3152
        %v6118 = vsel %vm2109, %v6087, %v3221
        %v6119 = vsel %vm2109, %v6088, %v3155
        %v6120 = vsel %vm2109, %v6089, %v3222
        %v6121 = vsel %vm2109, %v6090, %v3158
        %v6122 = vsel %vm2109, %v6091, %v3223
        %v6123 = vsel %vm2109, %v6092, %v3161
        %v6124 = vsel %vm2109, %v6093, %v3224
        %v6125 = vsel %vm2109, %v6094, %v3164
        %v6126 = vsel %vm2109, %v6095, %v3225
        %v6127 = vsel %vm2109, %v6096, %v3167
        %v6128 = vsel %vm2109, %v6097, %v3226
        %v6129 = vsel %vm2109, %v6098, %v3170
        %v6130 = vsel %vm2109, %v6099, %v3227
        %v6131 = vsel %vm2109, %v6100, %v3173
        %v6132 = vsel %vm2109, %v6101, %v3228
        %v6133 = vsel %vm2109, %v6102, %v3176
        %v6134 = vsel %vm2109, %v6103, %v3229
        %v6135 = vsel %vm2109, %v6104, %v3179
        %v6136 = vsel %vm2109, %v6105, %v3230
        %v6137 = vsel %vm2109, %v6106, %v3182
        %v6138 = vsel %vm2109, %v6107, %v3231
        %v6139 = vsel %vm2109, %v6108, %v3185
        %v6140 = vsel %vm2109, %v6109, %v3232
        %v6141 = vsel %vm2109, %v6110, 0.0
        %v6142 = vsel %vm2142, %v6111, %v5714
        %v6143 = vsel %vm2142, %v6112, %v5716
        %v6144 = vsel %vm2142, %v6113, %v5718
        %v6145 = vsel %vm2142, %v6114, %v5720
        %v6146 = vsel %vm2142, %v6115, %v5722
        %v6147 = vsel %vm2142, %v6116, %v5724
        %v6148 = vsel %vm2142, %v6117, %v5726
        %v6149 = vsel %vm2142, %v6118, %v5728
        %v6150 = vsel %vm2142, %v6119, %v5730
        %v6151 = vsel %vm2142, %v6120, %v5732
        %v6152 = vsel %vm2142, %v6121, %v5734
        %v6153 = vsel %vm2142, %v6122, %v5736
        %v6154 = vsel %vm2142, %v6123, %v5738
        %v6155 = vsel %vm2142, %v6124, %v5740
        %v6156 = vsel %vm2142, %v6125, %v5742
        %v6157 = vsel %vm2142, %v6126, %v5744
        %v6158 = vsel %vm2142, %v6127, %v5746
        %v6159 = vsel %vm2142, %v6128, %v5748
        %v6160 = vsel %vm2142, %v6129, %v5750
        %v6161 = vsel %vm2142, %v6130, %v5752
        %v6162 = vsel %vm2142, %v6131, %v5754
        %v6163 = vsel %vm2142, %v6132, %v5756
        %v6164 = vsel %vm2142, %v6133, %v5758
        %v6165 = vsel %vm2142, %v6134, %v5760
        %v6166 = vsel %vm2142, %v6135, %v5762
        %v6167 = vsel %vm2142, %v6136, %v5764
        %v6168 = vsel %vm2142, %v6137, %v5766
        %v6169 = vsel %vm2142, %v6138, %v5768
        %v6170 = vsel %vm2142, %v6139, %v3672
        %v6171 = vsel %vm2142, %v6140, %v3672
        %v6172 = vsel %vm2142, %v6141, %v3672
        %v6173 = vsel %vm2175, %v6142, %v5798
        %v6174 = vsel %vm2175, %v6143, %v5800
        %v6175 = vsel %vm2175, %v6144, %v5802
        %v6176 = vsel %vm2175, %v6145, %v5804
        %v6177 = vsel %vm2175, %v6146, %v5806
        %v6178 = vsel %vm2175, %v6147, %v5808
        %v6179 = vsel %vm2175, %v6148, %v5810
        %v6180 = vsel %vm2175, %v6149, %v5812
        %v6181 = vsel %vm2175, %v6150, %v5814
        %v6182 = vsel %vm2175, %v6151, %v5816
        %v6183 = vsel %vm2175, %v6152, %v5818
        %v6184 = vsel %vm2175, %v6153, %v5820
        %v6185 = vsel %vm2175, %v6154, %v5822
        %v6186 = vsel %vm2175, %v6155, %v5824
        %v6187 = vsel %vm2175, %v6156, %v5826
        %v6188 = vsel %vm2175, %v6157, %v5828
        %v6189 = vsel %vm2175, %v6158, %v5830
        %v6190 = vsel %vm2175, %v6159, %v5832
        %v6191 = vsel %vm2175, %v6160, %v5834
        %v6192 = vsel %vm2175, %v6161, %v5836
        %v6193 = vsel %vm2175, %v6162, %v5838
        %v6194 = vsel %vm2175, %v6163, %v5840
        %v6195 = vsel %vm2175, %v6164, %v5842
        %v6196 = vsel %vm2175, %v6165, %v5844
        %v6197 = vsel %vm2175, %v6166, %v5846
        %v6198 = vsel %vm2175, %v6167, %v5848
        %v6199 = vsel %vm2175, %v6168, %v5850
        %v6200 = vsel %vm2175, %v6169, %v5852
        %v6201 = vsel %vm2175, %v6170, %v2013
        %v6202 = vsel %vm2175, %v6171, %v2013
        %v6203 = vsel %vm2175, %v6172, %v2013
        %v6204 = vsel %vm2208, %v6173, %v5882
        %v6205 = vsel %vm2208, %v6174, %v5884
        %v6206 = vsel %vm2208, %v6175, %v5886
        %v6207 = vsel %vm2208, %v6176, %v5888
        %v6208 = vsel %vm2208, %v6177, %v5890
        %v6209 = vsel %vm2208, %v6178, %v5892
        %v6210 = vsel %vm2208, %v6179, %v5894
        %v6211 = vsel %vm2208, %v6180, %v5896
        %v6212 = vsel %vm2208, %v6181, %v5898
        %v6213 = vsel %vm2208, %v6182, %v5900
        %v6214 = vsel %vm2208, %v6183, %v5902
        %v6215 = vsel %vm2208, %v6184, %v5904
        %v6216 = vsel %vm2208, %v6185, %v5906
        %v6217 = vsel %vm2208, %v6186, %v5908
        %v6218 = vsel %vm2208, %v6187, %v5910
        %v6219 = vsel %vm2208, %v6188, %v5912
        %v6220 = vsel %vm2208, %v6189, %v5914
        %v6221 = vsel %vm2208, %v6190, %v5916
        %v6222 = vsel %vm2208, %v6191, %v5918
        %v6223 = vsel %vm2208, %v6192, %v5920
        %v6224 = vsel %vm2208, %v6193, %v5922
        %v6225 = vsel %vm2208, %v6194, %v5924
        %v6226 = vsel %vm2208, %v6195, %v5926
        %v6227 = vsel %vm2208, %v6196, %v5928
        %v6228 = vsel %vm2208, %v6197, %v5930
        %v6229 = vsel %vm2208, %v6198, %v5932
        %v6230 = vsel %vm2208, %v6199, %v5934
        %v6231 = vsel %vm2208, %v6200, %v5936
        %v6232 = vsel %vm2208, %v6201, %v3585
        %v6233 = vsel %vm2208, %v6202, %v3585
        %v6234 = vsel %vm2208, %v6203, %v3585
        %v6235 = vsel %vm2241, %v6204, %v5966
        %v6236 = vsel %vm2241, %v6205, %v5968
        %v6237 = vsel %vm2241, %v6206, %v5970
        %v6238 = vsel %vm2241, %v6207, %v5972
        %v6239 = vsel %vm2241, %v6208, %v5974
        %v6240 = vsel %vm2241, %v6209, %v5976
        %v6241 = vsel %vm2241, %v6210, %v5978
        %v6242 = vsel %vm2241, %v6211, %v5980
        %v6243 = vsel %vm2241, %v6212, %v5982
        %v6244 = vsel %vm2241, %v6213, %v5984
        %v6245 = vsel %vm2241, %v6214, %v5986
        %v6246 = vsel %vm2241, %v6215, %v5988
        %v6247 = vsel %vm2241, %v6216, %v5990
        %v6248 = vsel %vm2241, %v6217, %v5992
        %v6249 = vsel %vm2241, %v6218, %v5994
        %v6250 = vsel %vm2241, %v6219, %v5996
        %v6251 = vsel %vm2241, %v6220, %v5998
        %v6252 = vsel %vm2241, %v6221, %v6000
        %v6253 = vsel %vm2241, %v6222, %v6002
        %v6254 = vsel %vm2241, %v6223, %v6004
        %v6255 = vsel %vm2241, %v6224, %v6006
        %v6256 = vsel %vm2241, %v6225, %v6008
        %v6257 = vsel %vm2241, %v6226, %v6010
        %v6258 = vsel %vm2241, %v6227, %v6012
        %v6259 = vsel %vm2241, %v6228, %v6014
        %v6260 = vsel %vm2241, %v6229, %v6016
        %v6261 = vsel %vm2241, %v6230, %v6018
        %v6262 = vsel %vm2241, %v6231, %v6020
        %v6263 = vsel %vm2241, %v6232, %v3672
        %v6264 = vsel %vm2241, %v6233, %v3672
        %v6265 = vsel %vm2241, %v6234, %v3672
        %v6266 = vpack.c.bf16 %v6236, %v6235
        %v6267 = vpack.c.bf16 %v6238, %v6237
        %v6268 = vpack.c.bf16 %v6240, %v6239
        %v6269 = vpack.c.bf16 %v6242, %v6241
        %v6270 = vpack.c.bf16 %v6244, %v6243
        %v6271 = vpack.c.bf16 %v6246, %v6245
        %v6272 = vpack.c.bf16 %v6248, %v6247
        %v6273 = vpack.c.bf16 %v6250, %v6249
        %v6274 = vpack.c.bf16 %v6252, %v6251
        %v6275 = vpack.c.bf16 %v6254, %v6253
        %v6276 = vpack.c.bf16 %v6256, %v6255
        %v6277 = vpack.c.bf16 %v6258, %v6257
        %v6278 = vpack.c.bf16 %v6260, %v6259
        %v6279 = vpack.c.bf16 %v6262, %v6261
        %v6280 = vpack.c.bf16 %v6264, %v6263
        %v6281 = vpack.c.bf16 %v6265, %v6265
        %v6298 = vunpack.c.l.b16 %v2848
        %v6299 = vunpack.c.l.b16 %v2849
        %v6300 = vunpack.c.l.b16 %v2850
        %v6301 = vunpack.c.l.b16 %v2851
        %v6302 = vunpack.c.l.b16 %v2852
        %v6303 = vunpack.c.l.b16 %v2853
        %v6304 = vunpack.c.l.b16 %v2854
        %v6305 = vunpack.c.l.b16 %v2855
        %v6306 = vunpack.c.l.b16 %v2856
        %v6307 = vunpack.c.l.b16 %v2857
        %v6308 = vunpack.c.l.b16 %v2858
        %v6309 = vunpack.c.l.b16 %v2859
        %v6310 = vunpack.c.l.b16 %v2860
        %v6311 = vunpack.c.l.b16 %v2861
        %v6312 = vunpack.c.l.b16 %v2862
        %v6313 = vunpack.c.l.b16 %v2863
        %v6314 = vpack.c.b16 %v6299, %v6298
        %v6315 = vpack.c.b16 %v6301, %v6300
        %v6316 = vpack.c.b16 %v6303, %v6302
        %v6317 = vpack.c.b16 %v6305, %v6304
        %v6318 = vpack.c.b16 %v6307, %v6306
        %v6319 = vpack.c.b16 %v6309, %v6308
        %v6320 = vpack.c.b16 %v6311, %v6310
        %v6321 = vpack.c.b16 %v6313, %v6312
        %6330 = vmatprep.subr.bf16.mxu0 0
        %6331 = vmatpush1.bf16.msra.mxu0 %v6321
        %6332 = vmatprep.subr.bf16.mxu0 0
        %6333 = vmatpush1.bf16.msra.mxu0 %v6320
        %6334 = vmatprep.subr.bf16.mxu0 0
        %6335 = vmatpush1.bf16.msra.mxu0 %v6319
        %6336 = vmatprep.subr.bf16.mxu0 0
        %6337 = vmatpush1.bf16.msra.mxu0 %v6318
        %6338 = vmatprep.subr.bf16.mxu0 0
        %6339 = vmatpush1.bf16.msra.mxu0 %v6317
        %6340 = vmatprep.subr.bf16.mxu0 0
        %6341 = vmatpush1.bf16.msra.mxu0 %v6316
        %6342 = vmatprep.subr.bf16.mxu0 0
        %6343 = vmatpush1.bf16.msra.mxu0 %v6315
        %6344 = vmatprep.subr.bf16.mxu0 0
        %6345 = vmatpush1.bf16.msra.mxu0 %v6314
        %6346 = vmatprep.subr.bf16.mxu0 0
        %6347 = vmatpush2.bf16.msra.mxu0 0
        %6348 = vmatprep.subr.bf16.mxu0 0
        %6349 = vmatpush2.bf16.msra.mxu0 0
        %6350 = vmatprep.subr.bf16.mxu0 0
        %6351 = vmatpush2.bf16.msra.mxu0 0
        %6352 = vmatprep.subr.bf16.mxu0 0
        %6353 = vmatpush2.bf16.msra.mxu0 0
        %6354 = vmatprep.subr.bf16.mxu0 0
        %6355 = vmatpush2.bf16.msra.mxu0 0
        %6356 = vmatprep.subr.bf16.mxu0 0
        %6357 = vmatpush2.bf16.msra.mxu0 0
        %6358 = vmatprep.subr.bf16.mxu0 0
        %6359 = vmatpush2.bf16.msra.mxu0 0
        %6360 = vmatprep.subr.bf16.mxu0 0
        %6361 = vmatpush2.bf16.msra.mxu0 0
        %6362 = vmatprep.mubr.bf16.mxu0 0
        %6363 = vmatmul.mubr.bf16.gmra.mxu0 %v6266
        %v6364 = vpop.f32.mrf.mxu0
        %v6365 = vadd.f32 0.0, %v6364
        %v6366 = vpop.f32.mrf.mxu0
        %v6367 = vpop.f32.mrf.mxu0
        %v6368 = vadd.f32 0.0, %v6367
        %v6369 = vpop.f32.mrf.mxu0
        %6370 = vmatprep.mubr.bf16.mxu0 0
        %6371 = vmatmul.mubr.bf16.gmra.mxu0 %v6267
        %v6372 = vpop.f32.mrf.mxu0
        %v6373 = vadd.f32 0.0, %v6372
        %v6374 = vpop.f32.mrf.mxu0
        %v6375 = vpop.f32.mrf.mxu0
        %v6376 = vadd.f32 0.0, %v6375
        %v6377 = vpop.f32.mrf.mxu0
        %6378 = vmatprep.mubr.bf16.mxu0 0
        %6379 = vmatmul.mubr.bf16.gmra.mxu0 %v6268
        %v6380 = vpop.f32.mrf.mxu0
        %v6381 = vadd.f32 0.0, %v6380
        %v6382 = vpop.f32.mrf.mxu0
        %v6383 = vpop.f32.mrf.mxu0
        %v6384 = vadd.f32 0.0, %v6383
        %v6385 = vpop.f32.mrf.mxu0
        %6386 = vmatprep.mubr.bf16.mxu0 0
        %6387 = vmatmul.mubr.bf16.gmra.mxu0 %v6269
        %v6388 = vpop.f32.mrf.mxu0
        %v6389 = vadd.f32 0.0, %v6388
        %v6390 = vpop.f32.mrf.mxu0
        %v6391 = vpop.f32.mrf.mxu0
        %v6392 = vadd.f32 0.0, %v6391
        %v6393 = vpop.f32.mrf.mxu0
        %6394 = vmatprep.mubr.bf16.mxu0 0
        %6395 = vmatmul.mubr.bf16.gmra.mxu0 %v6270
        %v6396 = vpop.f32.mrf.mxu0
        %v6397 = vadd.f32 0.0, %v6396
        %v6398 = vpop.f32.mrf.mxu0
        %v6399 = vpop.f32.mrf.mxu0
        %v6400 = vadd.f32 0.0, %v6399
        %v6401 = vpop.f32.mrf.mxu0
        %6402 = vmatprep.mubr.bf16.mxu0 0
        %6403 = vmatmul.mubr.bf16.gmra.mxu0 %v6271
        %v6404 = vpop.f32.mrf.mxu0
        %v6405 = vadd.f32 0.0, %v6404
        %v6406 = vpop.f32.mrf.mxu0
        %v6407 = vpop.f32.mrf.mxu0
        %v6408 = vadd.f32 0.0, %v6407
        %v6409 = vpop.f32.mrf.mxu0
        %6410 = vmatprep.mubr.bf16.mxu0 0
        %6411 = vmatmul.mubr.bf16.gmra.mxu0 %v6272
        %v6412 = vpop.f32.mrf.mxu0
        %v6413 = vadd.f32 0.0, %v6412
        %v6414 = vpop.f32.mrf.mxu0
        %v6415 = vpop.f32.mrf.mxu0
        %v6416 = vadd.f32 0.0, %v6415
        %v6417 = vpop.f32.mrf.mxu0
        %6418 = vmatprep.mubr.bf16.mxu0 0
        %6419 = vmatmul.mubr.bf16.gmra.mxu0 %v6273
        %v6420 = vpop.f32.mrf.mxu0
        %v6421 = vadd.f32 0.0, %v6420
        %v6422 = vpop.f32.mrf.mxu0
        %v6423 = vpop.f32.mrf.mxu0
        %v6424 = vadd.f32 0.0, %v6423
        %v6425 = vpop.f32.mrf.mxu0
        %6426 = vmatprep.mubr.bf16.mxu0 0
        %6427 = vmatmul.mubr.bf16.gmra.mxu0 %v6274
        %v6428 = vpop.f32.mrf.mxu0
        %v6429 = vadd.f32 0.0, %v6428
        %v6430 = vpop.f32.mrf.mxu0
        %v6431 = vpop.f32.mrf.mxu0
        %v6432 = vadd.f32 0.0, %v6431
        %v6433 = vpop.f32.mrf.mxu0
        %6434 = vmatprep.mubr.bf16.mxu0 0
        %6435 = vmatmul.mubr.bf16.gmra.mxu0 %v6275
        %v6436 = vpop.f32.mrf.mxu0
        %v6437 = vadd.f32 0.0, %v6436
        %v6438 = vpop.f32.mrf.mxu0
        %v6439 = vpop.f32.mrf.mxu0
        %v6440 = vadd.f32 0.0, %v6439
        %v6441 = vpop.f32.mrf.mxu0
        %6442 = vmatprep.mubr.bf16.mxu0 0
        %6443 = vmatmul.mubr.bf16.gmra.mxu0 %v6276
        %v6444 = vpop.f32.mrf.mxu0
        %v6445 = vadd.f32 0.0, %v6444
        %v6446 = vpop.f32.mrf.mxu0
        %v6447 = vpop.f32.mrf.mxu0
        %v6448 = vadd.f32 0.0, %v6447
        %v6449 = vpop.f32.mrf.mxu0
        %6450 = vmatprep.mubr.bf16.mxu0 0
        %6451 = vmatmul.mubr.bf16.gmra.mxu0 %v6277
        %v6452 = vpop.f32.mrf.mxu0
        %v6453 = vadd.f32 0.0, %v6452
        %v6454 = vpop.f32.mrf.mxu0
        %v6455 = vpop.f32.mrf.mxu0
        %v6456 = vadd.f32 0.0, %v6455
        %v6457 = vpop.f32.mrf.mxu0
        %6458 = vmatprep.mubr.bf16.mxu0 0
        %6459 = vmatmul.mubr.bf16.gmra.mxu0 %v6278
        %v6460 = vpop.f32.mrf.mxu0
        %v6461 = vadd.f32 0.0, %v6460
        %v6462 = vpop.f32.mrf.mxu0
        %v6463 = vpop.f32.mrf.mxu0
        %v6464 = vadd.f32 0.0, %v6463
        %v6465 = vpop.f32.mrf.mxu0
        %6466 = vmatprep.mubr.bf16.mxu0 0
        %6467 = vmatmul.mubr.bf16.gmra.mxu0 %v6279
        %v6468 = vpop.f32.mrf.mxu0
        %v6469 = vadd.f32 0.0, %v6468
        %v6470 = vpop.f32.mrf.mxu0
        %v6471 = vpop.f32.mrf.mxu0
        %v6472 = vadd.f32 0.0, %v6471
        %v6473 = vpop.f32.mrf.mxu0
        %6474 = vmatprep.mubr.bf16.mxu0 0
        %6475 = vmatmul.mubr.bf16.gmra.mxu0 %v6280
        %v6476 = vpop.f32.mrf.mxu0
        %v6477 = vadd.f32 0.0, %v6476
        %v6478 = vpop.f32.mrf.mxu0
        %v6479 = vpop.f32.mrf.mxu0
        %v6480 = vadd.f32 0.0, %v6479
        %v6481 = vpop.f32.mrf.mxu0
        %6482 = vmatprep.mubr.bf16.mxu0 0
        %6483 = vmatmul.mubr.bf16.gmra.mxu0 %v6281
        %v6484 = vpop.f32.mrf.mxu0
        %v6485 = vadd.f32 0.0, %v6484
        %v6486 = vpop.f32.mrf.mxu0
        %v6487 = vpop.f32.mrf.mxu0
        %v6488 = vadd.f32 0.0, %v6487
        %v6489 = vpop.f32.mrf.mxu0
        %6490 = vdwg.mxu0
        %v6491 = vadd.f32 %v5463, %v6365
        %v6492 = vadd.f32 %v5466, %v6368
        %v6493 = vadd.f32 %v5471, %v6373
        %v6494 = vadd.f32 %v5474, %v6376
        %v6495 = vadd.f32 %v5479, %v6381
        %v6496 = vadd.f32 %v5482, %v6384
        %v6497 = vadd.f32 %v5487, %v6389
        %v6498 = vadd.f32 %v5490, %v6392
        %v6499 = vadd.f32 %v5495, %v6397
        %v6500 = vadd.f32 %v5498, %v6400
        %v6501 = vadd.f32 %v5503, %v6405
        %v6502 = vadd.f32 %v5506, %v6408
        %v6503 = vadd.f32 %v5511, %v6413
        %v6504 = vadd.f32 %v5514, %v6416
        %v6505 = vadd.f32 %v5519, %v6421
        %v6506 = vadd.f32 %v5522, %v6424
        %v6507 = vadd.f32 %v5527, %v6429
        %v6508 = vadd.f32 %v5530, %v6432
        %v6509 = vadd.f32 %v5535, %v6437
        %v6510 = vadd.f32 %v5538, %v6440
        %v6511 = vadd.f32 %v5543, %v6445
        %v6512 = vadd.f32 %v5546, %v6448
        %v6513 = vadd.f32 %v5551, %v6453
        %v6514 = vadd.f32 %v5554, %v6456
        %v6515 = vadd.f32 %v5559, %v6461
        %v6516 = vadd.f32 %v5562, %v6464
        %v6517 = vadd.f32 %v5567, %v6469
        %v6518 = vadd.f32 %v5570, %v6472
        %v6519 = vadd.f32 %v5575, %v6477
        %v6520 = vadd.f32 %v5578, %v6480
        %v6521 = vadd.f32 %v5583, %v6485
        %v6522 = vadd.f32 %v5586, %v6488
        %v6523 = vpack.c.bf16 %v3219, %v3146
        %v6524 = vpack.c.bf16 %v3220, %v3149
        %v6525 = vpack.c.bf16 %v3221, %v3152
        %v6526 = vpack.c.bf16 %v3222, %v3155
        %v6527 = vpack.c.bf16 %v3223, %v3158
        %v6528 = vpack.c.bf16 %v3224, %v3161
        %v6529 = vpack.c.bf16 %v3225, %v3164
        %v6530 = vpack.c.bf16 %v3226, %v3167
        %v6531 = vpack.c.bf16 %v3227, %v3170
        %v6532 = vpack.c.bf16 %v3228, %v3173
        %v6533 = vpack.c.bf16 %v3229, %v3176
        %v6534 = vpack.c.bf16 %v3230, %v3179
        %v6535 = vpack.c.bf16 %v3231, %v3182
        %v6536 = vpack.c.bf16 %v3232, %v3185
        %6551 = vrot.lane.b32.xlu0 %v6523, 80
        %v6552 = vpop.permute.xlu0 %6551
        %6553 = vrot.lane.b32.xlu0 %v6524, 80
        %v6554 = vpop.permute.xlu0 %6553
        %6555 = vrot.lane.b32.xlu0 %v6525, 80
        %v6556 = vpop.permute.xlu0 %6555
        %6557 = vrot.lane.b32.xlu0 %v6526, 80
        %v6558 = vpop.permute.xlu0 %6557
        %6559 = vrot.lane.b32.xlu0 %v6527, 80
        %v6560 = vpop.permute.xlu0 %6559
        %6561 = vrot.lane.b32.xlu0 %v6528, 80
        %v6562 = vpop.permute.xlu0 %6561
        %6563 = vrot.lane.b32.xlu0 %v6529, 80
        %v6564 = vpop.permute.xlu0 %6563
        %6565 = vrot.lane.b32.xlu0 %v6530, 80
        %v6566 = vpop.permute.xlu0 %6565
        %6567 = vrot.lane.b32.xlu0 %v6531, 80
        %v6568 = vpop.permute.xlu0 %6567
        %6569 = vrot.lane.b32.xlu0 %v6532, 80
        %v6570 = vpop.permute.xlu0 %6569
        %6571 = vrot.lane.b32.xlu0 %v6533, 80
        %v6572 = vpop.permute.xlu0 %6571
        %6573 = vrot.lane.b32.xlu0 %v6534, 80
        %v6574 = vpop.permute.xlu0 %6573
        %6575 = vrot.lane.b32.xlu0 %v6535, 80
        %v6576 = vpop.permute.xlu0 %6575
        %6577 = vrot.lane.b32.xlu0 %v6536, 80
        %v6578 = vpop.permute.xlu0 %6577
        %6579 = vrot.lane.b32.xlu0 %v2305, 80
        %v6580 = vpop.permute.xlu0 %6579
        %v6583 = vunpack.c.l.b16 %v2864
        %v6584 = vunpack.c.l.b16 %v2865
        %v6585 = vpack.c.b16 %v6584, %v6583
        %v6588 = vsel %vm2045, %v6552, 0
        %v6591 = vsel %vm2045, %v6554, 0
        %v6594 = vsel %vm2045, %v6556, 0
        %v6597 = vsel %vm2045, %v6558, 0
        %v6600 = vsel %vm2045, %v6560, 0
        %v6603 = vsel %vm2045, %v6562, 0
        %v6606 = vsel %vm2045, %v6564, 0
        %v6609 = vsel %vm2045, %v6566, 0
        %v6612 = vsel %vm2045, %v6568, 0
        %v6615 = vsel %vm2045, %v6570, 0
        %v6618 = vsel %vm2045, %v6572, 0
        %v6621 = vsel %vm2045, %v6574, 0
        %v6624 = vsel %vm2045, %v6576, 0
        %v6627 = vsel %vm2045, %v6578, 0
        %v6630 = vsel %vm2045, %v6580, 0
        %6632 = vmatprep.subr.bf16.mxu0 0
        %6633 = vmatpush1.bf16.msra.mxu0 0
        %6634 = vmatprep.subr.bf16.mxu0 0
        %6635 = vmatpush1.bf16.msra.mxu0 0
        %6636 = vmatprep.subr.bf16.mxu0 0
        %6637 = vmatpush1.bf16.msra.mxu0 0
        %6638 = vmatprep.subr.bf16.mxu0 0
        %6639 = vmatpush1.bf16.msra.mxu0 0
        %6640 = vmatprep.subr.bf16.mxu0 0
        %6641 = vmatpush1.bf16.msra.mxu0 0
        %6642 = vmatprep.subr.bf16.mxu0 0
        %6643 = vmatpush1.bf16.msra.mxu0 0
        %6644 = vmatprep.subr.bf16.mxu0 0
        %6645 = vmatpush1.bf16.msra.mxu0 0
        %6646 = vmatprep.subr.bf16.mxu0 0
        %6647 = vmatpush1.bf16.msra.mxu0 %v6585
        %6648 = vmatprep.subr.bf16.mxu0 0
        %6649 = vmatpush2.bf16.msra.mxu0 0
        %6650 = vmatprep.subr.bf16.mxu0 0
        %6651 = vmatpush2.bf16.msra.mxu0 0
        %6652 = vmatprep.subr.bf16.mxu0 0
        %6653 = vmatpush2.bf16.msra.mxu0 0
        %6654 = vmatprep.subr.bf16.mxu0 0
        %6655 = vmatpush2.bf16.msra.mxu0 0
        %6656 = vmatprep.subr.bf16.mxu0 0
        %6657 = vmatpush2.bf16.msra.mxu0 0
        %6658 = vmatprep.subr.bf16.mxu0 0
        %6659 = vmatpush2.bf16.msra.mxu0 0
        %6660 = vmatprep.subr.bf16.mxu0 0
        %6661 = vmatpush2.bf16.msra.mxu0 0
        %6662 = vmatprep.subr.bf16.mxu0 0
        %6663 = vmatpush2.bf16.msra.mxu0 0
        %6664 = vmatprep.mubr.bf16.mxu0 0
        %6665 = vmatmul.mubr.bf16.gmra.mxu0 %v6588
        %v6666 = vpop.f32.mrf.mxu0
        %v6667 = vadd.f32 0.0, %v6666
        %v6668 = vpop.f32.mrf.mxu0
        %v6669 = vpop.f32.mrf.mxu0
        %v6670 = vadd.f32 0.0, %v6669
        %v6671 = vpop.f32.mrf.mxu0
        %6672 = vmatprep.mubr.bf16.mxu0 0
        %6673 = vmatmul.mubr.bf16.gmra.mxu0 %v6591
        %v6674 = vpop.f32.mrf.mxu0
        %v6675 = vadd.f32 0.0, %v6674
        %v6676 = vpop.f32.mrf.mxu0
        %v6677 = vpop.f32.mrf.mxu0
        %v6678 = vadd.f32 0.0, %v6677
        %v6679 = vpop.f32.mrf.mxu0
        %6680 = vmatprep.mubr.bf16.mxu0 0
        %6681 = vmatmul.mubr.bf16.gmra.mxu0 %v6594
        %v6682 = vpop.f32.mrf.mxu0
        %v6683 = vadd.f32 0.0, %v6682
        %v6684 = vpop.f32.mrf.mxu0
        %v6685 = vpop.f32.mrf.mxu0
        %v6686 = vadd.f32 0.0, %v6685
        %v6687 = vpop.f32.mrf.mxu0
        %6688 = vmatprep.mubr.bf16.mxu0 0
        %6689 = vmatmul.mubr.bf16.gmra.mxu0 %v6597
        %v6690 = vpop.f32.mrf.mxu0
        %v6691 = vadd.f32 0.0, %v6690
        %v6692 = vpop.f32.mrf.mxu0
        %v6693 = vpop.f32.mrf.mxu0
        %v6694 = vadd.f32 0.0, %v6693
        %v6695 = vpop.f32.mrf.mxu0
        %6696 = vmatprep.mubr.bf16.mxu0 0
        %6697 = vmatmul.mubr.bf16.gmra.mxu0 %v6600
        %v6698 = vpop.f32.mrf.mxu0
        %v6699 = vadd.f32 0.0, %v6698
        %v6700 = vpop.f32.mrf.mxu0
        %v6701 = vpop.f32.mrf.mxu0
        %v6702 = vadd.f32 0.0, %v6701
        %v6703 = vpop.f32.mrf.mxu0
        %6704 = vmatprep.mubr.bf16.mxu0 0
        %6705 = vmatmul.mubr.bf16.gmra.mxu0 %v6603
        %v6706 = vpop.f32.mrf.mxu0
        %v6707 = vadd.f32 0.0, %v6706
        %v6708 = vpop.f32.mrf.mxu0
        %v6709 = vpop.f32.mrf.mxu0
        %v6710 = vadd.f32 0.0, %v6709
        %v6711 = vpop.f32.mrf.mxu0
        %6712 = vmatprep.mubr.bf16.mxu0 0
        %6713 = vmatmul.mubr.bf16.gmra.mxu0 %v6606
        %v6714 = vpop.f32.mrf.mxu0
        %v6715 = vadd.f32 0.0, %v6714
        %v6716 = vpop.f32.mrf.mxu0
        %v6717 = vpop.f32.mrf.mxu0
        %v6718 = vadd.f32 0.0, %v6717
        %v6719 = vpop.f32.mrf.mxu0
        %6720 = vmatprep.mubr.bf16.mxu0 0
        %6721 = vmatmul.mubr.bf16.gmra.mxu0 %v6609
        %v6722 = vpop.f32.mrf.mxu0
        %v6723 = vadd.f32 0.0, %v6722
        %v6724 = vpop.f32.mrf.mxu0
        %v6725 = vpop.f32.mrf.mxu0
        %v6726 = vadd.f32 0.0, %v6725
        %v6727 = vpop.f32.mrf.mxu0
        %6728 = vmatprep.mubr.bf16.mxu0 0
        %6729 = vmatmul.mubr.bf16.gmra.mxu0 %v6612
        %v6730 = vpop.f32.mrf.mxu0
        %v6731 = vadd.f32 0.0, %v6730
        %v6732 = vpop.f32.mrf.mxu0
        %v6733 = vpop.f32.mrf.mxu0
        %v6734 = vadd.f32 0.0, %v6733
        %v6735 = vpop.f32.mrf.mxu0
        %6736 = vmatprep.mubr.bf16.mxu0 0
        %6737 = vmatmul.mubr.bf16.gmra.mxu0 %v6615
        %v6738 = vpop.f32.mrf.mxu0
        %v6739 = vadd.f32 0.0, %v6738
        %v6740 = vpop.f32.mrf.mxu0
        %v6741 = vpop.f32.mrf.mxu0
        %v6742 = vadd.f32 0.0, %v6741
        %v6743 = vpop.f32.mrf.mxu0
        %6744 = vmatprep.mubr.bf16.mxu0 0
        %6745 = vmatmul.mubr.bf16.gmra.mxu0 %v6618
        %v6746 = vpop.f32.mrf.mxu0
        %v6747 = vadd.f32 0.0, %v6746
        %v6748 = vpop.f32.mrf.mxu0
        %v6749 = vpop.f32.mrf.mxu0
        %v6750 = vadd.f32 0.0, %v6749
        %v6751 = vpop.f32.mrf.mxu0
        %6752 = vmatprep.mubr.bf16.mxu0 0
        %6753 = vmatmul.mubr.bf16.gmra.mxu0 %v6621
        %v6754 = vpop.f32.mrf.mxu0
        %v6755 = vadd.f32 0.0, %v6754
        %v6756 = vpop.f32.mrf.mxu0
        %v6757 = vpop.f32.mrf.mxu0
        %v6758 = vadd.f32 0.0, %v6757
        %v6759 = vpop.f32.mrf.mxu0
        %6760 = vmatprep.mubr.bf16.mxu0 0
        %6761 = vmatmul.mubr.bf16.gmra.mxu0 %v6624
        %v6762 = vpop.f32.mrf.mxu0
        %v6763 = vadd.f32 0.0, %v6762
        %v6764 = vpop.f32.mrf.mxu0
        %v6765 = vpop.f32.mrf.mxu0
        %v6766 = vadd.f32 0.0, %v6765
        %v6767 = vpop.f32.mrf.mxu0
        %6768 = vmatprep.mubr.bf16.mxu0 0
        %6769 = vmatmul.mubr.bf16.gmra.mxu0 %v6627
        %v6770 = vpop.f32.mrf.mxu0
        %v6771 = vadd.f32 0.0, %v6770
        %v6772 = vpop.f32.mrf.mxu0
        %v6773 = vpop.f32.mrf.mxu0
        %v6774 = vadd.f32 0.0, %v6773
        %v6775 = vpop.f32.mrf.mxu0
        %6776 = vmatprep.mubr.bf16.mxu0 0
        %6777 = vmatmul.mubr.bf16.gmra.mxu0 %v6630
        %v6778 = vpop.f32.mrf.mxu0
        %v6779 = vadd.f32 0.0, %v6778
        %v6780 = vpop.f32.mrf.mxu0
        %v6781 = vpop.f32.mrf.mxu0
        %v6782 = vadd.f32 0.0, %v6781
        %v6783 = vpop.f32.mrf.mxu0
        %6784 = vmatprep.mubr.bf16.mxu0 0
        %6785 = vmatmul.mubr.bf16.gmra.mxu0 %v6630
        %v6786 = vpop.f32.mrf.mxu0
        %v6787 = vadd.f32 0.0, %v6786
        %v6788 = vpop.f32.mrf.mxu0
        %v6789 = vpop.f32.mrf.mxu0
        %v6790 = vadd.f32 0.0, %v6789
        %v6791 = vpop.f32.mrf.mxu0
        %6792 = vdwg.mxu0
        %v6793 = vadd.f32 %v6491, %v6667
        %v6794 = vadd.f32 %v6492, %v6670
        %v6795 = vadd.f32 %v6493, %v6675
        %v6796 = vadd.f32 %v6494, %v6678
        %v6797 = vadd.f32 %v6495, %v6683
        %v6798 = vadd.f32 %v6496, %v6686
        %v6799 = vadd.f32 %v6497, %v6691
        %v6800 = vadd.f32 %v6498, %v6694
        %v6801 = vadd.f32 %v6499, %v6699
        %v6802 = vadd.f32 %v6500, %v6702
        %v6803 = vadd.f32 %v6501, %v6707
        %v6804 = vadd.f32 %v6502, %v6710
        %v6805 = vadd.f32 %v6503, %v6715
        %v6806 = vadd.f32 %v6504, %v6718
        %v6807 = vadd.f32 %v6505, %v6723
        %v6808 = vadd.f32 %v6506, %v6726
        %v6809 = vadd.f32 %v6507, %v6731
        %v6810 = vadd.f32 %v6508, %v6734
        %v6811 = vadd.f32 %v6509, %v6739
        %v6812 = vadd.f32 %v6510, %v6742
        %v6813 = vadd.f32 %v6511, %v6747
        %v6814 = vadd.f32 %v6512, %v6750
        %v6815 = vadd.f32 %v6513, %v6755
        %v6816 = vadd.f32 %v6514, %v6758
        %v6817 = vadd.f32 %v6515, %v6763
        %v6818 = vadd.f32 %v6516, %v6766
        %v6819 = vadd.f32 %v6517, %v6771
        %v6820 = vadd.f32 %v6518, %v6774
        %v6821 = vadd.f32 %v6519, %v6779
        %v6822 = vadd.f32 %v6520, %v6782
        %v6823 = vadd.f32 %v6521, %v6787
        %v6824 = vadd.f32 %v6522, %v6790
        %v6826 = vlaneseq
        %v6827 = vshrl.u32 %v6826, 7
        %v6828 = vsub.s32 0, %v6827
        %v6829 = vrot.slane %v2866, %v6828
        %v6831 = vadd.f32 %v6793, %v6829
        %v6832 = vadd.f32 %v6794, %v6829
        %v6833 = vadd.f32 %v6795, %v6829
        %v6834 = vadd.f32 %v6796, %v6829
        %v6835 = vadd.f32 %v6797, %v6829
        %v6836 = vadd.f32 %v6798, %v6829
        %v6837 = vadd.f32 %v6799, %v6829
        %v6838 = vadd.f32 %v6800, %v6829
        %v6839 = vadd.f32 %v6801, %v6829
        %v6840 = vadd.f32 %v6802, %v6829
        %v6841 = vadd.f32 %v6803, %v6829
        %v6842 = vadd.f32 %v6804, %v6829
        %v6843 = vadd.f32 %v6805, %v6829
        %v6844 = vadd.f32 %v6806, %v6829
        %v6845 = vadd.f32 %v6807, %v6829
        %v6846 = vadd.f32 %v6808, %v6829
        %v6847 = vadd.f32 %v6809, %v6829
        %v6848 = vadd.f32 %v6810, %v6829
        %v6849 = vadd.f32 %v6811, %v6829
        %v6850 = vadd.f32 %v6812, %v6829
        %v6851 = vadd.f32 %v6813, %v6829
        %v6852 = vadd.f32 %v6814, %v6829
        %v6853 = vadd.f32 %v6815, %v6829
        %v6854 = vadd.f32 %v6816, %v6829
        %v6855 = vadd.f32 %v6817, %v6829
        %v6856 = vadd.f32 %v6818, %v6829
        %v6857 = vadd.f32 %v6819, %v6829
        %v6858 = vadd.f32 %v6820, %v6829
        %v6859 = vadd.f32 %v6821, %v6829
        %v6860 = vadd.f32 %v6822, %v6829
        %v6861 = vadd.f32 %v6823, %v6829
        %v6862 = vadd.f32 %v6824, %v6829
        %v6863 = vmax.f32 %v657, %v655
        %v6864 = vmax.f32 %v658, %v656
        %v6865 = vmax.f32 %v659, %v657
        %v6866 = vmax.f32 %v660, %v658
        %v6867 = vmax.f32 %v661, %v659
        %v6868 = vmax.f32 %v662, %v660
        %v6869 = vmax.f32 %v663, %v661
        %v6870 = vmax.f32 %v664, %v662
        %v6871 = vmax.f32 %v665, %v663
        %v6872 = vmax.f32 %v666, %v664
        %v6873 = vmax.f32 %v667, %v665
        %v6874 = vmax.f32 %v668, %v666
        %v6875 = vmax.f32 %v669, %v667
        %v6876 = vmax.f32 %v670, %v668
        %v6877 = vmax.f32 %v671, %v669
        %v6878 = vmax.f32 %v672, %v670
        %v6879 = vmax.f32 %v673, %v671
        %v6880 = vmax.f32 %v674, %v672
        %v6881 = vmax.f32 %v675, %v673
        %v6882 = vmax.f32 %v676, %v674
        %v6883 = vmax.f32 %v677, %v675
        %v6884 = vmax.f32 %v678, %v676
        %v6885 = vmax.f32 %v679, %v677
        %v6886 = vmax.f32 %v680, %v678
        %v6887 = vmax.f32 %v681, %v679
        %v6888 = vmax.f32 %v682, %v680
        %v6889 = vmax.f32 %v683, %v681
        %v6890 = vmax.f32 %v684, %v682
        %v6891 = vmax.f32 %v685, %v683
        %v6892 = vmax.f32 %v686, %v684
        %v6893 = vmax.f32 %v6863, %v655
        %v6894 = vmax.f32 %v6864, %v656
        %v6895 = vmax.f32 %v6865, %v655
        %v6896 = vmax.f32 %v6866, %v656
        %v6897 = vmax.f32 %v6867, %v657
        %v6898 = vmax.f32 %v6868, %v658
        %v6899 = vmax.f32 %v6869, %v659
        %v6900 = vmax.f32 %v6870, %v660
        %v6901 = vmax.f32 %v6871, %v661
        %v6902 = vmax.f32 %v6872, %v662
        %v6903 = vmax.f32 %v6873, %v663
        %v6904 = vmax.f32 %v6874, %v664
        %v6905 = vmax.f32 %v6875, %v665
        %v6906 = vmax.f32 %v6876, %v666
        %v6907 = vmax.f32 %v6877, %v667
        %v6908 = vmax.f32 %v6878, %v668
        %v6909 = vmax.f32 %v6879, %v669
        %v6910 = vmax.f32 %v6880, %v670
        %v6911 = vmax.f32 %v6881, %v671
        %v6912 = vmax.f32 %v6882, %v672
        %v6913 = vmax.f32 %v6883, %v673
        %v6914 = vmax.f32 %v6884, %v674
        %v6915 = vmax.f32 %v6885, %v675
        %v6916 = vmax.f32 %v6886, %v676
        %v6917 = vmax.f32 %v6887, %v677
        %v6918 = vmax.f32 %v6888, %v678
        %v6919 = vmax.f32 %v6889, %v679
        %v6920 = vmax.f32 %v6890, %v680
        %v6921 = vmax.f32 %v6891, %v681
        %v6922 = vmax.f32 %v6892, %v682
        %v6955 = vrot.slane %v6893, 1
        %v6956 = vrot.slane %v6894, 1
        %v6957 = vsel %vm1136, %v6955, %v6956
        %v6958 = vrot.slane %v6895, 1
        %v6959 = vrot.slane %v6896, 1
        %v6960 = vsel %vm1136, %v6958, %v6959
        %v6961 = vrot.slane %v6897, 1
        %v6962 = vrot.slane %v6898, 1
        %v6963 = vsel %vm1136, %v6961, %v6962
        %v6964 = vrot.slane %v6899, 1
        %v6965 = vrot.slane %v6900, 1
        %v6966 = vsel %vm1136, %v6964, %v6965
        %v6967 = vrot.slane %v6901, 1
        %v6968 = vrot.slane %v6902, 1
        %v6969 = vsel %vm1136, %v6967, %v6968
        %v6970 = vrot.slane %v6903, 1
        %v6971 = vrot.slane %v6904, 1
        %v6972 = vsel %vm1136, %v6970, %v6971
        %v6973 = vrot.slane %v6905, 1
        %v6974 = vrot.slane %v6906, 1
        %v6975 = vsel %vm1136, %v6973, %v6974
        %v6976 = vrot.slane %v6907, 1
        %v6977 = vrot.slane %v6908, 1
        %v6978 = vsel %vm1136, %v6976, %v6977
        %v6979 = vrot.slane %v6909, 1
        %v6980 = vrot.slane %v6910, 1
        %v6981 = vsel %vm1136, %v6979, %v6980
        %v6982 = vrot.slane %v6911, 1
        %v6983 = vrot.slane %v6912, 1
        %v6984 = vsel %vm1136, %v6982, %v6983
        %v6985 = vrot.slane %v6913, 1
        %v6986 = vrot.slane %v6914, 1
        %v6987 = vsel %vm1136, %v6985, %v6986
        %v6988 = vrot.slane %v6915, 1
        %v6989 = vrot.slane %v6916, 1
        %v6990 = vsel %vm1136, %v6988, %v6989
        %v6991 = vrot.slane %v6917, 1
        %v6992 = vrot.slane %v6918, 1
        %v6993 = vsel %vm1136, %v6991, %v6992
        %v6994 = vrot.slane %v6919, 1
        %v6995 = vrot.slane %v6920, 1
        %v6996 = vsel %vm1136, %v6994, %v6995
        %v6997 = vrot.slane %v6921, 1
        %v6998 = vrot.slane %v6922, 1
        %v6999 = vsel %vm1136, %v6997, %v6998
        %v7000 = vrot.slane %v6891, 1
        %v7001 = vrot.slane %v6892, 1
        %v7002 = vsel %vm1136, %v7000, %v7001
        %v7035 = vsel %vm1136, %v6956, %v6894
        %v7036 = vsel %vm1136, %v6959, %v6896
        %v7037 = vsel %vm1136, %v6962, %v6898
        %v7038 = vsel %vm1136, %v6965, %v6900
        %v7039 = vsel %vm1136, %v6968, %v6902
        %v7040 = vsel %vm1136, %v6971, %v6904
        %v7041 = vsel %vm1136, %v6974, %v6906
        %v7042 = vsel %vm1136, %v6977, %v6908
        %v7043 = vsel %vm1136, %v6980, %v6910
        %v7044 = vsel %vm1136, %v6983, %v6912
        %v7045 = vsel %vm1136, %v6986, %v6914
        %v7046 = vsel %vm1136, %v6989, %v6916
        %v7047 = vsel %vm1136, %v6992, %v6918
        %v7048 = vsel %vm1136, %v6995, %v6920
        %v7049 = vsel %vm1136, %v6998, %v6922
        %v7050 = vsel %vm1136, %v7001, %v6892
        %v7051 = vrot.slane %v6893, 7
        %v7052 = vrot.slane %v6894, 7
        %v7053 = vsel %vm976, %v7051, %v7052
        %v7054 = vrot.slane %v6895, 7
        %v7055 = vrot.slane %v6896, 7
        %v7056 = vsel %vm976, %v7054, %v7055
        %v7057 = vrot.slane %v6897, 7
        %v7058 = vrot.slane %v6898, 7
        %v7059 = vsel %vm976, %v7057, %v7058
        %v7060 = vrot.slane %v6899, 7
        %v7061 = vrot.slane %v6900, 7
        %v7062 = vsel %vm976, %v7060, %v7061
        %v7063 = vrot.slane %v6901, 7
        %v7064 = vrot.slane %v6902, 7
        %v7065 = vsel %vm976, %v7063, %v7064
        %v7066 = vrot.slane %v6903, 7
        %v7067 = vrot.slane %v6904, 7
        %v7068 = vsel %vm976, %v7066, %v7067
        %v7069 = vrot.slane %v6905, 7
        %v7070 = vrot.slane %v6906, 7
        %v7071 = vsel %vm976, %v7069, %v7070
        %v7072 = vrot.slane %v6907, 7
        %v7073 = vrot.slane %v6908, 7
        %v7074 = vsel %vm976, %v7072, %v7073
        %v7075 = vrot.slane %v6909, 7
        %v7076 = vrot.slane %v6910, 7
        %v7077 = vsel %vm976, %v7075, %v7076
        %v7078 = vrot.slane %v6911, 7
        %v7079 = vrot.slane %v6912, 7
        %v7080 = vsel %vm976, %v7078, %v7079
        %v7081 = vrot.slane %v6913, 7
        %v7082 = vrot.slane %v6914, 7
        %v7083 = vsel %vm976, %v7081, %v7082
        %v7084 = vrot.slane %v6915, 7
        %v7085 = vrot.slane %v6916, 7
        %v7086 = vsel %vm976, %v7084, %v7085
        %v7087 = vrot.slane %v6917, 7
        %v7088 = vrot.slane %v6918, 7
        %v7089 = vsel %vm976, %v7087, %v7088
        %v7090 = vrot.slane %v6919, 7
        %v7091 = vrot.slane %v6920, 7
        %v7092 = vsel %vm976, %v7090, %v7091
        %v7093 = vrot.slane %v6921, 7
        %v7094 = vrot.slane %v6922, 7
        %v7095 = vsel %vm976, %v7093, %v7094
        %v7096 = vrot.slane %v6891, 7
        %v7097 = vrot.slane %v6892, 7
        %v7098 = vsel %vm976, %v7096, %v7097
        %v7131 = vsel %vm976, %v6893, %v7051
        %v7132 = vsel %vm976, %v6895, %v7054
        %v7133 = vsel %vm976, %v6897, %v7057
        %v7134 = vsel %vm976, %v6899, %v7060
        %v7135 = vsel %vm976, %v6901, %v7063
        %v7136 = vsel %vm976, %v6903, %v7066
        %v7137 = vsel %vm976, %v6905, %v7069
        %v7138 = vsel %vm976, %v6907, %v7072
        %v7139 = vsel %vm976, %v6909, %v7075
        %v7140 = vsel %vm976, %v6911, %v7078
        %v7141 = vsel %vm976, %v6913, %v7081
        %v7142 = vsel %vm976, %v6915, %v7084
        %v7143 = vsel %vm976, %v6917, %v7087
        %v7144 = vsel %vm976, %v6919, %v7090
        %v7145 = vsel %vm976, %v6921, %v7093
        %v7146 = vsel %vm976, %v6891, %v7096
        %v7147 = vmax.f32 %v6957, %v6893
        %v7148 = vmax.f32 %v7035, %v6894
        %v7149 = vmax.f32 %v6960, %v6895
        %v7150 = vmax.f32 %v7036, %v6896
        %v7151 = vmax.f32 %v6963, %v6897
        %v7152 = vmax.f32 %v7037, %v6898
        %v7153 = vmax.f32 %v6966, %v6899
        %v7154 = vmax.f32 %v7038, %v6900
        %v7155 = vmax.f32 %v6969, %v6901
        %v7156 = vmax.f32 %v7039, %v6902
        %v7157 = vmax.f32 %v6972, %v6903
        %v7158 = vmax.f32 %v7040, %v6904
        %v7159 = vmax.f32 %v6975, %v6905
        %v7160 = vmax.f32 %v7041, %v6906
        %v7161 = vmax.f32 %v6978, %v6907
        %v7162 = vmax.f32 %v7042, %v6908
        %v7163 = vmax.f32 %v6981, %v6909
        %v7164 = vmax.f32 %v7043, %v6910
        %v7165 = vmax.f32 %v6984, %v6911
        %v7166 = vmax.f32 %v7044, %v6912
        %v7167 = vmax.f32 %v6987, %v6913
        %v7168 = vmax.f32 %v7045, %v6914
        %v7169 = vmax.f32 %v6990, %v6915
        %v7170 = vmax.f32 %v7046, %v6916
        %v7171 = vmax.f32 %v6993, %v6917
        %v7172 = vmax.f32 %v7047, %v6918
        %v7173 = vmax.f32 %v6996, %v6919
        %v7174 = vmax.f32 %v7048, %v6920
        %v7175 = vmax.f32 %v6999, %v6921
        %v7176 = vmax.f32 %v7049, %v6922
        %v7177 = vmax.f32 %v7002, %v6891
        %v7178 = vmax.f32 %v7050, %v6892
        %v7179 = vmax.f32 %v7147, %v7131
        %v7180 = vmax.f32 %v7148, %v7053
        %v7181 = vmax.f32 %v7149, %v7132
        %v7182 = vmax.f32 %v7150, %v7056
        %v7183 = vmax.f32 %v7151, %v7133
        %v7184 = vmax.f32 %v7152, %v7059
        %v7185 = vmax.f32 %v7153, %v7134
        %v7186 = vmax.f32 %v7154, %v7062
        %v7187 = vmax.f32 %v7155, %v7135
        %v7188 = vmax.f32 %v7156, %v7065
        %v7189 = vmax.f32 %v7157, %v7136
        %v7190 = vmax.f32 %v7158, %v7068
        %v7191 = vmax.f32 %v7159, %v7137
        %v7192 = vmax.f32 %v7160, %v7071
        %v7193 = vmax.f32 %v7161, %v7138
        %v7194 = vmax.f32 %v7162, %v7074
        %v7195 = vmax.f32 %v7163, %v7139
        %v7196 = vmax.f32 %v7164, %v7077
        %v7197 = vmax.f32 %v7165, %v7140
        %v7198 = vmax.f32 %v7166, %v7080
        %v7199 = vmax.f32 %v7167, %v7141
        %v7200 = vmax.f32 %v7168, %v7083
        %v7201 = vmax.f32 %v7169, %v7142
        %v7202 = vmax.f32 %v7170, %v7086
        %v7203 = vmax.f32 %v7171, %v7143
        %v7204 = vmax.f32 %v7172, %v7089
        %v7205 = vmax.f32 %v7173, %v7144
        %v7206 = vmax.f32 %v7174, %v7092
        %v7207 = vmax.f32 %v7175, %v7145
        %v7208 = vmax.f32 %v7176, %v7095
        %v7209 = vmax.f32 %v7177, %v7146
        %v7210 = vmax.f32 %v7178, %v7098
        %v7211 = vpack.c.bf16 %v7180, %v7179
        %v7212 = vpack.c.bf16 %v7182, %v7181
        %v7213 = vpack.c.bf16 %v7184, %v7183
        %v7214 = vpack.c.bf16 %v7186, %v7185
        %v7215 = vpack.c.bf16 %v7188, %v7187
        %v7216 = vpack.c.bf16 %v7190, %v7189
        %v7217 = vpack.c.bf16 %v7192, %v7191
        %v7218 = vpack.c.bf16 %v7194, %v7193
        %v7219 = vpack.c.bf16 %v7196, %v7195
        %v7220 = vpack.c.bf16 %v7198, %v7197
        %v7221 = vpack.c.bf16 %v7200, %v7199
        %v7222 = vpack.c.bf16 %v7202, %v7201
        %v7223 = vpack.c.bf16 %v7204, %v7203
        %v7224 = vpack.c.bf16 %v7206, %v7205
        %v7225 = vpack.c.bf16 %v7208, %v7207
        %v7226 = vpack.c.bf16 %v7210, %v7209
        %v7227 = vld [vmem:[%s7] sm:$0xf]
        %v7228 = vld [vmem:[%s8] sm:$0x1]
        %v7230 = vlaneseq
        %v7231 = vshrl.u32 %v7230, 7
        %v7232 = vsub.s32 0, %v7231
        %v7233 = vrot.slane %v7228, %v7232
        %v7236 = vsel %vm711, %v7211, 0
        %v7239 = vsel %vm711, %v7212, 0
        %v7242 = vsel %vm711, %v7213, 0
        %v7245 = vsel %vm711, %v7214, 0
        %v7248 = vsel %vm711, %v7215, 0
        %v7251 = vsel %vm711, %v7216, 0
        %v7254 = vsel %vm711, %v7217, 0
        %v7257 = vsel %vm711, %v7218, 0
        %v7260 = vsel %vm711, %v7219, 0
        %v7263 = vsel %vm711, %v7220, 0
        %v7266 = vsel %vm711, %v7221, 0
        %v7269 = vsel %vm711, %v7222, 0
        %v7272 = vsel %vm711, %v7223, 0
        %v7275 = vsel %vm711, %v7224, 0
        %v7278 = vsel %vm711, %v7225, 0
        %v7281 = vsel %vm711, %v7226, 0
        %v7284 = vsel %vm760, %v7227, 0
        %7286 = vmatprep.subr.bf16.mxu0 0
        %7287 = vmatpush1.bf16.msra.mxu0 0
        %7288 = vmatprep.subr.bf16.mxu0 0
        %7289 = vmatpush1.bf16.msra.mxu0 0
        %7290 = vmatprep.subr.bf16.mxu0 0
        %7291 = vmatpush1.bf16.msra.mxu0 0
        %7292 = vmatprep.subr.bf16.mxu0 0
        %7293 = vmatpush1.bf16.msra.mxu0 0
        %7294 = vmatprep.subr.bf16.mxu0 0
        %7295 = vmatpush1.bf16.msra.mxu0 0
        %7296 = vmatprep.subr.bf16.mxu0 0
        %7297 = vmatpush1.bf16.msra.mxu0 0
        %7298 = vmatprep.subr.bf16.mxu0 0
        %7299 = vmatpush1.bf16.msra.mxu0 0
        %7300 = vmatprep.subr.bf16.mxu0 0
        %7301 = vmatpush1.bf16.msra.mxu0 %v7284
        %7302 = vmatprep.subr.bf16.mxu0 0
        %7303 = vmatpush2.bf16.msra.mxu0 0
        %7304 = vmatprep.subr.bf16.mxu0 0
        %7305 = vmatpush2.bf16.msra.mxu0 0
        %7306 = vmatprep.subr.bf16.mxu0 0
        %7307 = vmatpush2.bf16.msra.mxu0 0
        %7308 = vmatprep.subr.bf16.mxu0 0
        %7309 = vmatpush2.bf16.msra.mxu0 0
        %7310 = vmatprep.subr.bf16.mxu0 0
        %7311 = vmatpush2.bf16.msra.mxu0 0
        %7312 = vmatprep.subr.bf16.mxu0 0
        %7313 = vmatpush2.bf16.msra.mxu0 0
        %7314 = vmatprep.subr.bf16.mxu0 0
        %7315 = vmatpush2.bf16.msra.mxu0 0
        %7316 = vmatprep.subr.bf16.mxu0 0
        %7317 = vmatpush2.bf16.msra.mxu0 0
        %7318 = vmatprep.mubr.bf16.mxu0 0
        %7319 = vmatmul.mubr.bf16.gmra.mxu0 %v7236
        %v7320 = vpop.f32.mrf.mxu0
        %v7321 = vadd.f32 %v7233, %v7320
        %v7322 = vpop.f32.mrf.mxu0
        %v7323 = vpop.f32.mrf.mxu0
        %v7324 = vadd.f32 %v7233, %v7323
        %v7325 = vpop.f32.mrf.mxu0
        %7326 = vmatprep.mubr.bf16.mxu0 0
        %7327 = vmatmul.mubr.bf16.gmra.mxu0 %v7239
        %v7328 = vpop.f32.mrf.mxu0
        %v7329 = vadd.f32 %v7233, %v7328
        %v7330 = vpop.f32.mrf.mxu0
        %v7331 = vpop.f32.mrf.mxu0
        %v7332 = vadd.f32 %v7233, %v7331
        %v7333 = vpop.f32.mrf.mxu0
        %7334 = vmatprep.mubr.bf16.mxu0 0
        %7335 = vmatmul.mubr.bf16.gmra.mxu0 %v7242
        %v7336 = vpop.f32.mrf.mxu0
        %v7337 = vadd.f32 %v7233, %v7336
        %v7338 = vpop.f32.mrf.mxu0
        %v7339 = vpop.f32.mrf.mxu0
        %v7340 = vadd.f32 %v7233, %v7339
        %v7341 = vpop.f32.mrf.mxu0
        %7342 = vmatprep.mubr.bf16.mxu0 0
        %7343 = vmatmul.mubr.bf16.gmra.mxu0 %v7245
        %v7344 = vpop.f32.mrf.mxu0
        %v7345 = vadd.f32 %v7233, %v7344
        %v7346 = vpop.f32.mrf.mxu0
        %v7347 = vpop.f32.mrf.mxu0
        %v7348 = vadd.f32 %v7233, %v7347
        %v7349 = vpop.f32.mrf.mxu0
        %7350 = vmatprep.mubr.bf16.mxu0 0
        %7351 = vmatmul.mubr.bf16.gmra.mxu0 %v7248
        %v7352 = vpop.f32.mrf.mxu0
        %v7353 = vadd.f32 %v7233, %v7352
        %v7354 = vpop.f32.mrf.mxu0
        %v7355 = vpop.f32.mrf.mxu0
        %v7356 = vadd.f32 %v7233, %v7355
        %v7357 = vpop.f32.mrf.mxu0
        %7358 = vmatprep.mubr.bf16.mxu0 0
        %7359 = vmatmul.mubr.bf16.gmra.mxu0 %v7251
        %v7360 = vpop.f32.mrf.mxu0
        %v7361 = vadd.f32 %v7233, %v7360
        %v7362 = vpop.f32.mrf.mxu0
        %v7363 = vpop.f32.mrf.mxu0
        %v7364 = vadd.f32 %v7233, %v7363
        %v7365 = vpop.f32.mrf.mxu0
        %7366 = vmatprep.mubr.bf16.mxu0 0
        %7367 = vmatmul.mubr.bf16.gmra.mxu0 %v7254
        %v7368 = vpop.f32.mrf.mxu0
        %v7369 = vadd.f32 %v7233, %v7368
        %v7370 = vpop.f32.mrf.mxu0
        %v7371 = vpop.f32.mrf.mxu0
        %v7372 = vadd.f32 %v7233, %v7371
        %v7373 = vpop.f32.mrf.mxu0
        %7374 = vmatprep.mubr.bf16.mxu0 0
        %7375 = vmatmul.mubr.bf16.gmra.mxu0 %v7257
        %v7376 = vpop.f32.mrf.mxu0
        %v7377 = vadd.f32 %v7233, %v7376
        %v7378 = vpop.f32.mrf.mxu0
        %v7379 = vpop.f32.mrf.mxu0
        %v7380 = vadd.f32 %v7233, %v7379
        %v7381 = vpop.f32.mrf.mxu0
        %7382 = vmatprep.mubr.bf16.mxu0 0
        %7383 = vmatmul.mubr.bf16.gmra.mxu0 %v7260
        %v7384 = vpop.f32.mrf.mxu0
        %v7385 = vadd.f32 %v7233, %v7384
        %v7386 = vpop.f32.mrf.mxu0
        %v7387 = vpop.f32.mrf.mxu0
        %v7388 = vadd.f32 %v7233, %v7387
        %v7389 = vpop.f32.mrf.mxu0
        %7390 = vmatprep.mubr.bf16.mxu0 0
        %7391 = vmatmul.mubr.bf16.gmra.mxu0 %v7263
        %v7392 = vpop.f32.mrf.mxu0
        %v7393 = vadd.f32 %v7233, %v7392
        %v7394 = vpop.f32.mrf.mxu0
        %v7395 = vpop.f32.mrf.mxu0
        %v7396 = vadd.f32 %v7233, %v7395
        %v7397 = vpop.f32.mrf.mxu0
        %7398 = vmatprep.mubr.bf16.mxu0 0
        %7399 = vmatmul.mubr.bf16.gmra.mxu0 %v7266
        %v7400 = vpop.f32.mrf.mxu0
        %v7401 = vadd.f32 %v7233, %v7400
        %v7402 = vpop.f32.mrf.mxu0
        %v7403 = vpop.f32.mrf.mxu0
        %v7404 = vadd.f32 %v7233, %v7403
        %v7405 = vpop.f32.mrf.mxu0
        %7406 = vmatprep.mubr.bf16.mxu0 0
        %7407 = vmatmul.mubr.bf16.gmra.mxu0 %v7269
        %v7408 = vpop.f32.mrf.mxu0
        %v7409 = vadd.f32 %v7233, %v7408
        %v7410 = vpop.f32.mrf.mxu0
        %v7411 = vpop.f32.mrf.mxu0
        %v7412 = vadd.f32 %v7233, %v7411
        %v7413 = vpop.f32.mrf.mxu0
        %7414 = vmatprep.mubr.bf16.mxu0 0
        %7415 = vmatmul.mubr.bf16.gmra.mxu0 %v7272
        %v7416 = vpop.f32.mrf.mxu0
        %v7417 = vadd.f32 %v7233, %v7416
        %v7418 = vpop.f32.mrf.mxu0
        %v7419 = vpop.f32.mrf.mxu0
        %v7420 = vadd.f32 %v7233, %v7419
        %v7421 = vpop.f32.mrf.mxu0
        %7422 = vmatprep.mubr.bf16.mxu0 0
        %7423 = vmatmul.mubr.bf16.gmra.mxu0 %v7275
        %v7424 = vpop.f32.mrf.mxu0
        %v7425 = vadd.f32 %v7233, %v7424
        %v7426 = vpop.f32.mrf.mxu0
        %v7427 = vpop.f32.mrf.mxu0
        %v7428 = vadd.f32 %v7233, %v7427
        %v7429 = vpop.f32.mrf.mxu0
        %7430 = vmatprep.mubr.bf16.mxu0 0
        %7431 = vmatmul.mubr.bf16.gmra.mxu0 %v7278
        %v7432 = vpop.f32.mrf.mxu0
        %v7433 = vadd.f32 %v7233, %v7432
        %v7434 = vpop.f32.mrf.mxu0
        %v7435 = vpop.f32.mrf.mxu0
        %v7436 = vadd.f32 %v7233, %v7435
        %v7437 = vpop.f32.mrf.mxu0
        %7438 = vmatprep.mubr.bf16.mxu0 0
        %7439 = vmatmul.mubr.bf16.gmra.mxu0 %v7281
        %v7440 = vpop.f32.mrf.mxu0
        %v7441 = vadd.f32 %v7233, %v7440
        %v7442 = vpop.f32.mrf.mxu0
        %v7443 = vpop.f32.mrf.mxu0
        %v7444 = vadd.f32 %v7233, %v7443
        %v7445 = vpop.f32.mrf.mxu0
        %7446 = vdwg.mxu0
        %7479 = vrot.lane.b32.xlu0 %v2784, 32
        %v7480 = vpop.permute.xlu0 %7479
        %7481 = vrot.lane.b32.xlu0 %v2785, 32
        %v7482 = vpop.permute.xlu0 %7481
        %7483 = vrot.lane.b32.xlu0 %v2786, 32
        %v7484 = vpop.permute.xlu0 %7483
        %7485 = vrot.lane.b32.xlu0 %v2787, 32
        %v7486 = vpop.permute.xlu0 %7485
        %7487 = vrot.lane.b32.xlu0 %v2788, 32
        %v7488 = vpop.permute.xlu0 %7487
        %7489 = vrot.lane.b32.xlu0 %v2789, 32
        %v7490 = vpop.permute.xlu0 %7489
        %7491 = vrot.lane.b32.xlu0 %v2790, 32
        %v7492 = vpop.permute.xlu0 %7491
        %7493 = vrot.lane.b32.xlu0 %v2791, 32
        %v7494 = vpop.permute.xlu0 %7493
        %7495 = vrot.lane.b32.xlu0 %v2792, 32
        %v7496 = vpop.permute.xlu0 %7495
        %7497 = vrot.lane.b32.xlu0 %v2793, 32
        %v7498 = vpop.permute.xlu0 %7497
        %7499 = vrot.lane.b32.xlu0 %v2794, 32
        %v7500 = vpop.permute.xlu0 %7499
        %7501 = vrot.lane.b32.xlu0 %v2795, 32
        %v7502 = vpop.permute.xlu0 %7501
        %7503 = vrot.lane.b32.xlu0 %v2796, 32
        %v7504 = vpop.permute.xlu0 %7503
        %7505 = vrot.lane.b32.xlu0 %v2797, 32
        %v7506 = vpop.permute.xlu0 %7505
        %7507 = vrot.lane.b32.xlu0 %v2798, 32
        %v7508 = vpop.permute.xlu0 %7507
        %7509 = vrot.lane.b32.xlu0 %v2799, 32
        %v7510 = vpop.permute.xlu0 %7509
        %7511 = vrot.lane.b32.xlu0 %v2800, 32
        %v7512 = vpop.permute.xlu0 %7511
        %7513 = vrot.lane.b32.xlu0 %v2801, 32
        %v7514 = vpop.permute.xlu0 %7513
        %7515 = vrot.lane.b32.xlu0 %v2802, 32
        %v7516 = vpop.permute.xlu0 %7515
        %7517 = vrot.lane.b32.xlu0 %v2803, 32
        %v7518 = vpop.permute.xlu0 %7517
        %7519 = vrot.lane.b32.xlu0 %v2804, 32
        %v7520 = vpop.permute.xlu0 %7519
        %7521 = vrot.lane.b32.xlu0 %v2805, 32
        %v7522 = vpop.permute.xlu0 %7521
        %7523 = vrot.lane.b32.xlu0 %v2806, 32
        %v7524 = vpop.permute.xlu0 %7523
        %7525 = vrot.lane.b32.xlu0 %v2807, 32
        %v7526 = vpop.permute.xlu0 %7525
        %7527 = vrot.lane.b32.xlu0 %v2808, 32
        %v7528 = vpop.permute.xlu0 %7527
        %7529 = vrot.lane.b32.xlu0 %v2809, 32
        %v7530 = vpop.permute.xlu0 %7529
        %7531 = vrot.lane.b32.xlu0 %v2810, 32
        %v7532 = vpop.permute.xlu0 %7531
        %7533 = vrot.lane.b32.xlu0 %v2811, 32
        %v7534 = vpop.permute.xlu0 %7533
        %7535 = vrot.lane.b32.xlu0 %v2812, 32
        %v7536 = vpop.permute.xlu0 %7535
        %7537 = vrot.lane.b32.xlu0 %v2813, 32
        %v7538 = vpop.permute.xlu0 %7537
        %7539 = vrot.lane.b32.xlu0 %v2814, 32
        %v7540 = vpop.permute.xlu0 %7539
        %7541 = vrot.lane.b32.xlu0 %v2815, 32
        %v7542 = vpop.permute.xlu0 %7541
        %7607 = vrot.lane.b32.xlu0 %v6831, 64
        %v7608 = vpop.permute.xlu0 %7607
        %7609 = vrot.lane.b32.xlu0 %v6832, 64
        %v7610 = vpop.permute.xlu0 %7609
        %7611 = vrot.lane.b32.xlu0 %v6833, 64
        %v7612 = vpop.permute.xlu0 %7611
        %7613 = vrot.lane.b32.xlu0 %v6834, 64
        %v7614 = vpop.permute.xlu0 %7613
        %7615 = vrot.lane.b32.xlu0 %v6835, 64
        %v7616 = vpop.permute.xlu0 %7615
        %7617 = vrot.lane.b32.xlu0 %v6836, 64
        %v7618 = vpop.permute.xlu0 %7617
        %7619 = vrot.lane.b32.xlu0 %v6837, 64
        %v7620 = vpop.permute.xlu0 %7619
        %7621 = vrot.lane.b32.xlu0 %v6838, 64
        %v7622 = vpop.permute.xlu0 %7621
        %7623 = vrot.lane.b32.xlu0 %v6839, 64
        %v7624 = vpop.permute.xlu0 %7623
        %7625 = vrot.lane.b32.xlu0 %v6840, 64
        %v7626 = vpop.permute.xlu0 %7625
        %7627 = vrot.lane.b32.xlu0 %v6841, 64
        %v7628 = vpop.permute.xlu0 %7627
        %7629 = vrot.lane.b32.xlu0 %v6842, 64
        %v7630 = vpop.permute.xlu0 %7629
        %7631 = vrot.lane.b32.xlu0 %v6843, 64
        %v7632 = vpop.permute.xlu0 %7631
        %7633 = vrot.lane.b32.xlu0 %v6844, 64
        %v7634 = vpop.permute.xlu0 %7633
        %7635 = vrot.lane.b32.xlu0 %v6845, 64
        %v7636 = vpop.permute.xlu0 %7635
        %7637 = vrot.lane.b32.xlu0 %v6846, 64
        %v7638 = vpop.permute.xlu0 %7637
        %7639 = vrot.lane.b32.xlu0 %v6847, 64
        %v7640 = vpop.permute.xlu0 %7639
        %7641 = vrot.lane.b32.xlu0 %v6848, 64
        %v7642 = vpop.permute.xlu0 %7641
        %7643 = vrot.lane.b32.xlu0 %v6849, 64
        %v7644 = vpop.permute.xlu0 %7643
        %7645 = vrot.lane.b32.xlu0 %v6850, 64
        %v7646 = vpop.permute.xlu0 %7645
        %7647 = vrot.lane.b32.xlu0 %v6851, 64
        %v7648 = vpop.permute.xlu0 %7647
        %7649 = vrot.lane.b32.xlu0 %v6852, 64
        %v7650 = vpop.permute.xlu0 %7649
        %7651 = vrot.lane.b32.xlu0 %v6853, 64
        %v7652 = vpop.permute.xlu0 %7651
        %7653 = vrot.lane.b32.xlu0 %v6854, 64
        %v7654 = vpop.permute.xlu0 %7653
        %7655 = vrot.lane.b32.xlu0 %v6855, 64
        %v7656 = vpop.permute.xlu0 %7655
        %7657 = vrot.lane.b32.xlu0 %v6856, 64
        %v7658 = vpop.permute.xlu0 %7657
        %7659 = vrot.lane.b32.xlu0 %v6857, 64
        %v7660 = vpop.permute.xlu0 %7659
        %7661 = vrot.lane.b32.xlu0 %v6858, 64
        %v7662 = vpop.permute.xlu0 %7661
        %7663 = vrot.lane.b32.xlu0 %v6859, 64
        %v7664 = vpop.permute.xlu0 %7663
        %7665 = vrot.lane.b32.xlu0 %v6860, 64
        %v7666 = vpop.permute.xlu0 %7665
        %7667 = vrot.lane.b32.xlu0 %v6861, 64
        %v7668 = vpop.permute.xlu0 %7667
        %7669 = vrot.lane.b32.xlu0 %v6862, 64
        %v7670 = vpop.permute.xlu0 %7669
        %7735 = vrot.lane.b32.xlu0 %v7321, 96
        %v7736 = vpop.permute.xlu0 %7735
        %7737 = vrot.lane.b32.xlu0 %v7324, 96
        %v7738 = vpop.permute.xlu0 %7737
        %7739 = vrot.lane.b32.xlu0 %v7329, 96
        %v7740 = vpop.permute.xlu0 %7739
        %7741 = vrot.lane.b32.xlu0 %v7332, 96
        %v7742 = vpop.permute.xlu0 %7741
        %7743 = vrot.lane.b32.xlu0 %v7337, 96
        %v7744 = vpop.permute.xlu0 %7743
        %7745 = vrot.lane.b32.xlu0 %v7340, 96
        %v7746 = vpop.permute.xlu0 %7745
        %7747 = vrot.lane.b32.xlu0 %v7345, 96
        %v7748 = vpop.permute.xlu0 %7747
        %7749 = vrot.lane.b32.xlu0 %v7348, 96
        %v7750 = vpop.permute.xlu0 %7749
        %7751 = vrot.lane.b32.xlu0 %v7353, 96
        %v7752 = vpop.permute.xlu0 %7751
        %7753 = vrot.lane.b32.xlu0 %v7356, 96
        %v7754 = vpop.permute.xlu0 %7753
        %7755 = vrot.lane.b32.xlu0 %v7361, 96
        %v7756 = vpop.permute.xlu0 %7755
        %7757 = vrot.lane.b32.xlu0 %v7364, 96
        %v7758 = vpop.permute.xlu0 %7757
        %7759 = vrot.lane.b32.xlu0 %v7369, 96
        %v7760 = vpop.permute.xlu0 %7759
        %7761 = vrot.lane.b32.xlu0 %v7372, 96
        %v7762 = vpop.permute.xlu0 %7761
        %7763 = vrot.lane.b32.xlu0 %v7377, 96
        %v7764 = vpop.permute.xlu0 %7763
        %7765 = vrot.lane.b32.xlu0 %v7380, 96
        %v7766 = vpop.permute.xlu0 %7765
        %7767 = vrot.lane.b32.xlu0 %v7385, 96
        %v7768 = vpop.permute.xlu0 %7767
        %7769 = vrot.lane.b32.xlu0 %v7388, 96
        %v7770 = vpop.permute.xlu0 %7769
        %7771 = vrot.lane.b32.xlu0 %v7393, 96
        %v7772 = vpop.permute.xlu0 %7771
        %7773 = vrot.lane.b32.xlu0 %v7396, 96
        %v7774 = vpop.permute.xlu0 %7773
        %7775 = vrot.lane.b32.xlu0 %v7401, 96
        %v7776 = vpop.permute.xlu0 %7775
        %7777 = vrot.lane.b32.xlu0 %v7404, 96
        %v7778 = vpop.permute.xlu0 %7777
        %7779 = vrot.lane.b32.xlu0 %v7409, 96
        %v7780 = vpop.permute.xlu0 %7779
        %7781 = vrot.lane.b32.xlu0 %v7412, 96
        %v7782 = vpop.permute.xlu0 %7781
        %7783 = vrot.lane.b32.xlu0 %v7417, 96
        %v7784 = vpop.permute.xlu0 %7783
        %7785 = vrot.lane.b32.xlu0 %v7420, 96
        %v7786 = vpop.permute.xlu0 %7785
        %7787 = vrot.lane.b32.xlu0 %v7425, 96
        %v7788 = vpop.permute.xlu0 %7787
        %7789 = vrot.lane.b32.xlu0 %v7428, 96
        %v7790 = vpop.permute.xlu0 %7789
        %7791 = vrot.lane.b32.xlu0 %v7433, 96
        %v7792 = vpop.permute.xlu0 %7791
        %7793 = vrot.lane.b32.xlu0 %v7436, 96
        %v7794 = vpop.permute.xlu0 %7793
        %7795 = vrot.lane.b32.xlu0 %v7441, 96
        %v7796 = vpop.permute.xlu0 %7795
        %7797 = vrot.lane.b32.xlu0 %v7444, 96
        %v7798 = vpop.permute.xlu0 %7797
        %v7831 = vsel %vm2077, %v799, %v7480
        %v7832 = vsel %vm2077, %v802, %v7482
        %v7833 = vsel %vm2077, %v807, %v7484
        %v7834 = vsel %vm2077, %v810, %v7486
        %v7835 = vsel %vm2077, %v815, %v7488
        %v7836 = vsel %vm2077, %v818, %v7490
        %v7837 = vsel %vm2077, %v823, %v7492
        %v7838 = vsel %vm2077, %v826, %v7494
        %v7839 = vsel %vm2077, %v831, %v7496
        %v7840 = vsel %vm2077, %v834, %v7498
        %v7841 = vsel %vm2077, %v839, %v7500
        %v7842 = vsel %vm2077, %v842, %v7502
        %v7843 = vsel %vm2077, %v847, %v7504
        %v7844 = vsel %vm2077, %v850, %v7506
        %v7845 = vsel %vm2077, %v855, %v7508
        %v7846 = vsel %vm2077, %v858, %v7510
        %v7847 = vsel %vm2077, %v863, %v7512
        %v7848 = vsel %vm2077, %v866, %v7514
        %v7849 = vsel %vm2077, %v871, %v7516
        %v7850 = vsel %vm2077, %v874, %v7518
        %v7851 = vsel %vm2077, %v879, %v7520
        %v7852 = vsel %vm2077, %v882, %v7522
        %v7853 = vsel %vm2077, %v887, %v7524
        %v7854 = vsel %vm2077, %v890, %v7526
        %v7855 = vsel %vm2077, %v895, %v7528
        %v7856 = vsel %vm2077, %v898, %v7530
        %v7857 = vsel %vm2077, %v903, %v7532
        %v7858 = vsel %vm2077, %v906, %v7534
        %v7859 = vsel %vm2077, %v911, %v7536
        %v7860 = vsel %vm2077, %v914, %v7538
        %v7861 = vsel %vm2077, %v919, %v7540
        %v7862 = vsel %vm2077, %v922, %v7542
        %v7863 = vsel %vm2142, %v7831, %v7608
        %v7864 = vsel %vm2142, %v7832, %v7610
        %v7865 = vsel %vm2142, %v7833, %v7612
        %v7866 = vsel %vm2142, %v7834, %v7614
        %v7867 = vsel %vm2142, %v7835, %v7616
        %v7868 = vsel %vm2142, %v7836, %v7618
        %v7869 = vsel %vm2142, %v7837, %v7620
        %v7870 = vsel %vm2142, %v7838, %v7622
        %v7871 = vsel %vm2142, %v7839, %v7624
        %v7872 = vsel %vm2142, %v7840, %v7626
        %v7873 = vsel %vm2142, %v7841, %v7628
        %v7874 = vsel %vm2142, %v7842, %v7630
        %v7875 = vsel %vm2142, %v7843, %v7632
        %v7876 = vsel %vm2142, %v7844, %v7634
        %v7877 = vsel %vm2142, %v7845, %v7636
        %v7878 = vsel %vm2142, %v7846, %v7638
        %v7879 = vsel %vm2142, %v7847, %v7640
        %v7880 = vsel %vm2142, %v7848, %v7642
        %v7881 = vsel %vm2142, %v7849, %v7644
        %v7882 = vsel %vm2142, %v7850, %v7646
        %v7883 = vsel %vm2142, %v7851, %v7648
        %v7884 = vsel %vm2142, %v7852, %v7650
        %v7885 = vsel %vm2142, %v7853, %v7652
        %v7886 = vsel %vm2142, %v7854, %v7654
        %v7887 = vsel %vm2142, %v7855, %v7656
        %v7888 = vsel %vm2142, %v7856, %v7658
        %v7889 = vsel %vm2142, %v7857, %v7660
        %v7890 = vsel %vm2142, %v7858, %v7662
        %v7891 = vsel %vm2142, %v7859, %v7664
        %v7892 = vsel %vm2142, %v7860, %v7666
        %v7893 = vsel %vm2142, %v7861, %v7668
        %v7894 = vsel %vm2142, %v7862, %v7670
        %v7895 = vsel %vm2208, %v7863, %v7736
        %v7896 = vsel %vm2208, %v7864, %v7738
        %v7897 = vsel %vm2208, %v7865, %v7740
        %v7898 = vsel %vm2208, %v7866, %v7742
        %v7899 = vsel %vm2208, %v7867, %v7744
        %v7900 = vsel %vm2208, %v7868, %v7746
        %v7901 = vsel %vm2208, %v7869, %v7748
        %v7902 = vsel %vm2208, %v7870, %v7750
        %v7903 = vsel %vm2208, %v7871, %v7752
        %v7904 = vsel %vm2208, %v7872, %v7754
        %v7905 = vsel %vm2208, %v7873, %v7756
        %v7906 = vsel %vm2208, %v7874, %v7758
        %v7907 = vsel %vm2208, %v7875, %v7760
        %v7908 = vsel %vm2208, %v7876, %v7762
        %v7909 = vsel %vm2208, %v7877, %v7764
        %v7910 = vsel %vm2208, %v7878, %v7766
        %v7911 = vsel %vm2208, %v7879, %v7768
        %v7912 = vsel %vm2208, %v7880, %v7770
        %v7913 = vsel %vm2208, %v7881, %v7772
        %v7914 = vsel %vm2208, %v7882, %v7774
        %v7915 = vsel %vm2208, %v7883, %v7776
        %v7916 = vsel %vm2208, %v7884, %v7778
        %v7917 = vsel %vm2208, %v7885, %v7780
        %v7918 = vsel %vm2208, %v7886, %v7782
        %v7919 = vsel %vm2208, %v7887, %v7784
        %v7920 = vsel %vm2208, %v7888, %v7786
        %v7921 = vsel %vm2208, %v7889, %v7788
        %v7922 = vsel %vm2208, %v7890, %v7790
        %v7923 = vsel %vm2208, %v7891, %v7792
        %v7924 = vsel %vm2208, %v7892, %v7794
        %v7925 = vsel %vm2208, %v7893, %v7796
        %v7926 = vsel %vm2208, %v7894, %v7798
        %v7927 = vadd.f32 %v7895, %v7896
        %v7928 = vadd.f32 %v7927, %v7897
        %v7929 = vadd.f32 %v7928, %v7898
        %v7930 = vadd.f32 %v7929, %v7899
        %v7931 = vadd.f32 %v7930, %v7900
        %v7932 = vadd.f32 %v7931, %v7901
        %v7933 = vadd.f32 %v7932, %v7902
        %v7934 = vadd.f32 %v7933, %v7903
        %v7935 = vadd.f32 %v7934, %v7904
        %v7936 = vadd.f32 %v7935, %v7905
        %v7937 = vadd.f32 %v7936, %v7906
        %v7938 = vadd.f32 %v7937, %v7907
        %v7939 = vadd.f32 %v7938, %v7908
        %v7940 = vadd.f32 %v7939, %v7909
        %v7941 = vadd.f32 %v7940, %v7910
        %v7942 = vadd.f32 %v7941, %v7911
        %v7943 = vadd.f32 %v7942, %v7912
        %v7944 = vadd.f32 %v7943, %v7913
        %v7945 = vadd.f32 %v7944, %v7914
        %v7946 = vadd.f32 %v7945, %v7915
        %v7947 = vadd.f32 %v7946, %v7916
        %v7948 = vadd.f32 %v7947, %v7917
        %v7949 = vadd.f32 %v7948, %v7918
        %v7950 = vadd.f32 %v7949, %v7919
        %v7951 = vadd.f32 %v7950, %v7920
        %v7952 = vadd.f32 %v7951, %v7921
        %v7953 = vadd.f32 %v7952, %v7922
        %v7954 = vadd.f32 %v7953, %v7923
        %v7955 = vadd.f32 %v7954, %v7924
        %v7956 = vadd.f32 %v7955, %v7925
        %v7957 = vadd.f32 %v7956, %v7926
        %v7958 = vrot.slane %v7957, 4
        %v7959 = vadd.f32 %v7957, %v7958
        %v7960 = vrot.slane %v7959, 2
        %v7961 = vadd.f32 %v7959, %v7960
        %v7962 = vrot.slane %v7961, 1
        %v7963 = vadd.f32 %v7961, %v7962
        %v7964 = vmul.f32 %v7963, 0.00390625
        %v7965 = vld [vmem:[%s9] sm:$0xff]
        %v7966 = vld [vmem:[%s9 + $0x8] sm:$0xff]
        %v7967 = vld [vmem:[%s9 + $0x10] sm:$0xff]
        %v7968 = vld [vmem:[%s9 + $0x18] sm:$0xff]
        %v7969 = vld [vmem:[%s9 + $0x20] sm:$0xff]
        %v7970 = vld [vmem:[%s9 + $0x28] sm:$0xff]
        %v7971 = vld [vmem:[%s9 + $0x30] sm:$0xff]
        %v7972 = vld [vmem:[%s9 + $0x38] sm:$0xff]
        %v7973 = vld [vmem:[%s9 + $0x40] sm:$0xff]
        %v7974 = vld [vmem:[%s9 + $0x48] sm:$0xff]
        %v7975 = vld [vmem:[%s9 + $0x50] sm:$0xff]
        %v7976 = vld [vmem:[%s9 + $0x58] sm:$0xff]
        %v7977 = vld [vmem:[%s9 + $0x60] sm:$0xff]
        %v7978 = vld [vmem:[%s9 + $0x68] sm:$0xff]
        %v7979 = vld [vmem:[%s9 + $0x70] sm:$0xff]
        %v7980 = vld [vmem:[%s9 + $0x78] sm:$0xff]
        %v7981 = vld [vmem:[%s10] sm:$0x1]
        %7982 = vmatprep.subr.mxu0 0.0
        %7983 = vmatpush1.msra.mxu0 %v7980
        %7984 = vmatprep.subr.mxu0 0.0
        %7985 = vmatpush1.msra.mxu0 %v7979
        %7986 = vmatprep.subr.mxu0 0.0
        %7987 = vmatpush1.msra.mxu0 %v7978
        %7988 = vmatprep.subr.mxu0 0.0
        %7989 = vmatpush1.msra.mxu0 %v7977
        %7990 = vmatprep.subr.mxu0 0.0
        %7991 = vmatpush1.msra.mxu0 %v7976
        %7992 = vmatprep.subr.mxu0 0.0
        %7993 = vmatpush1.msra.mxu0 %v7975
        %7994 = vmatprep.subr.mxu0 0.0
        %7995 = vmatpush1.msra.mxu0 %v7974
        %7996 = vmatprep.subr.mxu0 0.0
        %7997 = vmatpush1.msra.mxu0 %v7973
        %7998 = vmatprep.subr.mxu0 0.0
        %7999 = vmatpush1.msra.mxu0 %v7972
        %8000 = vmatprep.subr.mxu0 0.0
        %8001 = vmatpush1.msra.mxu0 %v7971
        %8002 = vmatprep.subr.mxu0 0.0
        %8003 = vmatpush1.msra.mxu0 %v7970
        %8004 = vmatprep.subr.mxu0 0.0
        %8005 = vmatpush1.msra.mxu0 %v7969
        %8006 = vmatprep.subr.mxu0 0.0
        %8007 = vmatpush1.msra.mxu0 %v7968
        %8008 = vmatprep.subr.mxu0 0.0
        %8009 = vmatpush1.msra.mxu0 %v7967
        %8010 = vmatprep.subr.mxu0 0.0
        %8011 = vmatpush1.msra.mxu0 %v7966
        %8012 = vmatprep.subr.mxu0 0.0
        %8013 = vmatpush1.msra.mxu0 %v7965
        %8014 = vmatprep.subr.mxu0 0.0
        %8015 = vmatpush2.msra.mxu0 0.0
        %8016 = vmatprep.subr.mxu0 0.0
        %8017 = vmatpush2.msra.mxu0 0.0
        %8018 = vmatprep.subr.mxu0 0.0
        %8019 = vmatpush2.msra.mxu0 0.0
        %8020 = vmatprep.subr.mxu0 0.0
        %8021 = vmatpush2.msra.mxu0 0.0
        %8022 = vmatprep.subr.mxu0 0.0
        %8023 = vmatpush2.msra.mxu0 0.0
        %8024 = vmatprep.subr.mxu0 0.0
        %8025 = vmatpush2.msra.mxu0 0.0
        %8026 = vmatprep.subr.mxu0 0.0
        %8027 = vmatpush2.msra.mxu0 0.0
        %8028 = vmatprep.subr.mxu0 0.0
        %8029 = vmatpush2.msra.mxu0 0.0
        %8030 = vmatprep.subr.mxu0 0.0
        %8031 = vmatpush2.msra.mxu0 0.0
        %8032 = vmatprep.subr.mxu0 0.0
        %8033 = vmatpush2.msra.mxu0 0.0
        %8034 = vmatprep.subr.mxu0 0.0
        %8035 = vmatpush2.msra.mxu0 0.0
        %8036 = vmatprep.subr.mxu0 0.0
        %8037 = vmatpush2.msra.mxu0 0.0
        %8038 = vmatprep.subr.mxu0 0.0
        %8039 = vmatpush2.msra.mxu0 0.0
        %8040 = vmatprep.subr.mxu0 0.0
        %8041 = vmatpush2.msra.mxu0 0.0
        %8042 = vmatprep.subr.mxu0 0.0
        %8043 = vmatpush2.msra.mxu0 0.0
        %8044 = vmatprep.subr.mxu0 0.0
        %8045 = vmatpush2.msra.mxu0 0.0
        %8046 = vmatprep.mubr.f32.mxu0 0.0
        %8047 = vmatmul.mubr.f32.gmra.mxu0 %v7964
        %v8048 = vpop.f32.mrf.mxu0
        %v8049 = vadd.f32 %v7981, %v8048
        %v8050 = vpop.f32.mrf.mxu0
        %8051 = vdwg.mxu0
        %v8052 = vmax.f32 %v7897, %v7895
        %v8053 = vmax.f32 %v7898, %v7896
        %v8054 = vmax.f32 %v7899, %v7897
        %v8055 = vmax.f32 %v7900, %v7898
        %v8056 = vmax.f32 %v7901, %v7899
        %v8057 = vmax.f32 %v7902, %v7900
        %v8058 = vmax.f32 %v7903, %v7901
        %v8059 = vmax.f32 %v7904, %v7902
        %v8060 = vmax.f32 %v7905, %v7903
        %v8061 = vmax.f32 %v7906, %v7904
        %v8062 = vmax.f32 %v7907, %v7905
        %v8063 = vmax.f32 %v7908, %v7906
        %v8064 = vmax.f32 %v7909, %v7907
        %v8065 = vmax.f32 %v7910, %v7908
        %v8066 = vmax.f32 %v7911, %v7909
        %v8067 = vmax.f32 %v7912, %v7910
        %v8068 = vmax.f32 %v7913, %v7911
        %v8069 = vmax.f32 %v7914, %v7912
        %v8070 = vmax.f32 %v7915, %v7913
        %v8071 = vmax.f32 %v7916, %v7914
        %v8072 = vmax.f32 %v7917, %v7915
        %v8073 = vmax.f32 %v7918, %v7916
        %v8074 = vmax.f32 %v7919, %v7917
        %v8075 = vmax.f32 %v7920, %v7918
        %v8076 = vmax.f32 %v7921, %v7919
        %v8077 = vmax.f32 %v7922, %v7920
        %v8078 = vmax.f32 %v7923, %v7921
        %v8079 = vmax.f32 %v7924, %v7922
        %v8080 = vmax.f32 %v7925, %v7923
        %v8081 = vmax.f32 %v7926, %v7924
        %v8082 = vmax.f32 %v8052, %v7895
        %v8083 = vmax.f32 %v8053, %v7896
        %v8084 = vmax.f32 %v8054, %v7895
        %v8085 = vmax.f32 %v8055, %v7896
        %v8086 = vmax.f32 %v8056, %v7897
        %v8087 = vmax.f32 %v8057, %v7898
        %v8088 = vmax.f32 %v8058, %v7899
        %v8089 = vmax.f32 %v8059, %v7900
        %v8090 = vmax.f32 %v8060, %v7901
        %v8091 = vmax.f32 %v8061, %v7902
        %v8092 = vmax.f32 %v8062, %v7903
        %v8093 = vmax.f32 %v8063, %v7904
        %v8094 = vmax.f32 %v8064, %v7905
        %v8095 = vmax.f32 %v8065, %v7906
        %v8096 = vmax.f32 %v8066, %v7907
        %v8097 = vmax.f32 %v8067, %v7908
        %v8098 = vmax.f32 %v8068, %v7909
        %v8099 = vmax.f32 %v8069, %v7910
        %v8100 = vmax.f32 %v8070, %v7911
        %v8101 = vmax.f32 %v8071, %v7912
        %v8102 = vmax.f32 %v8072, %v7913
        %v8103 = vmax.f32 %v8073, %v7914
        %v8104 = vmax.f32 %v8074, %v7915
        %v8105 = vmax.f32 %v8075, %v7916
        %v8106 = vmax.f32 %v8076, %v7917
        %v8107 = vmax.f32 %v8077, %v7918
        %v8108 = vmax.f32 %v8078, %v7919
        %v8109 = vmax.f32 %v8079, %v7920
        %v8110 = vmax.f32 %v8080, %v7921
        %v8111 = vmax.f32 %v8081, %v7922
        %v8144 = vrot.slane %v8082, 1
        %v8145 = vrot.slane %v8083, 1
        %v8146 = vsel %vm1136, %v8144, %v8145
        %v8147 = vrot.slane %v8084, 1
        %v8148 = vrot.slane %v8085, 1
        %v8149 = vsel %vm1136, %v8147, %v8148
        %v8150 = vrot.slane %v8086, 1
        %v8151 = vrot.slane %v8087, 1
        %v8152 = vsel %vm1136, %v8150, %v8151
        %v8153 = vrot.slane %v8088, 1
        %v8154 = vrot.slane %v8089, 1
        %v8155 = vsel %vm1136, %v8153, %v8154
        %v8156 = vrot.slane %v8090, 1
        %v8157 = vrot.slane %v8091, 1
        %v8158 = vsel %vm1136, %v8156, %v8157
        %v8159 = vrot.slane %v8092, 1
        %v8160 = vrot.slane %v8093, 1
        %v8161 = vsel %vm1136, %v8159, %v8160
        %v8162 = vrot.slane %v8094, 1
        %v8163 = vrot.slane %v8095, 1
        %v8164 = vsel %vm1136, %v8162, %v8163
        %v8165 = vrot.slane %v8096, 1
        %v8166 = vrot.slane %v8097, 1
        %v8167 = vsel %vm1136, %v8165, %v8166
        %v8168 = vrot.slane %v8098, 1
        %v8169 = vrot.slane %v8099, 1
        %v8170 = vsel %vm1136, %v8168, %v8169
        %v8171 = vrot.slane %v8100, 1
        %v8172 = vrot.slane %v8101, 1
        %v8173 = vsel %vm1136, %v8171, %v8172
        %v8174 = vrot.slane %v8102, 1
        %v8175 = vrot.slane %v8103, 1
        %v8176 = vsel %vm1136, %v8174, %v8175
        %v8177 = vrot.slane %v8104, 1
        %v8178 = vrot.slane %v8105, 1
        %v8179 = vsel %vm1136, %v8177, %v8178
        %v8180 = vrot.slane %v8106, 1
        %v8181 = vrot.slane %v8107, 1
        %v8182 = vsel %vm1136, %v8180, %v8181
        %v8183 = vrot.slane %v8108, 1
        %v8184 = vrot.slane %v8109, 1
        %v8185 = vsel %vm1136, %v8183, %v8184
        %v8186 = vrot.slane %v8110, 1
        %v8187 = vrot.slane %v8111, 1
        %v8188 = vsel %vm1136, %v8186, %v8187
        %v8189 = vrot.slane %v8080, 1
        %v8190 = vrot.slane %v8081, 1
        %v8191 = vsel %vm1136, %v8189, %v8190
        %v8224 = vsel %vm1136, %v8145, %v8083
        %v8225 = vsel %vm1136, %v8148, %v8085
        %v8226 = vsel %vm1136, %v8151, %v8087
        %v8227 = vsel %vm1136, %v8154, %v8089
        %v8228 = vsel %vm1136, %v8157, %v8091
        %v8229 = vsel %vm1136, %v8160, %v8093
        %v8230 = vsel %vm1136, %v8163, %v8095
        %v8231 = vsel %vm1136, %v8166, %v8097
        %v8232 = vsel %vm1136, %v8169, %v8099
        %v8233 = vsel %vm1136, %v8172, %v8101
        %v8234 = vsel %vm1136, %v8175, %v8103
        %v8235 = vsel %vm1136, %v8178, %v8105
        %v8236 = vsel %vm1136, %v8181, %v8107
        %v8237 = vsel %vm1136, %v8184, %v8109
        %v8238 = vsel %vm1136, %v8187, %v8111
        %v8239 = vsel %vm1136, %v8190, %v8081
        %v8240 = vrot.slane %v8082, 7
        %v8241 = vrot.slane %v8083, 7
        %v8242 = vsel %vm976, %v8240, %v8241
        %v8243 = vrot.slane %v8084, 7
        %v8244 = vrot.slane %v8085, 7
        %v8245 = vsel %vm976, %v8243, %v8244
        %v8246 = vrot.slane %v8086, 7
        %v8247 = vrot.slane %v8087, 7
        %v8248 = vsel %vm976, %v8246, %v8247
        %v8249 = vrot.slane %v8088, 7
        %v8250 = vrot.slane %v8089, 7
        %v8251 = vsel %vm976, %v8249, %v8250
        %v8252 = vrot.slane %v8090, 7
        %v8253 = vrot.slane %v8091, 7
        %v8254 = vsel %vm976, %v8252, %v8253
        %v8255 = vrot.slane %v8092, 7
        %v8256 = vrot.slane %v8093, 7
        %v8257 = vsel %vm976, %v8255, %v8256
        %v8258 = vrot.slane %v8094, 7
        %v8259 = vrot.slane %v8095, 7
        %v8260 = vsel %vm976, %v8258, %v8259
        %v8261 = vrot.slane %v8096, 7
        %v8262 = vrot.slane %v8097, 7
        %v8263 = vsel %vm976, %v8261, %v8262
        %v8264 = vrot.slane %v8098, 7
        %v8265 = vrot.slane %v8099, 7
        %v8266 = vsel %vm976, %v8264, %v8265
        %v8267 = vrot.slane %v8100, 7
        %v8268 = vrot.slane %v8101, 7
        %v8269 = vsel %vm976, %v8267, %v8268
        %v8270 = vrot.slane %v8102, 7
        %v8271 = vrot.slane %v8103, 7
        %v8272 = vsel %vm976, %v8270, %v8271
        %v8273 = vrot.slane %v8104, 7
        %v8274 = vrot.slane %v8105, 7
        %v8275 = vsel %vm976, %v8273, %v8274
        %v8276 = vrot.slane %v8106, 7
        %v8277 = vrot.slane %v8107, 7
        %v8278 = vsel %vm976, %v8276, %v8277
        %v8279 = vrot.slane %v8108, 7
        %v8280 = vrot.slane %v8109, 7
        %v8281 = vsel %vm976, %v8279, %v8280
        %v8282 = vrot.slane %v8110, 7
        %v8283 = vrot.slane %v8111, 7
        %v8284 = vsel %vm976, %v8282, %v8283
        %v8285 = vrot.slane %v8080, 7
        %v8286 = vrot.slane %v8081, 7
        %v8287 = vsel %vm976, %v8285, %v8286
        %v8320 = vsel %vm976, %v8082, %v8240
        %v8321 = vsel %vm976, %v8084, %v8243
        %v8322 = vsel %vm976, %v8086, %v8246
        %v8323 = vsel %vm976, %v8088, %v8249
        %v8324 = vsel %vm976, %v8090, %v8252
        %v8325 = vsel %vm976, %v8092, %v8255
        %v8326 = vsel %vm976, %v8094, %v8258
        %v8327 = vsel %vm976, %v8096, %v8261
        %v8328 = vsel %vm976, %v8098, %v8264
        %v8329 = vsel %vm976, %v8100, %v8267
        %v8330 = vsel %vm976, %v8102, %v8270
        %v8331 = vsel %vm976, %v8104, %v8273
        %v8332 = vsel %vm976, %v8106, %v8276
        %v8333 = vsel %vm976, %v8108, %v8279
        %v8334 = vsel %vm976, %v8110, %v8282
        %v8335 = vsel %vm976, %v8080, %v8285
        %v8336 = vmax.f32 %v8146, %v8082
        %v8337 = vmax.f32 %v8224, %v8083
        %v8338 = vmax.f32 %v8149, %v8084
        %v8339 = vmax.f32 %v8225, %v8085
        %v8340 = vmax.f32 %v8152, %v8086
        %v8341 = vmax.f32 %v8226, %v8087
        %v8342 = vmax.f32 %v8155, %v8088
        %v8343 = vmax.f32 %v8227, %v8089
        %v8344 = vmax.f32 %v8158, %v8090
        %v8345 = vmax.f32 %v8228, %v8091
        %v8346 = vmax.f32 %v8161, %v8092
        %v8347 = vmax.f32 %v8229, %v8093
        %v8348 = vmax.f32 %v8164, %v8094
        %v8349 = vmax.f32 %v8230, %v8095
        %v8350 = vmax.f32 %v8167, %v8096
        %v8351 = vmax.f32 %v8231, %v8097
        %v8352 = vmax.f32 %v8170, %v8098
        %v8353 = vmax.f32 %v8232, %v8099
        %v8354 = vmax.f32 %v8173, %v8100
        %v8355 = vmax.f32 %v8233, %v8101
        %v8356 = vmax.f32 %v8176, %v8102
        %v8357 = vmax.f32 %v8234, %v8103
        %v8358 = vmax.f32 %v8179, %v8104
        %v8359 = vmax.f32 %v8235, %v8105
        %v8360 = vmax.f32 %v8182, %v8106
        %v8361 = vmax.f32 %v8236, %v8107
        %v8362 = vmax.f32 %v8185, %v8108
        %v8363 = vmax.f32 %v8237, %v8109
        %v8364 = vmax.f32 %v8188, %v8110
        %v8365 = vmax.f32 %v8238, %v8111
        %v8366 = vmax.f32 %v8191, %v8080
        %v8367 = vmax.f32 %v8239, %v8081
        %v8368 = vmax.f32 %v8336, %v8320
        %v8369 = vmax.f32 %v8337, %v8242
        %v8370 = vmax.f32 %v8338, %v8321
        %v8371 = vmax.f32 %v8339, %v8245
        %v8372 = vmax.f32 %v8340, %v8322
        %v8373 = vmax.f32 %v8341, %v8248
        %v8374 = vmax.f32 %v8342, %v8323
        %v8375 = vmax.f32 %v8343, %v8251
        %v8376 = vmax.f32 %v8344, %v8324
        %v8377 = vmax.f32 %v8345, %v8254
        %v8378 = vmax.f32 %v8346, %v8325
        %v8379 = vmax.f32 %v8347, %v8257
        %v8380 = vmax.f32 %v8348, %v8326
        %v8381 = vmax.f32 %v8349, %v8260
        %v8382 = vmax.f32 %v8350, %v8327
        %v8383 = vmax.f32 %v8351, %v8263
        %v8384 = vmax.f32 %v8352, %v8328
        %v8385 = vmax.f32 %v8353, %v8266
        %v8386 = vmax.f32 %v8354, %v8329
        %v8387 = vmax.f32 %v8355, %v8269
        %v8388 = vmax.f32 %v8356, %v8330
        %v8389 = vmax.f32 %v8357, %v8272
        %v8390 = vmax.f32 %v8358, %v8331
        %v8391 = vmax.f32 %v8359, %v8275
        %v8392 = vmax.f32 %v8360, %v8332
        %v8393 = vmax.f32 %v8361, %v8278
        %v8394 = vmax.f32 %v8362, %v8333
        %v8395 = vmax.f32 %v8363, %v8281
        %v8396 = vmax.f32 %v8364, %v8334
        %v8397 = vmax.f32 %v8365, %v8284
        %v8398 = vmax.f32 %v8366, %v8335
        %v8399 = vmax.f32 %v8367, %v8287
        %v8400 = vadd.f32 %v8368, %v8369
        %v8401 = vadd.f32 %v8400, %v8370
        %v8402 = vadd.f32 %v8401, %v8371
        %v8403 = vadd.f32 %v8402, %v8372
        %v8404 = vadd.f32 %v8403, %v8373
        %v8405 = vadd.f32 %v8404, %v8374
        %v8406 = vadd.f32 %v8405, %v8375
        %v8407 = vadd.f32 %v8406, %v8376
        %v8408 = vadd.f32 %v8407, %v8377
        %v8409 = vadd.f32 %v8408, %v8378
        %v8410 = vadd.f32 %v8409, %v8379
        %v8411 = vadd.f32 %v8410, %v8380
        %v8412 = vadd.f32 %v8411, %v8381
        %v8413 = vadd.f32 %v8412, %v8382
        %v8414 = vadd.f32 %v8413, %v8383
        %v8415 = vadd.f32 %v8414, %v8384
        %v8416 = vadd.f32 %v8415, %v8385
        %v8417 = vadd.f32 %v8416, %v8386
        %v8418 = vadd.f32 %v8417, %v8387
        %v8419 = vadd.f32 %v8418, %v8388
        %v8420 = vadd.f32 %v8419, %v8389
        %v8421 = vadd.f32 %v8420, %v8390
        %v8422 = vadd.f32 %v8421, %v8391
        %v8423 = vadd.f32 %v8422, %v8392
        %v8424 = vadd.f32 %v8423, %v8393
        %v8425 = vadd.f32 %v8424, %v8394
        %v8426 = vadd.f32 %v8425, %v8395
        %v8427 = vadd.f32 %v8426, %v8396
        %v8428 = vadd.f32 %v8427, %v8397
        %v8429 = vadd.f32 %v8428, %v8398
        %v8430 = vadd.f32 %v8429, %v8399
        %v8431 = vrot.slane %v8430, 4
        %v8432 = vadd.f32 %v8430, %v8431
        %v8433 = vrot.slane %v8432, 2
        %v8434 = vadd.f32 %v8432, %v8433
        %v8435 = vrot.slane %v8434, 1
        %v8436 = vadd.f32 %v8434, %v8435
        %v8437 = vmul.f32 %v8436, 0.00390625
        %v8438 = vld [vmem:[%s17] sm:$0xff]
        %v8439 = vld [vmem:[%s17 + $0x8] sm:$0xff]
        %v8440 = vld [vmem:[%s17 + $0x10] sm:$0xff]
        %v8441 = vld [vmem:[%s17 + $0x18] sm:$0xff]
        %v8442 = vld [vmem:[%s17 + $0x20] sm:$0xff]
        %v8443 = vld [vmem:[%s17 + $0x28] sm:$0xff]
        %v8444 = vld [vmem:[%s17 + $0x30] sm:$0xff]
        %v8445 = vld [vmem:[%s17 + $0x38] sm:$0xff]
        %v8446 = vld [vmem:[%s17 + $0x40] sm:$0xff]
        %v8447 = vld [vmem:[%s17 + $0x48] sm:$0xff]
        %v8448 = vld [vmem:[%s17 + $0x50] sm:$0xff]
        %v8449 = vld [vmem:[%s17 + $0x58] sm:$0xff]
        %v8450 = vld [vmem:[%s17 + $0x60] sm:$0xff]
        %v8451 = vld [vmem:[%s17 + $0x68] sm:$0xff]
        %v8452 = vld [vmem:[%s17 + $0x70] sm:$0xff]
        %v8453 = vld [vmem:[%s17 + $0x78] sm:$0xff]
        %v8454 = vld [vmem:[%s18] sm:$0x1]
        %8455 = vmatprep.subr.mxu0 0.0
        %8456 = vmatpush1.msra.mxu0 %v8453
        %8457 = vmatprep.subr.mxu0 0.0
        %8458 = vmatpush1.msra.mxu0 %v8452
        %8459 = vmatprep.subr.mxu0 0.0
        %8460 = vmatpush1.msra.mxu0 %v8451
        %8461 = vmatprep.subr.mxu0 0.0
        %8462 = vmatpush1.msra.mxu0 %v8450
        %8463 = vmatprep.subr.mxu0 0.0
        %8464 = vmatpush1.msra.mxu0 %v8449
        %8465 = vmatprep.subr.mxu0 0.0
        %8466 = vmatpush1.msra.mxu0 %v8448
        %8467 = vmatprep.subr.mxu0 0.0
        %8468 = vmatpush1.msra.mxu0 %v8447
        %8469 = vmatprep.subr.mxu0 0.0
        %8470 = vmatpush1.msra.mxu0 %v8446
        %8471 = vmatprep.subr.mxu0 0.0
        %8472 = vmatpush1.msra.mxu0 %v8445
        %8473 = vmatprep.subr.mxu0 0.0
        %8474 = vmatpush1.msra.mxu0 %v8444
        %8475 = vmatprep.subr.mxu0 0.0
        %8476 = vmatpush1.msra.mxu0 %v8443
        %8477 = vmatprep.subr.mxu0 0.0
        %8478 = vmatpush1.msra.mxu0 %v8442
        %8479 = vmatprep.subr.mxu0 0.0
        %8480 = vmatpush1.msra.mxu0 %v8441
        %8481 = vmatprep.subr.mxu0 0.0
        %8482 = vmatpush1.msra.mxu0 %v8440
        %8483 = vmatprep.subr.mxu0 0.0
        %8484 = vmatpush1.msra.mxu0 %v8439
        %8485 = vmatprep.subr.mxu0 0.0
        %8486 = vmatpush1.msra.mxu0 %v8438
        %8487 = vmatprep.subr.mxu0 0.0
        %8488 = vmatpush2.msra.mxu0 0.0
        %8489 = vmatprep.subr.mxu0 0.0
        %8490 = vmatpush2.msra.mxu0 0.0
        %8491 = vmatprep.subr.mxu0 0.0
        %8492 = vmatpush2.msra.mxu0 0.0
        %8493 = vmatprep.subr.mxu0 0.0
        %8494 = vmatpush2.msra.mxu0 0.0
        %8495 = vmatprep.subr.mxu0 0.0
        %8496 = vmatpush2.msra.mxu0 0.0
        %8497 = vmatprep.subr.mxu0 0.0
        %8498 = vmatpush2.msra.mxu0 0.0
        %8499 = vmatprep.subr.mxu0 0.0
        %8500 = vmatpush2.msra.mxu0 0.0
        %8501 = vmatprep.subr.mxu0 0.0
        %8502 = vmatpush2.msra.mxu0 0.0
        %8503 = vmatprep.subr.mxu0 0.0
        %8504 = vmatpush2.msra.mxu0 0.0
        %8505 = vmatprep.subr.mxu0 0.0
        %8506 = vmatpush2.msra.mxu0 0.0
        %8507 = vmatprep.subr.mxu0 0.0
        %8508 = vmatpush2.msra.mxu0 0.0
        %8509 = vmatprep.subr.mxu0 0.0
        %8510 = vmatpush2.msra.mxu0 0.0
        %8511 = vmatprep.subr.mxu0 0.0
        %8512 = vmatpush2.msra.mxu0 0.0
        %8513 = vmatprep.subr.mxu0 0.0
        %8514 = vmatpush2.msra.mxu0 0.0
        %8515 = vmatprep.subr.mxu0 0.0
        %8516 = vmatpush2.msra.mxu0 0.0
        %8517 = vmatprep.subr.mxu0 0.0
        %8518 = vmatpush2.msra.mxu0 0.0
        %8519 = vmatprep.mubr.f32.mxu0 0.0
        %8520 = vmatmul.mubr.f32.gmra.mxu0 %v8437
        %v8521 = vpop.f32.mrf.mxu0
        %v8522 = vadd.f32 %v8454, %v8521
        %v8523 = vpop.f32.mrf.mxu0
        %8524 = vdwg.mxu0
        %v8525 = vpack.c.bf16 %v7896, %v7895
        %v8526 = vpack.c.bf16 %v7898, %v7897
        %v8527 = vpack.c.bf16 %v7900, %v7899
        %v8528 = vpack.c.bf16 %v7902, %v7901
        %v8529 = vpack.c.bf16 %v7904, %v7903
        %v8530 = vpack.c.bf16 %v7906, %v7905
        %v8531 = vpack.c.bf16 %v7908, %v7907
        %v8532 = vpack.c.bf16 %v7910, %v7909
        %v8533 = vpack.c.bf16 %v7912, %v7911
        %v8534 = vpack.c.bf16 %v7914, %v7913
        %v8535 = vpack.c.bf16 %v7916, %v7915
        %v8536 = vpack.c.bf16 %v7918, %v7917
        %v8537 = vpack.c.bf16 %v7920, %v7919
        %v8538 = vpack.c.bf16 %v7922, %v7921
        %v8539 = vpack.c.bf16 %v7924, %v7923
        %v8540 = vpack.c.bf16 %v7926, %v7925
        %v8541 = vld [vmem:[%s11] sm:$0xf]
        %v8542 = vld [vmem:[%s11 + $0x4] sm:$0xf]
        %v8543 = vld [vmem:[%s11 + $0x8] sm:$0xf]
        %v8544 = vld [vmem:[%s11 + $0xc] sm:$0xf]
        %v8545 = vld [vmem:[%s11 + $0x10] sm:$0xf]
        %v8546 = vld [vmem:[%s11 + $0x14] sm:$0xf]
        %v8547 = vld [vmem:[%s11 + $0x18] sm:$0xf]
        %v8548 = vld [vmem:[%s11 + $0x1c] sm:$0xf]
        %v8549 = vld [vmem:[%s11 + $0x20] sm:$0xf]
        %v8550 = vld [vmem:[%s11 + $0x24] sm:$0xf]
        %v8551 = vld [vmem:[%s11 + $0x28] sm:$0xf]
        %v8552 = vld [vmem:[%s11 + $0x2c] sm:$0xf]
        %v8553 = vld [vmem:[%s11 + $0x30] sm:$0xf]
        %v8554 = vld [vmem:[%s11 + $0x34] sm:$0xf]
        %v8555 = vld [vmem:[%s11 + $0x38] sm:$0xf]
        %v8556 = vld [vmem:[%s11 + $0x3c] sm:$0xf]
        %v8557 = vld [vmem:[%s12] sm:$0x1]
        %v8559 = vlaneseq
        %v8560 = vshrl.u32 %v8559, 7
        %v8561 = vsub.s32 0, %v8560
        %v8562 = vrot.slane %v8557, %v8561
        %v8580 = vunpack.c.l.b16 %v8541
        %v8581 = vunpack.c.l.b16 %v8542
        %v8582 = vunpack.c.l.b16 %v8543
        %v8583 = vunpack.c.l.b16 %v8544
        %v8584 = vunpack.c.l.b16 %v8545
        %v8585 = vunpack.c.l.b16 %v8546
        %v8586 = vunpack.c.l.b16 %v8547
        %v8587 = vunpack.c.l.b16 %v8548
        %v8588 = vunpack.c.l.b16 %v8549
        %v8589 = vunpack.c.l.b16 %v8550
        %v8590 = vunpack.c.l.b16 %v8551
        %v8591 = vunpack.c.l.b16 %v8552
        %v8592 = vunpack.c.l.b16 %v8553
        %v8593 = vunpack.c.l.b16 %v8554
        %v8594 = vunpack.c.l.b16 %v8555
        %v8595 = vunpack.c.l.b16 %v8556
        %v8596 = vpack.c.b16 %v8581, %v8580
        %v8597 = vpack.c.b16 %v8583, %v8582
        %v8598 = vpack.c.b16 %v8585, %v8584
        %v8599 = vpack.c.b16 %v8587, %v8586
        %v8600 = vpack.c.b16 %v8589, %v8588
        %v8601 = vpack.c.b16 %v8591, %v8590
        %v8602 = vpack.c.b16 %v8593, %v8592
        %v8603 = vpack.c.b16 %v8595, %v8594
        %8612 = vmatprep.subr.bf16.mxu0 0
        %8613 = vmatpush1.bf16.msra.mxu0 %v8603
        %8614 = vmatprep.subr.bf16.mxu0 0
        %8615 = vmatpush1.bf16.msra.mxu0 %v8602
        %8616 = vmatprep.subr.bf16.mxu0 0
        %8617 = vmatpush1.bf16.msra.mxu0 %v8601
        %8618 = vmatprep.subr.bf16.mxu0 0
        %8619 = vmatpush1.bf16.msra.mxu0 %v8600
        %8620 = vmatprep.subr.bf16.mxu0 0
        %8621 = vmatpush1.bf16.msra.mxu0 %v8599
        %8622 = vmatprep.subr.bf16.mxu0 0
        %8623 = vmatpush1.bf16.msra.mxu0 %v8598
        %8624 = vmatprep.subr.bf16.mxu0 0
        %8625 = vmatpush1.bf16.msra.mxu0 %v8597
        %8626 = vmatprep.subr.bf16.mxu0 0
        %8627 = vmatpush1.bf16.msra.mxu0 %v8596
        %8628 = vmatprep.subr.bf16.mxu0 0
        %8629 = vmatpush2.bf16.msra.mxu0 0
        %8630 = vmatprep.subr.bf16.mxu0 0
        %8631 = vmatpush2.bf16.msra.mxu0 0
        %8632 = vmatprep.subr.bf16.mxu0 0
        %8633 = vmatpush2.bf16.msra.mxu0 0
        %8634 = vmatprep.subr.bf16.mxu0 0
        %8635 = vmatpush2.bf16.msra.mxu0 0
        %8636 = vmatprep.subr.bf16.mxu0 0
        %8637 = vmatpush2.bf16.msra.mxu0 0
        %8638 = vmatprep.subr.bf16.mxu0 0
        %8639 = vmatpush2.bf16.msra.mxu0 0
        %8640 = vmatprep.subr.bf16.mxu0 0
        %8641 = vmatpush2.bf16.msra.mxu0 0
        %8642 = vmatprep.subr.bf16.mxu0 0
        %8643 = vmatpush2.bf16.msra.mxu0 0
        %8644 = vmatprep.mubr.bf16.mxu0 0
        %8645 = vmatmul.mubr.bf16.gmra.mxu0 %v8525
        %v8646 = vpop.f32.mrf.mxu0
        %v8647 = vadd.f32 %v8562, %v8646
        %v8648 = vpop.f32.mrf.mxu0
        %v8649 = vpop.f32.mrf.mxu0
        %v8650 = vadd.f32 %v8562, %v8649
        %v8651 = vpop.f32.mrf.mxu0
        %8652 = vmatprep.mubr.bf16.mxu0 0
        %8653 = vmatmul.mubr.bf16.gmra.mxu0 %v8526
        %v8654 = vpop.f32.mrf.mxu0
        %v8655 = vadd.f32 %v8562, %v8654
        %v8656 = vpop.f32.mrf.mxu0
        %v8657 = vpop.f32.mrf.mxu0
        %v8658 = vadd.f32 %v8562, %v8657
        %v8659 = vpop.f32.mrf.mxu0
        %8660 = vmatprep.mubr.bf16.mxu0 0
        %8661 = vmatmul.mubr.bf16.gmra.mxu0 %v8527
        %v8662 = vpop.f32.mrf.mxu0
        %v8663 = vadd.f32 %v8562, %v8662
        %v8664 = vpop.f32.mrf.mxu0
        %v8665 = vpop.f32.mrf.mxu0
        %v8666 = vadd.f32 %v8562, %v8665
        %v8667 = vpop.f32.mrf.mxu0
        %8668 = vmatprep.mubr.bf16.mxu0 0
        %8669 = vmatmul.mubr.bf16.gmra.mxu0 %v8528
        %v8670 = vpop.f32.mrf.mxu0
        %v8671 = vadd.f32 %v8562, %v8670
        %v8672 = vpop.f32.mrf.mxu0
        %v8673 = vpop.f32.mrf.mxu0
        %v8674 = vadd.f32 %v8562, %v8673
        %v8675 = vpop.f32.mrf.mxu0
        %8676 = vmatprep.mubr.bf16.mxu0 0
        %8677 = vmatmul.mubr.bf16.gmra.mxu0 %v8529
        %v8678 = vpop.f32.mrf.mxu0
        %v8679 = vadd.f32 %v8562, %v8678
        %v8680 = vpop.f32.mrf.mxu0
        %v8681 = vpop.f32.mrf.mxu0
        %v8682 = vadd.f32 %v8562, %v8681
        %v8683 = vpop.f32.mrf.mxu0
        %8684 = vmatprep.mubr.bf16.mxu0 0
        %8685 = vmatmul.mubr.bf16.gmra.mxu0 %v8530
        %v8686 = vpop.f32.mrf.mxu0
        %v8687 = vadd.f32 %v8562, %v8686
        %v8688 = vpop.f32.mrf.mxu0
        %v8689 = vpop.f32.mrf.mxu0
        %v8690 = vadd.f32 %v8562, %v8689
        %v8691 = vpop.f32.mrf.mxu0
        %8692 = vmatprep.mubr.bf16.mxu0 0
        %8693 = vmatmul.mubr.bf16.gmra.mxu0 %v8531
        %v8694 = vpop.f32.mrf.mxu0
        %v8695 = vadd.f32 %v8562, %v8694
        %v8696 = vpop.f32.mrf.mxu0
        %v8697 = vpop.f32.mrf.mxu0
        %v8698 = vadd.f32 %v8562, %v8697
        %v8699 = vpop.f32.mrf.mxu0
        %8700 = vmatprep.mubr.bf16.mxu0 0
        %8701 = vmatmul.mubr.bf16.gmra.mxu0 %v8532
        %v8702 = vpop.f32.mrf.mxu0
        %v8703 = vadd.f32 %v8562, %v8702
        %v8704 = vpop.f32.mrf.mxu0
        %v8705 = vpop.f32.mrf.mxu0
        %v8706 = vadd.f32 %v8562, %v8705
        %v8707 = vpop.f32.mrf.mxu0
        %8708 = vmatprep.mubr.bf16.mxu0 0
        %8709 = vmatmul.mubr.bf16.gmra.mxu0 %v8533
        %v8710 = vpop.f32.mrf.mxu0
        %v8711 = vadd.f32 %v8562, %v8710
        %v8712 = vpop.f32.mrf.mxu0
        %v8713 = vpop.f32.mrf.mxu0
        %v8714 = vadd.f32 %v8562, %v8713
        %v8715 = vpop.f32.mrf.mxu0
        %8716 = vmatprep.mubr.bf16.mxu0 0
        %8717 = vmatmul.mubr.bf16.gmra.mxu0 %v8534
        %v8718 = vpop.f32.mrf.mxu0
        %v8719 = vadd.f32 %v8562, %v8718
        %v8720 = vpop.f32.mrf.mxu0
        %v8721 = vpop.f32.mrf.mxu0
        %v8722 = vadd.f32 %v8562, %v8721
        %v8723 = vpop.f32.mrf.mxu0
        %8724 = vmatprep.mubr.bf16.mxu0 0
        %8725 = vmatmul.mubr.bf16.gmra.mxu0 %v8535
        %v8726 = vpop.f32.mrf.mxu0
        %v8727 = vadd.f32 %v8562, %v8726
        %v8728 = vpop.f32.mrf.mxu0
        %v8729 = vpop.f32.mrf.mxu0
        %v8730 = vadd.f32 %v8562, %v8729
        %v8731 = vpop.f32.mrf.mxu0
        %8732 = vmatprep.mubr.bf16.mxu0 0
        %8733 = vmatmul.mubr.bf16.gmra.mxu0 %v8536
        %v8734 = vpop.f32.mrf.mxu0
        %v8735 = vadd.f32 %v8562, %v8734
        %v8736 = vpop.f32.mrf.mxu0
        %v8737 = vpop.f32.mrf.mxu0
        %v8738 = vadd.f32 %v8562, %v8737
        %v8739 = vpop.f32.mrf.mxu0
        %8740 = vmatprep.mubr.bf16.mxu0 0
        %8741 = vmatmul.mubr.bf16.gmra.mxu0 %v8537
        %v8742 = vpop.f32.mrf.mxu0
        %v8743 = vadd.f32 %v8562, %v8742
        %v8744 = vpop.f32.mrf.mxu0
        %v8745 = vpop.f32.mrf.mxu0
        %v8746 = vadd.f32 %v8562, %v8745
        %v8747 = vpop.f32.mrf.mxu0
        %8748 = vmatprep.mubr.bf16.mxu0 0
        %8749 = vmatmul.mubr.bf16.gmra.mxu0 %v8538
        %v8750 = vpop.f32.mrf.mxu0
        %v8751 = vadd.f32 %v8562, %v8750
        %v8752 = vpop.f32.mrf.mxu0
        %v8753 = vpop.f32.mrf.mxu0
        %v8754 = vadd.f32 %v8562, %v8753
        %v8755 = vpop.f32.mrf.mxu0
        %8756 = vmatprep.mubr.bf16.mxu0 0
        %8757 = vmatmul.mubr.bf16.gmra.mxu0 %v8539
        %v8758 = vpop.f32.mrf.mxu0
        %v8759 = vadd.f32 %v8562, %v8758
        %v8760 = vpop.f32.mrf.mxu0
        %v8761 = vpop.f32.mrf.mxu0
        %v8762 = vadd.f32 %v8562, %v8761
        %v8763 = vpop.f32.mrf.mxu0
        %8764 = vmatprep.mubr.bf16.mxu0 0
        %8765 = vmatmul.mubr.bf16.gmra.mxu0 %v8540
        %v8766 = vpop.f32.mrf.mxu0
        %v8767 = vadd.f32 %v8562, %v8766
        %v8768 = vpop.f32.mrf.mxu0
        %v8769 = vpop.f32.mrf.mxu0
        %v8770 = vadd.f32 %v8562, %v8769
        %v8771 = vpop.f32.mrf.mxu0
        %8772 = vdwg.mxu0
        %v8773 = vld [vmem:[%s13] sm:$0xff]
        %v8774 = vld [vmem:[%s13 + $0x8] sm:$0xff]
        %v8775 = vld [vmem:[%s13 + $0x10] sm:$0xff]
        %v8776 = vld [vmem:[%s13 + $0x18] sm:$0xff]
        %v8777 = vld [vmem:[%s13 + $0x20] sm:$0xff]
        %v8778 = vld [vmem:[%s13 + $0x28] sm:$0xff]
        %v8779 = vld [vmem:[%s13 + $0x30] sm:$0xff]
        %v8780 = vld [vmem:[%s13 + $0x38] sm:$0xff]
        %v8781 = vld [vmem:[%s13 + $0x40] sm:$0xff]
        %v8782 = vld [vmem:[%s13 + $0x48] sm:$0xff]
        %v8783 = vld [vmem:[%s13 + $0x50] sm:$0xff]
        %v8784 = vld [vmem:[%s13 + $0x58] sm:$0xff]
        %v8785 = vld [vmem:[%s13 + $0x60] sm:$0xff]
        %v8786 = vld [vmem:[%s13 + $0x68] sm:$0xff]
        %v8787 = vld [vmem:[%s13 + $0x70] sm:$0xff]
        %v8788 = vld [vmem:[%s13 + $0x78] sm:$0xff]
        %v8789 = vld [vmem:[%s13 + $0x80] sm:$0xff]
        %v8790 = vld [vmem:[%s13 + $0x88] sm:$0xff]
        %v8791 = vld [vmem:[%s14] sm:$0x1]
        %v8792 = vsel %vm2045, %v8647, 0.0
        %v8793 = vsel %vm2045, %v8655, 0.0
        %v8794 = vadd.f32 %v8792, %v8793
        %v8795 = vsel %vm2045, %v8663, 0.0
        %v8796 = vadd.f32 %v8794, %v8795
        %v8797 = vsel %vm2045, %v8671, 0.0
        %v8798 = vadd.f32 %v8796, %v8797
        %v8799 = vsel %vm2045, %v8679, 0.0
        %v8800 = vadd.f32 %v8798, %v8799
        %v8801 = vsel %vm2045, %v8687, 0.0
        %v8802 = vadd.f32 %v8800, %v8801
        %v8803 = vsel %vm2045, %v8695, 0.0
        %v8804 = vadd.f32 %v8802, %v8803
        %v8805 = vsel %vm2045, %v8703, 0.0
        %v8806 = vadd.f32 %v8804, %v8805
        %v8807 = vsel %vm2045, %v8711, 0.0
        %v8808 = vadd.f32 %v8806, %v8807
        %v8809 = vsel %vm2045, %v8719, 0.0
        %v8810 = vadd.f32 %v8808, %v8809
        %v8811 = vsel %vm2045, %v8727, 0.0
        %v8812 = vadd.f32 %v8810, %v8811
        %v8813 = vsel %vm2045, %v8735, 0.0
        %v8814 = vadd.f32 %v8812, %v8813
        %v8815 = vsel %vm2045, %v8743, 0.0
        %v8816 = vadd.f32 %v8814, %v8815
        %v8817 = vsel %vm2045, %v8751, 0.0
        %v8818 = vadd.f32 %v8816, %v8817
        %v8819 = vsel %vm2045, %v8759, 0.0
        %v8820 = vadd.f32 %v8818, %v8819
        %vm8821 = vcmask 129024
        %v8822 = vsel %vm8821, %v8650, 0.0
        %v8823 = vsel %vm8821, %v8658, 0.0
        %v8824 = vadd.f32 %v8822, %v8823
        %v8825 = vsel %vm8821, %v8666, 0.0
        %v8826 = vadd.f32 %v8824, %v8825
        %v8827 = vsel %vm8821, %v8674, 0.0
        %v8828 = vadd.f32 %v8826, %v8827
        %v8829 = vsel %vm8821, %v8682, 0.0
        %v8830 = vadd.f32 %v8828, %v8829
        %v8831 = vsel %vm8821, %v8690, 0.0
        %v8832 = vadd.f32 %v8830, %v8831
        %v8833 = vsel %vm8821, %v8698, 0.0
        %v8834 = vadd.f32 %v8832, %v8833
        %v8835 = vsel %vm8821, %v8706, 0.0
        %v8836 = vadd.f32 %v8834, %v8835
        %v8837 = vsel %vm8821, %v8714, 0.0
        %v8838 = vadd.f32 %v8836, %v8837
        %v8839 = vsel %vm8821, %v8722, 0.0
        %v8840 = vadd.f32 %v8838, %v8839
        %v8841 = vsel %vm8821, %v8730, 0.0
        %v8842 = vadd.f32 %v8840, %v8841
        %v8843 = vsel %vm8821, %v8738, 0.0
        %v8844 = vadd.f32 %v8842, %v8843
        %v8845 = vsel %vm8821, %v8746, 0.0
        %v8846 = vadd.f32 %v8844, %v8845
        %v8847 = vsel %vm8821, %v8754, 0.0
        %v8848 = vadd.f32 %v8846, %v8847
        %v8849 = vsel %vm8821, %v8762, 0.0
        %v8850 = vadd.f32 %v8848, %v8849
        %v8851 = vsel %vm2045, %v8820, 0.0
        %v8852 = vsel %vm8821, %v8850, 0.0
        %v8853 = vadd.f32 %v8851, %v8852
        %v8854 = vrot.slane %v8853, 4
        %v8855 = vadd.f32 %v8853, %v8854
        %v8856 = vrot.slane %v8855, 2
        %v8857 = vadd.f32 %v8855, %v8856
        %v8858 = vrot.slane %v8857, 1
        %v8859 = vadd.f32 %v8857, %v8858
        %v8860 = vsel %vm2045, %v8650, 0.0
        %v8861 = vsel %vm2045, %v8658, 0.0
        %v8862 = vadd.f32 %v8860, %v8861
        %v8863 = vsel %vm2045, %v8666, 0.0
        %v8864 = vadd.f32 %v8862, %v8863
        %v8865 = vsel %vm2045, %v8674, 0.0
        %v8866 = vadd.f32 %v8864, %v8865
        %v8867 = vsel %vm2045, %v8682, 0.0
        %v8868 = vadd.f32 %v8866, %v8867
        %v8869 = vsel %vm2045, %v8690, 0.0
        %v8870 = vadd.f32 %v8868, %v8869
        %v8871 = vsel %vm2045, %v8698, 0.0
        %v8872 = vadd.f32 %v8870, %v8871
        %v8873 = vsel %vm2045, %v8706, 0.0
        %v8874 = vadd.f32 %v8872, %v8873
        %v8875 = vsel %vm2045, %v8714, 0.0
        %v8876 = vadd.f32 %v8874, %v8875
        %v8877 = vsel %vm2045, %v8722, 0.0
        %v8878 = vadd.f32 %v8876, %v8877
        %v8879 = vsel %vm2045, %v8730, 0.0
        %v8880 = vadd.f32 %v8878, %v8879
        %v8881 = vsel %vm2045, %v8738, 0.0
        %v8882 = vadd.f32 %v8880, %v8881
        %v8883 = vsel %vm2045, %v8746, 0.0
        %v8884 = vadd.f32 %v8882, %v8883
        %v8885 = vsel %vm2045, %v8754, 0.0
        %v8886 = vadd.f32 %v8884, %v8885
        %v8887 = vsel %vm2045, %v8762, 0.0
        %v8888 = vadd.f32 %v8886, %v8887
        %v8889 = vsel %vm2045, %v8888, 0.0
        %v8890 = vadd.f32 %v8851, %v8889
        %v8891 = vrot.slane %v8890, 4
        %v8892 = vadd.f32 %v8890, %v8891
        %v8893 = vrot.slane %v8892, 2
        %v8894 = vadd.f32 %v8892, %v8893
        %v8895 = vrot.slane %v8894, 1
        %v8896 = vadd.f32 %v8894, %v8895
        %vm8897 = vcmask 130049
        %v8898 = vsel %vm8897, %v8647, 0.0
        %v8899 = vsel %vm8897, %v8655, 0.0
        %v8900 = vadd.f32 %v8898, %v8899
        %v8901 = vsel %vm8897, %v8663, 0.0
        %v8902 = vadd.f32 %v8900, %v8901
        %v8903 = vsel %vm8897, %v8671, 0.0
        %v8904 = vadd.f32 %v8902, %v8903
        %v8905 = vsel %vm8897, %v8679, 0.0
        %v8906 = vadd.f32 %v8904, %v8905
        %v8907 = vsel %vm8897, %v8687, 0.0
        %v8908 = vadd.f32 %v8906, %v8907
        %v8909 = vsel %vm8897, %v8695, 0.0
        %v8910 = vadd.f32 %v8908, %v8909
        %v8911 = vsel %vm8897, %v8703, 0.0
        %v8912 = vadd.f32 %v8910, %v8911
        %v8913 = vsel %vm8897, %v8711, 0.0
        %v8914 = vadd.f32 %v8912, %v8913
        %v8915 = vsel %vm8897, %v8719, 0.0
        %v8916 = vadd.f32 %v8914, %v8915
        %v8917 = vsel %vm8897, %v8727, 0.0
        %v8918 = vadd.f32 %v8916, %v8917
        %v8919 = vsel %vm8897, %v8735, 0.0
        %v8920 = vadd.f32 %v8918, %v8919
        %v8921 = vsel %vm8897, %v8743, 0.0
        %v8922 = vadd.f32 %v8920, %v8921
        %v8923 = vsel %vm8897, %v8751, 0.0
        %v8924 = vadd.f32 %v8922, %v8923
        %v8925 = vsel %vm8897, %v8759, 0.0
        %v8926 = vadd.f32 %v8924, %v8925
        %v8929 = vrot.slane %v8926, 1
        %v8930 = vrot.slane %v8888, 1
        %v8931 = vsel %vm1136, %v8929, %v8930
        %v8934 = vsel %vm2045, %v8931, 0.0
        %v8935 = vsel %vm8821, %v8930, 0.0
        %v8936 = vadd.f32 %v8934, %v8935
        %v8937 = vrot.slane %v8936, 4
        %v8938 = vadd.f32 %v8936, %v8937
        %v8939 = vrot.slane %v8938, 2
        %v8940 = vadd.f32 %v8938, %v8939
        %v8941 = vrot.slane %v8940, 1
        %v8942 = vadd.f32 %v8940, %v8941
        %v8943 = vsel %vm2045, %v8767, 0.0
        %v8944 = vadd.f32 %v8820, %v8943
        %v8945 = vsel %vm8821, %v8770, 0.0
        %v8946 = vadd.f32 %v8850, %v8945
        %v8947 = vsel %vm2045, %v8944, 0.0
        %v8948 = vsel %vm8821, %v8946, 0.0
        %v8949 = vadd.f32 %v8947, %v8948
        %v8950 = vrot.slane %v8949, 4
        %v8951 = vadd.f32 %v8949, %v8950
        %v8952 = vrot.slane %v8951, 2
        %v8953 = vadd.f32 %v8951, %v8952
        %v8954 = vrot.slane %v8953, 1
        %v8955 = vadd.f32 %v8953, %v8954
        %v8956 = vsel %vm2045, %v8770, 0.0
        %v8957 = vadd.f32 %v8888, %v8956
        %v8958 = vsel %vm2045, %v8957, 0.0
        %v8959 = vadd.f32 %v8947, %v8958
        %v8960 = vrot.slane %v8959, 4
        %v8961 = vadd.f32 %v8959, %v8960
        %v8962 = vrot.slane %v8961, 2
        %v8963 = vadd.f32 %v8961, %v8962
        %v8964 = vrot.slane %v8963, 1
        %v8965 = vadd.f32 %v8963, %v8964
        %v8966 = vsel %vm8897, %v8767, 0.0
        %v8967 = vadd.f32 %v8926, %v8966
        %v8970 = vrot.slane %v8967, 1
        %v8971 = vrot.slane %v8957, 1
        %v8972 = vsel %vm1136, %v8970, %v8971
        %v8975 = vsel %vm2045, %v8972, 0.0
        %v8976 = vsel %vm8821, %v8971, 0.0
        %v8977 = vadd.f32 %v8975, %v8976
        %v8978 = vrot.slane %v8977, 4
        %v8979 = vadd.f32 %v8977, %v8978
        %v8980 = vrot.slane %v8979, 2
        %v8981 = vadd.f32 %v8979, %v8980
        %v8982 = vrot.slane %v8981, 1
        %v8983 = vadd.f32 %v8981, %v8982
        %v8984 = vadd.f32 %v8793, %v8795
        %v8985 = vadd.f32 %v8984, %v8797
        %v8986 = vadd.f32 %v8985, %v8799
        %v8987 = vadd.f32 %v8986, %v8801
        %v8988 = vadd.f32 %v8987, %v8803
        %v8989 = vadd.f32 %v8988, %v8805
        %v8990 = vadd.f32 %v8989, %v8807
        %v8991 = vadd.f32 %v8990, %v8809
        %v8992 = vadd.f32 %v8991, %v8811
        %v8993 = vadd.f32 %v8992, %v8813
        %v8994 = vadd.f32 %v8993, %v8815
        %v8995 = vadd.f32 %v8994, %v8817
        %v8996 = vadd.f32 %v8995, %v8819
        %v8997 = vadd.f32 %v8996, %v8943
        %v8998 = vadd.f32 %v8823, %v8825
        %v8999 = vadd.f32 %v8998, %v8827
        %v9000 = vadd.f32 %v8999, %v8829
        %v9001 = vadd.f32 %v9000, %v8831
        %v9002 = vadd.f32 %v9001, %v8833
        %v9003 = vadd.f32 %v9002, %v8835
        %v9004 = vadd.f32 %v9003, %v8837
        %v9005 = vadd.f32 %v9004, %v8839
        %v9006 = vadd.f32 %v9005, %v8841
        %v9007 = vadd.f32 %v9006, %v8843
        %v9008 = vadd.f32 %v9007, %v8845
        %v9009 = vadd.f32 %v9008, %v8847
        %v9010 = vadd.f32 %v9009, %v8849
        %v9011 = vadd.f32 %v9010, %v8945
        %v9012 = vsel %vm2045, %v8997, 0.0
        %v9013 = vsel %vm8821, %v9011, 0.0
        %v9014 = vadd.f32 %v9012, %v9013
        %v9015 = vrot.slane %v9014, 4
        %v9016 = vadd.f32 %v9014, %v9015
        %v9017 = vrot.slane %v9016, 2
        %v9018 = vadd.f32 %v9016, %v9017
        %v9019 = vrot.slane %v9018, 1
        %v9020 = vadd.f32 %v9018, %v9019
        %v9021 = vadd.f32 %v8861, %v8863
        %v9022 = vadd.f32 %v9021, %v8865
        %v9023 = vadd.f32 %v9022, %v8867
        %v9024 = vadd.f32 %v9023, %v8869
        %v9025 = vadd.f32 %v9024, %v8871
        %v9026 = vadd.f32 %v9025, %v8873
        %v9027 = vadd.f32 %v9026, %v8875
        %v9028 = vadd.f32 %v9027, %v8877
        %v9029 = vadd.f32 %v9028, %v8879
        %v9030 = vadd.f32 %v9029, %v8881
        %v9031 = vadd.f32 %v9030, %v8883
        %v9032 = vadd.f32 %v9031, %v8885
        %v9033 = vadd.f32 %v9032, %v8887
        %v9034 = vadd.f32 %v9033, %v8956
        %v9035 = vsel %vm2045, %v9034, 0.0
        %v9036 = vadd.f32 %v9012, %v9035
        %v9037 = vrot.slane %v9036, 4
        %v9038 = vadd.f32 %v9036, %v9037
        %v9039 = vrot.slane %v9038, 2
        %v9040 = vadd.f32 %v9038, %v9039
        %v9041 = vrot.slane %v9040, 1
        %v9042 = vadd.f32 %v9040, %v9041
        %v9043 = vadd.f32 %v8899, %v8901
        %v9044 = vadd.f32 %v9043, %v8903
        %v9045 = vadd.f32 %v9044, %v8905
        %v9046 = vadd.f32 %v9045, %v8907
        %v9047 = vadd.f32 %v9046, %v8909
        %v9048 = vadd.f32 %v9047, %v8911
        %v9049 = vadd.f32 %v9048, %v8913
        %v9050 = vadd.f32 %v9049, %v8915
        %v9051 = vadd.f32 %v9050, %v8917
        %v9052 = vadd.f32 %v9051, %v8919
        %v9053 = vadd.f32 %v9052, %v8921
        %v9054 = vadd.f32 %v9053, %v8923
        %v9055 = vadd.f32 %v9054, %v8925
        %v9056 = vadd.f32 %v9055, %v8966
        %v9059 = vrot.slane %v9056, 1
        %v9060 = vrot.slane %v9034, 1
        %v9061 = vsel %vm1136, %v9059, %v9060
        %v9064 = vsel %vm2045, %v9061, 0.0
        %v9065 = vsel %vm8821, %v9060, 0.0
        %v9066 = vadd.f32 %v9064, %v9065
        %v9067 = vrot.slane %v9066, 4
        %v9068 = vadd.f32 %v9066, %v9067
        %v9069 = vrot.slane %v9068, 2
        %v9070 = vadd.f32 %v9068, %v9069
        %v9071 = vrot.slane %v9070, 1
        %v9072 = vadd.f32 %v9070, %v9071
        %9074 = vrot.lane.b32.xlu0 %v8896, 16
        %v9075 = vpop.permute.xlu0 %9074
        %9078 = vrot.lane.b32.xlu0 %v8942, 32
        %v9079 = vpop.permute.xlu0 %9078
        %9082 = vrot.lane.b32.xlu0 %v8955, 48
        %v9083 = vpop.permute.xlu0 %9082
        %9086 = vrot.lane.b32.xlu0 %v8965, 64
        %v9087 = vpop.permute.xlu0 %9086
        %9090 = vrot.lane.b32.xlu0 %v8983, 80
        %v9091 = vpop.permute.xlu0 %9090
        %9094 = vrot.lane.b32.xlu0 %v9020, 96
        %v9095 = vpop.permute.xlu0 %9094
        %9098 = vrot.lane.b32.xlu0 %v9042, 112
        %v9099 = vpop.permute.xlu0 %9098
        %v9101 = vsel %vm2045, %v8859, %v9075
        %v9102 = vsel %vm2077, %v9101, %v9079
        %v9103 = vsel %vm2109, %v9102, %v9083
        %v9104 = vsel %vm2142, %v9103, %v9087
        %v9105 = vsel %vm2175, %v9104, %v9091
        %v9106 = vsel %vm2208, %v9105, %v9095
        %v9107 = vsel %vm2241, %v9106, %v9099
        %v9109 = vsel %vm2045, %v9072, 0
        %9111 = vmatprep.subr.mxu0 0.0
        %9112 = vmatpush1.msra.mxu0 %v8788
        %9113 = vmatprep.subr.mxu0 0.0
        %9114 = vmatpush1.msra.mxu0 %v8787
        %9115 = vmatprep.subr.mxu0 0.0
        %9116 = vmatpush1.msra.mxu0 %v8786
        %9117 = vmatprep.subr.mxu0 0.0
        %9118 = vmatpush1.msra.mxu0 %v8785
        %9119 = vmatprep.subr.mxu0 0.0
        %9120 = vmatpush1.msra.mxu0 %v8784
        %9121 = vmatprep.subr.mxu0 0.0
        %9122 = vmatpush1.msra.mxu0 %v8783
        %9123 = vmatprep.subr.mxu0 0.0
        %9124 = vmatpush1.msra.mxu0 %v8782
        %9125 = vmatprep.subr.mxu0 0.0
        %9126 = vmatpush1.msra.mxu0 %v8781
        %9127 = vmatprep.subr.mxu0 0.0
        %9128 = vmatpush1.msra.mxu0 %v8780
        %9129 = vmatprep.subr.mxu0 0.0
        %9130 = vmatpush1.msra.mxu0 %v8779
        %9131 = vmatprep.subr.mxu0 0.0
        %9132 = vmatpush1.msra.mxu0 %v8778
        %9133 = vmatprep.subr.mxu0 0.0
        %9134 = vmatpush1.msra.mxu0 %v8777
        %9135 = vmatprep.subr.mxu0 0.0
        %9136 = vmatpush1.msra.mxu0 %v8776
        %9137 = vmatprep.subr.mxu0 0.0
        %9138 = vmatpush1.msra.mxu0 %v8775
        %9139 = vmatprep.subr.mxu0 0.0
        %9140 = vmatpush1.msra.mxu0 %v8774
        %9141 = vmatprep.subr.mxu0 0.0
        %9142 = vmatpush1.msra.mxu0 %v8773
        %9143 = vmatprep.subr.mxu0 0.0
        %9144 = vmatpush2.msra.mxu0 0.0
        %9145 = vmatprep.subr.mxu0 0.0
        %9146 = vmatpush2.msra.mxu0 0.0
        %9147 = vmatprep.subr.mxu0 0.0
        %9148 = vmatpush2.msra.mxu0 0.0
        %9149 = vmatprep.subr.mxu0 0.0
        %9150 = vmatpush2.msra.mxu0 0.0
        %9151 = vmatprep.subr.mxu0 0.0
        %9152 = vmatpush2.msra.mxu0 0.0
        %9153 = vmatprep.subr.mxu0 0.0
        %9154 = vmatpush2.msra.mxu0 0.0
        %9155 = vmatprep.subr.mxu0 0.0
        %9156 = vmatpush2.msra.mxu0 0.0
        %9157 = vmatprep.subr.mxu0 0.0
        %9158 = vmatpush2.msra.mxu0 0.0
        %9159 = vmatprep.subr.mxu0 0.0
        %9160 = vmatpush2.msra.mxu0 0.0
        %9161 = vmatprep.subr.mxu0 0.0
        %9162 = vmatpush2.msra.mxu0 0.0
        %9163 = vmatprep.subr.mxu0 0.0
        %9164 = vmatpush2.msra.mxu0 0.0
        %9165 = vmatprep.subr.mxu0 0.0
        %9166 = vmatpush2.msra.mxu0 0.0
        %9167 = vmatprep.subr.mxu0 0.0
        %9168 = vmatpush2.msra.mxu0 0.0
        %9169 = vmatprep.subr.mxu0 0.0
        %9170 = vmatpush2.msra.mxu0 0.0
        %9171 = vmatprep.subr.mxu0 0.0
        %9172 = vmatpush2.msra.mxu0 %v8790
        %9173 = vmatprep.subr.mxu0 0.0
        %9174 = vmatpush2.msra.mxu0 %v8789
        %9175 = vmatprep.mubr.f32.mxu0 %v9109
        %9176 = vmatmul.mubr.f32.gmra.mxu0 %v9107
        %v9177 = vpop.f32.mrf.mxu0
        %v9178 = vadd.f32 0.0, %v9177
        %v9179 = vpop.f32.mrf.mxu0
        %9180 = vdwg.mxu0
        %v9181 = vmul.f32 %v9178, 0.00390625
        %v9182 = vadd.f32 %v9181, %v8791
        %v9183 = vld [vmem:[%s15] sm:$0xff]
        %v9184 = vld [vmem:[%s15 + $0x8] sm:$0xff]
        %v9185 = vld [vmem:[%s15 + $0x10] sm:$0xff]
        %v9186 = vld [vmem:[%s15 + $0x18] sm:$0xff]
        %v9187 = vld [vmem:[%s15 + $0x20] sm:$0xff]
        %v9188 = vld [vmem:[%s15 + $0x28] sm:$0xff]
        %v9189 = vld [vmem:[%s15 + $0x30] sm:$0xff]
        %v9190 = vld [vmem:[%s15 + $0x38] sm:$0xff]
        %v9191 = vld [vmem:[%s15 + $0x40] sm:$0xff]
        %v9192 = vld [vmem:[%s15 + $0x48] sm:$0xff]
        %v9193 = vld [vmem:[%s15 + $0x50] sm:$0xff]
        %v9194 = vld [vmem:[%s15 + $0x58] sm:$0xff]
        %v9195 = vld [vmem:[%s15 + $0x60] sm:$0xff]
        %v9196 = vld [vmem:[%s15 + $0x68] sm:$0xff]
        %v9197 = vld [vmem:[%s15 + $0x70] sm:$0xff]
        %v9198 = vld [vmem:[%s15 + $0x78] sm:$0xff]
        %v9199 = vld [vmem:[%s15 + $0x80] sm:$0xff]
        %v9200 = vld [vmem:[%s15 + $0x88] sm:$0xff]
        %v9201 = vld [vmem:[%s15 + $0x90] sm:$0xff]
        %v9202 = vld [vmem:[%s15 + $0x98] sm:$0xff]
        %v9203 = vld [vmem:[%s15 + $0xa0] sm:$0xff]
        %v9204 = vld [vmem:[%s15 + $0xa8] sm:$0xff]
        %v9205 = vld [vmem:[%s15 + $0xb0] sm:$0xff]
        %v9206 = vld [vmem:[%s15 + $0xb8] sm:$0xff]
        %v9207 = vld [vmem:[%s15 + $0xc0] sm:$0xff]
        %v9208 = vld [vmem:[%s15 + $0xc8] sm:$0xff]
        %v9209 = vld [vmem:[%s15 + $0xd0] sm:$0xff]
        %v9210 = vld [vmem:[%s15 + $0xd8] sm:$0xff]
        %v9211 = vld [vmem:[%s15 + $0xe0] sm:$0xff]
        %v9212 = vld [vmem:[%s15 + $0xe8] sm:$0xff]
        %v9213 = vld [vmem:[%s15 + $0xf0] sm:$0xff]
        %v9214 = vld [vmem:[%s15 + $0xf8] sm:$0xff]
        %v9215 = vld [vmem:[%s15 + $0x100] sm:$0xff]
        %v9216 = vld [vmem:[%s15 + $0x108] sm:$0xff]
        %v9217 = vld [vmem:[%s15 + $0x110] sm:$0xff]
        %v9218 = vld [vmem:[%s15 + $0x118] sm:$0xff]
        %v9219 = vld [vmem:[%s15 + $0x120] sm:$0xff]
        %v9220 = vld [vmem:[%s15 + $0x128] sm:$0xff]
        %v9221 = vld [vmem:[%s15 + $0x130] sm:$0xff]
        %v9222 = vld [vmem:[%s15 + $0x138] sm:$0xff]
        %v9223 = vld [vmem:[%s15 + $0x140] sm:$0xff]
        %v9224 = vld [vmem:[%s15 + $0x148] sm:$0xff]
        %v9225 = vld [vmem:[%s15 + $0x150] sm:$0xff]
        %v9226 = vld [vmem:[%s15 + $0x158] sm:$0xff]
        %v9227 = vld [vmem:[%s15 + $0x160] sm:$0xff]
        %v9228 = vld [vmem:[%s15 + $0x168] sm:$0xff]
        %v9229 = vld [vmem:[%s15 + $0x170] sm:$0xff]
        %v9230 = vld [vmem:[%s15 + $0x178] sm:$0xff]
        %v9231 = vld [vmem:[%s15 + $0x180] sm:$0xff]
        %v9232 = vld [vmem:[%s15 + $0x188] sm:$0xff]
        %v9233 = vld [vmem:[%s16] sm:$0x1]
        %vm9234 = vcmask 261248
        %v9235 = vsel %vm9234, %v8647, 0.0
        %v9236 = vsel %vm9234, %v8655, 0.0
        %v9237 = vadd.f32 %v9235, %v9236
        %v9238 = vsel %vm9234, %v8663, 0.0
        %v9239 = vadd.f32 %v9237, %v9238
        %v9240 = vsel %vm9234, %v8671, 0.0
        %v9241 = vadd.f32 %v9239, %v9240
        %v9242 = vsel %vm9234, %v8679, 0.0
        %v9243 = vadd.f32 %v9241, %v9242
        %v9244 = vsel %vm9234, %v8687, 0.0
        %v9245 = vadd.f32 %v9243, %v9244
        %v9246 = vsel %vm9234, %v8695, 0.0
        %v9247 = vadd.f32 %v9245, %v9246
        %v9248 = vsel %vm9234, %v8703, 0.0
        %v9249 = vadd.f32 %v9247, %v9248
        %v9250 = vsel %vm9234, %v8711, 0.0
        %v9251 = vadd.f32 %v9249, %v9250
        %v9252 = vsel %vm9234, %v8719, 0.0
        %v9253 = vadd.f32 %v9251, %v9252
        %v9254 = vsel %vm9234, %v8727, 0.0
        %v9255 = vadd.f32 %v9253, %v9254
        %v9256 = vsel %vm9234, %v8735, 0.0
        %v9257 = vadd.f32 %v9255, %v9256
        %v9258 = vsel %vm9234, %v8743, 0.0
        %v9259 = vadd.f32 %v9257, %v9258
        %v9260 = vsel %vm9234, %v8751, 0.0
        %v9261 = vadd.f32 %v9259, %v9260
        %vm9262 = vcmask 259200
        %v9263 = vsel %vm9262, %v8650, 0.0
        %v9264 = vsel %vm9262, %v8658, 0.0
        %v9265 = vadd.f32 %v9263, %v9264
        %v9266 = vsel %vm9262, %v8666, 0.0
        %v9267 = vadd.f32 %v9265, %v9266
        %v9268 = vsel %vm9262, %v8674, 0.0
        %v9269 = vadd.f32 %v9267, %v9268
        %v9270 = vsel %vm9262, %v8682, 0.0
        %v9271 = vadd.f32 %v9269, %v9270
        %v9272 = vsel %vm9262, %v8690, 0.0
        %v9273 = vadd.f32 %v9271, %v9272
        %v9274 = vsel %vm9262, %v8698, 0.0
        %v9275 = vadd.f32 %v9273, %v9274
        %v9276 = vsel %vm9262, %v8706, 0.0
        %v9277 = vadd.f32 %v9275, %v9276
        %v9278 = vsel %vm9262, %v8714, 0.0
        %v9279 = vadd.f32 %v9277, %v9278
        %v9280 = vsel %vm9262, %v8722, 0.0
        %v9281 = vadd.f32 %v9279, %v9280
        %v9282 = vsel %vm9262, %v8730, 0.0
        %v9283 = vadd.f32 %v9281, %v9282
        %v9284 = vsel %vm9262, %v8738, 0.0
        %v9285 = vadd.f32 %v9283, %v9284
        %v9286 = vsel %vm9262, %v8746, 0.0
        %v9287 = vadd.f32 %v9285, %v9286
        %v9288 = vsel %vm9262, %v8754, 0.0
        %v9289 = vadd.f32 %v9287, %v9288
        %v9290 = vsel %vm9234, %v9261, 0.0
        %v9291 = vsel %vm9262, %v9289, 0.0
        %v9292 = vadd.f32 %v9290, %v9291
        %v9293 = vrot.slane %v9292, 4
        %v9294 = vadd.f32 %v9292, %v9293
        %v9295 = vrot.slane %v9294, 2
        %v9296 = vadd.f32 %v9294, %v9295
        %v9297 = vrot.slane %v9296, 1
        %v9298 = vadd.f32 %v9296, %v9297
        %vm9299 = vcmask 260224
        %v9300 = vsel %vm9299, %v8650, 0.0
        %v9301 = vsel %vm9299, %v8658, 0.0
        %v9302 = vadd.f32 %v9300, %v9301
        %v9303 = vsel %vm9299, %v8666, 0.0
        %v9304 = vadd.f32 %v9302, %v9303
        %v9305 = vsel %vm9299, %v8674, 0.0
        %v9306 = vadd.f32 %v9304, %v9305
        %v9307 = vsel %vm9299, %v8682, 0.0
        %v9308 = vadd.f32 %v9306, %v9307
        %v9309 = vsel %vm9299, %v8690, 0.0
        %v9310 = vadd.f32 %v9308, %v9309
        %v9311 = vsel %vm9299, %v8698, 0.0
        %v9312 = vadd.f32 %v9310, %v9311
        %v9313 = vsel %vm9299, %v8706, 0.0
        %v9314 = vadd.f32 %v9312, %v9313
        %v9315 = vsel %vm9299, %v8714, 0.0
        %v9316 = vadd.f32 %v9314, %v9315
        %v9317 = vsel %vm9299, %v8722, 0.0
        %v9318 = vadd.f32 %v9316, %v9317
        %v9319 = vsel %vm9299, %v8730, 0.0
        %v9320 = vadd.f32 %v9318, %v9319
        %v9321 = vsel %vm9299, %v8738, 0.0
        %v9322 = vadd.f32 %v9320, %v9321
        %v9323 = vsel %vm9299, %v8746, 0.0
        %v9324 = vadd.f32 %v9322, %v9323
        %v9325 = vsel %vm9299, %v8754, 0.0
        %v9326 = vadd.f32 %v9324, %v9325
        %v9327 = vsel %vm9299, %v9326, 0.0
        %v9328 = vadd.f32 %v9290, %v9327
        %v9329 = vrot.slane %v9328, 4
        %v9330 = vadd.f32 %v9328, %v9329
        %v9331 = vrot.slane %v9330, 2
        %v9332 = vadd.f32 %v9330, %v9331
        %v9333 = vrot.slane %v9332, 1
        %v9334 = vadd.f32 %v9332, %v9333
        %v9335 = vsel %vm9234, %v8650, 0.0
        %v9336 = vsel %vm9234, %v8658, 0.0
        %v9337 = vadd.f32 %v9335, %v9336
        %v9338 = vsel %vm9234, %v8666, 0.0
        %v9339 = vadd.f32 %v9337, %v9338
        %v9340 = vsel %vm9234, %v8674, 0.0
        %v9341 = vadd.f32 %v9339, %v9340
        %v9342 = vsel %vm9234, %v8682, 0.0
        %v9343 = vadd.f32 %v9341, %v9342
        %v9344 = vsel %vm9234, %v8690, 0.0
        %v9345 = vadd.f32 %v9343, %v9344
        %v9346 = vsel %vm9234, %v8698, 0.0
        %v9347 = vadd.f32 %v9345, %v9346
        %v9348 = vsel %vm9234, %v8706, 0.0
        %v9349 = vadd.f32 %v9347, %v9348
        %v9350 = vsel %vm9234, %v8714, 0.0
        %v9351 = vadd.f32 %v9349, %v9350
        %v9352 = vsel %vm9234, %v8722, 0.0
        %v9353 = vadd.f32 %v9351, %v9352
        %v9354 = vsel %vm9234, %v8730, 0.0
        %v9355 = vadd.f32 %v9353, %v9354
        %v9356 = vsel %vm9234, %v8738, 0.0
        %v9357 = vadd.f32 %v9355, %v9356
        %v9358 = vsel %vm9234, %v8746, 0.0
        %v9359 = vadd.f32 %v9357, %v9358
        %v9360 = vsel %vm9234, %v8754, 0.0
        %v9361 = vadd.f32 %v9359, %v9360
        %v9362 = vsel %vm9234, %v9361, 0.0
        %v9363 = vadd.f32 %v9290, %v9362
        %v9364 = vrot.slane %v9363, 4
        %v9365 = vadd.f32 %v9363, %v9364
        %v9366 = vrot.slane %v9365, 2
        %v9367 = vadd.f32 %v9365, %v9366
        %v9368 = vrot.slane %v9367, 1
        %v9369 = vadd.f32 %v9367, %v9368
        %vm9370 = vcmask 261249
        %v9371 = vsel %vm9370, %v8647, 0.0
        %v9372 = vsel %vm9370, %v8655, 0.0
        %v9373 = vadd.f32 %v9371, %v9372
        %v9374 = vsel %vm9370, %v8663, 0.0
        %v9375 = vadd.f32 %v9373, %v9374
        %v9376 = vsel %vm9370, %v8671, 0.0
        %v9377 = vadd.f32 %v9375, %v9376
        %v9378 = vsel %vm9370, %v8679, 0.0
        %v9379 = vadd.f32 %v9377, %v9378
        %v9380 = vsel %vm9370, %v8687, 0.0
        %v9381 = vadd.f32 %v9379, %v9380
        %v9382 = vsel %vm9370, %v8695, 0.0
        %v9383 = vadd.f32 %v9381, %v9382
        %v9384 = vsel %vm9370, %v8703, 0.0
        %v9385 = vadd.f32 %v9383, %v9384
        %v9386 = vsel %vm9370, %v8711, 0.0
        %v9387 = vadd.f32 %v9385, %v9386
        %v9388 = vsel %vm9370, %v8719, 0.0
        %v9389 = vadd.f32 %v9387, %v9388
        %v9390 = vsel %vm9370, %v8727, 0.0
        %v9391 = vadd.f32 %v9389, %v9390
        %v9392 = vsel %vm9370, %v8735, 0.0
        %v9393 = vadd.f32 %v9391, %v9392
        %v9394 = vsel %vm9370, %v8743, 0.0
        %v9395 = vadd.f32 %v9393, %v9394
        %v9396 = vsel %vm9370, %v8751, 0.0
        %v9397 = vadd.f32 %v9395, %v9396
        %v9400 = vrot.slane %v9397, 1
        %v9401 = vrot.slane %v9361, 1
        %v9402 = vsel %vm1136, %v9400, %v9401
        %v9405 = vsel %vm9234, %v9402, 0.0
        %v9406 = vsel %vm9299, %v9401, 0.0
        %v9407 = vadd.f32 %v9405, %v9406
        %v9408 = vrot.slane %v9407, 4
        %v9409 = vadd.f32 %v9407, %v9408
        %v9410 = vrot.slane %v9409, 2
        %v9411 = vadd.f32 %v9409, %v9410
        %v9412 = vrot.slane %v9411, 1
        %v9413 = vadd.f32 %v9411, %v9412
        %vm9414 = vcmask 261250
        %v9415 = vsel %vm9414, %v8647, 0.0
        %v9416 = vsel %vm9414, %v8655, 0.0
        %v9417 = vadd.f32 %v9415, %v9416
        %v9418 = vsel %vm9414, %v8663, 0.0
        %v9419 = vadd.f32 %v9417, %v9418
        %v9420 = vsel %vm9414, %v8671, 0.0
        %v9421 = vadd.f32 %v9419, %v9420
        %v9422 = vsel %vm9414, %v8679, 0.0
        %v9423 = vadd.f32 %v9421, %v9422
        %v9424 = vsel %vm9414, %v8687, 0.0
        %v9425 = vadd.f32 %v9423, %v9424
        %v9426 = vsel %vm9414, %v8695, 0.0
        %v9427 = vadd.f32 %v9425, %v9426
        %v9428 = vsel %vm9414, %v8703, 0.0
        %v9429 = vadd.f32 %v9427, %v9428
        %v9430 = vsel %vm9414, %v8711, 0.0
        %v9431 = vadd.f32 %v9429, %v9430
        %v9432 = vsel %vm9414, %v8719, 0.0
        %v9433 = vadd.f32 %v9431, %v9432
        %v9434 = vsel %vm9414, %v8727, 0.0
        %v9435 = vadd.f32 %v9433, %v9434
        %v9436 = vsel %vm9414, %v8735, 0.0
        %v9437 = vadd.f32 %v9435, %v9436
        %v9438 = vsel %vm9414, %v8743, 0.0
        %v9439 = vadd.f32 %v9437, %v9438
        %v9440 = vsel %vm9414, %v8751, 0.0
        %v9441 = vadd.f32 %v9439, %v9440
        %v9443 = vrot.slane %v9441, 2
        %v9444 = vrot.slane %v9361, 2
        %v9445 = vsel %vm3137, %v9443, %v9444
        %v9448 = vsel %vm9234, %v9445, 0.0
        %v9449 = vsel %vm9262, %v9444, 0.0
        %v9450 = vadd.f32 %v9448, %v9449
        %v9451 = vrot.slane %v9450, 4
        %v9452 = vadd.f32 %v9450, %v9451
        %v9453 = vrot.slane %v9452, 2
        %v9454 = vadd.f32 %v9452, %v9453
        %v9455 = vrot.slane %v9454, 1
        %v9456 = vadd.f32 %v9454, %v9455
        %v9457 = vsel %vm9234, %v8759, 0.0
        %v9458 = vadd.f32 %v9261, %v9457
        %v9459 = vsel %vm9262, %v8762, 0.0
        %v9460 = vadd.f32 %v9289, %v9459
        %v9461 = vsel %vm9234, %v9458, 0.0
        %v9462 = vsel %vm9262, %v9460, 0.0
        %v9463 = vadd.f32 %v9461, %v9462
        %v9464 = vrot.slane %v9463, 4
        %v9465 = vadd.f32 %v9463, %v9464
        %v9466 = vrot.slane %v9465, 2
        %v9467 = vadd.f32 %v9465, %v9466
        %v9468 = vrot.slane %v9467, 1
        %v9469 = vadd.f32 %v9467, %v9468
        %v9470 = vsel %vm9299, %v8762, 0.0
        %v9471 = vadd.f32 %v9326, %v9470
        %v9472 = vsel %vm9299, %v9471, 0.0
        %v9473 = vadd.f32 %v9461, %v9472
        %v9474 = vrot.slane %v9473, 4
        %v9475 = vadd.f32 %v9473, %v9474
        %v9476 = vrot.slane %v9475, 2
        %v9477 = vadd.f32 %v9475, %v9476
        %v9478 = vrot.slane %v9477, 1
        %v9479 = vadd.f32 %v9477, %v9478
        %v9480 = vsel %vm9234, %v8762, 0.0
        %v9481 = vadd.f32 %v9361, %v9480
        %v9482 = vsel %vm9234, %v9481, 0.0
        %v9483 = vadd.f32 %v9461, %v9482
        %v9484 = vrot.slane %v9483, 4
        %v9485 = vadd.f32 %v9483, %v9484
        %v9486 = vrot.slane %v9485, 2
        %v9487 = vadd.f32 %v9485, %v9486
        %v9488 = vrot.slane %v9487, 1
        %v9489 = vadd.f32 %v9487, %v9488
        %v9490 = vsel %vm9370, %v8759, 0.0
        %v9491 = vadd.f32 %v9397, %v9490
        %v9494 = vrot.slane %v9491, 1
        %v9495 = vrot.slane %v9481, 1
        %v9496 = vsel %vm1136, %v9494, %v9495
        %v9499 = vsel %vm9234, %v9496, 0.0
        %v9500 = vsel %vm9299, %v9495, 0.0
        %v9501 = vadd.f32 %v9499, %v9500
        %v9502 = vrot.slane %v9501, 4
        %v9503 = vadd.f32 %v9501, %v9502
        %v9504 = vrot.slane %v9503, 2
        %v9505 = vadd.f32 %v9503, %v9504
        %v9506 = vrot.slane %v9505, 1
        %v9507 = vadd.f32 %v9505, %v9506
        %v9508 = vsel %vm9414, %v8759, 0.0
        %v9509 = vadd.f32 %v9441, %v9508
        %v9511 = vrot.slane %v9509, 2
        %v9512 = vrot.slane %v9481, 2
        %v9513 = vsel %vm3137, %v9511, %v9512
        %v9516 = vsel %vm9234, %v9513, 0.0
        %v9517 = vsel %vm9262, %v9512, 0.0
        %v9518 = vadd.f32 %v9516, %v9517
        %v9519 = vrot.slane %v9518, 4
        %v9520 = vadd.f32 %v9518, %v9519
        %v9521 = vrot.slane %v9520, 2
        %v9522 = vadd.f32 %v9520, %v9521
        %v9523 = vrot.slane %v9522, 1
        %v9524 = vadd.f32 %v9522, %v9523
        %v9525 = vsel %vm9234, %v8767, 0.0
        %v9526 = vadd.f32 %v9458, %v9525
        %v9527 = vsel %vm9262, %v8770, 0.0
        %v9528 = vadd.f32 %v9460, %v9527
        %v9529 = vsel %vm9234, %v9526, 0.0
        %v9530 = vsel %vm9262, %v9528, 0.0
        %v9531 = vadd.f32 %v9529, %v9530
        %v9532 = vrot.slane %v9531, 4
        %v9533 = vadd.f32 %v9531, %v9532
        %v9534 = vrot.slane %v9533, 2
        %v9535 = vadd.f32 %v9533, %v9534
        %v9536 = vrot.slane %v9535, 1
        %v9537 = vadd.f32 %v9535, %v9536
        %v9538 = vsel %vm9299, %v8770, 0.0
        %v9539 = vadd.f32 %v9471, %v9538
        %v9540 = vsel %vm9299, %v9539, 0.0
        %v9541 = vadd.f32 %v9529, %v9540
        %v9542 = vrot.slane %v9541, 4
        %v9543 = vadd.f32 %v9541, %v9542
        %v9544 = vrot.slane %v9543, 2
        %v9545 = vadd.f32 %v9543, %v9544
        %v9546 = vrot.slane %v9545, 1
        %v9547 = vadd.f32 %v9545, %v9546
        %v9548 = vsel %vm9234, %v8770, 0.0
        %v9549 = vadd.f32 %v9481, %v9548
        %v9550 = vsel %vm9234, %v9549, 0.0
        %v9551 = vadd.f32 %v9529, %v9550
        %v9552 = vrot.slane %v9551, 4
        %v9553 = vadd.f32 %v9551, %v9552
        %v9554 = vrot.slane %v9553, 2
        %v9555 = vadd.f32 %v9553, %v9554
        %v9556 = vrot.slane %v9555, 1
        %v9557 = vadd.f32 %v9555, %v9556
        %v9558 = vsel %vm9370, %v8767, 0.0
        %v9559 = vadd.f32 %v9491, %v9558
        %v9562 = vrot.slane %v9559, 1
        %v9563 = vrot.slane %v9549, 1
        %v9564 = vsel %vm1136, %v9562, %v9563
        %v9567 = vsel %vm9234, %v9564, 0.0
        %v9568 = vsel %vm9299, %v9563, 0.0
        %v9569 = vadd.f32 %v9567, %v9568
        %v9570 = vrot.slane %v9569, 4
        %v9571 = vadd.f32 %v9569, %v9570
        %v9572 = vrot.slane %v9571, 2
        %v9573 = vadd.f32 %v9571, %v9572
        %v9574 = vrot.slane %v9573, 1
        %v9575 = vadd.f32 %v9573, %v9574
        %v9576 = vsel %vm9414, %v8767, 0.0
        %v9577 = vadd.f32 %v9509, %v9576
        %v9579 = vrot.slane %v9577, 2
        %v9580 = vrot.slane %v9549, 2
        %v9581 = vsel %vm3137, %v9579, %v9580
        %v9584 = vsel %vm9234, %v9581, 0.0
        %v9585 = vsel %vm9262, %v9580, 0.0
        %v9586 = vadd.f32 %v9584, %v9585
        %v9587 = vrot.slane %v9586, 4
        %v9588 = vadd.f32 %v9586, %v9587
        %v9589 = vrot.slane %v9588, 2
        %v9590 = vadd.f32 %v9588, %v9589
        %v9591 = vrot.slane %v9590, 1
        %v9592 = vadd.f32 %v9590, %v9591
        %v9593 = vadd.f32 %v9236, %v9238
        %v9594 = vadd.f32 %v9593, %v9240
        %v9595 = vadd.f32 %v9594, %v9242
        %v9596 = vadd.f32 %v9595, %v9244
        %v9597 = vadd.f32 %v9596, %v9246
        %v9598 = vadd.f32 %v9597, %v9248
        %v9599 = vadd.f32 %v9598, %v9250
        %v9600 = vadd.f32 %v9599, %v9252
        %v9601 = vadd.f32 %v9600, %v9254
        %v9602 = vadd.f32 %v9601, %v9256
        %v9603 = vadd.f32 %v9602, %v9258
        %v9604 = vadd.f32 %v9603, %v9260
        %v9605 = vadd.f32 %v9604, %v9457
        %v9606 = vadd.f32 %v9605, %v9525
        %v9607 = vadd.f32 %v9264, %v9266
        %v9608 = vadd.f32 %v9607, %v9268
        %v9609 = vadd.f32 %v9608, %v9270
        %v9610 = vadd.f32 %v9609, %v9272
        %v9611 = vadd.f32 %v9610, %v9274
        %v9612 = vadd.f32 %v9611, %v9276
        %v9613 = vadd.f32 %v9612, %v9278
        %v9614 = vadd.f32 %v9613, %v9280
        %v9615 = vadd.f32 %v9614, %v9282
        %v9616 = vadd.f32 %v9615, %v9284
        %v9617 = vadd.f32 %v9616, %v9286
        %v9618 = vadd.f32 %v9617, %v9288
        %v9619 = vadd.f32 %v9618, %v9459
        %v9620 = vadd.f32 %v9619, %v9527
        %v9621 = vsel %vm9234, %v9606, 0.0
        %v9622 = vsel %vm9262, %v9620, 0.0
        %v9623 = vadd.f32 %v9621, %v9622
        %v9624 = vrot.slane %v9623, 4
        %v9625 = vadd.f32 %v9623, %v9624
        %v9626 = vrot.slane %v9625, 2
        %v9627 = vadd.f32 %v9625, %v9626
        %v9628 = vrot.slane %v9627, 1
        %v9629 = vadd.f32 %v9627, %v9628
        %v9630 = vadd.f32 %v9301, %v9303
        %v9631 = vadd.f32 %v9630, %v9305
        %v9632 = vadd.f32 %v9631, %v9307
        %v9633 = vadd.f32 %v9632, %v9309
        %v9634 = vadd.f32 %v9633, %v9311
        %v9635 = vadd.f32 %v9634, %v9313
        %v9636 = vadd.f32 %v9635, %v9315
        %v9637 = vadd.f32 %v9636, %v9317
        %v9638 = vadd.f32 %v9637, %v9319
        %v9639 = vadd.f32 %v9638, %v9321
        %v9640 = vadd.f32 %v9639, %v9323
        %v9641 = vadd.f32 %v9640, %v9325
        %v9642 = vadd.f32 %v9641, %v9470
        %v9643 = vadd.f32 %v9642, %v9538
        %v9644 = vsel %vm9299, %v9643, 0.0
        %v9645 = vadd.f32 %v9621, %v9644
        %v9646 = vrot.slane %v9645, 4
        %v9647 = vadd.f32 %v9645, %v9646
        %v9648 = vrot.slane %v9647, 2
        %v9649 = vadd.f32 %v9647, %v9648
        %v9650 = vrot.slane %v9649, 1
        %v9651 = vadd.f32 %v9649, %v9650
        %v9652 = vadd.f32 %v9336, %v9338
        %v9653 = vadd.f32 %v9652, %v9340
        %v9654 = vadd.f32 %v9653, %v9342
        %v9655 = vadd.f32 %v9654, %v9344
        %v9656 = vadd.f32 %v9655, %v9346
        %v9657 = vadd.f32 %v9656, %v9348
        %v9658 = vadd.f32 %v9657, %v9350
        %v9659 = vadd.f32 %v9658, %v9352
        %v9660 = vadd.f32 %v9659, %v9354
        %v9661 = vadd.f32 %v9660, %v9356
        %v9662 = vadd.f32 %v9661, %v9358
        %v9663 = vadd.f32 %v9662, %v9360
        %v9664 = vadd.f32 %v9663, %v9480
        %v9665 = vadd.f32 %v9664, %v9548
        %v9666 = vsel %vm9234, %v9665, 0.0
        %v9667 = vadd.f32 %v9621, %v9666
        %v9668 = vrot.slane %v9667, 4
        %v9669 = vadd.f32 %v9667, %v9668
        %v9670 = vrot.slane %v9669, 2
        %v9671 = vadd.f32 %v9669, %v9670
        %v9672 = vrot.slane %v9671, 1
        %v9673 = vadd.f32 %v9671, %v9672
        %v9674 = vadd.f32 %v9372, %v9374
        %v9675 = vadd.f32 %v9674, %v9376
        %v9676 = vadd.f32 %v9675, %v9378
        %v9677 = vadd.f32 %v9676, %v9380
        %v9678 = vadd.f32 %v9677, %v9382
        %v9679 = vadd.f32 %v9678, %v9384
        %v9680 = vadd.f32 %v9679, %v9386
        %v9681 = vadd.f32 %v9680, %v9388
        %v9682 = vadd.f32 %v9681, %v9390
        %v9683 = vadd.f32 %v9682, %v9392
        %v9684 = vadd.f32 %v9683, %v9394
        %v9685 = vadd.f32 %v9684, %v9396
        %v9686 = vadd.f32 %v9685, %v9490
        %v9687 = vadd.f32 %v9686, %v9558
        %v9690 = vrot.slane %v9687, 1
        %v9691 = vrot.slane %v9665, 1
        %v9692 = vsel %vm1136, %v9690, %v9691
        %v9695 = vsel %vm9234, %v9692, 0.0
        %v9696 = vsel %vm9299, %v9691, 0.0
        %v9697 = vadd.f32 %v9695, %v9696
        %v9698 = vrot.slane %v9697, 4
        %v9699 = vadd.f32 %v9697, %v9698
        %v9700 = vrot.slane %v9699, 2
        %v9701 = vadd.f32 %v9699, %v9700
        %v9702 = vrot.slane %v9701, 1
        %v9703 = vadd.f32 %v9701, %v9702
        %v9704 = vadd.f32 %v9416, %v9418
        %v9705 = vadd.f32 %v9704, %v9420
        %v9706 = vadd.f32 %v9705, %v9422
        %v9707 = vadd.f32 %v9706, %v9424
        %v9708 = vadd.f32 %v9707, %v9426
        %v9709 = vadd.f32 %v9708, %v9428
        %v9710 = vadd.f32 %v9709, %v9430
        %v9711 = vadd.f32 %v9710, %v9432
        %v9712 = vadd.f32 %v9711, %v9434
        %v9713 = vadd.f32 %v9712, %v9436
        %v9714 = vadd.f32 %v9713, %v9438
        %v9715 = vadd.f32 %v9714, %v9440
        %v9716 = vadd.f32 %v9715, %v9508
        %v9717 = vadd.f32 %v9716, %v9576
        %v9719 = vrot.slane %v9717, 2
        %v9720 = vrot.slane %v9665, 2
        %v9721 = vsel %vm3137, %v9719, %v9720
        %v9724 = vsel %vm9234, %v9721, 0.0
        %v9725 = vsel %vm9262, %v9720, 0.0
        %v9726 = vadd.f32 %v9724, %v9725
        %v9727 = vrot.slane %v9726, 4
        %v9728 = vadd.f32 %v9726, %v9727
        %v9729 = vrot.slane %v9728, 2
        %v9730 = vadd.f32 %v9728, %v9729
        %v9731 = vrot.slane %v9730, 1
        %v9732 = vadd.f32 %v9730, %v9731
        %v9733 = vadd.f32 %v9238, %v9240
        %v9734 = vadd.f32 %v9733, %v9242
        %v9735 = vadd.f32 %v9734, %v9244
        %v9736 = vadd.f32 %v9735, %v9246
        %v9737 = vadd.f32 %v9736, %v9248
        %v9738 = vadd.f32 %v9737, %v9250
        %v9739 = vadd.f32 %v9738, %v9252
        %v9740 = vadd.f32 %v9739, %v9254
        %v9741 = vadd.f32 %v9740, %v9256
        %v9742 = vadd.f32 %v9741, %v9258
        %v9743 = vadd.f32 %v9742, %v9260
        %v9744 = vadd.f32 %v9743, %v9457
        %v9745 = vadd.f32 %v9744, %v9525
        %v9746 = vadd.f32 %v9266, %v9268
        %v9747 = vadd.f32 %v9746, %v9270
        %v9748 = vadd.f32 %v9747, %v9272
        %v9749 = vadd.f32 %v9748, %v9274
        %v9750 = vadd.f32 %v9749, %v9276
        %v9751 = vadd.f32 %v9750, %v9278
        %v9752 = vadd.f32 %v9751, %v9280
        %v9753 = vadd.f32 %v9752, %v9282
        %v9754 = vadd.f32 %v9753, %v9284
        %v9755 = vadd.f32 %v9754, %v9286
        %v9756 = vadd.f32 %v9755, %v9288
        %v9757 = vadd.f32 %v9756, %v9459
        %v9758 = vadd.f32 %v9757, %v9527
        %v9759 = vsel %vm9234, %v9745, 0.0
        %v9760 = vsel %vm9262, %v9758, 0.0
        %v9761 = vadd.f32 %v9759, %v9760
        %v9762 = vrot.slane %v9761, 4
        %v9763 = vadd.f32 %v9761, %v9762
        %v9764 = vrot.slane %v9763, 2
        %v9765 = vadd.f32 %v9763, %v9764
        %v9766 = vrot.slane %v9765, 1
        %v9767 = vadd.f32 %v9765, %v9766
        %v9768 = vadd.f32 %v9303, %v9305
        %v9769 = vadd.f32 %v9768, %v9307
        %v9770 = vadd.f32 %v9769, %v9309
        %v9771 = vadd.f32 %v9770, %v9311
        %v9772 = vadd.f32 %v9771, %v9313
        %v9773 = vadd.f32 %v9772, %v9315
        %v9774 = vadd.f32 %v9773, %v9317
        %v9775 = vadd.f32 %v9774, %v9319
        %v9776 = vadd.f32 %v9775, %v9321
        %v9777 = vadd.f32 %v9776, %v9323
        %v9778 = vadd.f32 %v9777, %v9325
        %v9779 = vadd.f32 %v9778, %v9470
        %v9780 = vadd.f32 %v9779, %v9538
        %v9781 = vsel %vm9299, %v9780, 0.0
        %v9782 = vadd.f32 %v9759, %v9781
        %v9783 = vrot.slane %v9782, 4
        %v9784 = vadd.f32 %v9782, %v9783
        %v9785 = vrot.slane %v9784, 2
        %v9786 = vadd.f32 %v9784, %v9785
        %v9787 = vrot.slane %v9786, 1
        %v9788 = vadd.f32 %v9786, %v9787
        %v9789 = vadd.f32 %v9338, %v9340
        %v9790 = vadd.f32 %v9789, %v9342
        %v9791 = vadd.f32 %v9790, %v9344
        %v9792 = vadd.f32 %v9791, %v9346
        %v9793 = vadd.f32 %v9792, %v9348
        %v9794 = vadd.f32 %v9793, %v9350
        %v9795 = vadd.f32 %v9794, %v9352
        %v9796 = vadd.f32 %v9795, %v9354
        %v9797 = vadd.f32 %v9796, %v9356
        %v9798 = vadd.f32 %v9797, %v9358
        %v9799 = vadd.f32 %v9798, %v9360
        %v9800 = vadd.f32 %v9799, %v9480
        %v9801 = vadd.f32 %v9800, %v9548
        %v9802 = vsel %vm9234, %v9801, 0.0
        %v9803 = vadd.f32 %v9759, %v9802
        %v9804 = vrot.slane %v9803, 4
        %v9805 = vadd.f32 %v9803, %v9804
        %v9806 = vrot.slane %v9805, 2
        %v9807 = vadd.f32 %v9805, %v9806
        %v9808 = vrot.slane %v9807, 1
        %v9809 = vadd.f32 %v9807, %v9808
        %v9810 = vadd.f32 %v9374, %v9376
        %v9811 = vadd.f32 %v9810, %v9378
        %v9812 = vadd.f32 %v9811, %v9380
        %v9813 = vadd.f32 %v9812, %v9382
        %v9814 = vadd.f32 %v9813, %v9384
        %v9815 = vadd.f32 %v9814, %v9386
        %v9816 = vadd.f32 %v9815, %v9388
        %v9817 = vadd.f32 %v9816, %v9390
        %v9818 = vadd.f32 %v9817, %v9392
        %v9819 = vadd.f32 %v9818, %v9394
        %v9820 = vadd.f32 %v9819, %v9396
        %v9821 = vadd.f32 %v9820, %v9490
        %v9822 = vadd.f32 %v9821, %v9558
        %v9825 = vrot.slane %v9822, 1
        %v9826 = vrot.slane %v9801, 1
        %v9827 = vsel %vm1136, %v9825, %v9826
        %v9830 = vsel %vm9234, %v9827, 0.0
        %v9831 = vsel %vm9299, %v9826, 0.0
        %v9832 = vadd.f32 %v9830, %v9831
        %v9833 = vrot.slane %v9832, 4
        %v9834 = vadd.f32 %v9832, %v9833
        %v9835 = vrot.slane %v9834, 2
        %v9836 = vadd.f32 %v9834, %v9835
        %v9837 = vrot.slane %v9836, 1
        %v9838 = vadd.f32 %v9836, %v9837
        %v9839 = vadd.f32 %v9418, %v9420
        %v9840 = vadd.f32 %v9839, %v9422
        %v9841 = vadd.f32 %v9840, %v9424
        %v9842 = vadd.f32 %v9841, %v9426
        %v9843 = vadd.f32 %v9842, %v9428
        %v9844 = vadd.f32 %v9843, %v9430
        %v9845 = vadd.f32 %v9844, %v9432
        %v9846 = vadd.f32 %v9845, %v9434
        %v9847 = vadd.f32 %v9846, %v9436
        %v9848 = vadd.f32 %v9847, %v9438
        %v9849 = vadd.f32 %v9848, %v9440
        %v9850 = vadd.f32 %v9849, %v9508
        %v9851 = vadd.f32 %v9850, %v9576
        %v9853 = vrot.slane %v9851, 2
        %v9854 = vrot.slane %v9801, 2
        %v9855 = vsel %vm3137, %v9853, %v9854
        %v9858 = vsel %vm9234, %v9855, 0.0
        %v9859 = vsel %vm9262, %v9854, 0.0
        %v9860 = vadd.f32 %v9858, %v9859
        %v9861 = vrot.slane %v9860, 4
        %v9862 = vadd.f32 %v9860, %v9861
        %v9863 = vrot.slane %v9862, 2
        %v9864 = vadd.f32 %v9862, %v9863
        %v9865 = vrot.slane %v9864, 1
        %v9866 = vadd.f32 %v9864, %v9865
        %9868 = vrot.lane.b32.xlu0 %v9298, 112
        %v9869 = vpop.permute.xlu0 %9868
        %9872 = vrot.lane.b32.xlu0 %v9369, 16
        %v9873 = vpop.permute.xlu0 %9872
        %9876 = vrot.lane.b32.xlu0 %v9413, 32
        %v9877 = vpop.permute.xlu0 %9876
        %9880 = vrot.lane.b32.xlu0 %v9456, 48
        %v9881 = vpop.permute.xlu0 %9880
        %9884 = vrot.lane.b32.xlu0 %v9469, 64
        %v9885 = vpop.permute.xlu0 %9884
        %9888 = vrot.lane.b32.xlu0 %v9479, 80
        %v9889 = vpop.permute.xlu0 %9888
        %9892 = vrot.lane.b32.xlu0 %v9489, 96
        %v9893 = vpop.permute.xlu0 %9892
        %9896 = vrot.lane.b32.xlu0 %v9507, 112
        %v9897 = vpop.permute.xlu0 %9896
        %9900 = vrot.lane.b32.xlu0 %v9537, 16
        %v9901 = vpop.permute.xlu0 %9900
        %9904 = vrot.lane.b32.xlu0 %v9547, 32
        %v9905 = vpop.permute.xlu0 %9904
        %9908 = vrot.lane.b32.xlu0 %v9557, 48
        %v9909 = vpop.permute.xlu0 %9908
        %9912 = vrot.lane.b32.xlu0 %v9575, 64
        %v9913 = vpop.permute.xlu0 %9912
        %9916 = vrot.lane.b32.xlu0 %v9592, 80
        %v9917 = vpop.permute.xlu0 %9916
        %9920 = vrot.lane.b32.xlu0 %v9629, 96
        %v9921 = vpop.permute.xlu0 %9920
        %v9923 = vsel %vm2045, %v9869, %v9334
        %v9924 = vsel %vm2077, %v9923, %v9873
        %v9925 = vsel %vm2109, %v9924, %v9877
        %v9926 = vsel %vm2142, %v9925, %v9881
        %v9927 = vsel %vm2175, %v9926, %v9885
        %v9928 = vsel %vm2208, %v9927, %v9889
        %v9929 = vsel %vm2241, %v9928, %v9893
        %v9930 = vsel %vm2045, %v9897, %v9524
        %v9931 = vsel %vm2077, %v9930, %v9901
        %v9932 = vsel %vm2109, %v9931, %v9905
        %v9933 = vsel %vm2142, %v9932, %v9909
        %v9934 = vsel %vm2175, %v9933, %v9913
        %v9935 = vsel %vm2208, %v9934, %v9917
        %v9936 = vsel %vm2241, %v9935, %v9921
        %9938 = vrot.lane.b32.xlu0 %v9651, 112
        %v9939 = vpop.permute.xlu0 %9938
        %9942 = vrot.lane.b32.xlu0 %v9703, 16
        %v9943 = vpop.permute.xlu0 %9942
        %9946 = vrot.lane.b32.xlu0 %v9732, 32
        %v9947 = vpop.permute.xlu0 %9946
        %9950 = vrot.lane.b32.xlu0 %v9767, 48
        %v9951 = vpop.permute.xlu0 %9950
        %9954 = vrot.lane.b32.xlu0 %v9788, 64
        %v9955 = vpop.permute.xlu0 %9954
        %9958 = vrot.lane.b32.xlu0 %v9809, 80
        %v9959 = vpop.permute.xlu0 %9958
        %9962 = vrot.lane.b32.xlu0 %v9838, 96
        %v9963 = vpop.permute.xlu0 %9962
        %9966 = vrot.lane.b32.xlu0 %v9866, 112
        %v9967 = vpop.permute.xlu0 %9966
        %v9968 = vsel %vm2045, %v9939, %v9673
        %v9969 = vsel %vm2077, %v9968, %v9943
        %v9970 = vsel %vm2109, %v9969, %v9947
        %v9971 = vsel %vm2142, %v9970, %v9951
        %v9972 = vsel %vm2175, %v9971, %v9955
        %v9973 = vsel %vm2208, %v9972, %v9959
        %v9974 = vsel %vm2241, %v9973, %v9963
        %v9975 = vsel %vm2045, %v9967, 0
        %9977 = vmatprep.subr.mxu0 0.0
        %9978 = vmatpush1.msra.mxu0 %v9198
        %9979 = vmatprep.subr.mxu0 0.0
        %9980 = vmatpush1.msra.mxu0 %v9197
        %9981 = vmatprep.subr.mxu0 0.0
        %9982 = vmatpush1.msra.mxu0 %v9196
        %9983 = vmatprep.subr.mxu0 0.0
        %9984 = vmatpush1.msra.mxu0 %v9195
        %9985 = vmatprep.subr.mxu0 0.0
        %9986 = vmatpush1.msra.mxu0 %v9194
        %9987 = vmatprep.subr.mxu0 0.0
        %9988 = vmatpush1.msra.mxu0 %v9193
        %9989 = vmatprep.subr.mxu0 0.0
        %9990 = vmatpush1.msra.mxu0 %v9192
        %9991 = vmatprep.subr.mxu0 0.0
        %9992 = vmatpush1.msra.mxu0 %v9191
        %9993 = vmatprep.subr.mxu0 0.0
        %9994 = vmatpush1.msra.mxu0 %v9190
        %9995 = vmatprep.subr.mxu0 0.0
        %9996 = vmatpush1.msra.mxu0 %v9189
        %9997 = vmatprep.subr.mxu0 0.0
        %9998 = vmatpush1.msra.mxu0 %v9188
        %9999 = vmatprep.subr.mxu0 0.0
        %10000 = vmatpush1.msra.mxu0 %v9187
        %10001 = vmatprep.subr.mxu0 0.0
        %10002 = vmatpush1.msra.mxu0 %v9186
        %10003 = vmatprep.subr.mxu0 0.0
        %10004 = vmatpush1.msra.mxu0 %v9185
        %10005 = vmatprep.subr.mxu0 0.0
        %10006 = vmatpush1.msra.mxu0 %v9184
        %10007 = vmatprep.subr.mxu0 0.0
        %10008 = vmatpush1.msra.mxu0 %v9183
        %10009 = vmatprep.subr.mxu0 0.0
        %10010 = vmatpush2.msra.mxu0 %v9214
        %10011 = vmatprep.subr.mxu0 0.0
        %10012 = vmatpush2.msra.mxu0 %v9213
        %10013 = vmatprep.subr.mxu0 0.0
        %10014 = vmatpush2.msra.mxu0 %v9212
        %10015 = vmatprep.subr.mxu0 0.0
        %10016 = vmatpush2.msra.mxu0 %v9211
        %10017 = vmatprep.subr.mxu0 0.0
        %10018 = vmatpush2.msra.mxu0 %v9210
        %10019 = vmatprep.subr.mxu0 0.0
        %10020 = vmatpush2.msra.mxu0 %v9209
        %10021 = vmatprep.subr.mxu0 0.0
        %10022 = vmatpush2.msra.mxu0 %v9208
        %10023 = vmatprep.subr.mxu0 0.0
        %10024 = vmatpush2.msra.mxu0 %v9207
        %10025 = vmatprep.subr.mxu0 0.0
        %10026 = vmatpush2.msra.mxu0 %v9206
        %10027 = vmatprep.subr.mxu0 0.0
        %10028 = vmatpush2.msra.mxu0 %v9205
        %10029 = vmatprep.subr.mxu0 0.0
        %10030 = vmatpush2.msra.mxu0 %v9204
        %10031 = vmatprep.subr.mxu0 0.0
        %10032 = vmatpush2.msra.mxu0 %v9203
        %10033 = vmatprep.subr.mxu0 0.0
        %10034 = vmatpush2.msra.mxu0 %v9202
        %10035 = vmatprep.subr.mxu0 0.0
        %10036 = vmatpush2.msra.mxu0 %v9201
        %10037 = vmatprep.subr.mxu0 0.0
        %10038 = vmatpush2.msra.mxu0 %v9200
        %10039 = vmatprep.subr.mxu0 0.0
        %10040 = vmatpush2.msra.mxu0 %v9199
        %10041 = vmatprep.mubr.f32.mxu0 %v9936
        %10042 = vmatmul.mubr.f32.gmra.mxu0 %v9929
        %v10043 = vpop.f32.mrf.mxu0
        %v10044 = vadd.f32 0.0, %v10043
        %v10045 = vpop.f32.mrf.mxu0
        %10046 = vdwg.mxu0
        %10047 = vmatprep.subr.mxu0 0.0
        %10048 = vmatpush1.msra.mxu0 %v9230
        %10049 = vmatprep.subr.mxu0 0.0
        %10050 = vmatpush1.msra.mxu0 %v9229
        %10051 = vmatprep.subr.mxu0 0.0
        %10052 = vmatpush1.msra.mxu0 %v9228
        %10053 = vmatprep.subr.mxu0 0.0
        %10054 = vmatpush1.msra.mxu0 %v9227
        %10055 = vmatprep.subr.mxu0 0.0
        %10056 = vmatpush1.msra.mxu0 %v9226
        %10057 = vmatprep.subr.mxu0 0.0
        %10058 = vmatpush1.msra.mxu0 %v9225
        %10059 = vmatprep.subr.mxu0 0.0
        %10060 = vmatpush1.msra.mxu0 %v9224
        %10061 = vmatprep.subr.mxu0 0.0
        %10062 = vmatpush1.msra.mxu0 %v9223
        %10063 = vmatprep.subr.mxu0 0.0
        %10064 = vmatpush1.msra.mxu0 %v9222
        %10065 = vmatprep.subr.mxu0 0.0
        %10066 = vmatpush1.msra.mxu0 %v9221
        %10067 = vmatprep.subr.mxu0 0.0
        %10068 = vmatpush1.msra.mxu0 %v9220
        %10069 = vmatprep.subr.mxu0 0.0
        %10070 = vmatpush1.msra.mxu0 %v9219
        %10071 = vmatprep.subr.mxu0 0.0
        %10072 = vmatpush1.msra.mxu0 %v9218
        %10073 = vmatprep.subr.mxu0 0.0
        %10074 = vmatpush1.msra.mxu0 %v9217
        %10075 = vmatprep.subr.mxu0 0.0
        %10076 = vmatpush1.msra.mxu0 %v9216
        %10077 = vmatprep.subr.mxu0 0.0
        %10078 = vmatpush1.msra.mxu0 %v9215
        %10079 = vmatprep.subr.mxu0 0.0
        %10080 = vmatpush2.msra.mxu0 0.0
        %10081 = vmatprep.subr.mxu0 0.0
        %10082 = vmatpush2.msra.mxu0 0.0
        %10083 = vmatprep.subr.mxu0 0.0
        %10084 = vmatpush2.msra.mxu0 0.0
        %10085 = vmatprep.subr.mxu0 0.0
        %10086 = vmatpush2.msra.mxu0 0.0
        %10087 = vmatprep.subr.mxu0 0.0
        %10088 = vmatpush2.msra.mxu0 0.0
        %10089 = vmatprep.subr.mxu0 0.0
        %10090 = vmatpush2.msra.mxu0 0.0
        %10091 = vmatprep.subr.mxu0 0.0
        %10092 = vmatpush2.msra.mxu0 0.0
        %10093 = vmatprep.subr.mxu0 0.0
        %10094 = vmatpush2.msra.mxu0 0.0
        %10095 = vmatprep.subr.mxu0 0.0
        %10096 = vmatpush2.msra.mxu0 0.0
        %10097 = vmatprep.subr.mxu0 0.0
        %10098 = vmatpush2.msra.mxu0 0.0
        %10099 = vmatprep.subr.mxu0 0.0
        %10100 = vmatpush2.msra.mxu0 0.0
        %10101 = vmatprep.subr.mxu0 0.0
        %10102 = vmatpush2.msra.mxu0 0.0
        %10103 = vmatprep.subr.mxu0 0.0
        %10104 = vmatpush2.msra.mxu0 0.0
        %10105 = vmatprep.subr.mxu0 0.0
        %10106 = vmatpush2.msra.mxu0 0.0
        %10107 = vmatprep.subr.mxu0 0.0
        %10108 = vmatpush2.msra.mxu0 %v9232
        %10109 = vmatprep.subr.mxu0 0.0
        %10110 = vmatpush2.msra.mxu0 %v9231
        %10111 = vmatprep.mubr.f32.mxu0 %v9975
        %10112 = vmatmul.mubr.f32.gmra.mxu0 %v9974
        %v10113 = vpop.f32.mrf.mxu0
        %v10114 = vadd.f32 %v10044, %v10113
        %v10115 = vpop.f32.mrf.mxu0
        %10116 = vdwg.mxu0
        %v10117 = vmul.f32 %v10114, 0.00390625
        %v10118 = vadd.f32 %v10117, %v9233
        %10120 = vrot.lane.b32.xlu0 %v9182, 16
        %v10121 = vpop.permute.xlu0 %10120
        %10124 = vrot.lane.b32.xlu0 %v10118, 40
        %v10125 = vpop.permute.xlu0 %10124
        %10128 = vrot.lane.b32.xlu0 %v8522, 64
        %v10129 = vpop.permute.xlu0 %10128
        %v10131 = vsel %vm2045, %v8049, %v10121
        %vm10132 = vcmask 326656
        %v10133 = vsel %vm10132, %v10131, %v10125
        %v10134 = vsel %vm2142, %v10133, %v10129
        %v10135 = vld [vmem:[%s19] sm:$0xff]
        %v10136 = vld [vmem:[%s19 + $0x8] sm:$0xff]
        %v10137 = vld [vmem:[%s19 + $0x10] sm:$0xff]
        %v10138 = vld [vmem:[%s19 + $0x18] sm:$0xff]
        %v10139 = vld [vmem:[%s19 + $0x20] sm:$0xff]
        %v10140 = vld [vmem:[%s19 + $0x28] sm:$0xff]
        %v10141 = vld [vmem:[%s19 + $0x30] sm:$0xff]
        %v10142 = vld [vmem:[%s19 + $0x38] sm:$0xff]
        %v10143 = vld [vmem:[%s19 + $0x40] sm:$0xff]
        %v10144 = vld [vmem:[%s19 + $0x48] sm:$0xff]
        %v10145 = vld [vmem:[%s19 + $0x50] sm:$0xff]
        %v10146 = vld [vmem:[%s20] sm:$0x1]
        %vm10147 = vcmask 719872
        %v10149 = vsel %vm10147, %v10134, 0
        %10151 = vmatprep.subr.mxu0 0.0
        %10152 = vmatpush1.msra.mxu0 0.0
        %10153 = vmatprep.subr.mxu0 0.0
        %10154 = vmatpush1.msra.mxu0 0.0
        %10155 = vmatprep.subr.mxu0 0.0
        %10156 = vmatpush1.msra.mxu0 0.0
        %10157 = vmatprep.subr.mxu0 0.0
        %10158 = vmatpush1.msra.mxu0 0.0
        %10159 = vmatprep.subr.mxu0 0.0
        %10160 = vmatpush1.msra.mxu0 0.0
        %10161 = vmatprep.subr.mxu0 0.0
        %10162 = vmatpush1.msra.mxu0 %v10145
        %10163 = vmatprep.subr.mxu0 0.0
        %10164 = vmatpush1.msra.mxu0 %v10144
        %10165 = vmatprep.subr.mxu0 0.0
        %10166 = vmatpush1.msra.mxu0 %v10143
        %10167 = vmatprep.subr.mxu0 0.0
        %10168 = vmatpush1.msra.mxu0 %v10142
        %10169 = vmatprep.subr.mxu0 0.0
        %10170 = vmatpush1.msra.mxu0 %v10141
        %10171 = vmatprep.subr.mxu0 0.0
        %10172 = vmatpush1.msra.mxu0 %v10140
        %10173 = vmatprep.subr.mxu0 0.0
        %10174 = vmatpush1.msra.mxu0 %v10139
        %10175 = vmatprep.subr.mxu0 0.0
        %10176 = vmatpush1.msra.mxu0 %v10138
        %10177 = vmatprep.subr.mxu0 0.0
        %10178 = vmatpush1.msra.mxu0 %v10137
        %10179 = vmatprep.subr.mxu0 0.0
        %10180 = vmatpush1.msra.mxu0 %v10136
        %10181 = vmatprep.subr.mxu0 0.0
        %10182 = vmatpush1.msra.mxu0 %v10135
        %10183 = vmatprep.subr.mxu0 0.0
        %10184 = vmatpush2.msra.mxu0 0.0
        %10185 = vmatprep.subr.mxu0 0.0
        %10186 = vmatpush2.msra.mxu0 0.0
        %10187 = vmatprep.subr.mxu0 0.0
        %10188 = vmatpush2.msra.mxu0 0.0
        %10189 = vmatprep.subr.mxu0 0.0
        %10190 = vmatpush2.msra.mxu0 0.0
        %10191 = vmatprep.subr.mxu0 0.0
        %10192 = vmatpush2.msra.mxu0 0.0
        %10193 = vmatprep.subr.mxu0 0.0
        %10194 = vmatpush2.msra.mxu0 0.0
        %10195 = vmatprep.subr.mxu0 0.0
        %10196 = vmatpush2.msra.mxu0 0.0
        %10197 = vmatprep.subr.mxu0 0.0
        %10198 = vmatpush2.msra.mxu0 0.0
        %10199 = vmatprep.subr.mxu0 0.0
        %10200 = vmatpush2.msra.mxu0 0.0
        %10201 = vmatprep.subr.mxu0 0.0
        %10202 = vmatpush2.msra.mxu0 0.0
        %10203 = vmatprep.subr.mxu0 0.0
        %10204 = vmatpush2.msra.mxu0 0.0
        %10205 = vmatprep.subr.mxu0 0.0
        %10206 = vmatpush2.msra.mxu0 0.0
        %10207 = vmatprep.subr.mxu0 0.0
        %10208 = vmatpush2.msra.mxu0 0.0
        %10209 = vmatprep.subr.mxu0 0.0
        %10210 = vmatpush2.msra.mxu0 0.0
        %10211 = vmatprep.subr.mxu0 0.0
        %10212 = vmatpush2.msra.mxu0 0.0
        %10213 = vmatprep.subr.mxu0 0.0
        %10214 = vmatpush2.msra.mxu0 0.0
        %10215 = vmatprep.mubr.f32.mxu0 0.0
        %10216 = vmatmul.mubr.f32.gmra.mxu0 %v10149
        %v10217 = vpop.f32.mrf.mxu0
        %v10218 = vadd.f32 %v10146, %v10217
        %v10219 = vpop.f32.mrf.mxu0
        %10220 = vdwg.mxu0
        %vm10221 = vcmask 57344
        %10222 = vst.msk [vmem:[%s648] sm:$0x1] %vm10221, %v10218
        %s10223 = sand.u32 %s489, 1
        %s10224 = scalar_lea.sflag [#allocation3], %s10223
        %s10225 = sand.u32 %s489, 1
        %s10226 = scalar_lea.vmem [#allocation2], %s10225
        // Predicated region
        $region105: #{forward.1} parent=103 // pred_check
          %p10227 = pneg %p499
        $region106: #{forward.1} parent=103 // pred_check_branch
          %10229 = sbr.rel (%p10227) target = $region108
        $region107: #{forward.1} parent=103 // pred_region
          %s10231 = ssub.s32 16, 16
          %10232 = vsyncadd %s10224, %s10231
          %s10233 = smul.addr %s35, 16
          %s10234 = scalar_lea.hbm %s21, %s10233
          %s10236 = sshll.u32 %s10226, 4
          %s10237 = int_to_ptr.vmem [resolvable:$true] %s10236
          %10239 = dma.vmem_to_hbm [thread:$0]  %s10237, 16, %s10234, %s10224
        $region108: #{forward.1} parent=103 // pred_fallthru
          _
      $region104: #{forward.1} parent=5 // pred_fallthru
        _
      %p10240 = scmp.le.s32.totalorder 2, %s30
      // Predicated region
      $region109: #{forward.1} parent=5 // pred_check
        %p10241 = pneg %p10240
      $region110: #{forward.1} parent=5 // pred_check_branch
        %10243 = sbr.rel (%p10241) target = $region112
      $region111: #{forward.1} parent=5 // pred_region
        %s10244 = ssub.s32 %s30, 2
        // Predicated region
        $region113: #{forward.1} parent=111 // pred_check
          %p10245 = pneg %p505
        $region114: #{forward.1} parent=111 // pred_check_branch
          %10247 = sbr.rel (%p10245) target = $region116
        $region115: #{forward.1} parent=111 // pred_region
          %s10248 = sand.u32 %s490, 1
          %s10249 = scalar_lea.sflag [#allocation3], %s10248
          %s10250 = sand.u32 %s490, 1
          %s10251 = scalar_lea.vmem [#allocation2], %s10250
          %10252 = dma.done %s10249, 16
        $region116: #{forward.1} parent=111 // pred_fallthru
          _
      $region112: #{forward.1} parent=5 // pred_fallthru
        _
    $region6: #{forward.1} parent=1 // loop_footer
      %s34 = sadd.s32 1, %s30
    $region7: #{forward.1} parent=1 // loop_footer_branch
      %29 = sbr.rel target = $region3
    $region8: #{forward.1} parent=1 // loop_exit
      _
    %10253 = vsyncpa [#allocation3], 1
    %s10254 = scalar_lea.sflag [#allocation3], 1
    %10255 = vsyncpa %s10254, 1

</llo_original>
